<compile_context>
chip_gen: v7x
topology: tpu7x:2x2x1
jax: 0.10.0
libtpu: 0.0.40
codegen_flags: <defaults>
</compile_context>

<pallas_src>
import numpy as np
import jax
import jax.numpy as jnp
from jax import lax
from jax.experimental import pallas as pl
from jax.experimental.pallas import tpu as pltpu

EPS = 1e-5
POOL_W, POOL_S = 12, 7            # MaxPool1d(12, stride=7)
ROW_CHUNK = 128                   # matmul/stats row chunk (bounds live vregs)
POOL_BATCH = 8                    # pooled rows produced per store
VMEM_LIMIT = 32 * 1024 * 1024


# ------------------------------ fused forward ------------------------------- #
def autoencoder_forward(x_ncl, params):
    """AtuoEncoder.forward (training-mode BN) as a single fused Pallas TPU kernel."""
    N, _, L = x_ncl.shape
    w1_kio, w2_kio = params["w1"], params["w2"]
    w3_kio, wd_kio = params["w3"], params["wd"]
    K1, _, C1 = w1_kio.shape          # Conv1d(1, 32, 20, padding=1)
    K2, _, C2 = w2_kio.shape          # Conv1d(32, 64, 26, padding=1)
    K3, _, C3 = w3_kio.shape          # Conv1d(64, 128, 31, padding=1)
    Kd = wd_kio.shape[0]              # ConvTranspose1d(128, 1, 6, stride=3, padding=1)
    DEC_S, DEC_P = 3, 1

    conv_len = lambda l, k: l + 2 - k + 1
    pool_len = lambda l: (l - POOL_W) // POOL_S + 1
    Lc1 = conv_len(L, K1); Lp1 = pool_len(Lc1)
    Lc2 = conv_len(Lp1, K2); Lp2 = pool_len(Lc2)
    Lc3 = conv_len(Lp2, K3); Lp3 = pool_len(Lc3)
    Lout = (Lp3 - 1) * DEC_S - 2 * DEC_P + Kd

    # ---- wrapper-side layout plumbing (a handful of tiny, fused XLA ops) -----
    xpad = jnp.pad(x_ncl[:, 0, :], ((0, 0), (1, 1)))                     # (N, L+2)
    cols1 = jnp.stack([xpad[:, k:k + Lc1] for k in range(K1)], axis=-1)  # (N,Lc1,K1)
    w1_2d = w1_kio[:, 0, :]                                              # (K1, C1)

    # Dense ConvTranspose weight via ONE gather against numpy index/mask constants:
    #   w_eff[j*C3 + c, l] = wd[l + DEC_P - DEC_S*j, c, 0]  (0 outside [0, Kd))
    jj = np.arange(Lp3)[:, None]
    ll = np.arange(Lout)[None, :]
    kk = ll + DEC_P - DEC_S * jj                                         # (Lp3, Lout)
    mask = ((kk >= 0) & (kk < Kd)).astype(np.float32)[:, :, None]
    w_eff = wd_kio[np.clip(kk, 0, Kd - 1), :, 0] * mask                  # (Lp3,Lout,C3)
    w_eff = jnp.transpose(w_eff, (0, 2, 1)).reshape(Lp3 * C3, Lout)      # (Lp3*C3,Lout)

    # Biases b1/b2/b3/bd are deliberately NOT passed: a per-channel constant added
    # before a fresh training-mode BatchNorm cancels exactly in (x - mean) and
    # commutes with max-pool -> mathematical no-op in this forward.

    # static chunk plans (python ints only)
    s1_full, s1_rem = divmod(Lc1, ROW_CHUNK)
    s2_chunks = [(c0, min(ROW_CHUNK, Lc2 - c0)) for c0 in range(0, Lc2, ROW_CHUNK)]
    p1_full, p1_rem = divmod(Lp1, POOL_BATCH)
    p2_full, p2_rem = divmod(Lp2, POOL_BATCH)

    def kernel(cols1_ref, w1_ref, w2_ref, w3_ref, weff_ref, out_ref,
               y1_ref, p1_ref, y2_ref, p2_ref):
        f32 = jnp.float32

        def finish_stats(s, sq, count):
            # One-pass biased variance (training-mode BN).  E[y^2] - mean^2 is safe
            # here because activations are O(1); use a centered pass if that changes.
            mean = s * (1.0 / count)
            var = sq * (1.0 / count) - mean * mean
            return mean, lax.rsqrt(var + EPS)

        def window_max(y_ref, n, start):
            # max over one dense 12-row window -- plain (unstrided) dynamic slice
            return jnp.max(y_ref[n, pl.ds(start, POOL_W), :], axis=0, keepdims=True)

        def pool_block(y_ref, pp_ref, n, base, nwin, mean, inv):
            # nwin pooled rows [base, base+nwin) -> pp_ref rows [1+base, ...).
            # BN+tanh commute with max (per-channel strictly increasing), so they
            # are applied on the 7x smaller pooled slab only.
            rows = [window_max(y_ref, n, POOL_S * (base + s)) for s in range(nwin)]
            pooled = rows[0] if nwin == 1 else jnp.concatenate(rows, axis=0)
            pp_ref[n, pl.ds(1 + base, nwin), :] = jnp.tanh((pooled - mean) * inv)

        # zero the padded pooled-activation buffers (rows 0 / -1 are the next
        # conv's zero padding and are never overwritten)
        p1_ref[...] = jnp.zeros(p1_ref.shape, f32)
        p2_ref[...] = jnp.zeros(p2_ref.shape, f32)

        # ---------------- stage 1: Conv1d(1,32,20) + BN stats -----------------
        w1v = w1_ref[...]
        s1 = jnp.zeros((1, C1), f32)
        sq1 = jnp.zeros((1, C1), f32)
        for n in range(N):
            def s1_body(i, carry, n=n):
                s, sq = carry
                c0 = i * ROW_CHUNK
                y = jnp.dot(cols1_ref[n, pl.ds(c0, ROW_CHUNK), :], w1v,
                            preferred_element_type=f32)
                y1_ref[n, pl.ds(c0, ROW_CHUNK), :] = y
                return (s + jnp.sum(y, axis=0, keepdims=True),
                        sq + jnp.sum(y * y, axis=0, keepdims=True))
            s1, sq1 = lax.fori_loop(0, s1_full, s1_body, (s1, sq1))
            if s1_rem:
                c0 = s1_full * ROW_CHUNK
                y = jnp.dot(cols1_ref[n, pl.ds(c0, s1_rem), :], w1v,
                            preferred_element_type=f32)
                y1_ref[n, pl.ds(c0, s1_rem), :] = y
                s1 = s1 + jnp.sum(y, axis=0, keepdims=True)
                sq1 = sq1 + jnp.sum(y * y, axis=0, keepdims=True)
        mean1, inv1 = finish_stats(s1, sq1, float(N * Lc1))

        # ---------------- stage 1: MaxPool(12,7) -> BN -> tanh ----------------
        for n in range(N):
            def p1_body(b, c, n=n):
                pool_block(y1_ref, p1_ref, n, b * POOL_BATCH, POOL_BATCH, mean1, inv1)
                return c
            lax.fori_loop(0, p1_full, p1_body, 0)
            if p1_rem:
                pool_block(y1_ref, p1_ref, n, p1_full * POOL_BATCH, p1_rem,
                           mean1, inv1)

        # ---------------- stage 2: Conv1d(32,64,26) + BN stats ----------------
        # K accumulating (rows,32)@(32,64) MXU matmuls per <=128-row chunk
        # (no im2col materialisation, bounded live vregs).
        s2 = jnp.zeros((1, C2), f32)
        sq2 = jnp.zeros((1, C2), f32)
        for n in range(N):
            for c0, rows in s2_chunks:
                def tap2(k, acc, n=n, c0=c0, rows=rows):
                    return acc + jnp.dot(p1_ref[n, pl.ds(c0 + k, rows), :],
                                         w2_ref[k], preferred_element_type=f32)
                acc = lax.fori_loop(0, K2, tap2, jnp.zeros((rows, C2), f32))
                y2_ref[n, pl.ds(c0, rows), :] = acc
                s2 = s2 + jnp.sum(acc, axis=0, keepdims=True)
                sq2 = sq2 + jnp.sum(acc * acc, axis=0, keepdims=True)
        mean2, inv2 = finish_stats(s2, sq2, float(N * Lc2))

        # ---------------- stage 2: MaxPool(12,7) -> BN -> tanh ----------------
        for n in range(N):
            def p2_body(b, c, n=n):
                pool_block(y2_ref, p2_ref, n, b * POOL_BATCH, POOL_BATCH, mean2, inv2)
                return c
            lax.fori_loop(0, p2_full, p2_body, 0)
            if p2_rem:
                pool_block(y2_ref, p2_ref, n, p2_full * POOL_BATCH, p2_rem,
                           mean2, inv2)

        # ---------------- stage 3: Conv1d(64,128,31) + BN stats ---------------
        y3 = []
        for n in range(N):
            def tap3(k, acc, n=n):
                return acc + jnp.dot(p2_ref[n, pl.ds(k, Lc3), :], w3_ref[k],
                                     preferred_element_type=f32)
            y3.append(lax.fori_loop(0, K3, tap3, jnp.zeros((Lc3, C3), f32)))
        s3 = jnp.zeros((1, C3), f32)
        sq3 = jnp.zeros((1, C3), f32)
        for y in y3:
            s3 = s3 + jnp.sum(y, axis=0, keepdims=True)
            sq3 = sq3 + jnp.sum(y * y, axis=0, keepdims=True)
        mean3, inv3 = finish_stats(s3, sq3, float(N * Lc3))

        # ---- stage 3 pool+BN+tanh, ConvTranspose1d(128,1,6,3,1), BatchNorm1d(1) ----
        outs = []
        for n in range(N):
            pooled = jnp.concatenate(
                [jnp.max(y3[n][POOL_S * t:POOL_S * t + POOL_W, :],
                         axis=0, keepdims=True) for t in range(Lp3)], axis=0)
            a3 = jnp.tanh((pooled - mean3) * inv3)                       # (Lp3, C3)
            o = jnp.zeros((1, Lout), f32)
            for j in range(Lp3):
                o = o + jnp.dot(a3[j:j + 1, :], weff_ref[pl.ds(j * C3, C3), :],
                                preferred_element_type=f32)
            outs.append(o)
        o = jnp.concatenate(outs, axis=0)                                # (N, Lout)
        cnt = float(N * Lout)
        m = jnp.sum(o, axis=(0, 1), keepdims=True) * (1.0 / cnt)
        v = jnp.sum(o * o, axis=(0, 1), keepdims=True) * (1.0 / cnt) - m * m
        out_ref[...] = (o - m) * lax.rsqrt(v + EPS)

    out2d = pl.pallas_call(
        kernel,
        out_shape=jax.ShapeDtypeStruct((N, Lout), jnp.float32),
        grid=(1,),
        in_specs=[
            pl.BlockSpec((N, Lc1, K1), lambda i: (0, 0, 0)),
            pl.BlockSpec((K1, C1), lambda i: (0, 0)),
            pl.BlockSpec((K2, C1, C2), lambda i: (0, 0, 0)),
            pl.BlockSpec((K3, C2, C3), lambda i: (0, 0, 0)),
            pl.BlockSpec((Lp3 * C3, Lout), lambda i: (0, 0)),
        ],
        out_specs=pl.BlockSpec((N, Lout), lambda i: (0, 0)),
        scratch_shapes=[
            pltpu.VMEM((N, Lc1, C1), jnp.float32),       # raw conv-1 output
            pltpu.VMEM((N, Lp1 + 2, C1), jnp.float32),   # pooled act (+conv padding)
            pltpu.VMEM((N, Lc2, C2), jnp.float32),       # raw conv-2 output
            pltpu.VMEM((N, Lp2 + 2, C2), jnp.float32),   # pooled act (+conv padding)
        ],
        # TODO(synk): grid=(1,) leaves the 2nd TensorCore (v7x megacore) idle;
        # sharding the row-chunk loops would need a cross-core BN-stat reduction and
        # is not worth it at ~0.1 GFLOP.
        compiler_params=pltpu.CompilerParams(
            dimension_semantics=("arbitrary",), vmem_limit_bytes=VMEM_LIMIT),
    )(cols1, w1_2d, w2_kio, w3_kio, w_eff)
    return out2d[:, None, :]                              # (N, 1, Lout)  NCL


# --------------------------- Pure-JAX reference ------------------------------ #
def reference_forward(x_ncl, params):
    def conv(x, w_kio, b, pad):
        w = jnp.transpose(w_kio, (2, 1, 0))                          # (Cout, Cin, K)
        y = lax.conv_general_dilated(x, w, (1,), [(pad, pad)],
                                     dimension_numbers=("NCH", "OIH", "NCH"))
        return y + b.reshape(1, -1, 1)

    def bn(x, tanh):
        m = jnp.mean(x, axis=(0, 2), keepdims=True)
        v = jnp.var(x, axis=(0, 2), keepdims=True)
        y = (x - m) / jnp.sqrt(v + EPS)
        return jnp.tanh(y) if tanh else y

    def mp(x):
        return lax.reduce_window(x, -jnp.inf, lax.max, (1, 1, 12), (1, 1, 7), "VALID")

    def deconv(x, w_kio, b, stride, pad):
        K = w_kio.shape[0]
        w = jnp.flip(jnp.transpose(w_kio, (2, 1, 0)), axis=-1)
        y = lax.conv_general_dilated(x, w, (1,), [(K - 1 - pad, K - 1 - pad)],
                                     lhs_dilation=(stride,),
                                     dimension_numbers=("NCH", "OIH", "NCH"))
        return y + b.reshape(1, -1, 1)

    out = conv(x_ncl, params["w1"], params["b1"], 1); out = bn(out, True); out = mp(out)
    out = conv(out, params["w2"], params["b2"], 1);   out = bn(out, True); out = mp(out)
    out = conv(out, params["w3"], params["b3"], 1);   out = bn(out, True); out = mp(out)
    out = deconv(out, params["wd"], params["bd"], 3, 1)
    return bn(out, False)


# ------------------------------ Params / main -------------------------------- #
def init_params(key):
    ks = jax.random.split(key, 8)

    def u(k, shape, fan_in):
        bound = 1.0 / (fan_in ** 0.5)
        return jax.random.uniform(k, shape, jnp.float32, -bound, bound)

    return {
        "w1": u(ks[0], (20, 1, 32), 1 * 20),    "b1": u(ks[1], (1, 32), 1 * 20),
        "w2": u(ks[2], (26, 32, 64), 32 * 26),  "b2": u(ks[3], (1, 64), 32 * 26),
        "w3": u(ks[4], (31, 64, 128), 64 * 31), "b3": u(ks[5], (1, 128), 64 * 31),
        "wd": u(ks[6], (6, 128, 1), 128 * 6),   "bd": u(ks[7], (1, 1), 128 * 6),
    }


if __name__ == "__main__":
    key = jax.random.PRNGKey(0)
    pkey, xkey = jax.random.split(key)
    params = init_params(pkey)

    # Smallest convenient length that survives three (conv + MaxPool1d(12, stride=7))
    # stages given the module's kernel sizes (minimum valid L is ~2178).
    N, L = 2, 3000
    x = jax.random.normal(xkey, (N, 1, L), jnp.float32)

    fwd = jax.jit(autoencoder_forward)
    out = jax.block_until_ready(fwd(x, params))

    assert out.shape == (N, 1, 10), out.shape
    assert bool(jnp.all(jnp.isfinite(out)))

    ref = jax.jit(reference_forward)(x, params)
    max_err = float(jnp.max(jnp.abs(out - ref)))
    assert max_err < 1e-2, f"mismatch vs reference: {max_err}"

    print("KERNEL_OK")
</pallas_src>

<mosaic_0001>
module attributes {stable_mosaic.version = 11 : i64} {
  func.func @kernel(%arg0: i32, %arg1: memref<2x2983x20xf32, #tpu.memory_space<vmem>>, %arg2: memref<20x32xf32, #tpu.memory_space<vmem>>, %arg3: memref<26x32x64xf32, #tpu.memory_space<vmem>>, %arg4: memref<31x64x128xf32, #tpu.memory_space<vmem>>, %arg5: memref<384x10xf32, #tpu.memory_space<vmem>>, %arg6: memref<2x10xf32, #tpu.memory_space<vmem>>, %arg7: memref<2x2983x32xf32, #tpu.memory_space<vmem>>, %arg8: memref<2x427x32xf32, #tpu.memory_space<vmem>>, %arg9: memref<2x402x64xf32, #tpu.memory_space<vmem>>, %arg10: memref<2x58x64xf32, #tpu.memory_space<vmem>>) attributes {dimension_semantics = [#tpu.dimension_semantics<arbitrary>], iteration_bounds = array<i64: 1>, scalar_prefetch = 0 : i64, scratch_operands = 4 : i64, tpu.core_type = #tpu.core_type<tc>, window_params = [{pipeline_mode = #tpu.pipeline_mode<synchronous>, transform_indices = @transform_0, window_bounds = array<i64: 2, 2983, 20>}, {pipeline_mode = #tpu.pipeline_mode<synchronous>, transform_indices = @transform_1, window_bounds = array<i64: 20, 32>}, {pipeline_mode = #tpu.pipeline_mode<synchronous>, transform_indices = @transform_2, window_bounds = array<i64: 26, 32, 64>}, {pipeline_mode = #tpu.pipeline_mode<synchronous>, transform_indices = @transform_3, window_bounds = array<i64: 31, 64, 128>}, {pipeline_mode = #tpu.pipeline_mode<synchronous>, transform_indices = @transform_4, window_bounds = array<i64: 384, 10>}, {pipeline_mode = #tpu.pipeline_mode<synchronous>, transform_indices = @transform_5, window_bounds = array<i64: 2, 10>}]} {
    %cst = arith.constant 0.000000e+00 : f32
    %0 = vector.broadcast %cst : f32 to vector<2x427x32xf32>
    %c0 = arith.constant 0 : index
    %c0_0 = arith.constant 0 : index
    %c0_1 = arith.constant 0 : index
    %1 = vector.load %arg8[%c0, %c0_0, %c0_1] : memref<2x427x32xf32, #tpu.memory_space<vmem>>, vector<2x427x32xf32>
    tpu.vector_store %arg8[%c0, %c0_0, %c0_1], %0 {strides = array<i32>} : memref<2x427x32xf32, #tpu.memory_space<vmem>>, vector<2x427x32xf32>,
    %cst_2 = arith.constant 0.000000e+00 : f32
    %2 = vector.broadcast %cst_2 : f32 to vector<2x58x64xf32>
    %c0_3 = arith.constant 0 : index
    %c0_4 = arith.constant 0 : index
    %c0_5 = arith.constant 0 : index
    %3 = vector.load %arg10[%c0_3, %c0_4, %c0_5] : memref<2x58x64xf32, #tpu.memory_space<vmem>>, vector<2x58x64xf32>
    tpu.vector_store %arg10[%c0_3, %c0_4, %c0_5], %2 {strides = array<i32>} : memref<2x58x64xf32, #tpu.memory_space<vmem>>, vector<2x58x64xf32>,
    %c0_6 = arith.constant 0 : index
    %c0_7 = arith.constant 0 : index
    %4 = vector.load %arg2[%c0_6, %c0_7] : memref<20x32xf32, #tpu.memory_space<vmem>>, vector<20x32xf32>
    %cst_8 = arith.constant 0.000000e+00 : f32
    %5 = vector.broadcast %cst_8 : f32 to vector<1x32xf32>
    %cst_9 = arith.constant 0.000000e+00 : f32
    %6 = vector.broadcast %cst_9 : f32 to vector<1x32xf32>
    %c0_i32 = arith.constant 0 : i32
    %c23_i32 = arith.constant 23 : i32
    %7 = arith.addi %c0_i32, %c23_i32 : i32
    %c1_i32 = arith.constant 1 : i32
    %8:2 = scf.for %arg11 = %c0_i32 to %7 step %c1_i32 iter_args(%arg12 = %5, %arg13 = %6) -> (vector<1x32xf32>, vector<1x32xf32>)  : i32 {
      %c128_i32 = arith.constant 128 : i32
      %298 = arith.muli %arg11, %c128_i32 : i32
      %c0_192 = arith.constant 0 : index
      %299 = arith.index_cast %298 : i32 to index
      %c0_193 = arith.constant 0 : index
      %300 = vector.load %arg1[%c0_192, %299, %c0_193] : memref<2x2983x20xf32, #tpu.memory_space<vmem>>, vector<1x128x20xf32>
      %301 = vector.shape_cast %300 : vector<1x128x20xf32> to vector<128x20xf32>
      %cst_194 = arith.constant dense<0.000000e+00> : vector<128x32xf32>
      %302 = tpu.matmul %301, %4, %cst_194 {dimension_numbers = #tpu.dot_dimension_numbers<[1], [0], [0], [1], [0, 0, 1, 1], [], []>} : vector<128x20xf32>, vector<20x32xf32>, vector<128x32xf32> -> vector<128x32xf32>
      %c0_195 = arith.constant 0 : index
      %303 = arith.index_cast %298 : i32 to index
      %c0_196 = arith.constant 0 : index
      %304 = vector.load %arg7[%c0_195, %303, %c0_196] : memref<2x2983x32xf32, #tpu.memory_space<vmem>>, vector<1x128x32xf32>
      %305 = vector.shape_cast %304 : vector<1x128x32xf32> to vector<128x32xf32>
      %306 = vector.shape_cast %302 : vector<128x32xf32> to vector<1x128x32xf32>
      tpu.vector_store %arg7[%c0_195, %303, %c0_196], %306 {strides = array<i32>} : memref<2x2983x32xf32, #tpu.memory_space<vmem>>, vector<1x128x32xf32>,
      %cst_197 = arith.constant dense<0.000000e+00> : vector<32xf32>
      %307 = vector.multi_reduction <add>, %302, %cst_197 [0] : vector<128x32xf32> to vector<32xf32>
      %308 = vector.shape_cast %307 : vector<32xf32> to vector<1x32xf32>
      %309 = arith.addf %arg12, %308 : vector<1x32xf32>
      %310 = arith.mulf %302, %302 : vector<128x32xf32>
      %cst_198 = arith.constant dense<0.000000e+00> : vector<32xf32>
      %311 = vector.multi_reduction <add>, %310, %cst_198 [0] : vector<128x32xf32> to vector<32xf32>
      %312 = vector.shape_cast %311 : vector<32xf32> to vector<1x32xf32>
      %313 = arith.addf %arg13, %312 : vector<1x32xf32>
      scf.yield %309, %313 : vector<1x32xf32>, vector<1x32xf32>
    }
    %c23_i32_10 = arith.constant 23 : i32
    %c0_11 = arith.constant 0 : index
    %c2944 = arith.constant 2944 : index
    %c0_12 = arith.constant 0 : index
    %9 = vector.load %arg1[%c0_11, %c2944, %c0_12] : memref<2x2983x20xf32, #tpu.memory_space<vmem>>, vector<1x39x20xf32>
    %10 = vector.shape_cast %9 : vector<1x39x20xf32> to vector<39x20xf32>
    %cst_13 = arith.constant dense<0.000000e+00> : vector<39x32xf32>
    %11 = tpu.matmul %10, %4, %cst_13 {dimension_numbers = #tpu.dot_dimension_numbers<[1], [0], [0], [1], [0, 0, 1, 1], [], []>} : vector<39x20xf32>, vector<20x32xf32>, vector<39x32xf32> -> vector<39x32xf32>
    %c0_14 = arith.constant 0 : index
    %c2944_15 = arith.constant 2944 : index
    %c0_16 = arith.constant 0 : index
    %12 = vector.load %arg7[%c0_14, %c2944_15, %c0_16] : memref<2x2983x32xf32, #tpu.memory_space<vmem>>, vector<1x39x32xf32>
    %13 = vector.shape_cast %12 : vector<1x39x32xf32> to vector<39x32xf32>
    %14 = vector.shape_cast %11 : vector<39x32xf32> to vector<1x39x32xf32>
    tpu.vector_store %arg7[%c0_14, %c2944_15, %c0_16], %14 {strides = array<i32>} : memref<2x2983x32xf32, #tpu.memory_space<vmem>>, vector<1x39x32xf32>,
    %cst_17 = arith.constant dense<0.000000e+00> : vector<32xf32>
    %15 = vector.multi_reduction <add>, %11, %cst_17 [0] : vector<39x32xf32> to vector<32xf32>
    %16 = vector.shape_cast %15 : vector<32xf32> to vector<1x32xf32>
    %17 = arith.addf %8#0, %16 : vector<1x32xf32>
    %18 = arith.mulf %11, %11 : vector<39x32xf32>
    %cst_18 = arith.constant dense<0.000000e+00> : vector<32xf32>
    %19 = vector.multi_reduction <add>, %18, %cst_18 [0] : vector<39x32xf32> to vector<32xf32>
    %20 = vector.shape_cast %19 : vector<32xf32> to vector<1x32xf32>
    %21 = arith.addf %8#1, %20 : vector<1x32xf32>
    %c0_i32_19 = arith.constant 0 : i32
    %c23_i32_20 = arith.constant 23 : i32
    %22 = arith.addi %c0_i32_19, %c23_i32_20 : i32
    %c1_i32_21 = arith.constant 1 : i32
    %23:2 = scf.for %arg11 = %c0_i32_19 to %22 step %c1_i32_21 iter_args(%arg12 = %17, %arg13 = %21) -> (vector<1x32xf32>, vector<1x32xf32>)  : i32 {
      %c128_i32 = arith.constant 128 : i32
      %298 = arith.muli %arg11, %c128_i32 : i32
      %c1_192 = arith.constant 1 : index
      %299 = arith.index_cast %298 : i32 to index
      %c0_193 = arith.constant 0 : index
      %300 = vector.load %arg1[%c1_192, %299, %c0_193] : memref<2x2983x20xf32, #tpu.memory_space<vmem>>, vector<1x128x20xf32>
      %301 = vector.shape_cast %300 : vector<1x128x20xf32> to vector<128x20xf32>
      %cst_194 = arith.constant dense<0.000000e+00> : vector<128x32xf32>
      %302 = tpu.matmul %301, %4, %cst_194 {dimension_numbers = #tpu.dot_dimension_numbers<[1], [0], [0], [1], [0, 0, 1, 1], [], []>} : vector<128x20xf32>, vector<20x32xf32>, vector<128x32xf32> -> vector<128x32xf32>
      %c1_195 = arith.constant 1 : index
      %303 = arith.index_cast %298 : i32 to index
      %c0_196 = arith.constant 0 : index
      %304 = vector.load %arg7[%c1_195, %303, %c0_196] : memref<2x2983x32xf32, #tpu.memory_space<vmem>>, vector<1x128x32xf32>
      %305 = vector.shape_cast %304 : vector<1x128x32xf32> to vector<128x32xf32>
      %306 = vector.shape_cast %302 : vector<128x32xf32> to vector<1x128x32xf32>
      tpu.vector_store %arg7[%c1_195, %303, %c0_196], %306 {strides = array<i32>} : memref<2x2983x32xf32, #tpu.memory_space<vmem>>, vector<1x128x32xf32>,
      %cst_197 = arith.constant dense<0.000000e+00> : vector<32xf32>
      %307 = vector.multi_reduction <add>, %302, %cst_197 [0] : vector<128x32xf32> to vector<32xf32>
      %308 = vector.shape_cast %307 : vector<32xf32> to vector<1x32xf32>
      %309 = arith.addf %arg12, %308 : vector<1x32xf32>
      %310 = arith.mulf %302, %302 : vector<128x32xf32>
      %cst_198 = arith.constant dense<0.000000e+00> : vector<32xf32>
      %311 = vector.multi_reduction <add>, %310, %cst_198 [0] : vector<128x32xf32> to vector<32xf32>
      %312 = vector.shape_cast %311 : vector<32xf32> to vector<1x32xf32>
      %313 = arith.addf %arg13, %312 : vector<1x32xf32>
      scf.yield %309, %313 : vector<1x32xf32>, vector<1x32xf32>
    }
    %c23_i32_22 = arith.constant 23 : i32
    %c1 = arith.constant 1 : index
    %c2944_23 = arith.constant 2944 : index
    %c0_24 = arith.constant 0 : index
    %24 = vector.load %arg1[%c1, %c2944_23, %c0_24] : memref<2x2983x20xf32, #tpu.memory_space<vmem>>, vector<1x39x20xf32>
    %25 = vector.shape_cast %24 : vector<1x39x20xf32> to vector<39x20xf32>
    %cst_25 = arith.constant dense<0.000000e+00> : vector<39x32xf32>
    %26 = tpu.matmul %25, %4, %cst_25 {dimension_numbers = #tpu.dot_dimension_numbers<[1], [0], [0], [1], [0, 0, 1, 1], [], []>} : vector<39x20xf32>, vector<20x32xf32>, vector<39x32xf32> -> vector<39x32xf32>
    %c1_26 = arith.constant 1 : index
    %c2944_27 = arith.constant 2944 : index
    %c0_28 = arith.constant 0 : index
    %27 = vector.load %arg7[%c1_26, %c2944_27, %c0_28] : memref<2x2983x32xf32, #tpu.memory_space<vmem>>, vector<1x39x32xf32>
    %28 = vector.shape_cast %27 : vector<1x39x32xf32> to vector<39x32xf32>
    %29 = vector.shape_cast %26 : vector<39x32xf32> to vector<1x39x32xf32>
    tpu.vector_store %arg7[%c1_26, %c2944_27, %c0_28], %29 {strides = array<i32>} : memref<2x2983x32xf32, #tpu.memory_space<vmem>>, vector<1x39x32xf32>,
    %cst_29 = arith.constant dense<0.000000e+00> : vector<32xf32>
    %30 = vector.multi_reduction <add>, %26, %cst_29 [0] : vector<39x32xf32> to vector<32xf32>
    %31 = vector.shape_cast %30 : vector<32xf32> to vector<1x32xf32>
    %32 = arith.addf %23#0, %31 : vector<1x32xf32>
    %33 = arith.mulf %26, %26 : vector<39x32xf32>
    %cst_30 = arith.constant dense<0.000000e+00> : vector<32xf32>
    %34 = vector.multi_reduction <add>, %33, %cst_30 [0] : vector<39x32xf32> to vector<32xf32>
    %35 = vector.shape_cast %34 : vector<32xf32> to vector<1x32xf32>
    %36 = arith.addf %23#1, %35 : vector<1x32xf32>
    %cst_31 = arith.constant 1.67616497E-4 : f32
    %37 = vector.broadcast %cst_31 : f32 to vector<1x32xf32>
    %38 = arith.mulf %32, %37 : vector<1x32xf32>
    %cst_32 = arith.constant 1.67616497E-4 : f32
    %39 = vector.broadcast %cst_32 : f32 to vector<1x32xf32>
    %40 = arith.mulf %36, %39 : vector<1x32xf32>
    %41 = arith.mulf %38, %38 : vector<1x32xf32>
    %42 = arith.subf %40, %41 : vector<1x32xf32>
    %cst_33 = arith.constant 9.99999974E-6 : f32
    %43 = vector.broadcast %cst_33 : f32 to vector<1x32xf32>
    %44 = arith.addf %42, %43 : vector<1x32xf32>
    %45 = math.rsqrt %44 : vector<1x32xf32>
    %c0_i32_34 = arith.constant 0 : i32
    %c53_i32 = arith.constant 53 : i32
    %46 = arith.addi %c0_i32_34, %c53_i32 : i32
    %c1_i32_35 = arith.constant 1 : i32
    scf.for %arg11 = %c0_i32_34 to %46 step %c1_i32_35  : i32 {
      %c8_i32 = arith.constant 8 : i32
      %298 = arith.muli %arg11, %c8_i32 : i32
      %c0_i32_192 = arith.constant 0 : i32
      %299 = arith.addi %298, %c0_i32_192 : i32
      %c7_i32_193 = arith.constant 7 : i32
      %300 = arith.muli %c7_i32_193, %299 : i32
      %c0_194 = arith.constant 0 : index
      %301 = arith.index_cast %300 : i32 to index
      %c0_195 = arith.constant 0 : index
      %302 = vector.load %arg7[%c0_194, %301, %c0_195] : memref<2x2983x32xf32, #tpu.memory_space<vmem>>, vector<1x12x32xf32>
      %303 = vector.shape_cast %302 : vector<1x12x32xf32> to vector<12x32xf32>
      %cst_196 = arith.constant dense<0xFF800000> : vector<32xf32>
      %304 = vector.multi_reduction <maximumf>, %303, %cst_196 [0] : vector<12x32xf32> to vector<32xf32>
      %305 = vector.shape_cast %304 : vector<32xf32> to vector<1x32xf32>
      %c1_i32_197 = arith.constant 1 : i32
      %306 = arith.addi %298, %c1_i32_197 : i32
      %c7_i32_198 = arith.constant 7 : i32
      %307 = arith.muli %c7_i32_198, %306 : i32
      %c0_199 = arith.constant 0 : index
      %308 = arith.index_cast %307 : i32 to index
      %c0_200 = arith.constant 0 : index
      %309 = vector.load %arg7[%c0_199, %308, %c0_200] : memref<2x2983x32xf32, #tpu.memory_space<vmem>>, vector<1x12x32xf32>
      %310 = vector.shape_cast %309 : vector<1x12x32xf32> to vector<12x32xf32>
      %cst_201 = arith.constant dense<0xFF800000> : vector<32xf32>
      %311 = vector.multi_reduction <maximumf>, %310, %cst_201 [0] : vector<12x32xf32> to vector<32xf32>
      %312 = vector.shape_cast %311 : vector<32xf32> to vector<1x32xf32>
      %c2_i32 = arith.constant 2 : i32
      %313 = arith.addi %298, %c2_i32 : i32
      %c7_i32_202 = arith.constant 7 : i32
      %314 = arith.muli %c7_i32_202, %313 : i32
      %c0_203 = arith.constant 0 : index
      %315 = arith.index_cast %314 : i32 to index
      %c0_204 = arith.constant 0 : index
      %316 = vector.load %arg7[%c0_203, %315, %c0_204] : memref<2x2983x32xf32, #tpu.memory_space<vmem>>, vector<1x12x32xf32>
      %317 = vector.shape_cast %316 : vector<1x12x32xf32> to vector<12x32xf32>
      %cst_205 = arith.constant dense<0xFF800000> : vector<32xf32>
      %318 = vector.multi_reduction <maximumf>, %317, %cst_205 [0] : vector<12x32xf32> to vector<32xf32>
      %319 = vector.shape_cast %318 : vector<32xf32> to vector<1x32xf32>
      %c3_i32 = arith.constant 3 : i32
      %320 = arith.addi %298, %c3_i32 : i32
      %c7_i32_206 = arith.constant 7 : i32
      %321 = arith.muli %c7_i32_206, %320 : i32
      %c0_207 = arith.constant 0 : index
      %322 = arith.index_cast %321 : i32 to index
      %c0_208 = arith.constant 0 : index
      %323 = vector.load %arg7[%c0_207, %322, %c0_208] : memref<2x2983x32xf32, #tpu.memory_space<vmem>>, vector<1x12x32xf32>
      %324 = vector.shape_cast %323 : vector<1x12x32xf32> to vector<12x32xf32>
      %cst_209 = arith.constant dense<0xFF800000> : vector<32xf32>
      %325 = vector.multi_reduction <maximumf>, %324, %cst_209 [0] : vector<12x32xf32> to vector<32xf32>
      %326 = vector.shape_cast %325 : vector<32xf32> to vector<1x32xf32>
      %c4_i32 = arith.constant 4 : i32
      %327 = arith.addi %298, %c4_i32 : i32
      %c7_i32_210 = arith.constant 7 : i32
      %328 = arith.muli %c7_i32_210, %327 : i32
      %c0_211 = arith.constant 0 : index
      %329 = arith.index_cast %328 : i32 to index
      %c0_212 = arith.constant 0 : index
      %330 = vector.load %arg7[%c0_211, %329, %c0_212] : memref<2x2983x32xf32, #tpu.memory_space<vmem>>, vector<1x12x32xf32>
      %331 = vector.shape_cast %330 : vector<1x12x32xf32> to vector<12x32xf32>
      %cst_213 = arith.constant dense<0xFF800000> : vector<32xf32>
      %332 = vector.multi_reduction <maximumf>, %331, %cst_213 [0] : vector<12x32xf32> to vector<32xf32>
      %333 = vector.shape_cast %332 : vector<32xf32> to vector<1x32xf32>
      %c5_i32 = arith.constant 5 : i32
      %334 = arith.addi %298, %c5_i32 : i32
      %c7_i32_214 = arith.constant 7 : i32
      %335 = arith.muli %c7_i32_214, %334 : i32
      %c0_215 = arith.constant 0 : index
      %336 = arith.index_cast %335 : i32 to index
      %c0_216 = arith.constant 0 : index
      %337 = vector.load %arg7[%c0_215, %336, %c0_216] : memref<2x2983x32xf32, #tpu.memory_space<vmem>>, vector<1x12x32xf32>
      %338 = vector.shape_cast %337 : vector<1x12x32xf32> to vector<12x32xf32>
      %cst_217 = arith.constant dense<0xFF800000> : vector<32xf32>
      %339 = vector.multi_reduction <maximumf>, %338, %cst_217 [0] : vector<12x32xf32> to vector<32xf32>
      %340 = vector.shape_cast %339 : vector<32xf32> to vector<1x32xf32>
      %c6_i32 = arith.constant 6 : i32
      %341 = arith.addi %298, %c6_i32 : i32
      %c7_i32_218 = arith.constant 7 : i32
      %342 = arith.muli %c7_i32_218, %341 : i32
      %c0_219 = arith.constant 0 : index
      %343 = arith.index_cast %342 : i32 to index
      %c0_220 = arith.constant 0 : index
      %344 = vector.load %arg7[%c0_219, %343, %c0_220] : memref<2x2983x32xf32, #tpu.memory_space<vmem>>, vector<1x12x32xf32>
      %345 = vector.shape_cast %344 : vector<1x12x32xf32> to vector<12x32xf32>
      %cst_221 = arith.constant dense<0xFF800000> : vector<32xf32>
      %346 = vector.multi_reduction <maximumf>, %345, %cst_221 [0] : vector<12x32xf32> to vector<32xf32>
      %347 = vector.shape_cast %346 : vector<32xf32> to vector<1x32xf32>
      %c7_i32_222 = arith.constant 7 : i32
      %348 = arith.addi %298, %c7_i32_222 : i32
      %c7_i32_223 = arith.constant 7 : i32
      %349 = arith.muli %c7_i32_223, %348 : i32
      %c0_224 = arith.constant 0 : index
      %350 = arith.index_cast %349 : i32 to index
      %c0_225 = arith.constant 0 : index
      %351 = vector.load %arg7[%c0_224, %350, %c0_225] : memref<2x2983x32xf32, #tpu.memory_space<vmem>>, vector<1x12x32xf32>
      %352 = vector.shape_cast %351 : vector<1x12x32xf32> to vector<12x32xf32>
      %cst_226 = arith.constant dense<0xFF800000> : vector<32xf32>
      %353 = vector.multi_reduction <maximumf>, %352, %cst_226 [0] : vector<12x32xf32> to vector<32xf32>
      %354 = vector.shape_cast %353 : vector<32xf32> to vector<1x32xf32>
      %355 = tpu.concatenate %305, %312, %319, %326, %333, %340, %347, %354 in 0 : vector<1x32xf32>, vector<1x32xf32>, vector<1x32xf32>, vector<1x32xf32>, vector<1x32xf32>, vector<1x32xf32>, vector<1x32xf32>, vector<1x32xf32> -> vector<8x32xf32>
      %356 = vector.broadcast %38 : vector<1x32xf32> to vector<8x32xf32>
      %357 = arith.subf %355, %356 : vector<8x32xf32>
      %358 = vector.broadcast %45 : vector<1x32xf32> to vector<8x32xf32>
      %359 = arith.mulf %357, %358 : vector<8x32xf32>
      %360 = math.tanh %359 : vector<8x32xf32>
      %c1_i32_227 = arith.constant 1 : i32
      %361 = arith.addi %c1_i32_227, %298 : i32
      %c0_228 = arith.constant 0 : index
      %362 = arith.index_cast %361 : i32 to index
      %c0_229 = arith.constant 0 : index
      %363 = vector.load %arg8[%c0_228, %362, %c0_229] : memref<2x427x32xf32, #tpu.memory_space<vmem>>, vector<1x8x32xf32>
      %364 = vector.shape_cast %363 : vector<1x8x32xf32> to vector<8x32xf32>
      %365 = vector.shape_cast %360 : vector<8x32xf32> to vector<1x8x32xf32>
      tpu.vector_store %arg8[%c0_228, %362, %c0_229], %365 {strides = array<i32>} : memref<2x427x32xf32, #tpu.memory_space<vmem>>, vector<1x8x32xf32>,
    }
    %c53_i32_36 = arith.constant 53 : i32
    %c0_37 = arith.constant 0 : index
    %c2968 = arith.constant 2968 : index
    %c0_38 = arith.constant 0 : index
    %47 = vector.load %arg7[%c0_37, %c2968, %c0_38] : memref<2x2983x32xf32, #tpu.memory_space<vmem>>, vector<1x12x32xf32>
    %48 = vector.shape_cast %47 : vector<1x12x32xf32> to vector<12x32xf32>
    %cst_39 = arith.constant dense<0xFF800000> : vector<32xf32>
    %49 = vector.multi_reduction <maximumf>, %48, %cst_39 [0] : vector<12x32xf32> to vector<32xf32>
    %50 = vector.shape_cast %49 : vector<32xf32> to vector<1x32xf32>
    %51 = arith.subf %50, %38 : vector<1x32xf32>
    %52 = arith.mulf %51, %45 : vector<1x32xf32>
    %53 = math.tanh %52 : vector<1x32xf32>
    %c0_40 = arith.constant 0 : index
    %c425 = arith.constant 425 : index
    %c0_41 = arith.constant 0 : index
    %54 = vector.load %arg8[%c0_40, %c425, %c0_41] : memref<2x427x32xf32, #tpu.memory_space<vmem>>, vector<1x1x32xf32>
    %55 = vector.shape_cast %54 : vector<1x1x32xf32> to vector<1x32xf32>
    %56 = vector.shape_cast %53 : vector<1x32xf32> to vector<1x1x32xf32>
    tpu.vector_store %arg8[%c0_40, %c425, %c0_41], %56 {strides = array<i32>} : memref<2x427x32xf32, #tpu.memory_space<vmem>>, vector<1x1x32xf32>,
    %c0_i32_42 = arith.constant 0 : i32
    %c53_i32_43 = arith.constant 53 : i32
    %57 = arith.addi %c0_i32_42, %c53_i32_43 : i32
    %c1_i32_44 = arith.constant 1 : i32
    scf.for %arg11 = %c0_i32_42 to %57 step %c1_i32_44  : i32 {
      %c8_i32 = arith.constant 8 : i32
      %298 = arith.muli %arg11, %c8_i32 : i32
      %c0_i32_192 = arith.constant 0 : i32
      %299 = arith.addi %298, %c0_i32_192 : i32
      %c7_i32_193 = arith.constant 7 : i32
      %300 = arith.muli %c7_i32_193, %299 : i32
      %c1_194 = arith.constant 1 : index
      %301 = arith.index_cast %300 : i32 to index
      %c0_195 = arith.constant 0 : index
      %302 = vector.load %arg7[%c1_194, %301, %c0_195] : memref<2x2983x32xf32, #tpu.memory_space<vmem>>, vector<1x12x32xf32>
      %303 = vector.shape_cast %302 : vector<1x12x32xf32> to vector<12x32xf32>
      %cst_196 = arith.constant dense<0xFF800000> : vector<32xf32>
      %304 = vector.multi_reduction <maximumf>, %303, %cst_196 [0] : vector<12x32xf32> to vector<32xf32>
      %305 = vector.shape_cast %304 : vector<32xf32> to vector<1x32xf32>
      %c1_i32_197 = arith.constant 1 : i32
      %306 = arith.addi %298, %c1_i32_197 : i32
      %c7_i32_198 = arith.constant 7 : i32
      %307 = arith.muli %c7_i32_198, %306 : i32
      %c1_199 = arith.constant 1 : index
      %308 = arith.index_cast %307 : i32 to index
      %c0_200 = arith.constant 0 : index
      %309 = vector.load %arg7[%c1_199, %308, %c0_200] : memref<2x2983x32xf32, #tpu.memory_space<vmem>>, vector<1x12x32xf32>
      %310 = vector.shape_cast %309 : vector<1x12x32xf32> to vector<12x32xf32>
      %cst_201 = arith.constant dense<0xFF800000> : vector<32xf32>
      %311 = vector.multi_reduction <maximumf>, %310, %cst_201 [0] : vector<12x32xf32> to vector<32xf32>
      %312 = vector.shape_cast %311 : vector<32xf32> to vector<1x32xf32>
      %c2_i32 = arith.constant 2 : i32
      %313 = arith.addi %298, %c2_i32 : i32
      %c7_i32_202 = arith.constant 7 : i32
      %314 = arith.muli %c7_i32_202, %313 : i32
      %c1_203 = arith.constant 1 : index
      %315 = arith.index_cast %314 : i32 to index
      %c0_204 = arith.constant 0 : index
      %316 = vector.load %arg7[%c1_203, %315, %c0_204] : memref<2x2983x32xf32, #tpu.memory_space<vmem>>, vector<1x12x32xf32>
      %317 = vector.shape_cast %316 : vector<1x12x32xf32> to vector<12x32xf32>
      %cst_205 = arith.constant dense<0xFF800000> : vector<32xf32>
      %318 = vector.multi_reduction <maximumf>, %317, %cst_205 [0] : vector<12x32xf32> to vector<32xf32>
      %319 = vector.shape_cast %318 : vector<32xf32> to vector<1x32xf32>
      %c3_i32 = arith.constant 3 : i32
      %320 = arith.addi %298, %c3_i32 : i32
      %c7_i32_206 = arith.constant 7 : i32
      %321 = arith.muli %c7_i32_206, %320 : i32
      %c1_207 = arith.constant 1 : index
      %322 = arith.index_cast %321 : i32 to index
      %c0_208 = arith.constant 0 : index
      %323 = vector.load %arg7[%c1_207, %322, %c0_208] : memref<2x2983x32xf32, #tpu.memory_space<vmem>>, vector<1x12x32xf32>
      %324 = vector.shape_cast %323 : vector<1x12x32xf32> to vector<12x32xf32>
      %cst_209 = arith.constant dense<0xFF800000> : vector<32xf32>
      %325 = vector.multi_reduction <maximumf>, %324, %cst_209 [0] : vector<12x32xf32> to vector<32xf32>
      %326 = vector.shape_cast %325 : vector<32xf32> to vector<1x32xf32>
      %c4_i32 = arith.constant 4 : i32
      %327 = arith.addi %298, %c4_i32 : i32
      %c7_i32_210 = arith.constant 7 : i32
      %328 = arith.muli %c7_i32_210, %327 : i32
      %c1_211 = arith.constant 1 : index
      %329 = arith.index_cast %328 : i32 to index
      %c0_212 = arith.constant 0 : index
      %330 = vector.load %arg7[%c1_211, %329, %c0_212] : memref<2x2983x32xf32, #tpu.memory_space<vmem>>, vector<1x12x32xf32>
      %331 = vector.shape_cast %330 : vector<1x12x32xf32> to vector<12x32xf32>
      %cst_213 = arith.constant dense<0xFF800000> : vector<32xf32>
      %332 = vector.multi_reduction <maximumf>, %331, %cst_213 [0] : vector<12x32xf32> to vector<32xf32>
      %333 = vector.shape_cast %332 : vector<32xf32> to vector<1x32xf32>
      %c5_i32 = arith.constant 5 : i32
      %334 = arith.addi %298, %c5_i32 : i32
      %c7_i32_214 = arith.constant 7 : i32
      %335 = arith.muli %c7_i32_214, %334 : i32
      %c1_215 = arith.constant 1 : index
      %336 = arith.index_cast %335 : i32 to index
      %c0_216 = arith.constant 0 : index
      %337 = vector.load %arg7[%c1_215, %336, %c0_216] : memref<2x2983x32xf32, #tpu.memory_space<vmem>>, vector<1x12x32xf32>
      %338 = vector.shape_cast %337 : vector<1x12x32xf32> to vector<12x32xf32>
      %cst_217 = arith.constant dense<0xFF800000> : vector<32xf32>
      %339 = vector.multi_reduction <maximumf>, %338, %cst_217 [0] : vector<12x32xf32> to vector<32xf32>
      %340 = vector.shape_cast %339 : vector<32xf32> to vector<1x32xf32>
      %c6_i32 = arith.constant 6 : i32
      %341 = arith.addi %298, %c6_i32 : i32
      %c7_i32_218 = arith.constant 7 : i32
      %342 = arith.muli %c7_i32_218, %341 : i32
      %c1_219 = arith.constant 1 : index
      %343 = arith.index_cast %342 : i32 to index
      %c0_220 = arith.constant 0 : index
      %344 = vector.load %arg7[%c1_219, %343, %c0_220] : memref<2x2983x32xf32, #tpu.memory_space<vmem>>, vector<1x12x32xf32>
      %345 = vector.shape_cast %344 : vector<1x12x32xf32> to vector<12x32xf32>
      %cst_221 = arith.constant dense<0xFF800000> : vector<32xf32>
      %346 = vector.multi_reduction <maximumf>, %345, %cst_221 [0] : vector<12x32xf32> to vector<32xf32>
      %347 = vector.shape_cast %346 : vector<32xf32> to vector<1x32xf32>
      %c7_i32_222 = arith.constant 7 : i32
      %348 = arith.addi %298, %c7_i32_222 : i32
      %c7_i32_223 = arith.constant 7 : i32
      %349 = arith.muli %c7_i32_223, %348 : i32
      %c1_224 = arith.constant 1 : index
      %350 = arith.index_cast %349 : i32 to index
      %c0_225 = arith.constant 0 : index
      %351 = vector.load %arg7[%c1_224, %350, %c0_225] : memref<2x2983x32xf32, #tpu.memory_space<vmem>>, vector<1x12x32xf32>
      %352 = vector.shape_cast %351 : vector<1x12x32xf32> to vector<12x32xf32>
      %cst_226 = arith.constant dense<0xFF800000> : vector<32xf32>
      %353 = vector.multi_reduction <maximumf>, %352, %cst_226 [0] : vector<12x32xf32> to vector<32xf32>
      %354 = vector.shape_cast %353 : vector<32xf32> to vector<1x32xf32>
      %355 = tpu.concatenate %305, %312, %319, %326, %333, %340, %347, %354 in 0 : vector<1x32xf32>, vector<1x32xf32>, vector<1x32xf32>, vector<1x32xf32>, vector<1x32xf32>, vector<1x32xf32>, vector<1x32xf32>, vector<1x32xf32> -> vector<8x32xf32>
      %356 = vector.broadcast %38 : vector<1x32xf32> to vector<8x32xf32>
      %357 = arith.subf %355, %356 : vector<8x32xf32>
      %358 = vector.broadcast %45 : vector<1x32xf32> to vector<8x32xf32>
      %359 = arith.mulf %357, %358 : vector<8x32xf32>
      %360 = math.tanh %359 : vector<8x32xf32>
      %c1_i32_227 = arith.constant 1 : i32
      %361 = arith.addi %c1_i32_227, %298 : i32
      %c1_228 = arith.constant 1 : index
      %362 = arith.index_cast %361 : i32 to index
      %c0_229 = arith.constant 0 : index
      %363 = vector.load %arg8[%c1_228, %362, %c0_229] : memref<2x427x32xf32, #tpu.memory_space<vmem>>, vector<1x8x32xf32>
      %364 = vector.shape_cast %363 : vector<1x8x32xf32> to vector<8x32xf32>
      %365 = vector.shape_cast %360 : vector<8x32xf32> to vector<1x8x32xf32>
      tpu.vector_store %arg8[%c1_228, %362, %c0_229], %365 {strides = array<i32>} : memref<2x427x32xf32, #tpu.memory_space<vmem>>, vector<1x8x32xf32>,
    }
    %c53_i32_45 = arith.constant 53 : i32
    %c1_46 = arith.constant 1 : index
    %c2968_47 = arith.constant 2968 : index
    %c0_48 = arith.constant 0 : index
    %58 = vector.load %arg7[%c1_46, %c2968_47, %c0_48] : memref<2x2983x32xf32, #tpu.memory_space<vmem>>, vector<1x12x32xf32>
    %59 = vector.shape_cast %58 : vector<1x12x32xf32> to vector<12x32xf32>
    %cst_49 = arith.constant dense<0xFF800000> : vector<32xf32>
    %60 = vector.multi_reduction <maximumf>, %59, %cst_49 [0] : vector<12x32xf32> to vector<32xf32>
    %61 = vector.shape_cast %60 : vector<32xf32> to vector<1x32xf32>
    %62 = arith.subf %61, %38 : vector<1x32xf32>
    %63 = arith.mulf %62, %45 : vector<1x32xf32>
    %64 = math.tanh %63 : vector<1x32xf32>
    %c1_50 = arith.constant 1 : index
    %c425_51 = arith.constant 425 : index
    %c0_52 = arith.constant 0 : index
    %65 = vector.load %arg8[%c1_50, %c425_51, %c0_52] : memref<2x427x32xf32, #tpu.memory_space<vmem>>, vector<1x1x32xf32>
    %66 = vector.shape_cast %65 : vector<1x1x32xf32> to vector<1x32xf32>
    %67 = vector.shape_cast %64 : vector<1x32xf32> to vector<1x1x32xf32>
    tpu.vector_store %arg8[%c1_50, %c425_51, %c0_52], %67 {strides = array<i32>} : memref<2x427x32xf32, #tpu.memory_space<vmem>>, vector<1x1x32xf32>,
    %cst_53 = arith.constant 0.000000e+00 : f32
    %68 = vector.broadcast %cst_53 : f32 to vector<1x64xf32>
    %cst_54 = arith.constant 0.000000e+00 : f32
    %69 = vector.broadcast %cst_54 : f32 to vector<1x64xf32>
    %cst_55 = arith.constant 0.000000e+00 : f32
    %70 = vector.broadcast %cst_55 : f32 to vector<128x64xf32>
    %c0_i32_56 = arith.constant 0 : i32
    %c26_i32 = arith.constant 26 : i32
    %71 = arith.addi %c0_i32_56, %c26_i32 : i32
    %c1_i32_57 = arith.constant 1 : i32
    %72 = scf.for %arg11 = %c0_i32_56 to %71 step %c1_i32_57 iter_args(%arg12 = %70) -> (vector<128x64xf32>)  : i32 {
      %c0_i32_192 = arith.constant 0 : i32
      %298 = arith.addi %c0_i32_192, %arg11 : i32
      %c0_193 = arith.constant 0 : index
      %299 = arith.index_cast %298 : i32 to index
      %c0_194 = arith.constant 0 : index
      %300 = vector.load %arg8[%c0_193, %299, %c0_194] : memref<2x427x32xf32, #tpu.memory_space<vmem>>, vector<1x128x32xf32>
      %301 = vector.shape_cast %300 : vector<1x128x32xf32> to vector<128x32xf32>
      %302 = arith.index_cast %arg11 : i32 to index
      %c0_195 = arith.constant 0 : index
      %c0_196 = arith.constant 0 : index
      %303 = vector.load %arg3[%302, %c0_195, %c0_196] : memref<26x32x64xf32, #tpu.memory_space<vmem>>, vector<1x32x64xf32>
      %304 = vector.shape_cast %303 : vector<1x32x64xf32> to vector<32x64xf32>
      %cst_197 = arith.constant dense<0.000000e+00> : vector<128x64xf32>
      %305 = tpu.matmul %301, %304, %cst_197 {dimension_numbers = #tpu.dot_dimension_numbers<[1], [0], [0], [1], [0, 0, 1, 1], [], []>} : vector<128x32xf32>, vector<32x64xf32>, vector<128x64xf32> -> vector<128x64xf32>
      %306 = arith.addf %arg12, %305 : vector<128x64xf32>
      scf.yield %306 : vector<128x64xf32>
    }
    %c26_i32_58 = arith.constant 26 : i32
    %c0_59 = arith.constant 0 : index
    %c0_60 = arith.constant 0 : index
    %c0_61 = arith.constant 0 : index
    %73 = vector.load %arg9[%c0_59, %c0_60, %c0_61] : memref<2x402x64xf32, #tpu.memory_space<vmem>>, vector<1x128x64xf32>
    %74 = vector.shape_cast %73 : vector<1x128x64xf32> to vector<128x64xf32>
    %75 = vector.shape_cast %72 : vector<128x64xf32> to vector<1x128x64xf32>
    tpu.vector_store %arg9[%c0_59, %c0_60, %c0_61], %75 {strides = array<i32>} : memref<2x402x64xf32, #tpu.memory_space<vmem>>, vector<1x128x64xf32>,
    %cst_62 = arith.constant dense<0.000000e+00> : vector<64xf32>
    %76 = vector.multi_reduction <add>, %72, %cst_62 [0] : vector<128x64xf32> to vector<64xf32>
    %77 = vector.shape_cast %76 : vector<64xf32> to vector<1x64xf32>
    %78 = arith.addf %68, %77 : vector<1x64xf32>
    %79 = arith.mulf %72, %72 : vector<128x64xf32>
    %cst_63 = arith.constant dense<0.000000e+00> : vector<64xf32>
    %80 = vector.multi_reduction <add>, %79, %cst_63 [0] : vector<128x64xf32> to vector<64xf32>
    %81 = vector.shape_cast %80 : vector<64xf32> to vector<1x64xf32>
    %82 = arith.addf %69, %81 : vector<1x64xf32>
    %cst_64 = arith.constant 0.000000e+00 : f32
    %83 = vector.broadcast %cst_64 : f32 to vector<128x64xf32>
    %c0_i32_65 = arith.constant 0 : i32
    %c26_i32_66 = arith.constant 26 : i32
    %84 = arith.addi %c0_i32_65, %c26_i32_66 : i32
    %c1_i32_67 = arith.constant 1 : i32
    %85 = scf.for %arg11 = %c0_i32_65 to %84 step %c1_i32_67 iter_args(%arg12 = %83) -> (vector<128x64xf32>)  : i32 {
      %c128_i32 = arith.constant 128 : i32
      %298 = arith.addi %c128_i32, %arg11 : i32
      %c0_192 = arith.constant 0 : index
      %299 = arith.index_cast %298 : i32 to index
      %c0_193 = arith.constant 0 : index
      %300 = vector.load %arg8[%c0_192, %299, %c0_193] : memref<2x427x32xf32, #tpu.memory_space<vmem>>, vector<1x128x32xf32>
      %301 = vector.shape_cast %300 : vector<1x128x32xf32> to vector<128x32xf32>
      %302 = arith.index_cast %arg11 : i32 to index
      %c0_194 = arith.constant 0 : index
      %c0_195 = arith.constant 0 : index
      %303 = vector.load %arg3[%302, %c0_194, %c0_195] : memref<26x32x64xf32, #tpu.memory_space<vmem>>, vector<1x32x64xf32>
      %304 = vector.shape_cast %303 : vector<1x32x64xf32> to vector<32x64xf32>
      %cst_196 = arith.constant dense<0.000000e+00> : vector<128x64xf32>
      %305 = tpu.matmul %301, %304, %cst_196 {dimension_numbers = #tpu.dot_dimension_numbers<[1], [0], [0], [1], [0, 0, 1, 1], [], []>} : vector<128x32xf32>, vector<32x64xf32>, vector<128x64xf32> -> vector<128x64xf32>
      %306 = arith.addf %arg12, %305 : vector<128x64xf32>
      scf.yield %306 : vector<128x64xf32>
    }
    %c26_i32_68 = arith.constant 26 : i32
    %c0_69 = arith.constant 0 : index
    %c128 = arith.constant 128 : index
    %c0_70 = arith.constant 0 : index
    %86 = vector.load %arg9[%c0_69, %c128, %c0_70] : memref<2x402x64xf32, #tpu.memory_space<vmem>>, vector<1x128x64xf32>
    %87 = vector.shape_cast %86 : vector<1x128x64xf32> to vector<128x64xf32>
    %88 = vector.shape_cast %85 : vector<128x64xf32> to vector<1x128x64xf32>
    tpu.vector_store %arg9[%c0_69, %c128, %c0_70], %88 {strides = array<i32>} : memref<2x402x64xf32, #tpu.memory_space<vmem>>, vector<1x128x64xf32>,
    %cst_71 = arith.constant dense<0.000000e+00> : vector<64xf32>
    %89 = vector.multi_reduction <add>, %85, %cst_71 [0] : vector<128x64xf32> to vector<64xf32>
    %90 = vector.shape_cast %89 : vector<64xf32> to vector<1x64xf32>
    %91 = arith.addf %78, %90 : vector<1x64xf32>
    %92 = arith.mulf %85, %85 : vector<128x64xf32>
    %cst_72 = arith.constant dense<0.000000e+00> : vector<64xf32>
    %93 = vector.multi_reduction <add>, %92, %cst_72 [0] : vector<128x64xf32> to vector<64xf32>
    %94 = vector.shape_cast %93 : vector<64xf32> to vector<1x64xf32>
    %95 = arith.addf %82, %94 : vector<1x64xf32>
    %cst_73 = arith.constant 0.000000e+00 : f32
    %96 = vector.broadcast %cst_73 : f32 to vector<128x64xf32>
    %c0_i32_74 = arith.constant 0 : i32
    %c26_i32_75 = arith.constant 26 : i32
    %97 = arith.addi %c0_i32_74, %c26_i32_75 : i32
    %c1_i32_76 = arith.constant 1 : i32
    %98 = scf.for %arg11 = %c0_i32_74 to %97 step %c1_i32_76 iter_args(%arg12 = %96) -> (vector<128x64xf32>)  : i32 {
      %c256_i32 = arith.constant 256 : i32
      %298 = arith.addi %c256_i32, %arg11 : i32
      %c0_192 = arith.constant 0 : index
      %299 = arith.index_cast %298 : i32 to index
      %c0_193 = arith.constant 0 : index
      %300 = vector.load %arg8[%c0_192, %299, %c0_193] : memref<2x427x32xf32, #tpu.memory_space<vmem>>, vector<1x128x32xf32>
      %301 = vector.shape_cast %300 : vector<1x128x32xf32> to vector<128x32xf32>
      %302 = arith.index_cast %arg11 : i32 to index
      %c0_194 = arith.constant 0 : index
      %c0_195 = arith.constant 0 : index
      %303 = vector.load %arg3[%302, %c0_194, %c0_195] : memref<26x32x64xf32, #tpu.memory_space<vmem>>, vector<1x32x64xf32>
      %304 = vector.shape_cast %303 : vector<1x32x64xf32> to vector<32x64xf32>
      %cst_196 = arith.constant dense<0.000000e+00> : vector<128x64xf32>
      %305 = tpu.matmul %301, %304, %cst_196 {dimension_numbers = #tpu.dot_dimension_numbers<[1], [0], [0], [1], [0, 0, 1, 1], [], []>} : vector<128x32xf32>, vector<32x64xf32>, vector<128x64xf32> -> vector<128x64xf32>
      %306 = arith.addf %arg12, %305 : vector<128x64xf32>
      scf.yield %306 : vector<128x64xf32>
    }
    %c26_i32_77 = arith.constant 26 : i32
    %c0_78 = arith.constant 0 : index
    %c256 = arith.constant 256 : index
    %c0_79 = arith.constant 0 : index
    %99 = vector.load %arg9[%c0_78, %c256, %c0_79] : memref<2x402x64xf32, #tpu.memory_space<vmem>>, vector<1x128x64xf32>
    %100 = vector.shape_cast %99 : vector<1x128x64xf32> to vector<128x64xf32>
    %101 = vector.shape_cast %98 : vector<128x64xf32> to vector<1x128x64xf32>
    tpu.vector_store %arg9[%c0_78, %c256, %c0_79], %101 {strides = array<i32>} : memref<2x402x64xf32, #tpu.memory_space<vmem>>, vector<1x128x64xf32>,
    %cst_80 = arith.constant dense<0.000000e+00> : vector<64xf32>
    %102 = vector.multi_reduction <add>, %98, %cst_80 [0] : vector<128x64xf32> to vector<64xf32>
    %103 = vector.shape_cast %102 : vector<64xf32> to vector<1x64xf32>
    %104 = arith.addf %91, %103 : vector<1x64xf32>
    %105 = arith.mulf %98, %98 : vector<128x64xf32>
    %cst_81 = arith.constant dense<0.000000e+00> : vector<64xf32>
    %106 = vector.multi_reduction <add>, %105, %cst_81 [0] : vector<128x64xf32> to vector<64xf32>
    %107 = vector.shape_cast %106 : vector<64xf32> to vector<1x64xf32>
    %108 = arith.addf %95, %107 : vector<1x64xf32>
    %cst_82 = arith.constant 0.000000e+00 : f32
    %109 = vector.broadcast %cst_82 : f32 to vector<18x64xf32>
    %c0_i32_83 = arith.constant 0 : i32
    %c26_i32_84 = arith.constant 26 : i32
    %110 = arith.addi %c0_i32_83, %c26_i32_84 : i32
    %c1_i32_85 = arith.constant 1 : i32
    %111 = scf.for %arg11 = %c0_i32_83 to %110 step %c1_i32_85 iter_args(%arg12 = %109) -> (vector<18x64xf32>)  : i32 {
      %c384_i32 = arith.constant 384 : i32
      %298 = arith.addi %c384_i32, %arg11 : i32
      %c0_192 = arith.constant 0 : index
      %299 = arith.index_cast %298 : i32 to index
      %c0_193 = arith.constant 0 : index
      %300 = vector.load %arg8[%c0_192, %299, %c0_193] : memref<2x427x32xf32, #tpu.memory_space<vmem>>, vector<1x18x32xf32>
      %301 = vector.shape_cast %300 : vector<1x18x32xf32> to vector<18x32xf32>
      %302 = arith.index_cast %arg11 : i32 to index
      %c0_194 = arith.constant 0 : index
      %c0_195 = arith.constant 0 : index
      %303 = vector.load %arg3[%302, %c0_194, %c0_195] : memref<26x32x64xf32, #tpu.memory_space<vmem>>, vector<1x32x64xf32>
      %304 = vector.shape_cast %303 : vector<1x32x64xf32> to vector<32x64xf32>
      %cst_196 = arith.constant dense<0.000000e+00> : vector<18x64xf32>
      %305 = tpu.matmul %301, %304, %cst_196 {dimension_numbers = #tpu.dot_dimension_numbers<[1], [0], [0], [1], [0, 0, 1, 1], [], []>} : vector<18x32xf32>, vector<32x64xf32>, vector<18x64xf32> -> vector<18x64xf32>
      %306 = arith.addf %arg12, %305 : vector<18x64xf32>
      scf.yield %306 : vector<18x64xf32>
    }
    %c26_i32_86 = arith.constant 26 : i32
    %c0_87 = arith.constant 0 : index
    %c384 = arith.constant 384 : index
    %c0_88 = arith.constant 0 : index
    %112 = vector.load %arg9[%c0_87, %c384, %c0_88] : memref<2x402x64xf32, #tpu.memory_space<vmem>>, vector<1x18x64xf32>
    %113 = vector.shape_cast %112 : vector<1x18x64xf32> to vector<18x64xf32>
    %114 = vector.shape_cast %111 : vector<18x64xf32> to vector<1x18x64xf32>
    tpu.vector_store %arg9[%c0_87, %c384, %c0_88], %114 {strides = array<i32>} : memref<2x402x64xf32, #tpu.memory_space<vmem>>, vector<1x18x64xf32>,
    %cst_89 = arith.constant dense<0.000000e+00> : vector<64xf32>
    %115 = vector.multi_reduction <add>, %111, %cst_89 [0] : vector<18x64xf32> to vector<64xf32>
    %116 = vector.shape_cast %115 : vector<64xf32> to vector<1x64xf32>
    %117 = arith.addf %104, %116 : vector<1x64xf32>
    %118 = arith.mulf %111, %111 : vector<18x64xf32>
    %cst_90 = arith.constant dense<0.000000e+00> : vector<64xf32>
    %119 = vector.multi_reduction <add>, %118, %cst_90 [0] : vector<18x64xf32> to vector<64xf32>
    %120 = vector.shape_cast %119 : vector<64xf32> to vector<1x64xf32>
    %121 = arith.addf %108, %120 : vector<1x64xf32>
    %cst_91 = arith.constant 0.000000e+00 : f32
    %122 = vector.broadcast %cst_91 : f32 to vector<128x64xf32>
    %c0_i32_92 = arith.constant 0 : i32
    %c26_i32_93 = arith.constant 26 : i32
    %123 = arith.addi %c0_i32_92, %c26_i32_93 : i32
    %c1_i32_94 = arith.constant 1 : i32
    %124 = scf.for %arg11 = %c0_i32_92 to %123 step %c1_i32_94 iter_args(%arg12 = %122) -> (vector<128x64xf32>)  : i32 {
      %c0_i32_192 = arith.constant 0 : i32
      %298 = arith.addi %c0_i32_192, %arg11 : i32
      %c1_193 = arith.constant 1 : index
      %299 = arith.index_cast %298 : i32 to index
      %c0_194 = arith.constant 0 : index
      %300 = vector.load %arg8[%c1_193, %299, %c0_194] : memref<2x427x32xf32, #tpu.memory_space<vmem>>, vector<1x128x32xf32>
      %301 = vector.shape_cast %300 : vector<1x128x32xf32> to vector<128x32xf32>
      %302 = arith.index_cast %arg11 : i32 to index
      %c0_195 = arith.constant 0 : index
      %c0_196 = arith.constant 0 : index
      %303 = vector.load %arg3[%302, %c0_195, %c0_196] : memref<26x32x64xf32, #tpu.memory_space<vmem>>, vector<1x32x64xf32>
      %304 = vector.shape_cast %303 : vector<1x32x64xf32> to vector<32x64xf32>
      %cst_197 = arith.constant dense<0.000000e+00> : vector<128x64xf32>
      %305 = tpu.matmul %301, %304, %cst_197 {dimension_numbers = #tpu.dot_dimension_numbers<[1], [0], [0], [1], [0, 0, 1, 1], [], []>} : vector<128x32xf32>, vector<32x64xf32>, vector<128x64xf32> -> vector<128x64xf32>
      %306 = arith.addf %arg12, %305 : vector<128x64xf32>
      scf.yield %306 : vector<128x64xf32>
    }
    %c26_i32_95 = arith.constant 26 : i32
    %c1_96 = arith.constant 1 : index
    %c0_97 = arith.constant 0 : index
    %c0_98 = arith.constant 0 : index
    %125 = vector.load %arg9[%c1_96, %c0_97, %c0_98] : memref<2x402x64xf32, #tpu.memory_space<vmem>>, vector<1x128x64xf32>
    %126 = vector.shape_cast %125 : vector<1x128x64xf32> to vector<128x64xf32>
    %127 = vector.shape_cast %124 : vector<128x64xf32> to vector<1x128x64xf32>
    tpu.vector_store %arg9[%c1_96, %c0_97, %c0_98], %127 {strides = array<i32>} : memref<2x402x64xf32, #tpu.memory_space<vmem>>, vector<1x128x64xf32>,
    %cst_99 = arith.constant dense<0.000000e+00> : vector<64xf32>
    %128 = vector.multi_reduction <add>, %124, %cst_99 [0] : vector<128x64xf32> to vector<64xf32>
    %129 = vector.shape_cast %128 : vector<64xf32> to vector<1x64xf32>
    %130 = arith.addf %117, %129 : vector<1x64xf32>
    %131 = arith.mulf %124, %124 : vector<128x64xf32>
    %cst_100 = arith.constant dense<0.000000e+00> : vector<64xf32>
    %132 = vector.multi_reduction <add>, %131, %cst_100 [0] : vector<128x64xf32> to vector<64xf32>
    %133 = vector.shape_cast %132 : vector<64xf32> to vector<1x64xf32>
    %134 = arith.addf %121, %133 : vector<1x64xf32>
    %cst_101 = arith.constant 0.000000e+00 : f32
    %135 = vector.broadcast %cst_101 : f32 to vector<128x64xf32>
    %c0_i32_102 = arith.constant 0 : i32
    %c26_i32_103 = arith.constant 26 : i32
    %136 = arith.addi %c0_i32_102, %c26_i32_103 : i32
    %c1_i32_104 = arith.constant 1 : i32
    %137 = scf.for %arg11 = %c0_i32_102 to %136 step %c1_i32_104 iter_args(%arg12 = %135) -> (vector<128x64xf32>)  : i32 {
      %c128_i32 = arith.constant 128 : i32
      %298 = arith.addi %c128_i32, %arg11 : i32
      %c1_192 = arith.constant 1 : index
      %299 = arith.index_cast %298 : i32 to index
      %c0_193 = arith.constant 0 : index
      %300 = vector.load %arg8[%c1_192, %299, %c0_193] : memref<2x427x32xf32, #tpu.memory_space<vmem>>, vector<1x128x32xf32>
      %301 = vector.shape_cast %300 : vector<1x128x32xf32> to vector<128x32xf32>
      %302 = arith.index_cast %arg11 : i32 to index
      %c0_194 = arith.constant 0 : index
      %c0_195 = arith.constant 0 : index
      %303 = vector.load %arg3[%302, %c0_194, %c0_195] : memref<26x32x64xf32, #tpu.memory_space<vmem>>, vector<1x32x64xf32>
      %304 = vector.shape_cast %303 : vector<1x32x64xf32> to vector<32x64xf32>
      %cst_196 = arith.constant dense<0.000000e+00> : vector<128x64xf32>
      %305 = tpu.matmul %301, %304, %cst_196 {dimension_numbers = #tpu.dot_dimension_numbers<[1], [0], [0], [1], [0, 0, 1, 1], [], []>} : vector<128x32xf32>, vector<32x64xf32>, vector<128x64xf32> -> vector<128x64xf32>
      %306 = arith.addf %arg12, %305 : vector<128x64xf32>
      scf.yield %306 : vector<128x64xf32>
    }
    %c26_i32_105 = arith.constant 26 : i32
    %c1_106 = arith.constant 1 : index
    %c128_107 = arith.constant 128 : index
    %c0_108 = arith.constant 0 : index
    %138 = vector.load %arg9[%c1_106, %c128_107, %c0_108] : memref<2x402x64xf32, #tpu.memory_space<vmem>>, vector<1x128x64xf32>
    %139 = vector.shape_cast %138 : vector<1x128x64xf32> to vector<128x64xf32>
    %140 = vector.shape_cast %137 : vector<128x64xf32> to vector<1x128x64xf32>
    tpu.vector_store %arg9[%c1_106, %c128_107, %c0_108], %140 {strides = array<i32>} : memref<2x402x64xf32, #tpu.memory_space<vmem>>, vector<1x128x64xf32>,
    %cst_109 = arith.constant dense<0.000000e+00> : vector<64xf32>
    %141 = vector.multi_reduction <add>, %137, %cst_109 [0] : vector<128x64xf32> to vector<64xf32>
    %142 = vector.shape_cast %141 : vector<64xf32> to vector<1x64xf32>
    %143 = arith.addf %130, %142 : vector<1x64xf32>
    %144 = arith.mulf %137, %137 : vector<128x64xf32>
    %cst_110 = arith.constant dense<0.000000e+00> : vector<64xf32>
    %145 = vector.multi_reduction <add>, %144, %cst_110 [0] : vector<128x64xf32> to vector<64xf32>
    %146 = vector.shape_cast %145 : vector<64xf32> to vector<1x64xf32>
    %147 = arith.addf %134, %146 : vector<1x64xf32>
    %cst_111 = arith.constant 0.000000e+00 : f32
    %148 = vector.broadcast %cst_111 : f32 to vector<128x64xf32>
    %c0_i32_112 = arith.constant 0 : i32
    %c26_i32_113 = arith.constant 26 : i32
    %149 = arith.addi %c0_i32_112, %c26_i32_113 : i32
    %c1_i32_114 = arith.constant 1 : i32
    %150 = scf.for %arg11 = %c0_i32_112 to %149 step %c1_i32_114 iter_args(%arg12 = %148) -> (vector<128x64xf32>)  : i32 {
      %c256_i32 = arith.constant 256 : i32
      %298 = arith.addi %c256_i32, %arg11 : i32
      %c1_192 = arith.constant 1 : index
      %299 = arith.index_cast %298 : i32 to index
      %c0_193 = arith.constant 0 : index
      %300 = vector.load %arg8[%c1_192, %299, %c0_193] : memref<2x427x32xf32, #tpu.memory_space<vmem>>, vector<1x128x32xf32>
      %301 = vector.shape_cast %300 : vector<1x128x32xf32> to vector<128x32xf32>
      %302 = arith.index_cast %arg11 : i32 to index
      %c0_194 = arith.constant 0 : index
      %c0_195 = arith.constant 0 : index
      %303 = vector.load %arg3[%302, %c0_194, %c0_195] : memref<26x32x64xf32, #tpu.memory_space<vmem>>, vector<1x32x64xf32>
      %304 = vector.shape_cast %303 : vector<1x32x64xf32> to vector<32x64xf32>
      %cst_196 = arith.constant dense<0.000000e+00> : vector<128x64xf32>
      %305 = tpu.matmul %301, %304, %cst_196 {dimension_numbers = #tpu.dot_dimension_numbers<[1], [0], [0], [1], [0, 0, 1, 1], [], []>} : vector<128x32xf32>, vector<32x64xf32>, vector<128x64xf32> -> vector<128x64xf32>
      %306 = arith.addf %arg12, %305 : vector<128x64xf32>
      scf.yield %306 : vector<128x64xf32>
    }
    %c26_i32_115 = arith.constant 26 : i32
    %c1_116 = arith.constant 1 : index
    %c256_117 = arith.constant 256 : index
    %c0_118 = arith.constant 0 : index
    %151 = vector.load %arg9[%c1_116, %c256_117, %c0_118] : memref<2x402x64xf32, #tpu.memory_space<vmem>>, vector<1x128x64xf32>
    %152 = vector.shape_cast %151 : vector<1x128x64xf32> to vector<128x64xf32>
    %153 = vector.shape_cast %150 : vector<128x64xf32> to vector<1x128x64xf32>
    tpu.vector_store %arg9[%c1_116, %c256_117, %c0_118], %153 {strides = array<i32>} : memref<2x402x64xf32, #tpu.memory_space<vmem>>, vector<1x128x64xf32>,
    %cst_119 = arith.constant dense<0.000000e+00> : vector<64xf32>
    %154 = vector.multi_reduction <add>, %150, %cst_119 [0] : vector<128x64xf32> to vector<64xf32>
    %155 = vector.shape_cast %154 : vector<64xf32> to vector<1x64xf32>
    %156 = arith.addf %143, %155 : vector<1x64xf32>
    %157 = arith.mulf %150, %150 : vector<128x64xf32>
    %cst_120 = arith.constant dense<0.000000e+00> : vector<64xf32>
    %158 = vector.multi_reduction <add>, %157, %cst_120 [0] : vector<128x64xf32> to vector<64xf32>
    %159 = vector.shape_cast %158 : vector<64xf32> to vector<1x64xf32>
    %160 = arith.addf %147, %159 : vector<1x64xf32>
    %cst_121 = arith.constant 0.000000e+00 : f32
    %161 = vector.broadcast %cst_121 : f32 to vector<18x64xf32>
    %c0_i32_122 = arith.constant 0 : i32
    %c26_i32_123 = arith.constant 26 : i32
    %162 = arith.addi %c0_i32_122, %c26_i32_123 : i32
    %c1_i32_124 = arith.constant 1 : i32
    %163 = scf.for %arg11 = %c0_i32_122 to %162 step %c1_i32_124 iter_args(%arg12 = %161) -> (vector<18x64xf32>)  : i32 {
      %c384_i32 = arith.constant 384 : i32
      %298 = arith.addi %c384_i32, %arg11 : i32
      %c1_192 = arith.constant 1 : index
      %299 = arith.index_cast %298 : i32 to index
      %c0_193 = arith.constant 0 : index
      %300 = vector.load %arg8[%c1_192, %299, %c0_193] : memref<2x427x32xf32, #tpu.memory_space<vmem>>, vector<1x18x32xf32>
      %301 = vector.shape_cast %300 : vector<1x18x32xf32> to vector<18x32xf32>
      %302 = arith.index_cast %arg11 : i32 to index
      %c0_194 = arith.constant 0 : index
      %c0_195 = arith.constant 0 : index
      %303 = vector.load %arg3[%302, %c0_194, %c0_195] : memref<26x32x64xf32, #tpu.memory_space<vmem>>, vector<1x32x64xf32>
      %304 = vector.shape_cast %303 : vector<1x32x64xf32> to vector<32x64xf32>
      %cst_196 = arith.constant dense<0.000000e+00> : vector<18x64xf32>
      %305 = tpu.matmul %301, %304, %cst_196 {dimension_numbers = #tpu.dot_dimension_numbers<[1], [0], [0], [1], [0, 0, 1, 1], [], []>} : vector<18x32xf32>, vector<32x64xf32>, vector<18x64xf32> -> vector<18x64xf32>
      %306 = arith.addf %arg12, %305 : vector<18x64xf32>
      scf.yield %306 : vector<18x64xf32>
    }
    %c26_i32_125 = arith.constant 26 : i32
    %c1_126 = arith.constant 1 : index
    %c384_127 = arith.constant 384 : index
    %c0_128 = arith.constant 0 : index
    %164 = vector.load %arg9[%c1_126, %c384_127, %c0_128] : memref<2x402x64xf32, #tpu.memory_space<vmem>>, vector<1x18x64xf32>
    %165 = vector.shape_cast %164 : vector<1x18x64xf32> to vector<18x64xf32>
    %166 = vector.shape_cast %163 : vector<18x64xf32> to vector<1x18x64xf32>
    tpu.vector_store %arg9[%c1_126, %c384_127, %c0_128], %166 {strides = array<i32>} : memref<2x402x64xf32, #tpu.memory_space<vmem>>, vector<1x18x64xf32>,
    %cst_129 = arith.constant dense<0.000000e+00> : vector<64xf32>
    %167 = vector.multi_reduction <add>, %163, %cst_129 [0] : vector<18x64xf32> to vector<64xf32>
    %168 = vector.shape_cast %167 : vector<64xf32> to vector<1x64xf32>
    %169 = arith.addf %156, %168 : vector<1x64xf32>
    %170 = arith.mulf %163, %163 : vector<18x64xf32>
    %cst_130 = arith.constant dense<0.000000e+00> : vector<64xf32>
    %171 = vector.multi_reduction <add>, %170, %cst_130 [0] : vector<18x64xf32> to vector<64xf32>
    %172 = vector.shape_cast %171 : vector<64xf32> to vector<1x64xf32>
    %173 = arith.addf %160, %172 : vector<1x64xf32>
    %cst_131 = arith.constant 0.00124378107 : f32
    %174 = vector.broadcast %cst_131 : f32 to vector<1x64xf32>
    %175 = arith.mulf %169, %174 : vector<1x64xf32>
    %cst_132 = arith.constant 0.00124378107 : f32
    %176 = vector.broadcast %cst_132 : f32 to vector<1x64xf32>
    %177 = arith.mulf %173, %176 : vector<1x64xf32>
    %178 = arith.mulf %175, %175 : vector<1x64xf32>
    %179 = arith.subf %177, %178 : vector<1x64xf32>
    %cst_133 = arith.constant 9.99999974E-6 : f32
    %180 = vector.broadcast %cst_133 : f32 to vector<1x64xf32>
    %181 = arith.addf %179, %180 : vector<1x64xf32>
    %182 = math.rsqrt %181 : vector<1x64xf32>
    %c0_i32_134 = arith.constant 0 : i32
    %c7_i32 = arith.constant 7 : i32
    %183 = arith.addi %c0_i32_134, %c7_i32 : i32
    %c1_i32_135 = arith.constant 1 : i32
    scf.for %arg11 = %c0_i32_134 to %183 step %c1_i32_135  : i32 {
      %c8_i32 = arith.constant 8 : i32
      %298 = arith.muli %arg11, %c8_i32 : i32
      %c0_i32_192 = arith.constant 0 : i32
      %299 = arith.addi %298, %c0_i32_192 : i32
      %c7_i32_193 = arith.constant 7 : i32
      %300 = arith.muli %c7_i32_193, %299 : i32
      %c0_194 = arith.constant 0 : index
      %301 = arith.index_cast %300 : i32 to index
      %c0_195 = arith.constant 0 : index
      %302 = vector.load %arg9[%c0_194, %301, %c0_195] : memref<2x402x64xf32, #tpu.memory_space<vmem>>, vector<1x12x64xf32>
      %303 = vector.shape_cast %302 : vector<1x12x64xf32> to vector<12x64xf32>
      %cst_196 = arith.constant dense<0xFF800000> : vector<64xf32>
      %304 = vector.multi_reduction <maximumf>, %303, %cst_196 [0] : vector<12x64xf32> to vector<64xf32>
      %305 = vector.shape_cast %304 : vector<64xf32> to vector<1x64xf32>
      %c1_i32_197 = arith.constant 1 : i32
      %306 = arith.addi %298, %c1_i32_197 : i32
      %c7_i32_198 = arith.constant 7 : i32
      %307 = arith.muli %c7_i32_198, %306 : i32
      %c0_199 = arith.constant 0 : index
      %308 = arith.index_cast %307 : i32 to index
      %c0_200 = arith.constant 0 : index
      %309 = vector.load %arg9[%c0_199, %308, %c0_200] : memref<2x402x64xf32, #tpu.memory_space<vmem>>, vector<1x12x64xf32>
      %310 = vector.shape_cast %309 : vector<1x12x64xf32> to vector<12x64xf32>
      %cst_201 = arith.constant dense<0xFF800000> : vector<64xf32>
      %311 = vector.multi_reduction <maximumf>, %310, %cst_201 [0] : vector<12x64xf32> to vector<64xf32>
      %312 = vector.shape_cast %311 : vector<64xf32> to vector<1x64xf32>
      %c2_i32 = arith.constant 2 : i32
      %313 = arith.addi %298, %c2_i32 : i32
      %c7_i32_202 = arith.constant 7 : i32
      %314 = arith.muli %c7_i32_202, %313 : i32
      %c0_203 = arith.constant 0 : index
      %315 = arith.index_cast %314 : i32 to index
      %c0_204 = arith.constant 0 : index
      %316 = vector.load %arg9[%c0_203, %315, %c0_204] : memref<2x402x64xf32, #tpu.memory_space<vmem>>, vector<1x12x64xf32>
      %317 = vector.shape_cast %316 : vector<1x12x64xf32> to vector<12x64xf32>
      %cst_205 = arith.constant dense<0xFF800000> : vector<64xf32>
      %318 = vector.multi_reduction <maximumf>, %317, %cst_205 [0] : vector<12x64xf32> to vector<64xf32>
      %319 = vector.shape_cast %318 : vector<64xf32> to vector<1x64xf32>
      %c3_i32 = arith.constant 3 : i32
      %320 = arith.addi %298, %c3_i32 : i32
      %c7_i32_206 = arith.constant 7 : i32
      %321 = arith.muli %c7_i32_206, %320 : i32
      %c0_207 = arith.constant 0 : index
      %322 = arith.index_cast %321 : i32 to index
      %c0_208 = arith.constant 0 : index
      %323 = vector.load %arg9[%c0_207, %322, %c0_208] : memref<2x402x64xf32, #tpu.memory_space<vmem>>, vector<1x12x64xf32>
      %324 = vector.shape_cast %323 : vector<1x12x64xf32> to vector<12x64xf32>
      %cst_209 = arith.constant dense<0xFF800000> : vector<64xf32>
      %325 = vector.multi_reduction <maximumf>, %324, %cst_209 [0] : vector<12x64xf32> to vector<64xf32>
      %326 = vector.shape_cast %325 : vector<64xf32> to vector<1x64xf32>
      %c4_i32 = arith.constant 4 : i32
      %327 = arith.addi %298, %c4_i32 : i32
      %c7_i32_210 = arith.constant 7 : i32
      %328 = arith.muli %c7_i32_210, %327 : i32
      %c0_211 = arith.constant 0 : index
      %329 = arith.index_cast %328 : i32 to index
      %c0_212 = arith.constant 0 : index
      %330 = vector.load %arg9[%c0_211, %329, %c0_212] : memref<2x402x64xf32, #tpu.memory_space<vmem>>, vector<1x12x64xf32>
      %331 = vector.shape_cast %330 : vector<1x12x64xf32> to vector<12x64xf32>
      %cst_213 = arith.constant dense<0xFF800000> : vector<64xf32>
      %332 = vector.multi_reduction <maximumf>, %331, %cst_213 [0] : vector<12x64xf32> to vector<64xf32>
      %333 = vector.shape_cast %332 : vector<64xf32> to vector<1x64xf32>
      %c5_i32 = arith.constant 5 : i32
      %334 = arith.addi %298, %c5_i32 : i32
      %c7_i32_214 = arith.constant 7 : i32
      %335 = arith.muli %c7_i32_214, %334 : i32
      %c0_215 = arith.constant 0 : index
      %336 = arith.index_cast %335 : i32 to index
      %c0_216 = arith.constant 0 : index
      %337 = vector.load %arg9[%c0_215, %336, %c0_216] : memref<2x402x64xf32, #tpu.memory_space<vmem>>, vector<1x12x64xf32>
      %338 = vector.shape_cast %337 : vector<1x12x64xf32> to vector<12x64xf32>
      %cst_217 = arith.constant dense<0xFF800000> : vector<64xf32>
      %339 = vector.multi_reduction <maximumf>, %338, %cst_217 [0] : vector<12x64xf32> to vector<64xf32>
      %340 = vector.shape_cast %339 : vector<64xf32> to vector<1x64xf32>
      %c6_i32 = arith.constant 6 : i32
      %341 = arith.addi %298, %c6_i32 : i32
      %c7_i32_218 = arith.constant 7 : i32
      %342 = arith.muli %c7_i32_218, %341 : i32
      %c0_219 = arith.constant 0 : index
      %343 = arith.index_cast %342 : i32 to index
      %c0_220 = arith.constant 0 : index
      %344 = vector.load %arg9[%c0_219, %343, %c0_220] : memref<2x402x64xf32, #tpu.memory_space<vmem>>, vector<1x12x64xf32>
      %345 = vector.shape_cast %344 : vector<1x12x64xf32> to vector<12x64xf32>
      %cst_221 = arith.constant dense<0xFF800000> : vector<64xf32>
      %346 = vector.multi_reduction <maximumf>, %345, %cst_221 [0] : vector<12x64xf32> to vector<64xf32>
      %347 = vector.shape_cast %346 : vector<64xf32> to vector<1x64xf32>
      %c7_i32_222 = arith.constant 7 : i32
      %348 = arith.addi %298, %c7_i32_222 : i32
      %c7_i32_223 = arith.constant 7 : i32
      %349 = arith.muli %c7_i32_223, %348 : i32
      %c0_224 = arith.constant 0 : index
      %350 = arith.index_cast %349 : i32 to index
      %c0_225 = arith.constant 0 : index
      %351 = vector.load %arg9[%c0_224, %350, %c0_225] : memref<2x402x64xf32, #tpu.memory_space<vmem>>, vector<1x12x64xf32>
      %352 = vector.shape_cast %351 : vector<1x12x64xf32> to vector<12x64xf32>
      %cst_226 = arith.constant dense<0xFF800000> : vector<64xf32>
      %353 = vector.multi_reduction <maximumf>, %352, %cst_226 [0] : vector<12x64xf32> to vector<64xf32>
      %354 = vector.shape_cast %353 : vector<64xf32> to vector<1x64xf32>
      %355 = tpu.concatenate %305, %312, %319, %326, %333, %340, %347, %354 in 0 : vector<1x64xf32>, vector<1x64xf32>, vector<1x64xf32>, vector<1x64xf32>, vector<1x64xf32>, vector<1x64xf32>, vector<1x64xf32>, vector<1x64xf32> -> vector<8x64xf32>
      %356 = vector.broadcast %175 : vector<1x64xf32> to vector<8x64xf32>
      %357 = arith.subf %355, %356 : vector<8x64xf32>
      %358 = vector.broadcast %182 : vector<1x64xf32> to vector<8x64xf32>
      %359 = arith.mulf %357, %358 : vector<8x64xf32>
      %360 = math.tanh %359 : vector<8x64xf32>
      %c1_i32_227 = arith.constant 1 : i32
      %361 = arith.addi %c1_i32_227, %298 : i32
      %c0_228 = arith.constant 0 : index
      %362 = arith.index_cast %361 : i32 to index
      %c0_229 = arith.constant 0 : index
      %363 = vector.load %arg10[%c0_228, %362, %c0_229] : memref<2x58x64xf32, #tpu.memory_space<vmem>>, vector<1x8x64xf32>
      %364 = vector.shape_cast %363 : vector<1x8x64xf32> to vector<8x64xf32>
      %365 = vector.shape_cast %360 : vector<8x64xf32> to vector<1x8x64xf32>
      tpu.vector_store %arg10[%c0_228, %362, %c0_229], %365 {strides = array<i32>} : memref<2x58x64xf32, #tpu.memory_space<vmem>>, vector<1x8x64xf32>,
    }
    %c7_i32_136 = arith.constant 7 : i32
    %c0_i32_137 = arith.constant 0 : i32
    %c7_i32_138 = arith.constant 7 : i32
    %184 = arith.addi %c0_i32_137, %c7_i32_138 : i32
    %c1_i32_139 = arith.constant 1 : i32
    scf.for %arg11 = %c0_i32_137 to %184 step %c1_i32_139  : i32 {
      %c8_i32 = arith.constant 8 : i32
      %298 = arith.muli %arg11, %c8_i32 : i32
      %c0_i32_192 = arith.constant 0 : i32
      %299 = arith.addi %298, %c0_i32_192 : i32
      %c7_i32_193 = arith.constant 7 : i32
      %300 = arith.muli %c7_i32_193, %299 : i32
      %c1_194 = arith.constant 1 : index
      %301 = arith.index_cast %300 : i32 to index
      %c0_195 = arith.constant 0 : index
      %302 = vector.load %arg9[%c1_194, %301, %c0_195] : memref<2x402x64xf32, #tpu.memory_space<vmem>>, vector<1x12x64xf32>
      %303 = vector.shape_cast %302 : vector<1x12x64xf32> to vector<12x64xf32>
      %cst_196 = arith.constant dense<0xFF800000> : vector<64xf32>
      %304 = vector.multi_reduction <maximumf>, %303, %cst_196 [0] : vector<12x64xf32> to vector<64xf32>
      %305 = vector.shape_cast %304 : vector<64xf32> to vector<1x64xf32>
      %c1_i32_197 = arith.constant 1 : i32
      %306 = arith.addi %298, %c1_i32_197 : i32
      %c7_i32_198 = arith.constant 7 : i32
      %307 = arith.muli %c7_i32_198, %306 : i32
      %c1_199 = arith.constant 1 : index
      %308 = arith.index_cast %307 : i32 to index
      %c0_200 = arith.constant 0 : index
      %309 = vector.load %arg9[%c1_199, %308, %c0_200] : memref<2x402x64xf32, #tpu.memory_space<vmem>>, vector<1x12x64xf32>
      %310 = vector.shape_cast %309 : vector<1x12x64xf32> to vector<12x64xf32>
      %cst_201 = arith.constant dense<0xFF800000> : vector<64xf32>
      %311 = vector.multi_reduction <maximumf>, %310, %cst_201 [0] : vector<12x64xf32> to vector<64xf32>
      %312 = vector.shape_cast %311 : vector<64xf32> to vector<1x64xf32>
      %c2_i32 = arith.constant 2 : i32
      %313 = arith.addi %298, %c2_i32 : i32
      %c7_i32_202 = arith.constant 7 : i32
      %314 = arith.muli %c7_i32_202, %313 : i32
      %c1_203 = arith.constant 1 : index
      %315 = arith.index_cast %314 : i32 to index
      %c0_204 = arith.constant 0 : index
      %316 = vector.load %arg9[%c1_203, %315, %c0_204] : memref<2x402x64xf32, #tpu.memory_space<vmem>>, vector<1x12x64xf32>
      %317 = vector.shape_cast %316 : vector<1x12x64xf32> to vector<12x64xf32>
      %cst_205 = arith.constant dense<0xFF800000> : vector<64xf32>
      %318 = vector.multi_reduction <maximumf>, %317, %cst_205 [0] : vector<12x64xf32> to vector<64xf32>
      %319 = vector.shape_cast %318 : vector<64xf32> to vector<1x64xf32>
      %c3_i32 = arith.constant 3 : i32
      %320 = arith.addi %298, %c3_i32 : i32
      %c7_i32_206 = arith.constant 7 : i32
      %321 = arith.muli %c7_i32_206, %320 : i32
      %c1_207 = arith.constant 1 : index
      %322 = arith.index_cast %321 : i32 to index
      %c0_208 = arith.constant 0 : index
      %323 = vector.load %arg9[%c1_207, %322, %c0_208] : memref<2x402x64xf32, #tpu.memory_space<vmem>>, vector<1x12x64xf32>
      %324 = vector.shape_cast %323 : vector<1x12x64xf32> to vector<12x64xf32>
      %cst_209 = arith.constant dense<0xFF800000> : vector<64xf32>
      %325 = vector.multi_reduction <maximumf>, %324, %cst_209 [0] : vector<12x64xf32> to vector<64xf32>
      %326 = vector.shape_cast %325 : vector<64xf32> to vector<1x64xf32>
      %c4_i32 = arith.constant 4 : i32
      %327 = arith.addi %298, %c4_i32 : i32
      %c7_i32_210 = arith.constant 7 : i32
      %328 = arith.muli %c7_i32_210, %327 : i32
      %c1_211 = arith.constant 1 : index
      %329 = arith.index_cast %328 : i32 to index
      %c0_212 = arith.constant 0 : index
      %330 = vector.load %arg9[%c1_211, %329, %c0_212] : memref<2x402x64xf32, #tpu.memory_space<vmem>>, vector<1x12x64xf32>
      %331 = vector.shape_cast %330 : vector<1x12x64xf32> to vector<12x64xf32>
      %cst_213 = arith.constant dense<0xFF800000> : vector<64xf32>
      %332 = vector.multi_reduction <maximumf>, %331, %cst_213 [0] : vector<12x64xf32> to vector<64xf32>
      %333 = vector.shape_cast %332 : vector<64xf32> to vector<1x64xf32>
      %c5_i32 = arith.constant 5 : i32
      %334 = arith.addi %298, %c5_i32 : i32
      %c7_i32_214 = arith.constant 7 : i32
      %335 = arith.muli %c7_i32_214, %334 : i32
      %c1_215 = arith.constant 1 : index
      %336 = arith.index_cast %335 : i32 to index
      %c0_216 = arith.constant 0 : index
      %337 = vector.load %arg9[%c1_215, %336, %c0_216] : memref<2x402x64xf32, #tpu.memory_space<vmem>>, vector<1x12x64xf32>
      %338 = vector.shape_cast %337 : vector<1x12x64xf32> to vector<12x64xf32>
      %cst_217 = arith.constant dense<0xFF800000> : vector<64xf32>
      %339 = vector.multi_reduction <maximumf>, %338, %cst_217 [0] : vector<12x64xf32> to vector<64xf32>
      %340 = vector.shape_cast %339 : vector<64xf32> to vector<1x64xf32>
      %c6_i32 = arith.constant 6 : i32
      %341 = arith.addi %298, %c6_i32 : i32
      %c7_i32_218 = arith.constant 7 : i32
      %342 = arith.muli %c7_i32_218, %341 : i32
      %c1_219 = arith.constant 1 : index
      %343 = arith.index_cast %342 : i32 to index
      %c0_220 = arith.constant 0 : index
      %344 = vector.load %arg9[%c1_219, %343, %c0_220] : memref<2x402x64xf32, #tpu.memory_space<vmem>>, vector<1x12x64xf32>
      %345 = vector.shape_cast %344 : vector<1x12x64xf32> to vector<12x64xf32>
      %cst_221 = arith.constant dense<0xFF800000> : vector<64xf32>
      %346 = vector.multi_reduction <maximumf>, %345, %cst_221 [0] : vector<12x64xf32> to vector<64xf32>
      %347 = vector.shape_cast %346 : vector<64xf32> to vector<1x64xf32>
      %c7_i32_222 = arith.constant 7 : i32
      %348 = arith.addi %298, %c7_i32_222 : i32
      %c7_i32_223 = arith.constant 7 : i32
      %349 = arith.muli %c7_i32_223, %348 : i32
      %c1_224 = arith.constant 1 : index
      %350 = arith.index_cast %349 : i32 to index
      %c0_225 = arith.constant 0 : index
      %351 = vector.load %arg9[%c1_224, %350, %c0_225] : memref<2x402x64xf32, #tpu.memory_space<vmem>>, vector<1x12x64xf32>
      %352 = vector.shape_cast %351 : vector<1x12x64xf32> to vector<12x64xf32>
      %cst_226 = arith.constant dense<0xFF800000> : vector<64xf32>
      %353 = vector.multi_reduction <maximumf>, %352, %cst_226 [0] : vector<12x64xf32> to vector<64xf32>
      %354 = vector.shape_cast %353 : vector<64xf32> to vector<1x64xf32>
      %355 = tpu.concatenate %305, %312, %319, %326, %333, %340, %347, %354 in 0 : vector<1x64xf32>, vector<1x64xf32>, vector<1x64xf32>, vector<1x64xf32>, vector<1x64xf32>, vector<1x64xf32>, vector<1x64xf32>, vector<1x64xf32> -> vector<8x64xf32>
      %356 = vector.broadcast %175 : vector<1x64xf32> to vector<8x64xf32>
      %357 = arith.subf %355, %356 : vector<8x64xf32>
      %358 = vector.broadcast %182 : vector<1x64xf32> to vector<8x64xf32>
      %359 = arith.mulf %357, %358 : vector<8x64xf32>
      %360 = math.tanh %359 : vector<8x64xf32>
      %c1_i32_227 = arith.constant 1 : i32
      %361 = arith.addi %c1_i32_227, %298 : i32
      %c1_228 = arith.constant 1 : index
      %362 = arith.index_cast %361 : i32 to index
      %c0_229 = arith.constant 0 : index
      %363 = vector.load %arg10[%c1_228, %362, %c0_229] : memref<2x58x64xf32, #tpu.memory_space<vmem>>, vector<1x8x64xf32>
      %364 = vector.shape_cast %363 : vector<1x8x64xf32> to vector<8x64xf32>
      %365 = vector.shape_cast %360 : vector<8x64xf32> to vector<1x8x64xf32>
      tpu.vector_store %arg10[%c1_228, %362, %c0_229], %365 {strides = array<i32>} : memref<2x58x64xf32, #tpu.memory_space<vmem>>, vector<1x8x64xf32>,
    }
    %c7_i32_140 = arith.constant 7 : i32
    %cst_141 = arith.constant 0.000000e+00 : f32
    %185 = vector.broadcast %cst_141 : f32 to vector<28x128xf32>
    %c0_i32_142 = arith.constant 0 : i32
    %c31_i32 = arith.constant 31 : i32
    %186 = arith.addi %c0_i32_142, %c31_i32 : i32
    %c1_i32_143 = arith.constant 1 : i32
    %187 = scf.for %arg11 = %c0_i32_142 to %186 step %c1_i32_143 iter_args(%arg12 = %185) -> (vector<28x128xf32>)  : i32 {
      %c0_192 = arith.constant 0 : index
      %298 = arith.index_cast %arg11 : i32 to index
      %c0_193 = arith.constant 0 : index
      %299 = vector.load %arg10[%c0_192, %298, %c0_193] : memref<2x58x64xf32, #tpu.memory_space<vmem>>, vector<1x28x64xf32>
      %300 = vector.shape_cast %299 : vector<1x28x64xf32> to vector<28x64xf32>
      %301 = arith.index_cast %arg11 : i32 to index
      %c0_194 = arith.constant 0 : index
      %c0_195 = arith.constant 0 : index
      %302 = vector.load %arg4[%301, %c0_194, %c0_195] : memref<31x64x128xf32, #tpu.memory_space<vmem>>, vector<1x64x128xf32>
      %303 = vector.shape_cast %302 : vector<1x64x128xf32> to vector<64x128xf32>
      %cst_196 = arith.constant dense<0.000000e+00> : vector<28x128xf32>
      %304 = tpu.matmul %300, %303, %cst_196 {dimension_numbers = #tpu.dot_dimension_numbers<[1], [0], [0], [1], [0, 0, 1, 1], [], []>} : vector<28x64xf32>, vector<64x128xf32>, vector<28x128xf32> -> vector<28x128xf32>
      %305 = arith.addf %arg12, %304 : vector<28x128xf32>
      scf.yield %305 : vector<28x128xf32>
    }
    %c31_i32_144 = arith.constant 31 : i32
    %cst_145 = arith.constant 0.000000e+00 : f32
    %188 = vector.broadcast %cst_145 : f32 to vector<28x128xf32>
    %c0_i32_146 = arith.constant 0 : i32
    %c31_i32_147 = arith.constant 31 : i32
    %189 = arith.addi %c0_i32_146, %c31_i32_147 : i32
    %c1_i32_148 = arith.constant 1 : i32
    %190 = scf.for %arg11 = %c0_i32_146 to %189 step %c1_i32_148 iter_args(%arg12 = %188) -> (vector<28x128xf32>)  : i32 {
      %c1_192 = arith.constant 1 : index
      %298 = arith.index_cast %arg11 : i32 to index
      %c0_193 = arith.constant 0 : index
      %299 = vector.load %arg10[%c1_192, %298, %c0_193] : memref<2x58x64xf32, #tpu.memory_space<vmem>>, vector<1x28x64xf32>
      %300 = vector.shape_cast %299 : vector<1x28x64xf32> to vector<28x64xf32>
      %301 = arith.index_cast %arg11 : i32 to index
      %c0_194 = arith.constant 0 : index
      %c0_195 = arith.constant 0 : index
      %302 = vector.load %arg4[%301, %c0_194, %c0_195] : memref<31x64x128xf32, #tpu.memory_space<vmem>>, vector<1x64x128xf32>
      %303 = vector.shape_cast %302 : vector<1x64x128xf32> to vector<64x128xf32>
      %cst_196 = arith.constant dense<0.000000e+00> : vector<28x128xf32>
      %304 = tpu.matmul %300, %303, %cst_196 {dimension_numbers = #tpu.dot_dimension_numbers<[1], [0], [0], [1], [0, 0, 1, 1], [], []>} : vector<28x64xf32>, vector<64x128xf32>, vector<28x128xf32> -> vector<28x128xf32>
      %305 = arith.addf %arg12, %304 : vector<28x128xf32>
      scf.yield %305 : vector<28x128xf32>
    }
    %c31_i32_149 = arith.constant 31 : i32
    %cst_150 = arith.constant 0.000000e+00 : f32
    %191 = vector.broadcast %cst_150 : f32 to vector<1x128xf32>
    %cst_151 = arith.constant 0.000000e+00 : f32
    %192 = vector.broadcast %cst_151 : f32 to vector<1x128xf32>
    %cst_152 = arith.constant dense<0.000000e+00> : vector<128xf32>
    %193 = vector.multi_reduction <add>, %187, %cst_152 [0] : vector<28x128xf32> to vector<128xf32>
    %194 = vector.shape_cast %193 : vector<128xf32> to vector<1x128xf32>
    %195 = arith.addf %191, %194 : vector<1x128xf32>
    %196 = arith.mulf %187, %187 : vector<28x128xf32>
    %cst_153 = arith.constant dense<0.000000e+00> : vector<128xf32>
    %197 = vector.multi_reduction <add>, %196, %cst_153 [0] : vector<28x128xf32> to vector<128xf32>
    %198 = vector.shape_cast %197 : vector<128xf32> to vector<1x128xf32>
    %199 = arith.addf %192, %198 : vector<1x128xf32>
    %cst_154 = arith.constant dense<0.000000e+00> : vector<128xf32>
    %200 = vector.multi_reduction <add>, %190, %cst_154 [0] : vector<28x128xf32> to vector<128xf32>
    %201 = vector.shape_cast %200 : vector<128xf32> to vector<1x128xf32>
    %202 = arith.addf %195, %201 : vector<1x128xf32>
    %203 = arith.mulf %190, %190 : vector<28x128xf32>
    %cst_155 = arith.constant dense<0.000000e+00> : vector<128xf32>
    %204 = vector.multi_reduction <add>, %203, %cst_155 [0] : vector<28x128xf32> to vector<128xf32>
    %205 = vector.shape_cast %204 : vector<128xf32> to vector<1x128xf32>
    %206 = arith.addf %199, %205 : vector<1x128xf32>
    %cst_156 = arith.constant 0.0178571437 : f32
    %207 = vector.broadcast %cst_156 : f32 to vector<1x128xf32>
    %208 = arith.mulf %202, %207 : vector<1x128xf32>
    %cst_157 = arith.constant 0.0178571437 : f32
    %209 = vector.broadcast %cst_157 : f32 to vector<1x128xf32>
    %210 = arith.mulf %206, %209 : vector<1x128xf32>
    %211 = arith.mulf %208, %208 : vector<1x128xf32>
    %212 = arith.subf %210, %211 : vector<1x128xf32>
    %cst_158 = arith.constant 9.99999974E-6 : f32
    %213 = vector.broadcast %cst_158 : f32 to vector<1x128xf32>
    %214 = arith.addf %212, %213 : vector<1x128xf32>
    %215 = math.rsqrt %214 : vector<1x128xf32>
    %216 = vector.extract_strided_slice %187 {offsets = [0, 0], sizes = [12, 128], strides = [1, 1]} : vector<28x128xf32> to vector<12x128xf32>
    %cst_159 = arith.constant dense<0xFF800000> : vector<128xf32>
    %217 = vector.multi_reduction <maximumf>, %216, %cst_159 [0] : vector<12x128xf32> to vector<128xf32>
    %218 = vector.shape_cast %217 : vector<128xf32> to vector<1x128xf32>
    %219 = vector.extract_strided_slice %187 {offsets = [7, 0], sizes = [12, 128], strides = [1, 1]} : vector<28x128xf32> to vector<12x128xf32>
    %cst_160 = arith.constant dense<0xFF800000> : vector<128xf32>
    %220 = vector.multi_reduction <maximumf>, %219, %cst_160 [0] : vector<12x128xf32> to vector<128xf32>
    %221 = vector.shape_cast %220 : vector<128xf32> to vector<1x128xf32>
    %222 = vector.extract_strided_slice %187 {offsets = [14, 0], sizes = [12, 128], strides = [1, 1]} : vector<28x128xf32> to vector<12x128xf32>
    %cst_161 = arith.constant dense<0xFF800000> : vector<128xf32>
    %223 = vector.multi_reduction <maximumf>, %222, %cst_161 [0] : vector<12x128xf32> to vector<128xf32>
    %224 = vector.shape_cast %223 : vector<128xf32> to vector<1x128xf32>
    %225 = tpu.concatenate %218, %221, %224 in 0 : vector<1x128xf32>, vector<1x128xf32>, vector<1x128xf32> -> vector<3x128xf32>
    %226 = vector.broadcast %208 : vector<1x128xf32> to vector<3x128xf32>
    %227 = arith.subf %225, %226 : vector<3x128xf32>
    %228 = vector.broadcast %215 : vector<1x128xf32> to vector<3x128xf32>
    %229 = arith.mulf %227, %228 : vector<3x128xf32>
    %230 = math.tanh %229 : vector<3x128xf32>
    %cst_162 = arith.constant 0.000000e+00 : f32
    %231 = vector.broadcast %cst_162 : f32 to vector<1x10xf32>
    %232 = vector.extract_strided_slice %230 {offsets = [0, 0], sizes = [1, 128], strides = [1, 1]} : vector<3x128xf32> to vector<1x128xf32>
    %c0_163 = arith.constant 0 : index
    %c0_164 = arith.constant 0 : index
    %233 = vector.load %arg5[%c0_163, %c0_164] : memref<384x10xf32, #tpu.memory_space<vmem>>, vector<128x10xf32>
    %cst_165 = arith.constant dense<0.000000e+00> : vector<1x10xf32>
    %234 = tpu.matmul %232, %233, %cst_165 {dimension_numbers = #tpu.dot_dimension_numbers<[1], [0], [0], [1], [0, 0, 1, 1], [], []>} : vector<1x128xf32>, vector<128x10xf32>, vector<1x10xf32> -> vector<1x10xf32>
    %235 = arith.addf %231, %234 : vector<1x10xf32>
    %236 = vector.extract_strided_slice %230 {offsets = [1, 0], sizes = [1, 128], strides = [1, 1]} : vector<3x128xf32> to vector<1x128xf32>
    %c128_166 = arith.constant 128 : index
    %c0_167 = arith.constant 0 : index
    %237 = vector.load %arg5[%c128_166, %c0_167] : memref<384x10xf32, #tpu.memory_space<vmem>>, vector<128x10xf32>
    %cst_168 = arith.constant dense<0.000000e+00> : vector<1x10xf32>
    %238 = tpu.matmul %236, %237, %cst_168 {dimension_numbers = #tpu.dot_dimension_numbers<[1], [0], [0], [1], [0, 0, 1, 1], [], []>} : vector<1x128xf32>, vector<128x10xf32>, vector<1x10xf32> -> vector<1x10xf32>
    %239 = arith.addf %235, %238 : vector<1x10xf32>
    %240 = vector.extract_strided_slice %230 {offsets = [2, 0], sizes = [1, 128], strides = [1, 1]} : vector<3x128xf32> to vector<1x128xf32>
    %c256_169 = arith.constant 256 : index
    %c0_170 = arith.constant 0 : index
    %241 = vector.load %arg5[%c256_169, %c0_170] : memref<384x10xf32, #tpu.memory_space<vmem>>, vector<128x10xf32>
    %cst_171 = arith.constant dense<0.000000e+00> : vector<1x10xf32>
    %242 = tpu.matmul %240, %241, %cst_171 {dimension_numbers = #tpu.dot_dimension_numbers<[1], [0], [0], [1], [0, 0, 1, 1], [], []>} : vector<1x128xf32>, vector<128x10xf32>, vector<1x10xf32> -> vector<1x10xf32>
    %243 = arith.addf %239, %242 : vector<1x10xf32>
    %244 = vector.extract_strided_slice %190 {offsets = [0, 0], sizes = [12, 128], strides = [1, 1]} : vector<28x128xf32> to vector<12x128xf32>
    %cst_172 = arith.constant dense<0xFF800000> : vector<128xf32>
    %245 = vector.multi_reduction <maximumf>, %244, %cst_172 [0] : vector<12x128xf32> to vector<128xf32>
    %246 = vector.shape_cast %245 : vector<128xf32> to vector<1x128xf32>
    %247 = vector.extract_strided_slice %190 {offsets = [7, 0], sizes = [12, 128], strides = [1, 1]} : vector<28x128xf32> to vector<12x128xf32>
    %cst_173 = arith.constant dense<0xFF800000> : vector<128xf32>
    %248 = vector.multi_reduction <maximumf>, %247, %cst_173 [0] : vector<12x128xf32> to vector<128xf32>
    %249 = vector.shape_cast %248 : vector<128xf32> to vector<1x128xf32>
    %250 = vector.extract_strided_slice %190 {offsets = [14, 0], sizes = [12, 128], strides = [1, 1]} : vector<28x128xf32> to vector<12x128xf32>
    %cst_174 = arith.constant dense<0xFF800000> : vector<128xf32>
    %251 = vector.multi_reduction <maximumf>, %250, %cst_174 [0] : vector<12x128xf32> to vector<128xf32>
    %252 = vector.shape_cast %251 : vector<128xf32> to vector<1x128xf32>
    %253 = tpu.concatenate %246, %249, %252 in 0 : vector<1x128xf32>, vector<1x128xf32>, vector<1x128xf32> -> vector<3x128xf32>
    %254 = vector.broadcast %208 : vector<1x128xf32> to vector<3x128xf32>
    %255 = arith.subf %253, %254 : vector<3x128xf32>
    %256 = vector.broadcast %215 : vector<1x128xf32> to vector<3x128xf32>
    %257 = arith.mulf %255, %256 : vector<3x128xf32>
    %258 = math.tanh %257 : vector<3x128xf32>
    %cst_175 = arith.constant 0.000000e+00 : f32
    %259 = vector.broadcast %cst_175 : f32 to vector<1x10xf32>
    %260 = vector.extract_strided_slice %258 {offsets = [0, 0], sizes = [1, 128], strides = [1, 1]} : vector<3x128xf32> to vector<1x128xf32>
    %c0_176 = arith.constant 0 : index
    %c0_177 = arith.constant 0 : index
    %261 = vector.load %arg5[%c0_176, %c0_177] : memref<384x10xf32, #tpu.memory_space<vmem>>, vector<128x10xf32>
    %cst_178 = arith.constant dense<0.000000e+00> : vector<1x10xf32>
    %262 = tpu.matmul %260, %261, %cst_178 {dimension_numbers = #tpu.dot_dimension_numbers<[1], [0], [0], [1], [0, 0, 1, 1], [], []>} : vector<1x128xf32>, vector<128x10xf32>, vector<1x10xf32> -> vector<1x10xf32>
    %263 = arith.addf %259, %262 : vector<1x10xf32>
    %264 = vector.extract_strided_slice %258 {offsets = [1, 0], sizes = [1, 128], strides = [1, 1]} : vector<3x128xf32> to vector<1x128xf32>
    %c128_179 = arith.constant 128 : index
    %c0_180 = arith.constant 0 : index
    %265 = vector.load %arg5[%c128_179, %c0_180] : memref<384x10xf32, #tpu.memory_space<vmem>>, vector<128x10xf32>
    %cst_181 = arith.constant dense<0.000000e+00> : vector<1x10xf32>
    %266 = tpu.matmul %264, %265, %cst_181 {dimension_numbers = #tpu.dot_dimension_numbers<[1], [0], [0], [1], [0, 0, 1, 1], [], []>} : vector<1x128xf32>, vector<128x10xf32>, vector<1x10xf32> -> vector<1x10xf32>
    %267 = arith.addf %263, %266 : vector<1x10xf32>
    %268 = vector.extract_strided_slice %258 {offsets = [2, 0], sizes = [1, 128], strides = [1, 1]} : vector<3x128xf32> to vector<1x128xf32>
    %c256_182 = arith.constant 256 : index
    %c0_183 = arith.constant 0 : index
    %269 = vector.load %arg5[%c256_182, %c0_183] : memref<384x10xf32, #tpu.memory_space<vmem>>, vector<128x10xf32>
    %cst_184 = arith.constant dense<0.000000e+00> : vector<1x10xf32>
    %270 = tpu.matmul %268, %269, %cst_184 {dimension_numbers = #tpu.dot_dimension_numbers<[1], [0], [0], [1], [0, 0, 1, 1], [], []>} : vector<1x128xf32>, vector<128x10xf32>, vector<1x10xf32> -> vector<1x10xf32>
    %271 = arith.addf %267, %270 : vector<1x10xf32>
    %272 = tpu.concatenate %243, %271 in 0 : vector<1x10xf32>, vector<1x10xf32> -> vector<2x10xf32>
    %273 = vector.shape_cast %272 : vector<2x10xf32> to vector<1x2x10xf32>
    %cst_185 = arith.constant dense<0.000000e+00> : vector<1xf32>
    %274 = vector.multi_reduction <add>, %273, %cst_185 [1, 2] : vector<1x2x10xf32> to vector<1xf32>
    %275 = vector.shape_cast %274 : vector<1xf32> to vector<1x1x1xf32>
    %276 = vector.extract %275[0, 0, 0] : f32 from vector<1x1x1xf32>
    %277 = vector.broadcast %276 : f32 to vector<1x1xf32>
    %cst_186 = arith.constant 5.000000e-02 : f32
    %278 = vector.broadcast %cst_186 : f32 to vector<1x1xf32>
    %279 = arith.mulf %277, %278 : vector<1x1xf32>
    %280 = arith.mulf %272, %272 : vector<2x10xf32>
    %281 = vector.shape_cast %280 : vector<2x10xf32> to vector<1x2x10xf32>
    %cst_187 = arith.constant dense<0.000000e+00> : vector<1xf32>
    %282 = vector.multi_reduction <add>, %281, %cst_187 [1, 2] : vector<1x2x10xf32> to vector<1xf32>
    %283 = vector.shape_cast %282 : vector<1xf32> to vector<1x1x1xf32>
    %284 = vector.extract %283[0, 0, 0] : f32 from vector<1x1x1xf32>
    %285 = vector.broadcast %284 : f32 to vector<1x1xf32>
    %cst_188 = arith.constant 5.000000e-02 : f32
    %286 = vector.broadcast %cst_188 : f32 to vector<1x1xf32>
    %287 = arith.mulf %285, %286 : vector<1x1xf32>
    %288 = arith.mulf %279, %279 : vector<1x1xf32>
    %289 = arith.subf %287, %288 : vector<1x1xf32>
    %290 = vector.broadcast %279 : vector<1x1xf32> to vector<2x10xf32>
    %291 = arith.subf %272, %290 : vector<2x10xf32>
    %cst_189 = arith.constant 9.99999974E-6 : f32
    %292 = vector.broadcast %cst_189 : f32 to vector<1x1xf32>
    %293 = arith.addf %289, %292 : vector<1x1xf32>
    %294 = math.rsqrt %293 : vector<1x1xf32>
    %295 = vector.broadcast %294 : vector<1x1xf32> to vector<2x10xf32>
    %296 = arith.mulf %291, %295 : vector<2x10xf32>
    %c0_190 = arith.constant 0 : index
    %c0_191 = arith.constant 0 : index
    %297 = vector.load %arg6[%c0_190, %c0_191] : memref<2x10xf32, #tpu.memory_space<vmem>>, vector<2x10xf32>
    tpu.vector_store %arg6[%c0_190, %c0_191], %296 {strides = array<i32>} : memref<2x10xf32, #tpu.memory_space<vmem>>, vector<2x10xf32>,
    return
  }
  func.func @transform_0(%arg0: i32) -> (i32, i32, i32) {
    %c0_i32 = arith.constant 0 : i32
    %c0_i32_0 = arith.constant 0 : i32
    %c0_i32_1 = arith.constant 0 : i32
    %c0_i32_2 = arith.constant 0 : i32
    return %c0_i32, %c0_i32_0, %c0_i32_1 : i32, i32, i32
  }
  func.func @transform_1(%arg0: i32) -> (i32, i32) {
    %c0_i32 = arith.constant 0 : i32
    %c0_i32_0 = arith.constant 0 : i32
    %c0_i32_1 = arith.constant 0 : i32
    return %c0_i32, %c0_i32_0 : i32, i32
  }
  func.func @transform_2(%arg0: i32) -> (i32, i32, i32) {
    %c0_i32 = arith.constant 0 : i32
    %c0_i32_0 = arith.constant 0 : i32
    %c0_i32_1 = arith.constant 0 : i32
    %c0_i32_2 = arith.constant 0 : i32
    return %c0_i32, %c0_i32_0, %c0_i32_1 : i32, i32, i32
  }
  func.func @transform_3(%arg0: i32) -> (i32, i32, i32) {
    %c0_i32 = arith.constant 0 : i32
    %c0_i32_0 = arith.constant 0 : i32
    %c0_i32_1 = arith.constant 0 : i32
    %c0_i32_2 = arith.constant 0 : i32
    return %c0_i32, %c0_i32_0, %c0_i32_1 : i32, i32, i32
  }
  func.func @transform_4(%arg0: i32) -> (i32, i32) {
    %c0_i32 = arith.constant 0 : i32
    %c0_i32_0 = arith.constant 0 : i32
    %c0_i32_1 = arith.constant 0 : i32
    return %c0_i32, %c0_i32_0 : i32, i32
  }
  func.func @transform_5(%arg0: i32) -> (i32, i32) {
    %c0_i32 = arith.constant 0 : i32
    %c0_i32_0 = arith.constant 0 : i32
    %c0_i32_1 = arith.constant 0 : i32
    return %c0_i32, %c0_i32_0 : i32, i32
  }
}

</mosaic_0001>

<llo_original>
// kernel: autoencoder_forward.1
$region0: #{autoencoder_forward.1}
  #allocation0 [shape = 'u32[]', space=smem, size = 0x4, offset = 0x4, fixed_abs, tag = 'smem constant byte address 0x4 - core index']
  #allocation1 [shape = 'u32[144,128]{1,0:T(1,128)}', space=vmem, size = 0x12000, scoped, tag = 'internal scratch']
  #allocation2 [shape = 'f32[2,2983,32]{2,1,0:T(8,128)}', space=vmem, size = 0x2ea000, scoped, tag = 'scratch operand']
  #allocation3 [shape = 'f32[2,427,32]{2,1,0:T(8,128)}', space=vmem, size = 0x6c000, scoped, tag = 'scratch operand']
  #allocation4 [shape = 'f32[2,402,64]{2,1,0:T(8,128)}', space=vmem, size = 0x66000, scoped, tag = 'scratch operand']
  #allocation5 [shape = 'f32[2,58,64]{2,1,0:T(8,128)}', space=vmem, size = 0x10000, scoped, tag = 'scratch operand']
  %s0 = inlined_call_operand.vmem [shape: f32[2,2983,20], index: 0, kind: input, shape index: {}]
  %s1 = inlined_call_operand.vmem [shape: f32[20,32], index: 1, kind: input, shape index: {}]
  %s2 = inlined_call_operand.vmem [shape: f32[26,32,64], index: 2, kind: input, shape index: {}]
  %s3 = inlined_call_operand.vmem [shape: f32[31,64,128], index: 3, kind: input, shape index: {}]
  %s4 = inlined_call_operand.vmem [shape: f32[384,10], index: 4, kind: input, shape index: {}]
  %s5 = inlined_call_operand.hbm [shape: f32[2,10], index: 5, kind: output, shape index: {}]
  %s6 = sld [smem:[#allocation0]]
  $region142: #{autoencoder_forward.1} parent=0
    _
  %s8 = ssub.s32 1, %s6
  %s9 = scalar_select 0, %s8, %s6
  $region1: #{autoencoder_forward.1} parent=0
    #allocation6 [shape = 'u8[1024]{0}', space=vmem, size = 0x400, scoped, tag = 'output window, operand 0, single buffered']
    #allocation7 [shape = 's32[1]{0}', space=sflag, size = 0x4, scoped, tag = 'scoped memory for autoencoder_forward.1']
    %10 = vsyncpa [#allocation7], 0
    // Predicated region
    $region2: #{autoencoder_forward.1} parent=1 // pred_check
      _
    $region3: #{autoencoder_forward.1} parent=1 // pred_check_branch
      %12 = sbr.rel (0) target = $region5
    $region4: #{autoencoder_forward.1} parent=1 // pred_region
      _
    $region5: #{autoencoder_forward.1} parent=1 // pred_fallthru
      _
    // Predicated region
    $region6: #{autoencoder_forward.1} parent=1 // pred_check
      _
    $region7: #{autoencoder_forward.1} parent=1 // pred_check_branch
      %14 = sbr.rel (0) target = $region9
    $region8: #{autoencoder_forward.1} parent=1 // pred_region
      _
    $region9: #{autoencoder_forward.1} parent=1 // pred_fallthru
      _
    // Predicated region
    $region10: #{autoencoder_forward.1} parent=1 // pred_check
      _
    $region11: #{autoencoder_forward.1} parent=1 // pred_check_branch
      %16 = sbr.rel (0) target = $region13
    $region12: #{autoencoder_forward.1} parent=1 // pred_region
      _
    $region13: #{autoencoder_forward.1} parent=1 // pred_fallthru
      _
    // Predicated region
    $region14: #{autoencoder_forward.1} parent=1 // pred_check
      _
    $region15: #{autoencoder_forward.1} parent=1 // pred_check_branch
      %18 = sbr.rel (0) target = $region17
    $region16: #{autoencoder_forward.1} parent=1 // pred_region
      _
    $region17: #{autoencoder_forward.1} parent=1 // pred_fallthru
      _
    // Predicated region
    $region18: #{autoencoder_forward.1} parent=1 // pred_check
      _
    $region19: #{autoencoder_forward.1} parent=1 // pred_check_branch
      %20 = sbr.rel (0) target = $region21
    $region20: #{autoencoder_forward.1} parent=1 // pred_region
      _
    $region21: #{autoencoder_forward.1} parent=1 // pred_fallthru
      _
    %vm21 = vcmask 261120
    %22 = vst.msk [vmem:[#allocation3] sm:$0xff] %vm21, 0.0
    %23 = vst.msk [vmem:[#allocation3 + $0x8] sm:$0xff] %vm21, 0.0
    %24 = vst.msk [vmem:[#allocation3 + $0x10] sm:$0xff] %vm21, 0.0
    %25 = vst.msk [vmem:[#allocation3 + $0x18] sm:$0xff] %vm21, 0.0
    %26 = vst.msk [vmem:[#allocation3 + $0x20] sm:$0xff] %vm21, 0.0
    %27 = vst.msk [vmem:[#allocation3 + $0x28] sm:$0xff] %vm21, 0.0
    %28 = vst.msk [vmem:[#allocation3 + $0x30] sm:$0xff] %vm21, 0.0
    %29 = vst.msk [vmem:[#allocation3 + $0x38] sm:$0xff] %vm21, 0.0
    %30 = vst.msk [vmem:[#allocation3 + $0x40] sm:$0xff] %vm21, 0.0
    %31 = vst.msk [vmem:[#allocation3 + $0x48] sm:$0xff] %vm21, 0.0
    %32 = vst.msk [vmem:[#allocation3 + $0x50] sm:$0xff] %vm21, 0.0
    %33 = vst.msk [vmem:[#allocation3 + $0x58] sm:$0xff] %vm21, 0.0
    %34 = vst.msk [vmem:[#allocation3 + $0x60] sm:$0xff] %vm21, 0.0
    %35 = vst.msk [vmem:[#allocation3 + $0x68] sm:$0xff] %vm21, 0.0
    %36 = vst.msk [vmem:[#allocation3 + $0x70] sm:$0xff] %vm21, 0.0
    %37 = vst.msk [vmem:[#allocation3 + $0x78] sm:$0xff] %vm21, 0.0
    %38 = vst.msk [vmem:[#allocation3 + $0x80] sm:$0xff] %vm21, 0.0
    %39 = vst.msk [vmem:[#allocation3 + $0x88] sm:$0xff] %vm21, 0.0
    %40 = vst.msk [vmem:[#allocation3 + $0x90] sm:$0xff] %vm21, 0.0
    %41 = vst.msk [vmem:[#allocation3 + $0x98] sm:$0xff] %vm21, 0.0
    %42 = vst.msk [vmem:[#allocation3 + $0xa0] sm:$0xff] %vm21, 0.0
    %43 = vst.msk [vmem:[#allocation3 + $0xa8] sm:$0xff] %vm21, 0.0
    %44 = vst.msk [vmem:[#allocation3 + $0xb0] sm:$0xff] %vm21, 0.0
    %45 = vst.msk [vmem:[#allocation3 + $0xb8] sm:$0xff] %vm21, 0.0
    %46 = vst.msk [vmem:[#allocation3 + $0xc0] sm:$0xff] %vm21, 0.0
    %47 = vst.msk [vmem:[#allocation3 + $0xc8] sm:$0xff] %vm21, 0.0
    %48 = vst.msk [vmem:[#allocation3 + $0xd0] sm:$0xff] %vm21, 0.0
    %49 = vst.msk [vmem:[#allocation3 + $0xd8] sm:$0xff] %vm21, 0.0
    %50 = vst.msk [vmem:[#allocation3 + $0xe0] sm:$0xff] %vm21, 0.0
    %51 = vst.msk [vmem:[#allocation3 + $0xe8] sm:$0xff] %vm21, 0.0
    %52 = vst.msk [vmem:[#allocation3 + $0xf0] sm:$0xff] %vm21, 0.0
    %53 = vst.msk [vmem:[#allocation3 + $0xf8] sm:$0xff] %vm21, 0.0
    %54 = vst.msk [vmem:[#allocation3 + $0x100] sm:$0xff] %vm21, 0.0
    %55 = vst.msk [vmem:[#allocation3 + $0x108] sm:$0xff] %vm21, 0.0
    %56 = vst.msk [vmem:[#allocation3 + $0x110] sm:$0xff] %vm21, 0.0
    %57 = vst.msk [vmem:[#allocation3 + $0x118] sm:$0xff] %vm21, 0.0
    %58 = vst.msk [vmem:[#allocation3 + $0x120] sm:$0xff] %vm21, 0.0
    %59 = vst.msk [vmem:[#allocation3 + $0x128] sm:$0xff] %vm21, 0.0
    %60 = vst.msk [vmem:[#allocation3 + $0x130] sm:$0xff] %vm21, 0.0
    %61 = vst.msk [vmem:[#allocation3 + $0x138] sm:$0xff] %vm21, 0.0
    %62 = vst.msk [vmem:[#allocation3 + $0x140] sm:$0xff] %vm21, 0.0
    %63 = vst.msk [vmem:[#allocation3 + $0x148] sm:$0xff] %vm21, 0.0
    %64 = vst.msk [vmem:[#allocation3 + $0x150] sm:$0xff] %vm21, 0.0
    %65 = vst.msk [vmem:[#allocation3 + $0x158] sm:$0xff] %vm21, 0.0
    %66 = vst.msk [vmem:[#allocation3 + $0x160] sm:$0xff] %vm21, 0.0
    %67 = vst.msk [vmem:[#allocation3 + $0x168] sm:$0xff] %vm21, 0.0
    %68 = vst.msk [vmem:[#allocation3 + $0x170] sm:$0xff] %vm21, 0.0
    %69 = vst.msk [vmem:[#allocation3 + $0x178] sm:$0xff] %vm21, 0.0
    %70 = vst.msk [vmem:[#allocation3 + $0x180] sm:$0xff] %vm21, 0.0
    %71 = vst.msk [vmem:[#allocation3 + $0x188] sm:$0xff] %vm21, 0.0
    %72 = vst.msk [vmem:[#allocation3 + $0x190] sm:$0xff] %vm21, 0.0
    %73 = vst.msk [vmem:[#allocation3 + $0x198] sm:$0xff] %vm21, 0.0
    %74 = vst.msk [vmem:[#allocation3 + $0x1a0] sm:$0xff] %vm21, 0.0
    %vm75 = vcmask 256000
    %76 = vst.msk [vmem:[#allocation3 + $0x1a8] sm:$0x7] %vm75, 0.0
    %77 = vst.msk [vmem:[#allocation3 + $0x1b0] sm:$0xff] %vm21, 0.0
    %78 = vst.msk [vmem:[#allocation3 + $0x1b8] sm:$0xff] %vm21, 0.0
    %79 = vst.msk [vmem:[#allocation3 + $0x1c0] sm:$0xff] %vm21, 0.0
    %80 = vst.msk [vmem:[#allocation3 + $0x1c8] sm:$0xff] %vm21, 0.0
    %81 = vst.msk [vmem:[#allocation3 + $0x1d0] sm:$0xff] %vm21, 0.0
    %82 = vst.msk [vmem:[#allocation3 + $0x1d8] sm:$0xff] %vm21, 0.0
    %83 = vst.msk [vmem:[#allocation3 + $0x1e0] sm:$0xff] %vm21, 0.0
    %84 = vst.msk [vmem:[#allocation3 + $0x1e8] sm:$0xff] %vm21, 0.0
    %85 = vst.msk [vmem:[#allocation3 + $0x1f0] sm:$0xff] %vm21, 0.0
    %86 = vst.msk [vmem:[#allocation3 + $0x1f8] sm:$0xff] %vm21, 0.0
    %87 = vst.msk [vmem:[#allocation3 + $0x200] sm:$0xff] %vm21, 0.0
    %88 = vst.msk [vmem:[#allocation3 + $0x208] sm:$0xff] %vm21, 0.0
    %89 = vst.msk [vmem:[#allocation3 + $0x210] sm:$0xff] %vm21, 0.0
    %90 = vst.msk [vmem:[#allocation3 + $0x218] sm:$0xff] %vm21, 0.0
    %91 = vst.msk [vmem:[#allocation3 + $0x220] sm:$0xff] %vm21, 0.0
    %92 = vst.msk [vmem:[#allocation3 + $0x228] sm:$0xff] %vm21, 0.0
    %93 = vst.msk [vmem:[#allocation3 + $0x230] sm:$0xff] %vm21, 0.0
    %94 = vst.msk [vmem:[#allocation3 + $0x238] sm:$0xff] %vm21, 0.0
    %95 = vst.msk [vmem:[#allocation3 + $0x240] sm:$0xff] %vm21, 0.0
    %96 = vst.msk [vmem:[#allocation3 + $0x248] sm:$0xff] %vm21, 0.0
    %97 = vst.msk [vmem:[#allocation3 + $0x250] sm:$0xff] %vm21, 0.0
    %98 = vst.msk [vmem:[#allocation3 + $0x258] sm:$0xff] %vm21, 0.0
    %99 = vst.msk [vmem:[#allocation3 + $0x260] sm:$0xff] %vm21, 0.0
    %100 = vst.msk [vmem:[#allocation3 + $0x268] sm:$0xff] %vm21, 0.0
    %101 = vst.msk [vmem:[#allocation3 + $0x270] sm:$0xff] %vm21, 0.0
    %102 = vst.msk [vmem:[#allocation3 + $0x278] sm:$0xff] %vm21, 0.0
    %103 = vst.msk [vmem:[#allocation3 + $0x280] sm:$0xff] %vm21, 0.0
    %104 = vst.msk [vmem:[#allocation3 + $0x288] sm:$0xff] %vm21, 0.0
    %105 = vst.msk [vmem:[#allocation3 + $0x290] sm:$0xff] %vm21, 0.0
    %106 = vst.msk [vmem:[#allocation3 + $0x298] sm:$0xff] %vm21, 0.0
    %107 = vst.msk [vmem:[#allocation3 + $0x2a0] sm:$0xff] %vm21, 0.0
    %108 = vst.msk [vmem:[#allocation3 + $0x2a8] sm:$0xff] %vm21, 0.0
    %109 = vst.msk [vmem:[#allocation3 + $0x2b0] sm:$0xff] %vm21, 0.0
    %110 = vst.msk [vmem:[#allocation3 + $0x2b8] sm:$0xff] %vm21, 0.0
    %111 = vst.msk [vmem:[#allocation3 + $0x2c0] sm:$0xff] %vm21, 0.0
    %112 = vst.msk [vmem:[#allocation3 + $0x2c8] sm:$0xff] %vm21, 0.0
    %113 = vst.msk [vmem:[#allocation3 + $0x2d0] sm:$0xff] %vm21, 0.0
    %114 = vst.msk [vmem:[#allocation3 + $0x2d8] sm:$0xff] %vm21, 0.0
    %115 = vst.msk [vmem:[#allocation3 + $0x2e0] sm:$0xff] %vm21, 0.0
    %116 = vst.msk [vmem:[#allocation3 + $0x2e8] sm:$0xff] %vm21, 0.0
    %117 = vst.msk [vmem:[#allocation3 + $0x2f0] sm:$0xff] %vm21, 0.0
    %118 = vst.msk [vmem:[#allocation3 + $0x2f8] sm:$0xff] %vm21, 0.0
    %119 = vst.msk [vmem:[#allocation3 + $0x300] sm:$0xff] %vm21, 0.0
    %120 = vst.msk [vmem:[#allocation3 + $0x308] sm:$0xff] %vm21, 0.0
    %121 = vst.msk [vmem:[#allocation3 + $0x310] sm:$0xff] %vm21, 0.0
    %122 = vst.msk [vmem:[#allocation3 + $0x318] sm:$0xff] %vm21, 0.0
    %123 = vst.msk [vmem:[#allocation3 + $0x320] sm:$0xff] %vm21, 0.0
    %124 = vst.msk [vmem:[#allocation3 + $0x328] sm:$0xff] %vm21, 0.0
    %125 = vst.msk [vmem:[#allocation3 + $0x330] sm:$0xff] %vm21, 0.0
    %126 = vst.msk [vmem:[#allocation3 + $0x338] sm:$0xff] %vm21, 0.0
    %127 = vst.msk [vmem:[#allocation3 + $0x340] sm:$0xff] %vm21, 0.0
    %128 = vst.msk [vmem:[#allocation3 + $0x348] sm:$0xff] %vm21, 0.0
    %129 = vst.msk [vmem:[#allocation3 + $0x350] sm:$0xff] %vm21, 0.0
    %130 = vst.msk [vmem:[#allocation3 + $0x358] sm:$0x7] %vm75, 0.0
    %vm131 = vcmask 523264
    %132 = vst.msk [vmem:[#allocation5] sm:$0xff] %vm131, 0.0
    %133 = vst.msk [vmem:[#allocation5 + $0x8] sm:$0xff] %vm131, 0.0
    %134 = vst.msk [vmem:[#allocation5 + $0x10] sm:$0xff] %vm131, 0.0
    %135 = vst.msk [vmem:[#allocation5 + $0x18] sm:$0xff] %vm131, 0.0
    %136 = vst.msk [vmem:[#allocation5 + $0x20] sm:$0xff] %vm131, 0.0
    %137 = vst.msk [vmem:[#allocation5 + $0x28] sm:$0xff] %vm131, 0.0
    %138 = vst.msk [vmem:[#allocation5 + $0x30] sm:$0xff] %vm131, 0.0
    %vm139 = vcmask 517120
    %140 = vst.msk [vmem:[#allocation5 + $0x38] sm:$0x3] %vm139, 0.0
    %141 = vst.msk [vmem:[#allocation5 + $0x40] sm:$0xff] %vm131, 0.0
    %142 = vst.msk [vmem:[#allocation5 + $0x48] sm:$0xff] %vm131, 0.0
    %143 = vst.msk [vmem:[#allocation5 + $0x50] sm:$0xff] %vm131, 0.0
    %144 = vst.msk [vmem:[#allocation5 + $0x58] sm:$0xff] %vm131, 0.0
    %145 = vst.msk [vmem:[#allocation5 + $0x60] sm:$0xff] %vm131, 0.0
    %146 = vst.msk [vmem:[#allocation5 + $0x68] sm:$0xff] %vm131, 0.0
    %147 = vst.msk [vmem:[#allocation5 + $0x70] sm:$0xff] %vm131, 0.0
    %148 = vst.msk [vmem:[#allocation5 + $0x78] sm:$0x3] %vm139, 0.0
    %v149 = vld [vmem:[%s1] sm:$0xff]
    %v150 = vld [vmem:[%s1 + $0x8] sm:$0xff]
    %v151 = vld [vmem:[%s1 + $0x10] sm:$0xf]
    loop: start=0, step=1, limit=23
    $region22: #{autoencoder_forward.1} parent=1 // loop_pre_header
      _
    $region23: #{autoencoder_forward.1} parent=1 // loop_header
      %s153 = sphi 0, %s157
      %p154 = scmp.ge.s32.totalorder %s153, 23
      %v158 = vphi 0.0, %v430
      %v159 = vphi 0.0, %v484
    $region24: #{autoencoder_forward.1} parent=1 // loop_header_branch
      %156 = sbr.rel (%p154) target = $region28
    $region25: #{autoencoder_forward.1} parent=1 // loop_body
      %s160 = smul.u32 %s153, 128
      %s161 = scalar_lea.vmem %s0, %s160
      %v162 = vld [vmem:[%s161] sm:$0xff]
      %v163 = vld [vmem:[%s161 + $0x8] sm:$0xff]
      %v164 = vld [vmem:[%s161 + $0x10] sm:$0xff]
      %v165 = vld [vmem:[%s161 + $0x18] sm:$0xff]
      %v166 = vld [vmem:[%s161 + $0x20] sm:$0xff]
      %v167 = vld [vmem:[%s161 + $0x28] sm:$0xff]
      %v168 = vld [vmem:[%s161 + $0x30] sm:$0xff]
      %v169 = vld [vmem:[%s161 + $0x38] sm:$0xff]
      %v170 = vld [vmem:[%s161 + $0x40] sm:$0xff]
      %v171 = vld [vmem:[%s161 + $0x48] sm:$0xff]
      %v172 = vld [vmem:[%s161 + $0x50] sm:$0xff]
      %v173 = vld [vmem:[%s161 + $0x58] sm:$0xff]
      %v174 = vld [vmem:[%s161 + $0x60] sm:$0xff]
      %v175 = vld [vmem:[%s161 + $0x68] sm:$0xff]
      %v176 = vld [vmem:[%s161 + $0x70] sm:$0xff]
      %v177 = vld [vmem:[%s161 + $0x78] sm:$0xff]
      %vm178 = vcmask 162816
      %v180 = vsel %vm178, %v162, 0
      %v183 = vsel %vm178, %v163, 0
      %v186 = vsel %vm178, %v164, 0
      %v189 = vsel %vm178, %v165, 0
      %v192 = vsel %vm178, %v166, 0
      %v195 = vsel %vm178, %v167, 0
      %v198 = vsel %vm178, %v168, 0
      %v201 = vsel %vm178, %v169, 0
      %v204 = vsel %vm178, %v170, 0
      %v207 = vsel %vm178, %v171, 0
      %v210 = vsel %vm178, %v172, 0
      %v213 = vsel %vm178, %v173, 0
      %v216 = vsel %vm178, %v174, 0
      %v219 = vsel %vm178, %v175, 0
      %v222 = vsel %vm178, %v176, 0
      %v225 = vsel %vm178, %v177, 0
      %vm227 = vcmask 1043456
      %v229 = vsel %vm227, %v151, 0
      %231 = vmatprep.subr.mxu0 0.0
      %232 = vmatpush1.msra.mxu0 %v149
      %233 = vmatprep.subr.mxu0 0.0
      %234 = vmatpush1.msra.mxu0 %v150
      %235 = vmatprep.subr.mxu0 0.0
      %236 = vmatpush1.msra.mxu0 %v229
      %237 = vmatprep.subr.mxu0 0.0
      %238 = vmatpush1.msra.mxu0 0.0
      %239 = vmatprep.subr.mxu0 0.0
      %240 = vmatpush1.msra.mxu0 0.0
      %241 = vmatprep.subr.mxu0 0.0
      %242 = vmatpush1.msra.mxu0 0.0
      %243 = vmatprep.subr.mxu0 0.0
      %244 = vmatpush1.msra.mxu0 0.0
      %245 = vmatprep.subr.mxu0 0.0
      %246 = vmatpush1.msra.mxu0 0.0
      %247 = vmatprep.subr.mxu0 0.0
      %248 = vmatpush1.msra.mxu0 0.0
      %249 = vmatprep.subr.mxu0 0.0
      %250 = vmatpush1.msra.mxu0 0.0
      %251 = vmatprep.subr.mxu0 0.0
      %252 = vmatpush1.msra.mxu0 0.0
      %253 = vmatprep.subr.mxu0 0.0
      %254 = vmatpush1.msra.mxu0 0.0
      %255 = vmatprep.subr.mxu0 0.0
      %256 = vmatpush1.msra.mxu0 0.0
      %257 = vmatprep.subr.mxu0 0.0
      %258 = vmatpush1.msra.mxu0 0.0
      %259 = vmatprep.subr.mxu0 0.0
      %260 = vmatpush1.msra.mxu0 0.0
      %261 = vmatprep.subr.mxu0 0.0
      %262 = vmatpush1.msra.mxu0 0.0
      %263 = vmatprep.subr.mxu0 0.0
      %264 = vmatpush1.msra.mxu0 0.0
      %265 = vmatprep.subr.mxu0 0.0
      %266 = vmatpush1.msra.mxu0 0.0
      %267 = vmatprep.subr.mxu0 0.0
      %268 = vmatpush1.msra.mxu0 0.0
      %269 = vmatprep.subr.mxu0 0.0
      %270 = vmatpush1.msra.mxu0 0.0
      %271 = vmatprep.subr.mxu0 0.0
      %272 = vmatpush1.msra.mxu0 0.0
      %273 = vmatprep.subr.mxu0 0.0
      %274 = vmatpush1.msra.mxu0 0.0
      %275 = vmatprep.subr.mxu0 0.0
      %276 = vmatpush1.msra.mxu0 0.0
      %277 = vmatprep.subr.mxu0 0.0
      %278 = vmatpush1.msra.mxu0 0.0
      %279 = vmatprep.subr.mxu0 0.0
      %280 = vmatpush1.msra.mxu0 0.0
      %281 = vmatprep.subr.mxu0 0.0
      %282 = vmatpush1.msra.mxu0 0.0
      %283 = vmatprep.subr.mxu0 0.0
      %284 = vmatpush1.msra.mxu0 0.0
      %285 = vmatprep.subr.mxu0 0.0
      %286 = vmatpush1.msra.mxu0 0.0
      %287 = vmatprep.subr.mxu0 0.0
      %288 = vmatpush1.msra.mxu0 0.0
      %289 = vmatprep.subr.mxu0 0.0
      %290 = vmatpush1.msra.mxu0 0.0
      %291 = vmatprep.subr.mxu0 0.0
      %292 = vmatpush1.msra.mxu0 0.0
      %293 = vmatprep.subr.mxu0 0.0
      %294 = vmatpush1.msra.mxu0 0.0
      %295 = vmatprep.mubr.f32.mxu0 0.0
      %296 = vmatmul.mubr.f32.gmra.mrb[0].mxu0 %v180
      %v297 = vpop.f32.mrb[0].mxu0
      %v298 = vadd.f32 0.0, %v297
      %v299 = vpop.f32.mrb[0].mxu0
      %300 = vmatprep.mubr.f32.mxu0 0.0
      %301 = vmatmul.mubr.f32.gmra.mrb[0].mxu0 %v183
      %v302 = vpop.f32.mrb[0].mxu0
      %v303 = vadd.f32 0.0, %v302
      %v304 = vpop.f32.mrb[0].mxu0
      %305 = vmatprep.mubr.f32.mxu0 0.0
      %306 = vmatmul.mubr.f32.gmra.mrb[0].mxu0 %v186
      %v307 = vpop.f32.mrb[0].mxu0
      %v308 = vadd.f32 0.0, %v307
      %v309 = vpop.f32.mrb[0].mxu0
      %310 = vmatprep.mubr.f32.mxu0 0.0
      %311 = vmatmul.mubr.f32.gmra.mrb[0].mxu0 %v189
      %v312 = vpop.f32.mrb[0].mxu0
      %v313 = vadd.f32 0.0, %v312
      %v314 = vpop.f32.mrb[0].mxu0
      %315 = vmatprep.mubr.f32.mxu0 0.0
      %316 = vmatmul.mubr.f32.gmra.mrb[0].mxu0 %v192
      %v317 = vpop.f32.mrb[0].mxu0
      %v318 = vadd.f32 0.0, %v317
      %v319 = vpop.f32.mrb[0].mxu0
      %320 = vmatprep.mubr.f32.mxu0 0.0
      %321 = vmatmul.mubr.f32.gmra.mrb[0].mxu0 %v195
      %v322 = vpop.f32.mrb[0].mxu0
      %v323 = vadd.f32 0.0, %v322
      %v324 = vpop.f32.mrb[0].mxu0
      %325 = vmatprep.mubr.f32.mxu0 0.0
      %326 = vmatmul.mubr.f32.gmra.mrb[0].mxu0 %v198
      %v327 = vpop.f32.mrb[0].mxu0
      %v328 = vadd.f32 0.0, %v327
      %v329 = vpop.f32.mrb[0].mxu0
      %330 = vmatprep.mubr.f32.mxu0 0.0
      %331 = vmatmul.mubr.f32.gmra.mrb[0].mxu0 %v201
      %v332 = vpop.f32.mrb[0].mxu0
      %v333 = vadd.f32 0.0, %v332
      %v334 = vpop.f32.mrb[0].mxu0
      %335 = vmatprep.mubr.f32.mxu0 0.0
      %336 = vmatmul.mubr.f32.gmra.mrb[0].mxu0 %v204
      %v337 = vpop.f32.mrb[0].mxu0
      %v338 = vadd.f32 0.0, %v337
      %v339 = vpop.f32.mrb[0].mxu0
      %340 = vmatprep.mubr.f32.mxu0 0.0
      %341 = vmatmul.mubr.f32.gmra.mrb[0].mxu0 %v207
      %v342 = vpop.f32.mrb[0].mxu0
      %v343 = vadd.f32 0.0, %v342
      %v344 = vpop.f32.mrb[0].mxu0
      %345 = vmatprep.mubr.f32.mxu0 0.0
      %346 = vmatmul.mubr.f32.gmra.mrb[0].mxu0 %v210
      %v347 = vpop.f32.mrb[0].mxu0
      %v348 = vadd.f32 0.0, %v347
      %v349 = vpop.f32.mrb[0].mxu0
      %350 = vmatprep.mubr.f32.mxu0 0.0
      %351 = vmatmul.mubr.f32.gmra.mrb[0].mxu0 %v213
      %v352 = vpop.f32.mrb[0].mxu0
      %v353 = vadd.f32 0.0, %v352
      %v354 = vpop.f32.mrb[0].mxu0
      %355 = vmatprep.mubr.f32.mxu0 0.0
      %356 = vmatmul.mubr.f32.gmra.mrb[0].mxu0 %v216
      %v357 = vpop.f32.mrb[0].mxu0
      %v358 = vadd.f32 0.0, %v357
      %v359 = vpop.f32.mrb[0].mxu0
      %360 = vmatprep.mubr.f32.mxu0 0.0
      %361 = vmatmul.mubr.f32.gmra.mrb[0].mxu0 %v219
      %v362 = vpop.f32.mrb[0].mxu0
      %v363 = vadd.f32 0.0, %v362
      %v364 = vpop.f32.mrb[0].mxu0
      %365 = vmatprep.mubr.f32.mxu0 0.0
      %366 = vmatmul.mubr.f32.gmra.mrb[0].mxu0 %v222
      %v367 = vpop.f32.mrb[0].mxu0
      %v368 = vadd.f32 0.0, %v367
      %v369 = vpop.f32.mrb[0].mxu0
      %370 = vmatprep.mubr.f32.mxu0 0.0
      %371 = vmatmul.mubr.f32.gmra.mrb[0].mxu0 %v225
      %v372 = vpop.f32.mrb[0].mxu0
      %v373 = vadd.f32 0.0, %v372
      %v374 = vpop.f32.mrb[0].mxu0
      %375 = vdwg.mxu0
      %s376 = scalar_lea.vmem [#allocation2], %s160
      %377 = vst.msk [vmem:[%s376] sm:$0xff] %vm21, %v298
      %378 = vst.msk [vmem:[%s376 + $0x8] sm:$0xff] %vm21, %v303
      %379 = vst.msk [vmem:[%s376 + $0x10] sm:$0xff] %vm21, %v308
      %380 = vst.msk [vmem:[%s376 + $0x18] sm:$0xff] %vm21, %v313
      %381 = vst.msk [vmem:[%s376 + $0x20] sm:$0xff] %vm21, %v318
      %382 = vst.msk [vmem:[%s376 + $0x28] sm:$0xff] %vm21, %v323
      %383 = vst.msk [vmem:[%s376 + $0x30] sm:$0xff] %vm21, %v328
      %384 = vst.msk [vmem:[%s376 + $0x38] sm:$0xff] %vm21, %v333
      %385 = vst.msk [vmem:[%s376 + $0x40] sm:$0xff] %vm21, %v338
      %386 = vst.msk [vmem:[%s376 + $0x48] sm:$0xff] %vm21, %v343
      %387 = vst.msk [vmem:[%s376 + $0x50] sm:$0xff] %vm21, %v348
      %388 = vst.msk [vmem:[%s376 + $0x58] sm:$0xff] %vm21, %v353
      %389 = vst.msk [vmem:[%s376 + $0x60] sm:$0xff] %vm21, %v358
      %390 = vst.msk [vmem:[%s376 + $0x68] sm:$0xff] %vm21, %v363
      %391 = vst.msk [vmem:[%s376 + $0x70] sm:$0xff] %vm21, %v368
      %392 = vst.msk [vmem:[%s376 + $0x78] sm:$0xff] %vm21, %v373
      %v393 = vsel %vm21, %v298, 0.0
      %v394 = vsel %vm21, %v303, 0.0
      %v395 = vadd.f32 %v393, %v394
      %v396 = vsel %vm21, %v308, 0.0
      %v397 = vadd.f32 %v395, %v396
      %v398 = vsel %vm21, %v313, 0.0
      %v399 = vadd.f32 %v397, %v398
      %v400 = vsel %vm21, %v318, 0.0
      %v401 = vadd.f32 %v399, %v400
      %v402 = vsel %vm21, %v323, 0.0
      %v403 = vadd.f32 %v401, %v402
      %v404 = vsel %vm21, %v328, 0.0
      %v405 = vadd.f32 %v403, %v404
      %v406 = vsel %vm21, %v333, 0.0
      %v407 = vadd.f32 %v405, %v406
      %v408 = vsel %vm21, %v338, 0.0
      %v409 = vadd.f32 %v407, %v408
      %v410 = vsel %vm21, %v343, 0.0
      %v411 = vadd.f32 %v409, %v410
      %v412 = vsel %vm21, %v348, 0.0
      %v413 = vadd.f32 %v411, %v412
      %v414 = vsel %vm21, %v353, 0.0
      %v415 = vadd.f32 %v413, %v414
      %v416 = vsel %vm21, %v358, 0.0
      %v417 = vadd.f32 %v415, %v416
      %v418 = vsel %vm21, %v363, 0.0
      %v419 = vadd.f32 %v417, %v418
      %v420 = vsel %vm21, %v368, 0.0
      %v421 = vadd.f32 %v419, %v420
      %v422 = vsel %vm21, %v373, 0.0
      %v423 = vadd.f32 %v421, %v422
      %v424 = vrot.slane %v423, 4
      %v425 = vadd.f32 %v423, %v424
      %v426 = vrot.slane %v425, 2
      %v427 = vadd.f32 %v425, %v426
      %v428 = vrot.slane %v427, 1
      %v429 = vadd.f32 %v427, %v428
      %v430 = vadd.f32 %v158, %v429
      %v431 = vmul.f32 %v298, %v298
      %v432 = vmul.f32 %v303, %v303
      %v433 = vmul.f32 %v308, %v308
      %v434 = vmul.f32 %v313, %v313
      %v435 = vmul.f32 %v318, %v318
      %v436 = vmul.f32 %v323, %v323
      %v437 = vmul.f32 %v328, %v328
      %v438 = vmul.f32 %v333, %v333
      %v439 = vmul.f32 %v338, %v338
      %v440 = vmul.f32 %v343, %v343
      %v441 = vmul.f32 %v348, %v348
      %v442 = vmul.f32 %v353, %v353
      %v443 = vmul.f32 %v358, %v358
      %v444 = vmul.f32 %v363, %v363
      %v445 = vmul.f32 %v368, %v368
      %v446 = vmul.f32 %v373, %v373
      %v447 = vsel %vm21, %v431, 0.0
      %v448 = vsel %vm21, %v432, 0.0
      %v449 = vadd.f32 %v447, %v448
      %v450 = vsel %vm21, %v433, 0.0
      %v451 = vadd.f32 %v449, %v450
      %v452 = vsel %vm21, %v434, 0.0
      %v453 = vadd.f32 %v451, %v452
      %v454 = vsel %vm21, %v435, 0.0
      %v455 = vadd.f32 %v453, %v454
      %v456 = vsel %vm21, %v436, 0.0
      %v457 = vadd.f32 %v455, %v456
      %v458 = vsel %vm21, %v437, 0.0
      %v459 = vadd.f32 %v457, %v458
      %v460 = vsel %vm21, %v438, 0.0
      %v461 = vadd.f32 %v459, %v460
      %v462 = vsel %vm21, %v439, 0.0
      %v463 = vadd.f32 %v461, %v462
      %v464 = vsel %vm21, %v440, 0.0
      %v465 = vadd.f32 %v463, %v464
      %v466 = vsel %vm21, %v441, 0.0
      %v467 = vadd.f32 %v465, %v466
      %v468 = vsel %vm21, %v442, 0.0
      %v469 = vadd.f32 %v467, %v468
      %v470 = vsel %vm21, %v443, 0.0
      %v471 = vadd.f32 %v469, %v470
      %v472 = vsel %vm21, %v444, 0.0
      %v473 = vadd.f32 %v471, %v472
      %v474 = vsel %vm21, %v445, 0.0
      %v475 = vadd.f32 %v473, %v474
      %v476 = vsel %vm21, %v446, 0.0
      %v477 = vadd.f32 %v475, %v476
      %v478 = vrot.slane %v477, 4
      %v479 = vadd.f32 %v477, %v478
      %v480 = vrot.slane %v479, 2
      %v481 = vadd.f32 %v479, %v480
      %v482 = vrot.slane %v481, 1
      %v483 = vadd.f32 %v481, %v482
      %v484 = vadd.f32 %v159, %v483
    $region26: #{autoencoder_forward.1} parent=1 // loop_footer
      %s157 = sadd.s32 1, %s153
    $region27: #{autoencoder_forward.1} parent=1 // loop_footer_branch
      %152 = sbr.rel target = $region23
    $region28: #{autoencoder_forward.1} parent=1 // loop_exit
      _
    %v485 = vld [vmem:[%s0 + $0xb80] sm:$0xff]
    %v486 = vld [vmem:[%s0 + $0xb88] sm:$0xff]
    %v487 = vld [vmem:[%s0 + $0xb90] sm:$0xff]
    %v488 = vld [vmem:[%s0 + $0xb98] sm:$0xff]
    %v489 = vld [vmem:[%s0 + $0xba0] sm:$0x7f]
    %vm490 = vcmask 162816
    %v492 = vsel %vm490, %v485, 0
    %v495 = vsel %vm490, %v486, 0
    %v498 = vsel %vm490, %v487, 0
    %v501 = vsel %vm490, %v488, 0
    %v504 = vsel %vm490, %v489, 0
    %vm506 = vcmask 1043456
    %v508 = vsel %vm506, %v151, 0
    %510 = vmatprep.subr.mxu0 0.0
    %511 = vmatpush1.msra.mxu0 %v149
    %512 = vmatprep.subr.mxu0 0.0
    %513 = vmatpush1.msra.mxu0 %v150
    %514 = vmatprep.subr.mxu0 0.0
    %515 = vmatpush1.msra.mxu0 %v508
    %516 = vmatprep.subr.mxu0 0.0
    %517 = vmatpush1.msra.mxu0 0.0
    %518 = vmatprep.subr.mxu0 0.0
    %519 = vmatpush1.msra.mxu0 0.0
    %520 = vmatprep.subr.mxu0 0.0
    %521 = vmatpush1.msra.mxu0 0.0
    %522 = vmatprep.subr.mxu0 0.0
    %523 = vmatpush1.msra.mxu0 0.0
    %524 = vmatprep.subr.mxu0 0.0
    %525 = vmatpush1.msra.mxu0 0.0
    %526 = vmatprep.subr.mxu0 0.0
    %527 = vmatpush1.msra.mxu0 0.0
    %528 = vmatprep.subr.mxu0 0.0
    %529 = vmatpush1.msra.mxu0 0.0
    %530 = vmatprep.subr.mxu0 0.0
    %531 = vmatpush1.msra.mxu0 0.0
    %532 = vmatprep.subr.mxu0 0.0
    %533 = vmatpush1.msra.mxu0 0.0
    %534 = vmatprep.subr.mxu0 0.0
    %535 = vmatpush1.msra.mxu0 0.0
    %536 = vmatprep.subr.mxu0 0.0
    %537 = vmatpush1.msra.mxu0 0.0
    %538 = vmatprep.subr.mxu0 0.0
    %539 = vmatpush1.msra.mxu0 0.0
    %540 = vmatprep.subr.mxu0 0.0
    %541 = vmatpush1.msra.mxu0 0.0
    %542 = vmatprep.subr.mxu0 0.0
    %543 = vmatpush1.msra.mxu0 0.0
    %544 = vmatprep.subr.mxu0 0.0
    %545 = vmatpush1.msra.mxu0 0.0
    %546 = vmatprep.subr.mxu0 0.0
    %547 = vmatpush1.msra.mxu0 0.0
    %548 = vmatprep.subr.mxu0 0.0
    %549 = vmatpush1.msra.mxu0 0.0
    %550 = vmatprep.subr.mxu0 0.0
    %551 = vmatpush1.msra.mxu0 0.0
    %552 = vmatprep.subr.mxu0 0.0
    %553 = vmatpush1.msra.mxu0 0.0
    %554 = vmatprep.subr.mxu0 0.0
    %555 = vmatpush1.msra.mxu0 0.0
    %556 = vmatprep.subr.mxu0 0.0
    %557 = vmatpush1.msra.mxu0 0.0
    %558 = vmatprep.subr.mxu0 0.0
    %559 = vmatpush1.msra.mxu0 0.0
    %560 = vmatprep.subr.mxu0 0.0
    %561 = vmatpush1.msra.mxu0 0.0
    %562 = vmatprep.subr.mxu0 0.0
    %563 = vmatpush1.msra.mxu0 0.0
    %564 = vmatprep.subr.mxu0 0.0
    %565 = vmatpush1.msra.mxu0 0.0
    %566 = vmatprep.subr.mxu0 0.0
    %567 = vmatpush1.msra.mxu0 0.0
    %568 = vmatprep.subr.mxu0 0.0
    %569 = vmatpush1.msra.mxu0 0.0
    %570 = vmatprep.subr.mxu0 0.0
    %571 = vmatpush1.msra.mxu0 0.0
    %572 = vmatprep.subr.mxu0 0.0
    %573 = vmatpush1.msra.mxu0 0.0
    %574 = vmatprep.mubr.f32.mxu0 0.0
    %575 = vmatmul.mubr.f32.gmra.mrb[0].mxu0 %v492
    %v576 = vpop.f32.mrb[0].mxu0
    %v577 = vadd.f32 0.0, %v576
    %v578 = vpop.f32.mrb[0].mxu0
    %579 = vmatprep.mubr.f32.mxu0 0.0
    %580 = vmatmul.mubr.f32.gmra.mrb[0].mxu0 %v495
    %v581 = vpop.f32.mrb[0].mxu0
    %v582 = vadd.f32 0.0, %v581
    %v583 = vpop.f32.mrb[0].mxu0
    %584 = vmatprep.mubr.f32.mxu0 0.0
    %585 = vmatmul.mubr.f32.gmra.mrb[0].mxu0 %v498
    %v586 = vpop.f32.mrb[0].mxu0
    %v587 = vadd.f32 0.0, %v586
    %v588 = vpop.f32.mrb[0].mxu0
    %589 = vmatprep.mubr.f32.mxu0 0.0
    %590 = vmatmul.mubr.f32.gmra.mrb[0].mxu0 %v501
    %v591 = vpop.f32.mrb[0].mxu0
    %v592 = vadd.f32 0.0, %v591
    %v593 = vpop.f32.mrb[0].mxu0
    %594 = vmatprep.mubr.f32.mxu0 0.0
    %595 = vmatmul.mubr.f32.gmra.mrb[0].mxu0 %v504
    %v596 = vpop.f32.mrb[0].mxu0
    %v597 = vadd.f32 0.0, %v596
    %v598 = vpop.f32.mrb[0].mxu0
    %599 = vdwg.mxu0
    %600 = vst.msk [vmem:[#allocation2 + $0xb80] sm:$0xff] %vm21, %v577
    %601 = vst.msk [vmem:[#allocation2 + $0xb88] sm:$0xff] %vm21, %v582
    %602 = vst.msk [vmem:[#allocation2 + $0xb90] sm:$0xff] %vm21, %v587
    %603 = vst.msk [vmem:[#allocation2 + $0xb98] sm:$0xff] %vm21, %v592
    %vm604 = vcmask 260096
    %605 = vst.msk [vmem:[#allocation2 + $0xba0] sm:$0x7f] %vm604, %v597
    %v606 = vsel %vm21, %v577, 0.0
    %v607 = vsel %vm21, %v582, 0.0
    %v608 = vadd.f32 %v606, %v607
    %v609 = vsel %vm21, %v587, 0.0
    %v610 = vadd.f32 %v608, %v609
    %v611 = vsel %vm21, %v592, 0.0
    %v612 = vadd.f32 %v610, %v611
    %v613 = vsel %vm604, %v597, 0.0
    %v614 = vadd.f32 %v612, %v613
    %v615 = vrot.slane %v614, 4
    %v616 = vadd.f32 %v614, %v615
    %v617 = vrot.slane %v616, 2
    %v618 = vadd.f32 %v616, %v617
    %v619 = vrot.slane %v618, 1
    %v620 = vadd.f32 %v618, %v619
    %v621 = vadd.f32 %v158, %v620
    %v622 = vmul.f32 %v577, %v577
    %v623 = vmul.f32 %v582, %v582
    %v624 = vmul.f32 %v587, %v587
    %v625 = vmul.f32 %v592, %v592
    %v626 = vmul.f32 %v597, %v597
    %v627 = vsel %vm21, %v622, 0.0
    %v628 = vsel %vm21, %v623, 0.0
    %v629 = vadd.f32 %v627, %v628
    %v630 = vsel %vm21, %v624, 0.0
    %v631 = vadd.f32 %v629, %v630
    %v632 = vsel %vm21, %v625, 0.0
    %v633 = vadd.f32 %v631, %v632
    %v634 = vsel %vm604, %v626, 0.0
    %v635 = vadd.f32 %v633, %v634
    %v636 = vrot.slane %v635, 4
    %v637 = vadd.f32 %v635, %v636
    %v638 = vrot.slane %v637, 2
    %v639 = vadd.f32 %v637, %v638
    %v640 = vrot.slane %v639, 1
    %v641 = vadd.f32 %v639, %v640
    %v642 = vadd.f32 %v159, %v641
    loop: start=0, step=1, limit=23
    $region29: #{autoencoder_forward.1} parent=1 // loop_pre_header
      _
    $region30: #{autoencoder_forward.1} parent=1 // loop_header
      %s644 = sphi 0, %s648
      %p645 = scmp.ge.s32.totalorder %s644, 23
      %v649 = vphi %v621, %v917
      %v650 = vphi %v642, %v971
    $region31: #{autoencoder_forward.1} parent=1 // loop_header_branch
      %647 = sbr.rel (%p645) target = $region35
    $region32: #{autoencoder_forward.1} parent=1 // loop_body
      %s651 = smul.u32 %s644, 128
      %s652 = sadd.s32 %s651, 2984
      %s653 = scalar_lea.vmem %s0, %s652
      %v654 = vld [vmem:[%s653] sm:$0xff]
      %v655 = vld [vmem:[%s653 + $0x8] sm:$0xff]
      %v656 = vld [vmem:[%s653 + $0x10] sm:$0xff]
      %v657 = vld [vmem:[%s653 + $0x18] sm:$0xff]
      %v658 = vld [vmem:[%s653 + $0x20] sm:$0xff]
      %v659 = vld [vmem:[%s653 + $0x28] sm:$0xff]
      %v660 = vld [vmem:[%s653 + $0x30] sm:$0xff]
      %v661 = vld [vmem:[%s653 + $0x38] sm:$0xff]
      %v662 = vld [vmem:[%s653 + $0x40] sm:$0xff]
      %v663 = vld [vmem:[%s653 + $0x48] sm:$0xff]
      %v664 = vld [vmem:[%s653 + $0x50] sm:$0xff]
      %v665 = vld [vmem:[%s653 + $0x58] sm:$0xff]
      %v666 = vld [vmem:[%s653 + $0x60] sm:$0xff]
      %v667 = vld [vmem:[%s653 + $0x68] sm:$0xff]
      %v668 = vld [vmem:[%s653 + $0x70] sm:$0xff]
      %v669 = vld [vmem:[%s653 + $0x78] sm:$0xff]
      %v671 = vsel %vm490, %v654, 0
      %v674 = vsel %vm490, %v655, 0
      %v677 = vsel %vm490, %v656, 0
      %v680 = vsel %vm490, %v657, 0
      %v683 = vsel %vm490, %v658, 0
      %v686 = vsel %vm490, %v659, 0
      %v689 = vsel %vm490, %v660, 0
      %v692 = vsel %vm490, %v661, 0
      %v695 = vsel %vm490, %v662, 0
      %v698 = vsel %vm490, %v663, 0
      %v701 = vsel %vm490, %v664, 0
      %v704 = vsel %vm490, %v665, 0
      %v707 = vsel %vm490, %v666, 0
      %v710 = vsel %vm490, %v667, 0
      %v713 = vsel %vm490, %v668, 0
      %v716 = vsel %vm490, %v669, 0
      %718 = vmatprep.subr.mxu0 0.0
      %719 = vmatpush1.msra.mxu0 %v149
      %720 = vmatprep.subr.mxu0 0.0
      %721 = vmatpush1.msra.mxu0 %v150
      %722 = vmatprep.subr.mxu0 0.0
      %723 = vmatpush1.msra.mxu0 %v508
      %724 = vmatprep.subr.mxu0 0.0
      %725 = vmatpush1.msra.mxu0 0.0
      %726 = vmatprep.subr.mxu0 0.0
      %727 = vmatpush1.msra.mxu0 0.0
      %728 = vmatprep.subr.mxu0 0.0
      %729 = vmatpush1.msra.mxu0 0.0
      %730 = vmatprep.subr.mxu0 0.0
      %731 = vmatpush1.msra.mxu0 0.0
      %732 = vmatprep.subr.mxu0 0.0
      %733 = vmatpush1.msra.mxu0 0.0
      %734 = vmatprep.subr.mxu0 0.0
      %735 = vmatpush1.msra.mxu0 0.0
      %736 = vmatprep.subr.mxu0 0.0
      %737 = vmatpush1.msra.mxu0 0.0
      %738 = vmatprep.subr.mxu0 0.0
      %739 = vmatpush1.msra.mxu0 0.0
      %740 = vmatprep.subr.mxu0 0.0
      %741 = vmatpush1.msra.mxu0 0.0
      %742 = vmatprep.subr.mxu0 0.0
      %743 = vmatpush1.msra.mxu0 0.0
      %744 = vmatprep.subr.mxu0 0.0
      %745 = vmatpush1.msra.mxu0 0.0
      %746 = vmatprep.subr.mxu0 0.0
      %747 = vmatpush1.msra.mxu0 0.0
      %748 = vmatprep.subr.mxu0 0.0
      %749 = vmatpush1.msra.mxu0 0.0
      %750 = vmatprep.subr.mxu0 0.0
      %751 = vmatpush1.msra.mxu0 0.0
      %752 = vmatprep.subr.mxu0 0.0
      %753 = vmatpush1.msra.mxu0 0.0
      %754 = vmatprep.subr.mxu0 0.0
      %755 = vmatpush1.msra.mxu0 0.0
      %756 = vmatprep.subr.mxu0 0.0
      %757 = vmatpush1.msra.mxu0 0.0
      %758 = vmatprep.subr.mxu0 0.0
      %759 = vmatpush1.msra.mxu0 0.0
      %760 = vmatprep.subr.mxu0 0.0
      %761 = vmatpush1.msra.mxu0 0.0
      %762 = vmatprep.subr.mxu0 0.0
      %763 = vmatpush1.msra.mxu0 0.0
      %764 = vmatprep.subr.mxu0 0.0
      %765 = vmatpush1.msra.mxu0 0.0
      %766 = vmatprep.subr.mxu0 0.0
      %767 = vmatpush1.msra.mxu0 0.0
      %768 = vmatprep.subr.mxu0 0.0
      %769 = vmatpush1.msra.mxu0 0.0
      %770 = vmatprep.subr.mxu0 0.0
      %771 = vmatpush1.msra.mxu0 0.0
      %772 = vmatprep.subr.mxu0 0.0
      %773 = vmatpush1.msra.mxu0 0.0
      %774 = vmatprep.subr.mxu0 0.0
      %775 = vmatpush1.msra.mxu0 0.0
      %776 = vmatprep.subr.mxu0 0.0
      %777 = vmatpush1.msra.mxu0 0.0
      %778 = vmatprep.subr.mxu0 0.0
      %779 = vmatpush1.msra.mxu0 0.0
      %780 = vmatprep.subr.mxu0 0.0
      %781 = vmatpush1.msra.mxu0 0.0
      %782 = vmatprep.mubr.f32.mxu0 0.0
      %783 = vmatmul.mubr.f32.gmra.mrb[0].mxu0 %v671
      %v784 = vpop.f32.mrb[0].mxu0
      %v785 = vadd.f32 0.0, %v784
      %v786 = vpop.f32.mrb[0].mxu0
      %787 = vmatprep.mubr.f32.mxu0 0.0
      %788 = vmatmul.mubr.f32.gmra.mrb[0].mxu0 %v674
      %v789 = vpop.f32.mrb[0].mxu0
      %v790 = vadd.f32 0.0, %v789
      %v791 = vpop.f32.mrb[0].mxu0
      %792 = vmatprep.mubr.f32.mxu0 0.0
      %793 = vmatmul.mubr.f32.gmra.mrb[0].mxu0 %v677
      %v794 = vpop.f32.mrb[0].mxu0
      %v795 = vadd.f32 0.0, %v794
      %v796 = vpop.f32.mrb[0].mxu0
      %797 = vmatprep.mubr.f32.mxu0 0.0
      %798 = vmatmul.mubr.f32.gmra.mrb[0].mxu0 %v680
      %v799 = vpop.f32.mrb[0].mxu0
      %v800 = vadd.f32 0.0, %v799
      %v801 = vpop.f32.mrb[0].mxu0
      %802 = vmatprep.mubr.f32.mxu0 0.0
      %803 = vmatmul.mubr.f32.gmra.mrb[0].mxu0 %v683
      %v804 = vpop.f32.mrb[0].mxu0
      %v805 = vadd.f32 0.0, %v804
      %v806 = vpop.f32.mrb[0].mxu0
      %807 = vmatprep.mubr.f32.mxu0 0.0
      %808 = vmatmul.mubr.f32.gmra.mrb[0].mxu0 %v686
      %v809 = vpop.f32.mrb[0].mxu0
      %v810 = vadd.f32 0.0, %v809
      %v811 = vpop.f32.mrb[0].mxu0
      %812 = vmatprep.mubr.f32.mxu0 0.0
      %813 = vmatmul.mubr.f32.gmra.mrb[0].mxu0 %v689
      %v814 = vpop.f32.mrb[0].mxu0
      %v815 = vadd.f32 0.0, %v814
      %v816 = vpop.f32.mrb[0].mxu0
      %817 = vmatprep.mubr.f32.mxu0 0.0
      %818 = vmatmul.mubr.f32.gmra.mrb[0].mxu0 %v692
      %v819 = vpop.f32.mrb[0].mxu0
      %v820 = vadd.f32 0.0, %v819
      %v821 = vpop.f32.mrb[0].mxu0
      %822 = vmatprep.mubr.f32.mxu0 0.0
      %823 = vmatmul.mubr.f32.gmra.mrb[0].mxu0 %v695
      %v824 = vpop.f32.mrb[0].mxu0
      %v825 = vadd.f32 0.0, %v824
      %v826 = vpop.f32.mrb[0].mxu0
      %827 = vmatprep.mubr.f32.mxu0 0.0
      %828 = vmatmul.mubr.f32.gmra.mrb[0].mxu0 %v698
      %v829 = vpop.f32.mrb[0].mxu0
      %v830 = vadd.f32 0.0, %v829
      %v831 = vpop.f32.mrb[0].mxu0
      %832 = vmatprep.mubr.f32.mxu0 0.0
      %833 = vmatmul.mubr.f32.gmra.mrb[0].mxu0 %v701
      %v834 = vpop.f32.mrb[0].mxu0
      %v835 = vadd.f32 0.0, %v834
      %v836 = vpop.f32.mrb[0].mxu0
      %837 = vmatprep.mubr.f32.mxu0 0.0
      %838 = vmatmul.mubr.f32.gmra.mrb[0].mxu0 %v704
      %v839 = vpop.f32.mrb[0].mxu0
      %v840 = vadd.f32 0.0, %v839
      %v841 = vpop.f32.mrb[0].mxu0
      %842 = vmatprep.mubr.f32.mxu0 0.0
      %843 = vmatmul.mubr.f32.gmra.mrb[0].mxu0 %v707
      %v844 = vpop.f32.mrb[0].mxu0
      %v845 = vadd.f32 0.0, %v844
      %v846 = vpop.f32.mrb[0].mxu0
      %847 = vmatprep.mubr.f32.mxu0 0.0
      %848 = vmatmul.mubr.f32.gmra.mrb[0].mxu0 %v710
      %v849 = vpop.f32.mrb[0].mxu0
      %v850 = vadd.f32 0.0, %v849
      %v851 = vpop.f32.mrb[0].mxu0
      %852 = vmatprep.mubr.f32.mxu0 0.0
      %853 = vmatmul.mubr.f32.gmra.mrb[0].mxu0 %v713
      %v854 = vpop.f32.mrb[0].mxu0
      %v855 = vadd.f32 0.0, %v854
      %v856 = vpop.f32.mrb[0].mxu0
      %857 = vmatprep.mubr.f32.mxu0 0.0
      %858 = vmatmul.mubr.f32.gmra.mrb[0].mxu0 %v716
      %v859 = vpop.f32.mrb[0].mxu0
      %v860 = vadd.f32 0.0, %v859
      %v861 = vpop.f32.mrb[0].mxu0
      %862 = vdwg.mxu0
      %s863 = scalar_lea.vmem [#allocation2], %s652
      %864 = vst.msk [vmem:[%s863] sm:$0xff] %vm21, %v785
      %865 = vst.msk [vmem:[%s863 + $0x8] sm:$0xff] %vm21, %v790
      %866 = vst.msk [vmem:[%s863 + $0x10] sm:$0xff] %vm21, %v795
      %867 = vst.msk [vmem:[%s863 + $0x18] sm:$0xff] %vm21, %v800
      %868 = vst.msk [vmem:[%s863 + $0x20] sm:$0xff] %vm21, %v805
      %869 = vst.msk [vmem:[%s863 + $0x28] sm:$0xff] %vm21, %v810
      %870 = vst.msk [vmem:[%s863 + $0x30] sm:$0xff] %vm21, %v815
      %871 = vst.msk [vmem:[%s863 + $0x38] sm:$0xff] %vm21, %v820
      %872 = vst.msk [vmem:[%s863 + $0x40] sm:$0xff] %vm21, %v825
      %873 = vst.msk [vmem:[%s863 + $0x48] sm:$0xff] %vm21, %v830
      %874 = vst.msk [vmem:[%s863 + $0x50] sm:$0xff] %vm21, %v835
      %875 = vst.msk [vmem:[%s863 + $0x58] sm:$0xff] %vm21, %v840
      %876 = vst.msk [vmem:[%s863 + $0x60] sm:$0xff] %vm21, %v845
      %877 = vst.msk [vmem:[%s863 + $0x68] sm:$0xff] %vm21, %v850
      %878 = vst.msk [vmem:[%s863 + $0x70] sm:$0xff] %vm21, %v855
      %879 = vst.msk [vmem:[%s863 + $0x78] sm:$0xff] %vm21, %v860
      %v880 = vsel %vm21, %v785, 0.0
      %v881 = vsel %vm21, %v790, 0.0
      %v882 = vadd.f32 %v880, %v881
      %v883 = vsel %vm21, %v795, 0.0
      %v884 = vadd.f32 %v882, %v883
      %v885 = vsel %vm21, %v800, 0.0
      %v886 = vadd.f32 %v884, %v885
      %v887 = vsel %vm21, %v805, 0.0
      %v888 = vadd.f32 %v886, %v887
      %v889 = vsel %vm21, %v810, 0.0
      %v890 = vadd.f32 %v888, %v889
      %v891 = vsel %vm21, %v815, 0.0
      %v892 = vadd.f32 %v890, %v891
      %v893 = vsel %vm21, %v820, 0.0
      %v894 = vadd.f32 %v892, %v893
      %v895 = vsel %vm21, %v825, 0.0
      %v896 = vadd.f32 %v894, %v895
      %v897 = vsel %vm21, %v830, 0.0
      %v898 = vadd.f32 %v896, %v897
      %v899 = vsel %vm21, %v835, 0.0
      %v900 = vadd.f32 %v898, %v899
      %v901 = vsel %vm21, %v840, 0.0
      %v902 = vadd.f32 %v900, %v901
      %v903 = vsel %vm21, %v845, 0.0
      %v904 = vadd.f32 %v902, %v903
      %v905 = vsel %vm21, %v850, 0.0
      %v906 = vadd.f32 %v904, %v905
      %v907 = vsel %vm21, %v855, 0.0
      %v908 = vadd.f32 %v906, %v907
      %v909 = vsel %vm21, %v860, 0.0
      %v910 = vadd.f32 %v908, %v909
      %v911 = vrot.slane %v910, 4
      %v912 = vadd.f32 %v910, %v911
      %v913 = vrot.slane %v912, 2
      %v914 = vadd.f32 %v912, %v913
      %v915 = vrot.slane %v914, 1
      %v916 = vadd.f32 %v914, %v915
      %v917 = vadd.f32 %v649, %v916
      %v918 = vmul.f32 %v785, %v785
      %v919 = vmul.f32 %v790, %v790
      %v920 = vmul.f32 %v795, %v795
      %v921 = vmul.f32 %v800, %v800
      %v922 = vmul.f32 %v805, %v805
      %v923 = vmul.f32 %v810, %v810
      %v924 = vmul.f32 %v815, %v815
      %v925 = vmul.f32 %v820, %v820
      %v926 = vmul.f32 %v825, %v825
      %v927 = vmul.f32 %v830, %v830
      %v928 = vmul.f32 %v835, %v835
      %v929 = vmul.f32 %v840, %v840
      %v930 = vmul.f32 %v845, %v845
      %v931 = vmul.f32 %v850, %v850
      %v932 = vmul.f32 %v855, %v855
      %v933 = vmul.f32 %v860, %v860
      %v934 = vsel %vm21, %v918, 0.0
      %v935 = vsel %vm21, %v919, 0.0
      %v936 = vadd.f32 %v934, %v935
      %v937 = vsel %vm21, %v920, 0.0
      %v938 = vadd.f32 %v936, %v937
      %v939 = vsel %vm21, %v921, 0.0
      %v940 = vadd.f32 %v938, %v939
      %v941 = vsel %vm21, %v922, 0.0
      %v942 = vadd.f32 %v940, %v941
      %v943 = vsel %vm21, %v923, 0.0
      %v944 = vadd.f32 %v942, %v943
      %v945 = vsel %vm21, %v924, 0.0
      %v946 = vadd.f32 %v944, %v945
      %v947 = vsel %vm21, %v925, 0.0
      %v948 = vadd.f32 %v946, %v947
      %v949 = vsel %vm21, %v926, 0.0
      %v950 = vadd.f32 %v948, %v949
      %v951 = vsel %vm21, %v927, 0.0
      %v952 = vadd.f32 %v950, %v951
      %v953 = vsel %vm21, %v928, 0.0
      %v954 = vadd.f32 %v952, %v953
      %v955 = vsel %vm21, %v929, 0.0
      %v956 = vadd.f32 %v954, %v955
      %v957 = vsel %vm21, %v930, 0.0
      %v958 = vadd.f32 %v956, %v957
      %v959 = vsel %vm21, %v931, 0.0
      %v960 = vadd.f32 %v958, %v959
      %v961 = vsel %vm21, %v932, 0.0
      %v962 = vadd.f32 %v960, %v961
      %v963 = vsel %vm21, %v933, 0.0
      %v964 = vadd.f32 %v962, %v963
      %v965 = vrot.slane %v964, 4
      %v966 = vadd.f32 %v964, %v965
      %v967 = vrot.slane %v966, 2
      %v968 = vadd.f32 %v966, %v967
      %v969 = vrot.slane %v968, 1
      %v970 = vadd.f32 %v968, %v969
      %v971 = vadd.f32 %v650, %v970
    $region33: #{autoencoder_forward.1} parent=1 // loop_footer
      %s648 = sadd.s32 1, %s644
    $region34: #{autoencoder_forward.1} parent=1 // loop_footer_branch
      %643 = sbr.rel target = $region30
    $region35: #{autoencoder_forward.1} parent=1 // loop_exit
      _
    %s972 = scalar_lea.vmem %s0, 2984
    %v973 = vld [vmem:[%s972 + $0xb80] sm:$0xff]
    %v974 = vld [vmem:[%s972 + $0xb88] sm:$0xff]
    %v975 = vld [vmem:[%s972 + $0xb90] sm:$0xff]
    %v976 = vld [vmem:[%s972 + $0xb98] sm:$0xff]
    %v977 = vld [vmem:[%s972 + $0xba0] sm:$0x7f]
    %v979 = vsel %vm490, %v973, 0
    %v982 = vsel %vm490, %v974, 0
    %v985 = vsel %vm490, %v975, 0
    %v988 = vsel %vm490, %v976, 0
    %v991 = vsel %vm490, %v977, 0
    %993 = vmatprep.subr.mxu0 0.0
    %994 = vmatpush1.msra.mxu0 %v149
    %995 = vmatprep.subr.mxu0 0.0
    %996 = vmatpush1.msra.mxu0 %v150
    %997 = vmatprep.subr.mxu0 0.0
    %998 = vmatpush1.msra.mxu0 %v508
    %999 = vmatprep.subr.mxu0 0.0
    %1000 = vmatpush1.msra.mxu0 0.0
    %1001 = vmatprep.subr.mxu0 0.0
    %1002 = vmatpush1.msra.mxu0 0.0
    %1003 = vmatprep.subr.mxu0 0.0
    %1004 = vmatpush1.msra.mxu0 0.0
    %1005 = vmatprep.subr.mxu0 0.0
    %1006 = vmatpush1.msra.mxu0 0.0
    %1007 = vmatprep.subr.mxu0 0.0
    %1008 = vmatpush1.msra.mxu0 0.0
    %1009 = vmatprep.subr.mxu0 0.0
    %1010 = vmatpush1.msra.mxu0 0.0
    %1011 = vmatprep.subr.mxu0 0.0
    %1012 = vmatpush1.msra.mxu0 0.0
    %1013 = vmatprep.subr.mxu0 0.0
    %1014 = vmatpush1.msra.mxu0 0.0
    %1015 = vmatprep.subr.mxu0 0.0
    %1016 = vmatpush1.msra.mxu0 0.0
    %1017 = vmatprep.subr.mxu0 0.0
    %1018 = vmatpush1.msra.mxu0 0.0
    %1019 = vmatprep.subr.mxu0 0.0
    %1020 = vmatpush1.msra.mxu0 0.0
    %1021 = vmatprep.subr.mxu0 0.0
    %1022 = vmatpush1.msra.mxu0 0.0
    %1023 = vmatprep.subr.mxu0 0.0
    %1024 = vmatpush1.msra.mxu0 0.0
    %1025 = vmatprep.subr.mxu0 0.0
    %1026 = vmatpush1.msra.mxu0 0.0
    %1027 = vmatprep.subr.mxu0 0.0
    %1028 = vmatpush1.msra.mxu0 0.0
    %1029 = vmatprep.subr.mxu0 0.0
    %1030 = vmatpush1.msra.mxu0 0.0
    %1031 = vmatprep.subr.mxu0 0.0
    %1032 = vmatpush1.msra.mxu0 0.0
    %1033 = vmatprep.subr.mxu0 0.0
    %1034 = vmatpush1.msra.mxu0 0.0
    %1035 = vmatprep.subr.mxu0 0.0
    %1036 = vmatpush1.msra.mxu0 0.0
    %1037 = vmatprep.subr.mxu0 0.0
    %1038 = vmatpush1.msra.mxu0 0.0
    %1039 = vmatprep.subr.mxu0 0.0
    %1040 = vmatpush1.msra.mxu0 0.0
    %1041 = vmatprep.subr.mxu0 0.0
    %1042 = vmatpush1.msra.mxu0 0.0
    %1043 = vmatprep.subr.mxu0 0.0
    %1044 = vmatpush1.msra.mxu0 0.0
    %1045 = vmatprep.subr.mxu0 0.0
    %1046 = vmatpush1.msra.mxu0 0.0
    %1047 = vmatprep.subr.mxu0 0.0
    %1048 = vmatpush1.msra.mxu0 0.0
    %1049 = vmatprep.subr.mxu0 0.0
    %1050 = vmatpush1.msra.mxu0 0.0
    %1051 = vmatprep.subr.mxu0 0.0
    %1052 = vmatpush1.msra.mxu0 0.0
    %1053 = vmatprep.subr.mxu0 0.0
    %1054 = vmatpush1.msra.mxu0 0.0
    %1055 = vmatprep.subr.mxu0 0.0
    %1056 = vmatpush1.msra.mxu0 0.0
    %1057 = vmatprep.mubr.f32.mxu0 0.0
    %1058 = vmatmul.mubr.f32.gmra.mrb[0].mxu0 %v979
    %v1059 = vpop.f32.mrb[0].mxu0
    %v1060 = vadd.f32 0.0, %v1059
    %v1061 = vpop.f32.mrb[0].mxu0
    %1062 = vmatprep.mubr.f32.mxu0 0.0
    %1063 = vmatmul.mubr.f32.gmra.mrb[0].mxu0 %v982
    %v1064 = vpop.f32.mrb[0].mxu0
    %v1065 = vadd.f32 0.0, %v1064
    %v1066 = vpop.f32.mrb[0].mxu0
    %1067 = vmatprep.mubr.f32.mxu0 0.0
    %1068 = vmatmul.mubr.f32.gmra.mrb[0].mxu0 %v985
    %v1069 = vpop.f32.mrb[0].mxu0
    %v1070 = vadd.f32 0.0, %v1069
    %v1071 = vpop.f32.mrb[0].mxu0
    %1072 = vmatprep.mubr.f32.mxu0 0.0
    %1073 = vmatmul.mubr.f32.gmra.mrb[0].mxu0 %v988
    %v1074 = vpop.f32.mrb[0].mxu0
    %v1075 = vadd.f32 0.0, %v1074
    %v1076 = vpop.f32.mrb[0].mxu0
    %1077 = vmatprep.mubr.f32.mxu0 0.0
    %1078 = vmatmul.mubr.f32.gmra.mrb[0].mxu0 %v991
    %v1079 = vpop.f32.mrb[0].mxu0
    %v1080 = vadd.f32 0.0, %v1079
    %v1081 = vpop.f32.mrb[0].mxu0
    %1082 = vdwg.mxu0
    %s1083 = scalar_lea.vmem [#allocation2], 2984
    %1084 = vst.msk [vmem:[%s1083 + $0xb80] sm:$0xff] %vm21, %v1060
    %1085 = vst.msk [vmem:[%s1083 + $0xb88] sm:$0xff] %vm21, %v1065
    %1086 = vst.msk [vmem:[%s1083 + $0xb90] sm:$0xff] %vm21, %v1070
    %1087 = vst.msk [vmem:[%s1083 + $0xb98] sm:$0xff] %vm21, %v1075
    %1088 = vst.msk [vmem:[%s1083 + $0xba0] sm:$0x7f] %vm604, %v1080
    %v1089 = vsel %vm21, %v1060, 0.0
    %v1090 = vsel %vm21, %v1065, 0.0
    %v1091 = vadd.f32 %v1089, %v1090
    %v1092 = vsel %vm21, %v1070, 0.0
    %v1093 = vadd.f32 %v1091, %v1092
    %v1094 = vsel %vm21, %v1075, 0.0
    %v1095 = vadd.f32 %v1093, %v1094
    %v1096 = vsel %vm604, %v1080, 0.0
    %v1097 = vadd.f32 %v1095, %v1096
    %v1098 = vrot.slane %v1097, 4
    %v1099 = vadd.f32 %v1097, %v1098
    %v1100 = vrot.slane %v1099, 2
    %v1101 = vadd.f32 %v1099, %v1100
    %v1102 = vrot.slane %v1101, 1
    %v1103 = vadd.f32 %v1101, %v1102
    %v1104 = vadd.f32 %v649, %v1103
    %v1105 = vmul.f32 %v1060, %v1060
    %v1106 = vmul.f32 %v1065, %v1065
    %v1107 = vmul.f32 %v1070, %v1070
    %v1108 = vmul.f32 %v1075, %v1075
    %v1109 = vmul.f32 %v1080, %v1080
    %v1110 = vsel %vm21, %v1105, 0.0
    %v1111 = vsel %vm21, %v1106, 0.0
    %v1112 = vadd.f32 %v1110, %v1111
    %v1113 = vsel %vm21, %v1107, 0.0
    %v1114 = vadd.f32 %v1112, %v1113
    %v1115 = vsel %vm21, %v1108, 0.0
    %v1116 = vadd.f32 %v1114, %v1115
    %v1117 = vsel %vm604, %v1109, 0.0
    %v1118 = vadd.f32 %v1116, %v1117
    %v1119 = vrot.slane %v1118, 4
    %v1120 = vadd.f32 %v1118, %v1119
    %v1121 = vrot.slane %v1120, 2
    %v1122 = vadd.f32 %v1120, %v1121
    %v1123 = vrot.slane %v1122, 1
    %v1124 = vadd.f32 %v1122, %v1123
    %v1125 = vadd.f32 %v650, %v1124
    %v1126 = vmul.f32 %v1104, 0.0001676165
    %v1127 = vmul.f32 %v1125, 0.0001676165
    %v1128 = vmul.f32 %v1126, %v1126
    %v1129 = vsub.f32 %v1127, %v1128
    %v1130 = vadd.f32 %v1129, 1e-05
    %v1131 = vrsqrt.pop %v1130
    loop: start=0, step=1, limit=53
    $region36: #{autoencoder_forward.1} parent=1 // loop_pre_header
      _
    $region37: #{autoencoder_forward.1} parent=1 // loop_header
      %s1133 = sphi 0, %s1137
      %p1134 = scmp.ge.s32.totalorder %s1133, 53
    $region38: #{autoencoder_forward.1} parent=1 // loop_header_branch
      %1136 = sbr.rel (%p1134) target = $region42
    $region39: #{autoencoder_forward.1} parent=1 // loop_body
      %s1138 = smul.u32 %s1133, 8
      %s1139 = smul.u32 %s1133, 56
      %s1140 = scalar_lea.vmem [#allocation2], %s1139
      %v1141 = vld [vmem:[%s1140] sm:$0xff]
      %v1142 = vld [vmem:[%s1140 + $0x8] sm:$0xf]
      %v1143 = vsel %vm21, %v1141, -inf
      %vm1144 = vcmask 257024
      %v1145 = vsel %vm1144, %v1142, -inf
      %v1146 = vmax.f32 %v1143, %v1145
      %v1147 = vrot.slane %v1146, 4
      %v1148 = vmax.f32 %v1146, %v1147
      %v1149 = vrot.slane %v1148, 2
      %v1150 = vmax.f32 %v1148, %v1149
      %v1151 = vrot.slane %v1150, 1
      %v1152 = vmax.f32 %v1150, %v1151
      %s1153 = sadd.s32 %s1138, 1
      %s1154 = smul.u32 %s1153, 7
      %s1155 = scalar_lea.vmem [#allocation2], %s1154
      %v1156 = vld [vmem:[%s1155] sm:$0xff]
      %v1157 = vld [vmem:[%s1155 + $0x8] sm:$0xf]
      %v1158 = vsel %vm21, %v1156, -inf
      %v1159 = vsel %vm1144, %v1157, -inf
      %v1160 = vmax.f32 %v1158, %v1159
      %v1161 = vrot.slane %v1160, 4
      %v1162 = vmax.f32 %v1160, %v1161
      %v1163 = vrot.slane %v1162, 2
      %v1164 = vmax.f32 %v1162, %v1163
      %v1165 = vrot.slane %v1164, 1
      %v1166 = vmax.f32 %v1164, %v1165
      %s1167 = sadd.s32 %s1138, 2
      %s1168 = smul.u32 %s1167, 7
      %s1169 = scalar_lea.vmem [#allocation2], %s1168
      %v1170 = vld [vmem:[%s1169] sm:$0xff]
      %v1171 = vld [vmem:[%s1169 + $0x8] sm:$0xf]
      %v1172 = vsel %vm21, %v1170, -inf
      %v1173 = vsel %vm1144, %v1171, -inf
      %v1174 = vmax.f32 %v1172, %v1173
      %v1175 = vrot.slane %v1174, 4
      %v1176 = vmax.f32 %v1174, %v1175
      %v1177 = vrot.slane %v1176, 2
      %v1178 = vmax.f32 %v1176, %v1177
      %v1179 = vrot.slane %v1178, 1
      %v1180 = vmax.f32 %v1178, %v1179
      %s1181 = sadd.s32 %s1138, 3
      %s1182 = smul.u32 %s1181, 7
      %s1183 = scalar_lea.vmem [#allocation2], %s1182
      %v1184 = vld [vmem:[%s1183] sm:$0xff]
      %v1185 = vld [vmem:[%s1183 + $0x8] sm:$0xf]
      %v1186 = vsel %vm21, %v1184, -inf
      %v1187 = vsel %vm1144, %v1185, -inf
      %v1188 = vmax.f32 %v1186, %v1187
      %v1189 = vrot.slane %v1188, 4
      %v1190 = vmax.f32 %v1188, %v1189
      %v1191 = vrot.slane %v1190, 2
      %v1192 = vmax.f32 %v1190, %v1191
      %v1193 = vrot.slane %v1192, 1
      %v1194 = vmax.f32 %v1192, %v1193
      %s1195 = sadd.s32 %s1138, 4
      %s1196 = smul.u32 %s1195, 7
      %s1197 = scalar_lea.vmem [#allocation2], %s1196
      %v1198 = vld [vmem:[%s1197] sm:$0xff]
      %v1199 = vld [vmem:[%s1197 + $0x8] sm:$0xf]
      %v1200 = vsel %vm21, %v1198, -inf
      %v1201 = vsel %vm1144, %v1199, -inf
      %v1202 = vmax.f32 %v1200, %v1201
      %v1203 = vrot.slane %v1202, 4
      %v1204 = vmax.f32 %v1202, %v1203
      %v1205 = vrot.slane %v1204, 2
      %v1206 = vmax.f32 %v1204, %v1205
      %v1207 = vrot.slane %v1206, 1
      %v1208 = vmax.f32 %v1206, %v1207
      %s1209 = sadd.s32 %s1138, 5
      %s1210 = smul.u32 %s1209, 7
      %s1211 = scalar_lea.vmem [#allocation2], %s1210
      %v1212 = vld [vmem:[%s1211] sm:$0xff]
      %v1213 = vld [vmem:[%s1211 + $0x8] sm:$0xf]
      %v1214 = vsel %vm21, %v1212, -inf
      %v1215 = vsel %vm1144, %v1213, -inf
      %v1216 = vmax.f32 %v1214, %v1215
      %v1217 = vrot.slane %v1216, 4
      %v1218 = vmax.f32 %v1216, %v1217
      %v1219 = vrot.slane %v1218, 2
      %v1220 = vmax.f32 %v1218, %v1219
      %v1221 = vrot.slane %v1220, 1
      %v1222 = vmax.f32 %v1220, %v1221
      %s1223 = sadd.s32 %s1138, 6
      %s1224 = smul.u32 %s1223, 7
      %s1225 = scalar_lea.vmem [#allocation2], %s1224
      %v1226 = vld [vmem:[%s1225] sm:$0xff]
      %v1227 = vld [vmem:[%s1225 + $0x8] sm:$0xf]
      %v1228 = vsel %vm21, %v1226, -inf
      %v1229 = vsel %vm1144, %v1227, -inf
      %v1230 = vmax.f32 %v1228, %v1229
      %v1231 = vrot.slane %v1230, 4
      %v1232 = vmax.f32 %v1230, %v1231
      %v1233 = vrot.slane %v1232, 2
      %v1234 = vmax.f32 %v1232, %v1233
      %v1235 = vrot.slane %v1234, 1
      %v1236 = vmax.f32 %v1234, %v1235
      %s1237 = sadd.s32 %s1138, 7
      %s1238 = smul.u32 %s1237, 7
      %s1239 = scalar_lea.vmem [#allocation2], %s1238
      %v1240 = vld [vmem:[%s1239] sm:$0xff]
      %v1241 = vld [vmem:[%s1239 + $0x8] sm:$0xf]
      %v1242 = vsel %vm21, %v1240, -inf
      %v1243 = vsel %vm1144, %v1241, -inf
      %v1244 = vmax.f32 %v1242, %v1243
      %v1245 = vrot.slane %v1244, 4
      %v1246 = vmax.f32 %v1244, %v1245
      %v1247 = vrot.slane %v1246, 2
      %v1248 = vmax.f32 %v1246, %v1247
      %v1249 = vrot.slane %v1248, 1
      %v1250 = vmax.f32 %v1248, %v1249
      %vm1251 = vcmask 1040384
      %v1252 = vsel %vm1251, %v1152, %v1166
      %vm1253 = vcmask 1041408
      %v1254 = vsel %vm1253, %v1252, %v1180
      %vm1255 = vcmask 1042432
      %v1256 = vsel %vm1255, %v1254, %v1194
      %v1257 = vsel %vm506, %v1256, %v1208
      %vm1258 = vcmask 1044480
      %v1259 = vsel %vm1258, %v1257, %v1222
      %vm1260 = vcmask 1045504
      %v1261 = vsel %vm1260, %v1259, %v1236
      %vm1262 = vcmask 1046528
      %v1263 = vsel %vm1262, %v1261, %v1250
      %v1264 = vsub.f32 %v1263, %v1126
      %v1265 = vmul.f32 %v1264, %v1131
      %v1266 = vtanh.pop %v1265
      %s1267 = scalar_lea.vmem [#allocation3], %s1153
      %1268 = vst.msk [vmem:[%s1267] sm:$0xff] %vm21, %v1266
    $region40: #{autoencoder_forward.1} parent=1 // loop_footer
      %s1137 = sadd.s32 1, %s1133
    $region41: #{autoencoder_forward.1} parent=1 // loop_footer_branch
      %1132 = sbr.rel target = $region37
    $region42: #{autoencoder_forward.1} parent=1 // loop_exit
      _
    %v1269 = vld [vmem:[#allocation2 + $0xb98] sm:$0xff]
    %v1270 = vld [vmem:[#allocation2 + $0xba0] sm:$0xf]
    %v1271 = vsel %vm21, %v1269, -inf
    %vm1272 = vcmask 257024
    %v1273 = vsel %vm1272, %v1270, -inf
    %v1274 = vmax.f32 %v1271, %v1273
    %v1275 = vrot.slane %v1274, 4
    %v1276 = vmax.f32 %v1274, %v1275
    %v1277 = vrot.slane %v1276, 2
    %v1278 = vmax.f32 %v1276, %v1277
    %v1279 = vrot.slane %v1278, 1
    %v1280 = vmax.f32 %v1278, %v1279
    %v1281 = vsub.f32 %v1280, %v1126
    %v1282 = vmul.f32 %v1281, %v1131
    %v1283 = vtanh.pop %v1282
    %vm1284 = vcmask 253952
    %1285 = vst.msk [vmem:[#allocation3 + $0x1a9] sm:$0x1] %vm1284, %v1283
    loop: start=0, step=1, limit=53
    $region43: #{autoencoder_forward.1} parent=1 // loop_pre_header
      _
    $region44: #{autoencoder_forward.1} parent=1 // loop_header
      %s1287 = sphi 0, %s1291
      %p1288 = scmp.ge.s32.totalorder %s1287, 53
    $region45: #{autoencoder_forward.1} parent=1 // loop_header_branch
      %1290 = sbr.rel (%p1288) target = $region49
    $region46: #{autoencoder_forward.1} parent=1 // loop_body
      %s1292 = smul.u32 %s1287, 8
      %s1293 = smul.u32 %s1287, 56
      %s1294 = sadd.s32 %s1293, 2984
      %s1295 = scalar_lea.vmem [#allocation2], %s1294
      %v1296 = vld [vmem:[%s1295] sm:$0xff]
      %v1297 = vld [vmem:[%s1295 + $0x8] sm:$0xf]
      %v1298 = vsel %vm21, %v1296, -inf
      %v1299 = vsel %vm1272, %v1297, -inf
      %v1300 = vmax.f32 %v1298, %v1299
      %v1301 = vrot.slane %v1300, 4
      %v1302 = vmax.f32 %v1300, %v1301
      %v1303 = vrot.slane %v1302, 2
      %v1304 = vmax.f32 %v1302, %v1303
      %v1305 = vrot.slane %v1304, 1
      %v1306 = vmax.f32 %v1304, %v1305
      %s1307 = sadd.s32 %s1292, 1
      %s1308 = smul.u32 %s1307, 7
      %s1309 = sadd.s32 %s1308, 2984
      %s1310 = scalar_lea.vmem [#allocation2], %s1309
      %v1311 = vld [vmem:[%s1310] sm:$0xff]
      %v1312 = vld [vmem:[%s1310 + $0x8] sm:$0xf]
      %v1313 = vsel %vm21, %v1311, -inf
      %v1314 = vsel %vm1272, %v1312, -inf
      %v1315 = vmax.f32 %v1313, %v1314
      %v1316 = vrot.slane %v1315, 4
      %v1317 = vmax.f32 %v1315, %v1316
      %v1318 = vrot.slane %v1317, 2
      %v1319 = vmax.f32 %v1317, %v1318
      %v1320 = vrot.slane %v1319, 1
      %v1321 = vmax.f32 %v1319, %v1320
      %s1322 = sadd.s32 %s1292, 2
      %s1323 = smul.u32 %s1322, 7
      %s1324 = sadd.s32 %s1323, 2984
      %s1325 = scalar_lea.vmem [#allocation2], %s1324
      %v1326 = vld [vmem:[%s1325] sm:$0xff]
      %v1327 = vld [vmem:[%s1325 + $0x8] sm:$0xf]
      %v1328 = vsel %vm21, %v1326, -inf
      %v1329 = vsel %vm1272, %v1327, -inf
      %v1330 = vmax.f32 %v1328, %v1329
      %v1331 = vrot.slane %v1330, 4
      %v1332 = vmax.f32 %v1330, %v1331
      %v1333 = vrot.slane %v1332, 2
      %v1334 = vmax.f32 %v1332, %v1333
      %v1335 = vrot.slane %v1334, 1
      %v1336 = vmax.f32 %v1334, %v1335
      %s1337 = sadd.s32 %s1292, 3
      %s1338 = smul.u32 %s1337, 7
      %s1339 = sadd.s32 %s1338, 2984
      %s1340 = scalar_lea.vmem [#allocation2], %s1339
      %v1341 = vld [vmem:[%s1340] sm:$0xff]
      %v1342 = vld [vmem:[%s1340 + $0x8] sm:$0xf]
      %v1343 = vsel %vm21, %v1341, -inf
      %v1344 = vsel %vm1272, %v1342, -inf
      %v1345 = vmax.f32 %v1343, %v1344
      %v1346 = vrot.slane %v1345, 4
      %v1347 = vmax.f32 %v1345, %v1346
      %v1348 = vrot.slane %v1347, 2
      %v1349 = vmax.f32 %v1347, %v1348
      %v1350 = vrot.slane %v1349, 1
      %v1351 = vmax.f32 %v1349, %v1350
      %s1352 = sadd.s32 %s1292, 4
      %s1353 = smul.u32 %s1352, 7
      %s1354 = sadd.s32 %s1353, 2984
      %s1355 = scalar_lea.vmem [#allocation2], %s1354
      %v1356 = vld [vmem:[%s1355] sm:$0xff]
      %v1357 = vld [vmem:[%s1355 + $0x8] sm:$0xf]
      %v1358 = vsel %vm21, %v1356, -inf
      %v1359 = vsel %vm1272, %v1357, -inf
      %v1360 = vmax.f32 %v1358, %v1359
      %v1361 = vrot.slane %v1360, 4
      %v1362 = vmax.f32 %v1360, %v1361
      %v1363 = vrot.slane %v1362, 2
      %v1364 = vmax.f32 %v1362, %v1363
      %v1365 = vrot.slane %v1364, 1
      %v1366 = vmax.f32 %v1364, %v1365
      %s1367 = sadd.s32 %s1292, 5
      %s1368 = smul.u32 %s1367, 7
      %s1369 = sadd.s32 %s1368, 2984
      %s1370 = scalar_lea.vmem [#allocation2], %s1369
      %v1371 = vld [vmem:[%s1370] sm:$0xff]
      %v1372 = vld [vmem:[%s1370 + $0x8] sm:$0xf]
      %v1373 = vsel %vm21, %v1371, -inf
      %v1374 = vsel %vm1272, %v1372, -inf
      %v1375 = vmax.f32 %v1373, %v1374
      %v1376 = vrot.slane %v1375, 4
      %v1377 = vmax.f32 %v1375, %v1376
      %v1378 = vrot.slane %v1377, 2
      %v1379 = vmax.f32 %v1377, %v1378
      %v1380 = vrot.slane %v1379, 1
      %v1381 = vmax.f32 %v1379, %v1380
      %s1382 = sadd.s32 %s1292, 6
      %s1383 = smul.u32 %s1382, 7
      %s1384 = sadd.s32 %s1383, 2984
      %s1385 = scalar_lea.vmem [#allocation2], %s1384
      %v1386 = vld [vmem:[%s1385] sm:$0xff]
      %v1387 = vld [vmem:[%s1385 + $0x8] sm:$0xf]
      %v1388 = vsel %vm21, %v1386, -inf
      %v1389 = vsel %vm1272, %v1387, -inf
      %v1390 = vmax.f32 %v1388, %v1389
      %v1391 = vrot.slane %v1390, 4
      %v1392 = vmax.f32 %v1390, %v1391
      %v1393 = vrot.slane %v1392, 2
      %v1394 = vmax.f32 %v1392, %v1393
      %v1395 = vrot.slane %v1394, 1
      %v1396 = vmax.f32 %v1394, %v1395
      %s1397 = sadd.s32 %s1292, 7
      %s1398 = smul.u32 %s1397, 7
      %s1399 = sadd.s32 %s1398, 2984
      %s1400 = scalar_lea.vmem [#allocation2], %s1399
      %v1401 = vld [vmem:[%s1400] sm:$0xff]
      %v1402 = vld [vmem:[%s1400 + $0x8] sm:$0xf]
      %v1403 = vsel %vm21, %v1401, -inf
      %v1404 = vsel %vm1272, %v1402, -inf
      %v1405 = vmax.f32 %v1403, %v1404
      %v1406 = vrot.slane %v1405, 4
      %v1407 = vmax.f32 %v1405, %v1406
      %v1408 = vrot.slane %v1407, 2
      %v1409 = vmax.f32 %v1407, %v1408
      %v1410 = vrot.slane %v1409, 1
      %v1411 = vmax.f32 %v1409, %v1410
      %vm1412 = vcmask 1040384
      %v1413 = vsel %vm1412, %v1306, %v1321
      %vm1414 = vcmask 1041408
      %v1415 = vsel %vm1414, %v1413, %v1336
      %vm1416 = vcmask 1042432
      %v1417 = vsel %vm1416, %v1415, %v1351
      %v1418 = vsel %vm506, %v1417, %v1366
      %vm1419 = vcmask 1044480
      %v1420 = vsel %vm1419, %v1418, %v1381
      %vm1421 = vcmask 1045504
      %v1422 = vsel %vm1421, %v1420, %v1396
      %vm1423 = vcmask 1046528
      %v1424 = vsel %vm1423, %v1422, %v1411
      %v1425 = vsub.f32 %v1424, %v1126
      %v1426 = vmul.f32 %v1425, %v1131
      %v1427 = vtanh.pop %v1426
      %s1428 = sadd.s32 %s1307, 432
      %s1429 = scalar_lea.vmem [#allocation3], %s1428
      %1430 = vst.msk [vmem:[%s1429] sm:$0xff] %vm21, %v1427
    $region47: #{autoencoder_forward.1} parent=1 // loop_footer
      %s1291 = sadd.s32 1, %s1287
    $region48: #{autoencoder_forward.1} parent=1 // loop_footer_branch
      %1286 = sbr.rel target = $region44
    $region49: #{autoencoder_forward.1} parent=1 // loop_exit
      _
    %v1431 = vld [vmem:[%s1083 + $0xb98] sm:$0xff]
    %v1432 = vld [vmem:[%s1083 + $0xba0] sm:$0xf]
    %v1433 = vsel %vm21, %v1431, -inf
    %v1434 = vsel %vm1272, %v1432, -inf
    %v1435 = vmax.f32 %v1433, %v1434
    %v1436 = vrot.slane %v1435, 4
    %v1437 = vmax.f32 %v1435, %v1436
    %v1438 = vrot.slane %v1437, 2
    %v1439 = vmax.f32 %v1437, %v1438
    %v1440 = vrot.slane %v1439, 1
    %v1441 = vmax.f32 %v1439, %v1440
    %v1442 = vsub.f32 %v1441, %v1126
    %v1443 = vmul.f32 %v1442, %v1131
    %v1444 = vtanh.pop %v1443
    %s1445 = scalar_lea.vmem [#allocation3], 432
    %1446 = vst.msk [vmem:[%s1445 + $0x1a9] sm:$0x1] %vm1284, %v1444
    loop: start=0, step=1, limit=26
    $region50: #{autoencoder_forward.1} parent=1 // loop_pre_header
      _
    $region51: #{autoencoder_forward.1} parent=1 // loop_header
      %s1448 = sphi 0, %s1452
      %p1449 = scmp.ge.s32.totalorder %s1448, 26
      %v1453 = vphi 0.0, %v1685
      %v1454 = vphi 0.0, %v1686
      %v1455 = vphi 0.0, %v1687
      %v1456 = vphi 0.0, %v1688
      %v1457 = vphi 0.0, %v1689
      %v1458 = vphi 0.0, %v1690
      %v1459 = vphi 0.0, %v1691
      %v1460 = vphi 0.0, %v1692
      %v1461 = vphi 0.0, %v1693
      %v1462 = vphi 0.0, %v1694
      %v1463 = vphi 0.0, %v1695
      %v1464 = vphi 0.0, %v1696
      %v1465 = vphi 0.0, %v1697
      %v1466 = vphi 0.0, %v1698
      %v1467 = vphi 0.0, %v1699
      %v1468 = vphi 0.0, %v1700
    $region52: #{autoencoder_forward.1} parent=1 // loop_header_branch
      %1451 = sbr.rel (%p1449) target = $region56
    $region53: #{autoencoder_forward.1} parent=1 // loop_body
      %s1469 = scalar_lea.vmem [#allocation3], %s1448
      %v1470 = vld [vmem:[%s1469] sm:$0xff]
      %v1471 = vld [vmem:[%s1469 + $0x8] sm:$0xff]
      %v1472 = vld [vmem:[%s1469 + $0x10] sm:$0xff]
      %v1473 = vld [vmem:[%s1469 + $0x18] sm:$0xff]
      %v1474 = vld [vmem:[%s1469 + $0x20] sm:$0xff]
      %v1475 = vld [vmem:[%s1469 + $0x28] sm:$0xff]
      %v1476 = vld [vmem:[%s1469 + $0x30] sm:$0xff]
      %v1477 = vld [vmem:[%s1469 + $0x38] sm:$0xff]
      %v1478 = vld [vmem:[%s1469 + $0x40] sm:$0xff]
      %v1479 = vld [vmem:[%s1469 + $0x48] sm:$0xff]
      %v1480 = vld [vmem:[%s1469 + $0x50] sm:$0xff]
      %v1481 = vld [vmem:[%s1469 + $0x58] sm:$0xff]
      %v1482 = vld [vmem:[%s1469 + $0x60] sm:$0xff]
      %v1483 = vld [vmem:[%s1469 + $0x68] sm:$0xff]
      %v1484 = vld [vmem:[%s1469 + $0x70] sm:$0xff]
      %v1485 = vld [vmem:[%s1469 + $0x78] sm:$0xff]
      %s1486 = smul.u32 %s1448, 32
      %s1487 = scalar_lea.vmem %s2, %s1486
      %v1488 = vld [vmem:[%s1487] sm:$0xff]
      %v1489 = vld [vmem:[%s1487 + $0x8] sm:$0xff]
      %v1490 = vld [vmem:[%s1487 + $0x10] sm:$0xff]
      %v1491 = vld [vmem:[%s1487 + $0x18] sm:$0xff]
      %v1493 = vsel %vm21, %v1470, 0
      %v1496 = vsel %vm21, %v1471, 0
      %v1499 = vsel %vm21, %v1472, 0
      %v1502 = vsel %vm21, %v1473, 0
      %v1505 = vsel %vm21, %v1474, 0
      %v1508 = vsel %vm21, %v1475, 0
      %v1511 = vsel %vm21, %v1476, 0
      %v1514 = vsel %vm21, %v1477, 0
      %v1517 = vsel %vm21, %v1478, 0
      %v1520 = vsel %vm21, %v1479, 0
      %v1523 = vsel %vm21, %v1480, 0
      %v1526 = vsel %vm21, %v1481, 0
      %v1529 = vsel %vm21, %v1482, 0
      %v1532 = vsel %vm21, %v1483, 0
      %v1535 = vsel %vm21, %v1484, 0
      %v1538 = vsel %vm21, %v1485, 0
      %1540 = vmatprep.subr.mxu0 0.0
      %1541 = vmatpush1.msra.mxu0 %v1488
      %1542 = vmatprep.subr.mxu0 0.0
      %1543 = vmatpush1.msra.mxu0 %v1489
      %1544 = vmatprep.subr.mxu0 0.0
      %1545 = vmatpush1.msra.mxu0 %v1490
      %1546 = vmatprep.subr.mxu0 0.0
      %1547 = vmatpush1.msra.mxu0 %v1491
      %1548 = vmatprep.subr.mxu0 0.0
      %1549 = vmatpush1.msra.mxu0 0.0
      %1550 = vmatprep.subr.mxu0 0.0
      %1551 = vmatpush1.msra.mxu0 0.0
      %1552 = vmatprep.subr.mxu0 0.0
      %1553 = vmatpush1.msra.mxu0 0.0
      %1554 = vmatprep.subr.mxu0 0.0
      %1555 = vmatpush1.msra.mxu0 0.0
      %1556 = vmatprep.subr.mxu0 0.0
      %1557 = vmatpush1.msra.mxu0 0.0
      %1558 = vmatprep.subr.mxu0 0.0
      %1559 = vmatpush1.msra.mxu0 0.0
      %1560 = vmatprep.subr.mxu0 0.0
      %1561 = vmatpush1.msra.mxu0 0.0
      %1562 = vmatprep.subr.mxu0 0.0
      %1563 = vmatpush1.msra.mxu0 0.0
      %1564 = vmatprep.subr.mxu0 0.0
      %1565 = vmatpush1.msra.mxu0 0.0
      %1566 = vmatprep.subr.mxu0 0.0
      %1567 = vmatpush1.msra.mxu0 0.0
      %1568 = vmatprep.subr.mxu0 0.0
      %1569 = vmatpush1.msra.mxu0 0.0
      %1570 = vmatprep.subr.mxu0 0.0
      %1571 = vmatpush1.msra.mxu0 0.0
      %1572 = vmatprep.subr.mxu0 0.0
      %1573 = vmatpush1.msra.mxu0 0.0
      %1574 = vmatprep.subr.mxu0 0.0
      %1575 = vmatpush1.msra.mxu0 0.0
      %1576 = vmatprep.subr.mxu0 0.0
      %1577 = vmatpush1.msra.mxu0 0.0
      %1578 = vmatprep.subr.mxu0 0.0
      %1579 = vmatpush1.msra.mxu0 0.0
      %1580 = vmatprep.subr.mxu0 0.0
      %1581 = vmatpush1.msra.mxu0 0.0
      %1582 = vmatprep.subr.mxu0 0.0
      %1583 = vmatpush1.msra.mxu0 0.0
      %1584 = vmatprep.subr.mxu0 0.0
      %1585 = vmatpush1.msra.mxu0 0.0
      %1586 = vmatprep.subr.mxu0 0.0
      %1587 = vmatpush1.msra.mxu0 0.0
      %1588 = vmatprep.subr.mxu0 0.0
      %1589 = vmatpush1.msra.mxu0 0.0
      %1590 = vmatprep.subr.mxu0 0.0
      %1591 = vmatpush1.msra.mxu0 0.0
      %1592 = vmatprep.subr.mxu0 0.0
      %1593 = vmatpush1.msra.mxu0 0.0
      %1594 = vmatprep.subr.mxu0 0.0
      %1595 = vmatpush1.msra.mxu0 0.0
      %1596 = vmatprep.subr.mxu0 0.0
      %1597 = vmatpush1.msra.mxu0 0.0
      %1598 = vmatprep.subr.mxu0 0.0
      %1599 = vmatpush1.msra.mxu0 0.0
      %1600 = vmatprep.subr.mxu0 0.0
      %1601 = vmatpush1.msra.mxu0 0.0
      %1602 = vmatprep.subr.mxu0 0.0
      %1603 = vmatpush1.msra.mxu0 0.0
      %1604 = vmatprep.mubr.f32.mxu0 0.0
      %1605 = vmatmul.mubr.f32.gmra.mrb[0].mxu0 %v1493
      %v1606 = vpop.f32.mrb[0].mxu0
      %v1607 = vadd.f32 0.0, %v1606
      %v1608 = vpop.f32.mrb[0].mxu0
      %1609 = vmatprep.mubr.f32.mxu0 0.0
      %1610 = vmatmul.mubr.f32.gmra.mrb[0].mxu0 %v1496
      %v1611 = vpop.f32.mrb[0].mxu0
      %v1612 = vadd.f32 0.0, %v1611
      %v1613 = vpop.f32.mrb[0].mxu0
      %1614 = vmatprep.mubr.f32.mxu0 0.0
      %1615 = vmatmul.mubr.f32.gmra.mrb[0].mxu0 %v1499
      %v1616 = vpop.f32.mrb[0].mxu0
      %v1617 = vadd.f32 0.0, %v1616
      %v1618 = vpop.f32.mrb[0].mxu0
      %1619 = vmatprep.mubr.f32.mxu0 0.0
      %1620 = vmatmul.mubr.f32.gmra.mrb[0].mxu0 %v1502
      %v1621 = vpop.f32.mrb[0].mxu0
      %v1622 = vadd.f32 0.0, %v1621
      %v1623 = vpop.f32.mrb[0].mxu0
      %1624 = vmatprep.mubr.f32.mxu0 0.0
      %1625 = vmatmul.mubr.f32.gmra.mrb[0].mxu0 %v1505
      %v1626 = vpop.f32.mrb[0].mxu0
      %v1627 = vadd.f32 0.0, %v1626
      %v1628 = vpop.f32.mrb[0].mxu0
      %1629 = vmatprep.mubr.f32.mxu0 0.0
      %1630 = vmatmul.mubr.f32.gmra.mrb[0].mxu0 %v1508
      %v1631 = vpop.f32.mrb[0].mxu0
      %v1632 = vadd.f32 0.0, %v1631
      %v1633 = vpop.f32.mrb[0].mxu0
      %1634 = vmatprep.mubr.f32.mxu0 0.0
      %1635 = vmatmul.mubr.f32.gmra.mrb[0].mxu0 %v1511
      %v1636 = vpop.f32.mrb[0].mxu0
      %v1637 = vadd.f32 0.0, %v1636
      %v1638 = vpop.f32.mrb[0].mxu0
      %1639 = vmatprep.mubr.f32.mxu0 0.0
      %1640 = vmatmul.mubr.f32.gmra.mrb[0].mxu0 %v1514
      %v1641 = vpop.f32.mrb[0].mxu0
      %v1642 = vadd.f32 0.0, %v1641
      %v1643 = vpop.f32.mrb[0].mxu0
      %1644 = vmatprep.mubr.f32.mxu0 0.0
      %1645 = vmatmul.mubr.f32.gmra.mrb[0].mxu0 %v1517
      %v1646 = vpop.f32.mrb[0].mxu0
      %v1647 = vadd.f32 0.0, %v1646
      %v1648 = vpop.f32.mrb[0].mxu0
      %1649 = vmatprep.mubr.f32.mxu0 0.0
      %1650 = vmatmul.mubr.f32.gmra.mrb[0].mxu0 %v1520
      %v1651 = vpop.f32.mrb[0].mxu0
      %v1652 = vadd.f32 0.0, %v1651
      %v1653 = vpop.f32.mrb[0].mxu0
      %1654 = vmatprep.mubr.f32.mxu0 0.0
      %1655 = vmatmul.mubr.f32.gmra.mrb[0].mxu0 %v1523
      %v1656 = vpop.f32.mrb[0].mxu0
      %v1657 = vadd.f32 0.0, %v1656
      %v1658 = vpop.f32.mrb[0].mxu0
      %1659 = vmatprep.mubr.f32.mxu0 0.0
      %1660 = vmatmul.mubr.f32.gmra.mrb[0].mxu0 %v1526
      %v1661 = vpop.f32.mrb[0].mxu0
      %v1662 = vadd.f32 0.0, %v1661
      %v1663 = vpop.f32.mrb[0].mxu0
      %1664 = vmatprep.mubr.f32.mxu0 0.0
      %1665 = vmatmul.mubr.f32.gmra.mrb[0].mxu0 %v1529
      %v1666 = vpop.f32.mrb[0].mxu0
      %v1667 = vadd.f32 0.0, %v1666
      %v1668 = vpop.f32.mrb[0].mxu0
      %1669 = vmatprep.mubr.f32.mxu0 0.0
      %1670 = vmatmul.mubr.f32.gmra.mrb[0].mxu0 %v1532
      %v1671 = vpop.f32.mrb[0].mxu0
      %v1672 = vadd.f32 0.0, %v1671
      %v1673 = vpop.f32.mrb[0].mxu0
      %1674 = vmatprep.mubr.f32.mxu0 0.0
      %1675 = vmatmul.mubr.f32.gmra.mrb[0].mxu0 %v1535
      %v1676 = vpop.f32.mrb[0].mxu0
      %v1677 = vadd.f32 0.0, %v1676
      %v1678 = vpop.f32.mrb[0].mxu0
      %1679 = vmatprep.mubr.f32.mxu0 0.0
      %1680 = vmatmul.mubr.f32.gmra.mrb[0].mxu0 %v1538
      %v1681 = vpop.f32.mrb[0].mxu0
      %v1682 = vadd.f32 0.0, %v1681
      %v1683 = vpop.f32.mrb[0].mxu0
      %1684 = vdwg.mxu0
      %v1685 = vadd.f32 %v1453, %v1607
      %v1686 = vadd.f32 %v1454, %v1612
      %v1687 = vadd.f32 %v1455, %v1617
      %v1688 = vadd.f32 %v1456, %v1622
      %v1689 = vadd.f32 %v1457, %v1627
      %v1690 = vadd.f32 %v1458, %v1632
      %v1691 = vadd.f32 %v1459, %v1637
      %v1692 = vadd.f32 %v1460, %v1642
      %v1693 = vadd.f32 %v1461, %v1647
      %v1694 = vadd.f32 %v1462, %v1652
      %v1695 = vadd.f32 %v1463, %v1657
      %v1696 = vadd.f32 %v1464, %v1662
      %v1697 = vadd.f32 %v1465, %v1667
      %v1698 = vadd.f32 %v1466, %v1672
      %v1699 = vadd.f32 %v1467, %v1677
      %v1700 = vadd.f32 %v1468, %v1682
    $region54: #{autoencoder_forward.1} parent=1 // loop_footer
      %s1452 = sadd.s32 1, %s1448
    $region55: #{autoencoder_forward.1} parent=1 // loop_footer_branch
      %1447 = sbr.rel target = $region51
    $region56: #{autoencoder_forward.1} parent=1 // loop_exit
      _
    %1701 = vst.msk [vmem:[#allocation4] sm:$0xff] %vm131, %v1453
    %1702 = vst.msk [vmem:[#allocation4 + $0x8] sm:$0xff] %vm131, %v1454
    %1703 = vst.msk [vmem:[#allocation4 + $0x10] sm:$0xff] %vm131, %v1455
    %1704 = vst.msk [vmem:[#allocation4 + $0x18] sm:$0xff] %vm131, %v1456
    %1705 = vst.msk [vmem:[#allocation4 + $0x20] sm:$0xff] %vm131, %v1457
    %1706 = vst.msk [vmem:[#allocation4 + $0x28] sm:$0xff] %vm131, %v1458
    %1707 = vst.msk [vmem:[#allocation4 + $0x30] sm:$0xff] %vm131, %v1459
    %1708 = vst.msk [vmem:[#allocation4 + $0x38] sm:$0xff] %vm131, %v1460
    %1709 = vst.msk [vmem:[#allocation4 + $0x40] sm:$0xff] %vm131, %v1461
    %1710 = vst.msk [vmem:[#allocation4 + $0x48] sm:$0xff] %vm131, %v1462
    %1711 = vst.msk [vmem:[#allocation4 + $0x50] sm:$0xff] %vm131, %v1463
    %1712 = vst.msk [vmem:[#allocation4 + $0x58] sm:$0xff] %vm131, %v1464
    %1713 = vst.msk [vmem:[#allocation4 + $0x60] sm:$0xff] %vm131, %v1465
    %1714 = vst.msk [vmem:[#allocation4 + $0x68] sm:$0xff] %vm131, %v1466
    %1715 = vst.msk [vmem:[#allocation4 + $0x70] sm:$0xff] %vm131, %v1467
    %1716 = vst.msk [vmem:[#allocation4 + $0x78] sm:$0xff] %vm131, %v1468
    %v1717 = vsel %vm131, %v1453, 0.0
    %v1718 = vsel %vm131, %v1454, 0.0
    %v1719 = vadd.f32 %v1717, %v1718
    %v1720 = vsel %vm131, %v1455, 0.0
    %v1721 = vadd.f32 %v1719, %v1720
    %v1722 = vsel %vm131, %v1456, 0.0
    %v1723 = vadd.f32 %v1721, %v1722
    %v1724 = vsel %vm131, %v1457, 0.0
    %v1725 = vadd.f32 %v1723, %v1724
    %v1726 = vsel %vm131, %v1458, 0.0
    %v1727 = vadd.f32 %v1725, %v1726
    %v1728 = vsel %vm131, %v1459, 0.0
    %v1729 = vadd.f32 %v1727, %v1728
    %v1730 = vsel %vm131, %v1460, 0.0
    %v1731 = vadd.f32 %v1729, %v1730
    %v1732 = vsel %vm131, %v1461, 0.0
    %v1733 = vadd.f32 %v1731, %v1732
    %v1734 = vsel %vm131, %v1462, 0.0
    %v1735 = vadd.f32 %v1733, %v1734
    %v1736 = vsel %vm131, %v1463, 0.0
    %v1737 = vadd.f32 %v1735, %v1736
    %v1738 = vsel %vm131, %v1464, 0.0
    %v1739 = vadd.f32 %v1737, %v1738
    %v1740 = vsel %vm131, %v1465, 0.0
    %v1741 = vadd.f32 %v1739, %v1740
    %v1742 = vsel %vm131, %v1466, 0.0
    %v1743 = vadd.f32 %v1741, %v1742
    %v1744 = vsel %vm131, %v1467, 0.0
    %v1745 = vadd.f32 %v1743, %v1744
    %v1746 = vsel %vm131, %v1468, 0.0
    %v1747 = vadd.f32 %v1745, %v1746
    %v1748 = vrot.slane %v1747, 4
    %v1749 = vadd.f32 %v1747, %v1748
    %v1750 = vrot.slane %v1749, 2
    %v1751 = vadd.f32 %v1749, %v1750
    %v1752 = vrot.slane %v1751, 1
    %v1753 = vadd.f32 %v1751, %v1752
    %v1754 = vadd.f32 %v1753, 0.0
    %v1755 = vmul.f32 %v1453, %v1453
    %v1756 = vmul.f32 %v1454, %v1454
    %v1757 = vmul.f32 %v1455, %v1455
    %v1758 = vmul.f32 %v1456, %v1456
    %v1759 = vmul.f32 %v1457, %v1457
    %v1760 = vmul.f32 %v1458, %v1458
    %v1761 = vmul.f32 %v1459, %v1459
    %v1762 = vmul.f32 %v1460, %v1460
    %v1763 = vmul.f32 %v1461, %v1461
    %v1764 = vmul.f32 %v1462, %v1462
    %v1765 = vmul.f32 %v1463, %v1463
    %v1766 = vmul.f32 %v1464, %v1464
    %v1767 = vmul.f32 %v1465, %v1465
    %v1768 = vmul.f32 %v1466, %v1466
    %v1769 = vmul.f32 %v1467, %v1467
    %v1770 = vmul.f32 %v1468, %v1468
    %v1771 = vsel %vm131, %v1755, 0.0
    %v1772 = vsel %vm131, %v1756, 0.0
    %v1773 = vadd.f32 %v1771, %v1772
    %v1774 = vsel %vm131, %v1757, 0.0
    %v1775 = vadd.f32 %v1773, %v1774
    %v1776 = vsel %vm131, %v1758, 0.0
    %v1777 = vadd.f32 %v1775, %v1776
    %v1778 = vsel %vm131, %v1759, 0.0
    %v1779 = vadd.f32 %v1777, %v1778
    %v1780 = vsel %vm131, %v1760, 0.0
    %v1781 = vadd.f32 %v1779, %v1780
    %v1782 = vsel %vm131, %v1761, 0.0
    %v1783 = vadd.f32 %v1781, %v1782
    %v1784 = vsel %vm131, %v1762, 0.0
    %v1785 = vadd.f32 %v1783, %v1784
    %v1786 = vsel %vm131, %v1763, 0.0
    %v1787 = vadd.f32 %v1785, %v1786
    %v1788 = vsel %vm131, %v1764, 0.0
    %v1789 = vadd.f32 %v1787, %v1788
    %v1790 = vsel %vm131, %v1765, 0.0
    %v1791 = vadd.f32 %v1789, %v1790
    %v1792 = vsel %vm131, %v1766, 0.0
    %v1793 = vadd.f32 %v1791, %v1792
    %v1794 = vsel %vm131, %v1767, 0.0
    %v1795 = vadd.f32 %v1793, %v1794
    %v1796 = vsel %vm131, %v1768, 0.0
    %v1797 = vadd.f32 %v1795, %v1796
    %v1798 = vsel %vm131, %v1769, 0.0
    %v1799 = vadd.f32 %v1797, %v1798
    %v1800 = vsel %vm131, %v1770, 0.0
    %v1801 = vadd.f32 %v1799, %v1800
    %v1802 = vrot.slane %v1801, 4
    %v1803 = vadd.f32 %v1801, %v1802
    %v1804 = vrot.slane %v1803, 2
    %v1805 = vadd.f32 %v1803, %v1804
    %v1806 = vrot.slane %v1805, 1
    %v1807 = vadd.f32 %v1805, %v1806
    %v1808 = vadd.f32 %v1807, 0.0
    loop: start=0, step=1, limit=26
    $region57: #{autoencoder_forward.1} parent=1 // loop_pre_header
      _
    $region58: #{autoencoder_forward.1} parent=1 // loop_header
      %s1810 = sphi 0, %s1814
      %p1811 = scmp.ge.s32.totalorder %s1810, 26
      %v1815 = vphi 0.0, %v2048
      %v1816 = vphi 0.0, %v2049
      %v1817 = vphi 0.0, %v2050
      %v1818 = vphi 0.0, %v2051
      %v1819 = vphi 0.0, %v2052
      %v1820 = vphi 0.0, %v2053
      %v1821 = vphi 0.0, %v2054
      %v1822 = vphi 0.0, %v2055
      %v1823 = vphi 0.0, %v2056
      %v1824 = vphi 0.0, %v2057
      %v1825 = vphi 0.0, %v2058
      %v1826 = vphi 0.0, %v2059
      %v1827 = vphi 0.0, %v2060
      %v1828 = vphi 0.0, %v2061
      %v1829 = vphi 0.0, %v2062
      %v1830 = vphi 0.0, %v2063
    $region59: #{autoencoder_forward.1} parent=1 // loop_header_branch
      %1813 = sbr.rel (%p1811) target = $region63
    $region60: #{autoencoder_forward.1} parent=1 // loop_body
      %s1831 = sadd.s32 %s1810, 128
      %s1832 = scalar_lea.vmem [#allocation3], %s1831
      %v1833 = vld [vmem:[%s1832] sm:$0xff]
      %v1834 = vld [vmem:[%s1832 + $0x8] sm:$0xff]
      %v1835 = vld [vmem:[%s1832 + $0x10] sm:$0xff]
      %v1836 = vld [vmem:[%s1832 + $0x18] sm:$0xff]
      %v1837 = vld [vmem:[%s1832 + $0x20] sm:$0xff]
      %v1838 = vld [vmem:[%s1832 + $0x28] sm:$0xff]
      %v1839 = vld [vmem:[%s1832 + $0x30] sm:$0xff]
      %v1840 = vld [vmem:[%s1832 + $0x38] sm:$0xff]
      %v1841 = vld [vmem:[%s1832 + $0x40] sm:$0xff]
      %v1842 = vld [vmem:[%s1832 + $0x48] sm:$0xff]
      %v1843 = vld [vmem:[%s1832 + $0x50] sm:$0xff]
      %v1844 = vld [vmem:[%s1832 + $0x58] sm:$0xff]
      %v1845 = vld [vmem:[%s1832 + $0x60] sm:$0xff]
      %v1846 = vld [vmem:[%s1832 + $0x68] sm:$0xff]
      %v1847 = vld [vmem:[%s1832 + $0x70] sm:$0xff]
      %v1848 = vld [vmem:[%s1832 + $0x78] sm:$0xff]
      %s1849 = smul.u32 %s1810, 32
      %s1850 = scalar_lea.vmem %s2, %s1849
      %v1851 = vld [vmem:[%s1850] sm:$0xff]
      %v1852 = vld [vmem:[%s1850 + $0x8] sm:$0xff]
      %v1853 = vld [vmem:[%s1850 + $0x10] sm:$0xff]
      %v1854 = vld [vmem:[%s1850 + $0x18] sm:$0xff]
      %v1856 = vsel %vm21, %v1833, 0
      %v1859 = vsel %vm21, %v1834, 0
      %v1862 = vsel %vm21, %v1835, 0
      %v1865 = vsel %vm21, %v1836, 0
      %v1868 = vsel %vm21, %v1837, 0
      %v1871 = vsel %vm21, %v1838, 0
      %v1874 = vsel %vm21, %v1839, 0
      %v1877 = vsel %vm21, %v1840, 0
      %v1880 = vsel %vm21, %v1841, 0
      %v1883 = vsel %vm21, %v1842, 0
      %v1886 = vsel %vm21, %v1843, 0
      %v1889 = vsel %vm21, %v1844, 0
      %v1892 = vsel %vm21, %v1845, 0
      %v1895 = vsel %vm21, %v1846, 0
      %v1898 = vsel %vm21, %v1847, 0
      %v1901 = vsel %vm21, %v1848, 0
      %1903 = vmatprep.subr.mxu0 0.0
      %1904 = vmatpush1.msra.mxu0 %v1851
      %1905 = vmatprep.subr.mxu0 0.0
      %1906 = vmatpush1.msra.mxu0 %v1852
      %1907 = vmatprep.subr.mxu0 0.0
      %1908 = vmatpush1.msra.mxu0 %v1853
      %1909 = vmatprep.subr.mxu0 0.0
      %1910 = vmatpush1.msra.mxu0 %v1854
      %1911 = vmatprep.subr.mxu0 0.0
      %1912 = vmatpush1.msra.mxu0 0.0
      %1913 = vmatprep.subr.mxu0 0.0
      %1914 = vmatpush1.msra.mxu0 0.0
      %1915 = vmatprep.subr.mxu0 0.0
      %1916 = vmatpush1.msra.mxu0 0.0
      %1917 = vmatprep.subr.mxu0 0.0
      %1918 = vmatpush1.msra.mxu0 0.0
      %1919 = vmatprep.subr.mxu0 0.0
      %1920 = vmatpush1.msra.mxu0 0.0
      %1921 = vmatprep.subr.mxu0 0.0
      %1922 = vmatpush1.msra.mxu0 0.0
      %1923 = vmatprep.subr.mxu0 0.0
      %1924 = vmatpush1.msra.mxu0 0.0
      %1925 = vmatprep.subr.mxu0 0.0
      %1926 = vmatpush1.msra.mxu0 0.0
      %1927 = vmatprep.subr.mxu0 0.0
      %1928 = vmatpush1.msra.mxu0 0.0
      %1929 = vmatprep.subr.mxu0 0.0
      %1930 = vmatpush1.msra.mxu0 0.0
      %1931 = vmatprep.subr.mxu0 0.0
      %1932 = vmatpush1.msra.mxu0 0.0
      %1933 = vmatprep.subr.mxu0 0.0
      %1934 = vmatpush1.msra.mxu0 0.0
      %1935 = vmatprep.subr.mxu0 0.0
      %1936 = vmatpush1.msra.mxu0 0.0
      %1937 = vmatprep.subr.mxu0 0.0
      %1938 = vmatpush1.msra.mxu0 0.0
      %1939 = vmatprep.subr.mxu0 0.0
      %1940 = vmatpush1.msra.mxu0 0.0
      %1941 = vmatprep.subr.mxu0 0.0
      %1942 = vmatpush1.msra.mxu0 0.0
      %1943 = vmatprep.subr.mxu0 0.0
      %1944 = vmatpush1.msra.mxu0 0.0
      %1945 = vmatprep.subr.mxu0 0.0
      %1946 = vmatpush1.msra.mxu0 0.0
      %1947 = vmatprep.subr.mxu0 0.0
      %1948 = vmatpush1.msra.mxu0 0.0
      %1949 = vmatprep.subr.mxu0 0.0
      %1950 = vmatpush1.msra.mxu0 0.0
      %1951 = vmatprep.subr.mxu0 0.0
      %1952 = vmatpush1.msra.mxu0 0.0
      %1953 = vmatprep.subr.mxu0 0.0
      %1954 = vmatpush1.msra.mxu0 0.0
      %1955 = vmatprep.subr.mxu0 0.0
      %1956 = vmatpush1.msra.mxu0 0.0
      %1957 = vmatprep.subr.mxu0 0.0
      %1958 = vmatpush1.msra.mxu0 0.0
      %1959 = vmatprep.subr.mxu0 0.0
      %1960 = vmatpush1.msra.mxu0 0.0
      %1961 = vmatprep.subr.mxu0 0.0
      %1962 = vmatpush1.msra.mxu0 0.0
      %1963 = vmatprep.subr.mxu0 0.0
      %1964 = vmatpush1.msra.mxu0 0.0
      %1965 = vmatprep.subr.mxu0 0.0
      %1966 = vmatpush1.msra.mxu0 0.0
      %1967 = vmatprep.mubr.f32.mxu0 0.0
      %1968 = vmatmul.mubr.f32.gmra.mrb[0].mxu0 %v1856
      %v1969 = vpop.f32.mrb[0].mxu0
      %v1970 = vadd.f32 0.0, %v1969
      %v1971 = vpop.f32.mrb[0].mxu0
      %1972 = vmatprep.mubr.f32.mxu0 0.0
      %1973 = vmatmul.mubr.f32.gmra.mrb[0].mxu0 %v1859
      %v1974 = vpop.f32.mrb[0].mxu0
      %v1975 = vadd.f32 0.0, %v1974
      %v1976 = vpop.f32.mrb[0].mxu0
      %1977 = vmatprep.mubr.f32.mxu0 0.0
      %1978 = vmatmul.mubr.f32.gmra.mrb[0].mxu0 %v1862
      %v1979 = vpop.f32.mrb[0].mxu0
      %v1980 = vadd.f32 0.0, %v1979
      %v1981 = vpop.f32.mrb[0].mxu0
      %1982 = vmatprep.mubr.f32.mxu0 0.0
      %1983 = vmatmul.mubr.f32.gmra.mrb[0].mxu0 %v1865
      %v1984 = vpop.f32.mrb[0].mxu0
      %v1985 = vadd.f32 0.0, %v1984
      %v1986 = vpop.f32.mrb[0].mxu0
      %1987 = vmatprep.mubr.f32.mxu0 0.0
      %1988 = vmatmul.mubr.f32.gmra.mrb[0].mxu0 %v1868
      %v1989 = vpop.f32.mrb[0].mxu0
      %v1990 = vadd.f32 0.0, %v1989
      %v1991 = vpop.f32.mrb[0].mxu0
      %1992 = vmatprep.mubr.f32.mxu0 0.0
      %1993 = vmatmul.mubr.f32.gmra.mrb[0].mxu0 %v1871
      %v1994 = vpop.f32.mrb[0].mxu0
      %v1995 = vadd.f32 0.0, %v1994
      %v1996 = vpop.f32.mrb[0].mxu0
      %1997 = vmatprep.mubr.f32.mxu0 0.0
      %1998 = vmatmul.mubr.f32.gmra.mrb[0].mxu0 %v1874
      %v1999 = vpop.f32.mrb[0].mxu0
      %v2000 = vadd.f32 0.0, %v1999
      %v2001 = vpop.f32.mrb[0].mxu0
      %2002 = vmatprep.mubr.f32.mxu0 0.0
      %2003 = vmatmul.mubr.f32.gmra.mrb[0].mxu0 %v1877
      %v2004 = vpop.f32.mrb[0].mxu0
      %v2005 = vadd.f32 0.0, %v2004
      %v2006 = vpop.f32.mrb[0].mxu0
      %2007 = vmatprep.mubr.f32.mxu0 0.0
      %2008 = vmatmul.mubr.f32.gmra.mrb[0].mxu0 %v1880
      %v2009 = vpop.f32.mrb[0].mxu0
      %v2010 = vadd.f32 0.0, %v2009
      %v2011 = vpop.f32.mrb[0].mxu0
      %2012 = vmatprep.mubr.f32.mxu0 0.0
      %2013 = vmatmul.mubr.f32.gmra.mrb[0].mxu0 %v1883
      %v2014 = vpop.f32.mrb[0].mxu0
      %v2015 = vadd.f32 0.0, %v2014
      %v2016 = vpop.f32.mrb[0].mxu0
      %2017 = vmatprep.mubr.f32.mxu0 0.0
      %2018 = vmatmul.mubr.f32.gmra.mrb[0].mxu0 %v1886
      %v2019 = vpop.f32.mrb[0].mxu0
      %v2020 = vadd.f32 0.0, %v2019
      %v2021 = vpop.f32.mrb[0].mxu0
      %2022 = vmatprep.mubr.f32.mxu0 0.0
      %2023 = vmatmul.mubr.f32.gmra.mrb[0].mxu0 %v1889
      %v2024 = vpop.f32.mrb[0].mxu0
      %v2025 = vadd.f32 0.0, %v2024
      %v2026 = vpop.f32.mrb[0].mxu0
      %2027 = vmatprep.mubr.f32.mxu0 0.0
      %2028 = vmatmul.mubr.f32.gmra.mrb[0].mxu0 %v1892
      %v2029 = vpop.f32.mrb[0].mxu0
      %v2030 = vadd.f32 0.0, %v2029
      %v2031 = vpop.f32.mrb[0].mxu0
      %2032 = vmatprep.mubr.f32.mxu0 0.0
      %2033 = vmatmul.mubr.f32.gmra.mrb[0].mxu0 %v1895
      %v2034 = vpop.f32.mrb[0].mxu0
      %v2035 = vadd.f32 0.0, %v2034
      %v2036 = vpop.f32.mrb[0].mxu0
      %2037 = vmatprep.mubr.f32.mxu0 0.0
      %2038 = vmatmul.mubr.f32.gmra.mrb[0].mxu0 %v1898
      %v2039 = vpop.f32.mrb[0].mxu0
      %v2040 = vadd.f32 0.0, %v2039
      %v2041 = vpop.f32.mrb[0].mxu0
      %2042 = vmatprep.mubr.f32.mxu0 0.0
      %2043 = vmatmul.mubr.f32.gmra.mrb[0].mxu0 %v1901
      %v2044 = vpop.f32.mrb[0].mxu0
      %v2045 = vadd.f32 0.0, %v2044
      %v2046 = vpop.f32.mrb[0].mxu0
      %2047 = vdwg.mxu0
      %v2048 = vadd.f32 %v1815, %v1970
      %v2049 = vadd.f32 %v1816, %v1975
      %v2050 = vadd.f32 %v1817, %v1980
      %v2051 = vadd.f32 %v1818, %v1985
      %v2052 = vadd.f32 %v1819, %v1990
      %v2053 = vadd.f32 %v1820, %v1995
      %v2054 = vadd.f32 %v1821, %v2000
      %v2055 = vadd.f32 %v1822, %v2005
      %v2056 = vadd.f32 %v1823, %v2010
      %v2057 = vadd.f32 %v1824, %v2015
      %v2058 = vadd.f32 %v1825, %v2020
      %v2059 = vadd.f32 %v1826, %v2025
      %v2060 = vadd.f32 %v1827, %v2030
      %v2061 = vadd.f32 %v1828, %v2035
      %v2062 = vadd.f32 %v1829, %v2040
      %v2063 = vadd.f32 %v1830, %v2045
    $region61: #{autoencoder_forward.1} parent=1 // loop_footer
      %s1814 = sadd.s32 1, %s1810
    $region62: #{autoencoder_forward.1} parent=1 // loop_footer_branch
      %1809 = sbr.rel target = $region58
    $region63: #{autoencoder_forward.1} parent=1 // loop_exit
      _
    %2064 = vst.msk [vmem:[#allocation4 + $0x80] sm:$0xff] %vm131, %v1815
    %2065 = vst.msk [vmem:[#allocation4 + $0x88] sm:$0xff] %vm131, %v1816
    %2066 = vst.msk [vmem:[#allocation4 + $0x90] sm:$0xff] %vm131, %v1817
    %2067 = vst.msk [vmem:[#allocation4 + $0x98] sm:$0xff] %vm131, %v1818
    %2068 = vst.msk [vmem:[#allocation4 + $0xa0] sm:$0xff] %vm131, %v1819
    %2069 = vst.msk [vmem:[#allocation4 + $0xa8] sm:$0xff] %vm131, %v1820
    %2070 = vst.msk [vmem:[#allocation4 + $0xb0] sm:$0xff] %vm131, %v1821
    %2071 = vst.msk [vmem:[#allocation4 + $0xb8] sm:$0xff] %vm131, %v1822
    %2072 = vst.msk [vmem:[#allocation4 + $0xc0] sm:$0xff] %vm131, %v1823
    %2073 = vst.msk [vmem:[#allocation4 + $0xc8] sm:$0xff] %vm131, %v1824
    %2074 = vst.msk [vmem:[#allocation4 + $0xd0] sm:$0xff] %vm131, %v1825
    %2075 = vst.msk [vmem:[#allocation4 + $0xd8] sm:$0xff] %vm131, %v1826
    %2076 = vst.msk [vmem:[#allocation4 + $0xe0] sm:$0xff] %vm131, %v1827
    %2077 = vst.msk [vmem:[#allocation4 + $0xe8] sm:$0xff] %vm131, %v1828
    %2078 = vst.msk [vmem:[#allocation4 + $0xf0] sm:$0xff] %vm131, %v1829
    %2079 = vst.msk [vmem:[#allocation4 + $0xf8] sm:$0xff] %vm131, %v1830
    %v2080 = vsel %vm131, %v1815, 0.0
    %v2081 = vsel %vm131, %v1816, 0.0
    %v2082 = vadd.f32 %v2080, %v2081
    %v2083 = vsel %vm131, %v1817, 0.0
    %v2084 = vadd.f32 %v2082, %v2083
    %v2085 = vsel %vm131, %v1818, 0.0
    %v2086 = vadd.f32 %v2084, %v2085
    %v2087 = vsel %vm131, %v1819, 0.0
    %v2088 = vadd.f32 %v2086, %v2087
    %v2089 = vsel %vm131, %v1820, 0.0
    %v2090 = vadd.f32 %v2088, %v2089
    %v2091 = vsel %vm131, %v1821, 0.0
    %v2092 = vadd.f32 %v2090, %v2091
    %v2093 = vsel %vm131, %v1822, 0.0
    %v2094 = vadd.f32 %v2092, %v2093
    %v2095 = vsel %vm131, %v1823, 0.0
    %v2096 = vadd.f32 %v2094, %v2095
    %v2097 = vsel %vm131, %v1824, 0.0
    %v2098 = vadd.f32 %v2096, %v2097
    %v2099 = vsel %vm131, %v1825, 0.0
    %v2100 = vadd.f32 %v2098, %v2099
    %v2101 = vsel %vm131, %v1826, 0.0
    %v2102 = vadd.f32 %v2100, %v2101
    %v2103 = vsel %vm131, %v1827, 0.0
    %v2104 = vadd.f32 %v2102, %v2103
    %v2105 = vsel %vm131, %v1828, 0.0
    %v2106 = vadd.f32 %v2104, %v2105
    %v2107 = vsel %vm131, %v1829, 0.0
    %v2108 = vadd.f32 %v2106, %v2107
    %v2109 = vsel %vm131, %v1830, 0.0
    %v2110 = vadd.f32 %v2108, %v2109
    %v2111 = vrot.slane %v2110, 4
    %v2112 = vadd.f32 %v2110, %v2111
    %v2113 = vrot.slane %v2112, 2
    %v2114 = vadd.f32 %v2112, %v2113
    %v2115 = vrot.slane %v2114, 1
    %v2116 = vadd.f32 %v2114, %v2115
    %v2117 = vadd.f32 %v1754, %v2116
    %v2118 = vmul.f32 %v1815, %v1815
    %v2119 = vmul.f32 %v1816, %v1816
    %v2120 = vmul.f32 %v1817, %v1817
    %v2121 = vmul.f32 %v1818, %v1818
    %v2122 = vmul.f32 %v1819, %v1819
    %v2123 = vmul.f32 %v1820, %v1820
    %v2124 = vmul.f32 %v1821, %v1821
    %v2125 = vmul.f32 %v1822, %v1822
    %v2126 = vmul.f32 %v1823, %v1823
    %v2127 = vmul.f32 %v1824, %v1824
    %v2128 = vmul.f32 %v1825, %v1825
    %v2129 = vmul.f32 %v1826, %v1826
    %v2130 = vmul.f32 %v1827, %v1827
    %v2131 = vmul.f32 %v1828, %v1828
    %v2132 = vmul.f32 %v1829, %v1829
    %v2133 = vmul.f32 %v1830, %v1830
    %v2134 = vsel %vm131, %v2118, 0.0
    %v2135 = vsel %vm131, %v2119, 0.0
    %v2136 = vadd.f32 %v2134, %v2135
    %v2137 = vsel %vm131, %v2120, 0.0
    %v2138 = vadd.f32 %v2136, %v2137
    %v2139 = vsel %vm131, %v2121, 0.0
    %v2140 = vadd.f32 %v2138, %v2139
    %v2141 = vsel %vm131, %v2122, 0.0
    %v2142 = vadd.f32 %v2140, %v2141
    %v2143 = vsel %vm131, %v2123, 0.0
    %v2144 = vadd.f32 %v2142, %v2143
    %v2145 = vsel %vm131, %v2124, 0.0
    %v2146 = vadd.f32 %v2144, %v2145
    %v2147 = vsel %vm131, %v2125, 0.0
    %v2148 = vadd.f32 %v2146, %v2147
    %v2149 = vsel %vm131, %v2126, 0.0
    %v2150 = vadd.f32 %v2148, %v2149
    %v2151 = vsel %vm131, %v2127, 0.0
    %v2152 = vadd.f32 %v2150, %v2151
    %v2153 = vsel %vm131, %v2128, 0.0
    %v2154 = vadd.f32 %v2152, %v2153
    %v2155 = vsel %vm131, %v2129, 0.0
    %v2156 = vadd.f32 %v2154, %v2155
    %v2157 = vsel %vm131, %v2130, 0.0
    %v2158 = vadd.f32 %v2156, %v2157
    %v2159 = vsel %vm131, %v2131, 0.0
    %v2160 = vadd.f32 %v2158, %v2159
    %v2161 = vsel %vm131, %v2132, 0.0
    %v2162 = vadd.f32 %v2160, %v2161
    %v2163 = vsel %vm131, %v2133, 0.0
    %v2164 = vadd.f32 %v2162, %v2163
    %v2165 = vrot.slane %v2164, 4
    %v2166 = vadd.f32 %v2164, %v2165
    %v2167 = vrot.slane %v2166, 2
    %v2168 = vadd.f32 %v2166, %v2167
    %v2169 = vrot.slane %v2168, 1
    %v2170 = vadd.f32 %v2168, %v2169
    %v2171 = vadd.f32 %v1808, %v2170
    loop: start=0, step=1, limit=26
    $region64: #{autoencoder_forward.1} parent=1 // loop_pre_header
      _
    $region65: #{autoencoder_forward.1} parent=1 // loop_header
      %s2173 = sphi 0, %s2177
      %p2174 = scmp.ge.s32.totalorder %s2173, 26
      %v2178 = vphi 0.0, %v2411
      %v2179 = vphi 0.0, %v2412
      %v2180 = vphi 0.0, %v2413
      %v2181 = vphi 0.0, %v2414
      %v2182 = vphi 0.0, %v2415
      %v2183 = vphi 0.0, %v2416
      %v2184 = vphi 0.0, %v2417
      %v2185 = vphi 0.0, %v2418
      %v2186 = vphi 0.0, %v2419
      %v2187 = vphi 0.0, %v2420
      %v2188 = vphi 0.0, %v2421
      %v2189 = vphi 0.0, %v2422
      %v2190 = vphi 0.0, %v2423
      %v2191 = vphi 0.0, %v2424
      %v2192 = vphi 0.0, %v2425
      %v2193 = vphi 0.0, %v2426
    $region66: #{autoencoder_forward.1} parent=1 // loop_header_branch
      %2176 = sbr.rel (%p2174) target = $region70
    $region67: #{autoencoder_forward.1} parent=1 // loop_body
      %s2194 = sadd.s32 %s2173, 256
      %s2195 = scalar_lea.vmem [#allocation3], %s2194
      %v2196 = vld [vmem:[%s2195] sm:$0xff]
      %v2197 = vld [vmem:[%s2195 + $0x8] sm:$0xff]
      %v2198 = vld [vmem:[%s2195 + $0x10] sm:$0xff]
      %v2199 = vld [vmem:[%s2195 + $0x18] sm:$0xff]
      %v2200 = vld [vmem:[%s2195 + $0x20] sm:$0xff]
      %v2201 = vld [vmem:[%s2195 + $0x28] sm:$0xff]
      %v2202 = vld [vmem:[%s2195 + $0x30] sm:$0xff]
      %v2203 = vld [vmem:[%s2195 + $0x38] sm:$0xff]
      %v2204 = vld [vmem:[%s2195 + $0x40] sm:$0xff]
      %v2205 = vld [vmem:[%s2195 + $0x48] sm:$0xff]
      %v2206 = vld [vmem:[%s2195 + $0x50] sm:$0xff]
      %v2207 = vld [vmem:[%s2195 + $0x58] sm:$0xff]
      %v2208 = vld [vmem:[%s2195 + $0x60] sm:$0xff]
      %v2209 = vld [vmem:[%s2195 + $0x68] sm:$0xff]
      %v2210 = vld [vmem:[%s2195 + $0x70] sm:$0xff]
      %v2211 = vld [vmem:[%s2195 + $0x78] sm:$0xff]
      %s2212 = smul.u32 %s2173, 32
      %s2213 = scalar_lea.vmem %s2, %s2212
      %v2214 = vld [vmem:[%s2213] sm:$0xff]
      %v2215 = vld [vmem:[%s2213 + $0x8] sm:$0xff]
      %v2216 = vld [vmem:[%s2213 + $0x10] sm:$0xff]
      %v2217 = vld [vmem:[%s2213 + $0x18] sm:$0xff]
      %v2219 = vsel %vm21, %v2196, 0
      %v2222 = vsel %vm21, %v2197, 0
      %v2225 = vsel %vm21, %v2198, 0
      %v2228 = vsel %vm21, %v2199, 0
      %v2231 = vsel %vm21, %v2200, 0
      %v2234 = vsel %vm21, %v2201, 0
      %v2237 = vsel %vm21, %v2202, 0
      %v2240 = vsel %vm21, %v2203, 0
      %v2243 = vsel %vm21, %v2204, 0
      %v2246 = vsel %vm21, %v2205, 0
      %v2249 = vsel %vm21, %v2206, 0
      %v2252 = vsel %vm21, %v2207, 0
      %v2255 = vsel %vm21, %v2208, 0
      %v2258 = vsel %vm21, %v2209, 0
      %v2261 = vsel %vm21, %v2210, 0
      %v2264 = vsel %vm21, %v2211, 0
      %2266 = vmatprep.subr.mxu0 0.0
      %2267 = vmatpush1.msra.mxu0 %v2214
      %2268 = vmatprep.subr.mxu0 0.0
      %2269 = vmatpush1.msra.mxu0 %v2215
      %2270 = vmatprep.subr.mxu0 0.0
      %2271 = vmatpush1.msra.mxu0 %v2216
      %2272 = vmatprep.subr.mxu0 0.0
      %2273 = vmatpush1.msra.mxu0 %v2217
      %2274 = vmatprep.subr.mxu0 0.0
      %2275 = vmatpush1.msra.mxu0 0.0
      %2276 = vmatprep.subr.mxu0 0.0
      %2277 = vmatpush1.msra.mxu0 0.0
      %2278 = vmatprep.subr.mxu0 0.0
      %2279 = vmatpush1.msra.mxu0 0.0
      %2280 = vmatprep.subr.mxu0 0.0
      %2281 = vmatpush1.msra.mxu0 0.0
      %2282 = vmatprep.subr.mxu0 0.0
      %2283 = vmatpush1.msra.mxu0 0.0
      %2284 = vmatprep.subr.mxu0 0.0
      %2285 = vmatpush1.msra.mxu0 0.0
      %2286 = vmatprep.subr.mxu0 0.0
      %2287 = vmatpush1.msra.mxu0 0.0
      %2288 = vmatprep.subr.mxu0 0.0
      %2289 = vmatpush1.msra.mxu0 0.0
      %2290 = vmatprep.subr.mxu0 0.0
      %2291 = vmatpush1.msra.mxu0 0.0
      %2292 = vmatprep.subr.mxu0 0.0
      %2293 = vmatpush1.msra.mxu0 0.0
      %2294 = vmatprep.subr.mxu0 0.0
      %2295 = vmatpush1.msra.mxu0 0.0
      %2296 = vmatprep.subr.mxu0 0.0
      %2297 = vmatpush1.msra.mxu0 0.0
      %2298 = vmatprep.subr.mxu0 0.0
      %2299 = vmatpush1.msra.mxu0 0.0
      %2300 = vmatprep.subr.mxu0 0.0
      %2301 = vmatpush1.msra.mxu0 0.0
      %2302 = vmatprep.subr.mxu0 0.0
      %2303 = vmatpush1.msra.mxu0 0.0
      %2304 = vmatprep.subr.mxu0 0.0
      %2305 = vmatpush1.msra.mxu0 0.0
      %2306 = vmatprep.subr.mxu0 0.0
      %2307 = vmatpush1.msra.mxu0 0.0
      %2308 = vmatprep.subr.mxu0 0.0
      %2309 = vmatpush1.msra.mxu0 0.0
      %2310 = vmatprep.subr.mxu0 0.0
      %2311 = vmatpush1.msra.mxu0 0.0
      %2312 = vmatprep.subr.mxu0 0.0
      %2313 = vmatpush1.msra.mxu0 0.0
      %2314 = vmatprep.subr.mxu0 0.0
      %2315 = vmatpush1.msra.mxu0 0.0
      %2316 = vmatprep.subr.mxu0 0.0
      %2317 = vmatpush1.msra.mxu0 0.0
      %2318 = vmatprep.subr.mxu0 0.0
      %2319 = vmatpush1.msra.mxu0 0.0
      %2320 = vmatprep.subr.mxu0 0.0
      %2321 = vmatpush1.msra.mxu0 0.0
      %2322 = vmatprep.subr.mxu0 0.0
      %2323 = vmatpush1.msra.mxu0 0.0
      %2324 = vmatprep.subr.mxu0 0.0
      %2325 = vmatpush1.msra.mxu0 0.0
      %2326 = vmatprep.subr.mxu0 0.0
      %2327 = vmatpush1.msra.mxu0 0.0
      %2328 = vmatprep.subr.mxu0 0.0
      %2329 = vmatpush1.msra.mxu0 0.0
      %2330 = vmatprep.mubr.f32.mxu0 0.0
      %2331 = vmatmul.mubr.f32.gmra.mrb[0].mxu0 %v2219
      %v2332 = vpop.f32.mrb[0].mxu0
      %v2333 = vadd.f32 0.0, %v2332
      %v2334 = vpop.f32.mrb[0].mxu0
      %2335 = vmatprep.mubr.f32.mxu0 0.0
      %2336 = vmatmul.mubr.f32.gmra.mrb[0].mxu0 %v2222
      %v2337 = vpop.f32.mrb[0].mxu0
      %v2338 = vadd.f32 0.0, %v2337
      %v2339 = vpop.f32.mrb[0].mxu0
      %2340 = vmatprep.mubr.f32.mxu0 0.0
      %2341 = vmatmul.mubr.f32.gmra.mrb[0].mxu0 %v2225
      %v2342 = vpop.f32.mrb[0].mxu0
      %v2343 = vadd.f32 0.0, %v2342
      %v2344 = vpop.f32.mrb[0].mxu0
      %2345 = vmatprep.mubr.f32.mxu0 0.0
      %2346 = vmatmul.mubr.f32.gmra.mrb[0].mxu0 %v2228
      %v2347 = vpop.f32.mrb[0].mxu0
      %v2348 = vadd.f32 0.0, %v2347
      %v2349 = vpop.f32.mrb[0].mxu0
      %2350 = vmatprep.mubr.f32.mxu0 0.0
      %2351 = vmatmul.mubr.f32.gmra.mrb[0].mxu0 %v2231
      %v2352 = vpop.f32.mrb[0].mxu0
      %v2353 = vadd.f32 0.0, %v2352
      %v2354 = vpop.f32.mrb[0].mxu0
      %2355 = vmatprep.mubr.f32.mxu0 0.0
      %2356 = vmatmul.mubr.f32.gmra.mrb[0].mxu0 %v2234
      %v2357 = vpop.f32.mrb[0].mxu0
      %v2358 = vadd.f32 0.0, %v2357
      %v2359 = vpop.f32.mrb[0].mxu0
      %2360 = vmatprep.mubr.f32.mxu0 0.0
      %2361 = vmatmul.mubr.f32.gmra.mrb[0].mxu0 %v2237
      %v2362 = vpop.f32.mrb[0].mxu0
      %v2363 = vadd.f32 0.0, %v2362
      %v2364 = vpop.f32.mrb[0].mxu0
      %2365 = vmatprep.mubr.f32.mxu0 0.0
      %2366 = vmatmul.mubr.f32.gmra.mrb[0].mxu0 %v2240
      %v2367 = vpop.f32.mrb[0].mxu0
      %v2368 = vadd.f32 0.0, %v2367
      %v2369 = vpop.f32.mrb[0].mxu0
      %2370 = vmatprep.mubr.f32.mxu0 0.0
      %2371 = vmatmul.mubr.f32.gmra.mrb[0].mxu0 %v2243
      %v2372 = vpop.f32.mrb[0].mxu0
      %v2373 = vadd.f32 0.0, %v2372
      %v2374 = vpop.f32.mrb[0].mxu0
      %2375 = vmatprep.mubr.f32.mxu0 0.0
      %2376 = vmatmul.mubr.f32.gmra.mrb[0].mxu0 %v2246
      %v2377 = vpop.f32.mrb[0].mxu0
      %v2378 = vadd.f32 0.0, %v2377
      %v2379 = vpop.f32.mrb[0].mxu0
      %2380 = vmatprep.mubr.f32.mxu0 0.0
      %2381 = vmatmul.mubr.f32.gmra.mrb[0].mxu0 %v2249
      %v2382 = vpop.f32.mrb[0].mxu0
      %v2383 = vadd.f32 0.0, %v2382
      %v2384 = vpop.f32.mrb[0].mxu0
      %2385 = vmatprep.mubr.f32.mxu0 0.0
      %2386 = vmatmul.mubr.f32.gmra.mrb[0].mxu0 %v2252
      %v2387 = vpop.f32.mrb[0].mxu0
      %v2388 = vadd.f32 0.0, %v2387
      %v2389 = vpop.f32.mrb[0].mxu0
      %2390 = vmatprep.mubr.f32.mxu0 0.0
      %2391 = vmatmul.mubr.f32.gmra.mrb[0].mxu0 %v2255
      %v2392 = vpop.f32.mrb[0].mxu0
      %v2393 = vadd.f32 0.0, %v2392
      %v2394 = vpop.f32.mrb[0].mxu0
      %2395 = vmatprep.mubr.f32.mxu0 0.0
      %2396 = vmatmul.mubr.f32.gmra.mrb[0].mxu0 %v2258
      %v2397 = vpop.f32.mrb[0].mxu0
      %v2398 = vadd.f32 0.0, %v2397
      %v2399 = vpop.f32.mrb[0].mxu0
      %2400 = vmatprep.mubr.f32.mxu0 0.0
      %2401 = vmatmul.mubr.f32.gmra.mrb[0].mxu0 %v2261
      %v2402 = vpop.f32.mrb[0].mxu0
      %v2403 = vadd.f32 0.0, %v2402
      %v2404 = vpop.f32.mrb[0].mxu0
      %2405 = vmatprep.mubr.f32.mxu0 0.0
      %2406 = vmatmul.mubr.f32.gmra.mrb[0].mxu0 %v2264
      %v2407 = vpop.f32.mrb[0].mxu0
      %v2408 = vadd.f32 0.0, %v2407
      %v2409 = vpop.f32.mrb[0].mxu0
      %2410 = vdwg.mxu0
      %v2411 = vadd.f32 %v2178, %v2333
      %v2412 = vadd.f32 %v2179, %v2338
      %v2413 = vadd.f32 %v2180, %v2343
      %v2414 = vadd.f32 %v2181, %v2348
      %v2415 = vadd.f32 %v2182, %v2353
      %v2416 = vadd.f32 %v2183, %v2358
      %v2417 = vadd.f32 %v2184, %v2363
      %v2418 = vadd.f32 %v2185, %v2368
      %v2419 = vadd.f32 %v2186, %v2373
      %v2420 = vadd.f32 %v2187, %v2378
      %v2421 = vadd.f32 %v2188, %v2383
      %v2422 = vadd.f32 %v2189, %v2388
      %v2423 = vadd.f32 %v2190, %v2393
      %v2424 = vadd.f32 %v2191, %v2398
      %v2425 = vadd.f32 %v2192, %v2403
      %v2426 = vadd.f32 %v2193, %v2408
    $region68: #{autoencoder_forward.1} parent=1 // loop_footer
      %s2177 = sadd.s32 1, %s2173
    $region69: #{autoencoder_forward.1} parent=1 // loop_footer_branch
      %2172 = sbr.rel target = $region65
    $region70: #{autoencoder_forward.1} parent=1 // loop_exit
      _
    %2427 = vst.msk [vmem:[#allocation4 + $0x100] sm:$0xff] %vm131, %v2178
    %2428 = vst.msk [vmem:[#allocation4 + $0x108] sm:$0xff] %vm131, %v2179
    %2429 = vst.msk [vmem:[#allocation4 + $0x110] sm:$0xff] %vm131, %v2180
    %2430 = vst.msk [vmem:[#allocation4 + $0x118] sm:$0xff] %vm131, %v2181
    %2431 = vst.msk [vmem:[#allocation4 + $0x120] sm:$0xff] %vm131, %v2182
    %2432 = vst.msk [vmem:[#allocation4 + $0x128] sm:$0xff] %vm131, %v2183
    %2433 = vst.msk [vmem:[#allocation4 + $0x130] sm:$0xff] %vm131, %v2184
    %2434 = vst.msk [vmem:[#allocation4 + $0x138] sm:$0xff] %vm131, %v2185
    %2435 = vst.msk [vmem:[#allocation4 + $0x140] sm:$0xff] %vm131, %v2186
    %2436 = vst.msk [vmem:[#allocation4 + $0x148] sm:$0xff] %vm131, %v2187
    %2437 = vst.msk [vmem:[#allocation4 + $0x150] sm:$0xff] %vm131, %v2188
    %2438 = vst.msk [vmem:[#allocation4 + $0x158] sm:$0xff] %vm131, %v2189
    %2439 = vst.msk [vmem:[#allocation4 + $0x160] sm:$0xff] %vm131, %v2190
    %2440 = vst.msk [vmem:[#allocation4 + $0x168] sm:$0xff] %vm131, %v2191
    %2441 = vst.msk [vmem:[#allocation4 + $0x170] sm:$0xff] %vm131, %v2192
    %2442 = vst.msk [vmem:[#allocation4 + $0x178] sm:$0xff] %vm131, %v2193
    %v2443 = vsel %vm131, %v2178, 0.0
    %v2444 = vsel %vm131, %v2179, 0.0
    %v2445 = vadd.f32 %v2443, %v2444
    %v2446 = vsel %vm131, %v2180, 0.0
    %v2447 = vadd.f32 %v2445, %v2446
    %v2448 = vsel %vm131, %v2181, 0.0
    %v2449 = vadd.f32 %v2447, %v2448
    %v2450 = vsel %vm131, %v2182, 0.0
    %v2451 = vadd.f32 %v2449, %v2450
    %v2452 = vsel %vm131, %v2183, 0.0
    %v2453 = vadd.f32 %v2451, %v2452
    %v2454 = vsel %vm131, %v2184, 0.0
    %v2455 = vadd.f32 %v2453, %v2454
    %v2456 = vsel %vm131, %v2185, 0.0
    %v2457 = vadd.f32 %v2455, %v2456
    %v2458 = vsel %vm131, %v2186, 0.0
    %v2459 = vadd.f32 %v2457, %v2458
    %v2460 = vsel %vm131, %v2187, 0.0
    %v2461 = vadd.f32 %v2459, %v2460
    %v2462 = vsel %vm131, %v2188, 0.0
    %v2463 = vadd.f32 %v2461, %v2462
    %v2464 = vsel %vm131, %v2189, 0.0
    %v2465 = vadd.f32 %v2463, %v2464
    %v2466 = vsel %vm131, %v2190, 0.0
    %v2467 = vadd.f32 %v2465, %v2466
    %v2468 = vsel %vm131, %v2191, 0.0
    %v2469 = vadd.f32 %v2467, %v2468
    %v2470 = vsel %vm131, %v2192, 0.0
    %v2471 = vadd.f32 %v2469, %v2470
    %v2472 = vsel %vm131, %v2193, 0.0
    %v2473 = vadd.f32 %v2471, %v2472
    %v2474 = vrot.slane %v2473, 4
    %v2475 = vadd.f32 %v2473, %v2474
    %v2476 = vrot.slane %v2475, 2
    %v2477 = vadd.f32 %v2475, %v2476
    %v2478 = vrot.slane %v2477, 1
    %v2479 = vadd.f32 %v2477, %v2478
    %v2480 = vadd.f32 %v2117, %v2479
    %v2481 = vmul.f32 %v2178, %v2178
    %v2482 = vmul.f32 %v2179, %v2179
    %v2483 = vmul.f32 %v2180, %v2180
    %v2484 = vmul.f32 %v2181, %v2181
    %v2485 = vmul.f32 %v2182, %v2182
    %v2486 = vmul.f32 %v2183, %v2183
    %v2487 = vmul.f32 %v2184, %v2184
    %v2488 = vmul.f32 %v2185, %v2185
    %v2489 = vmul.f32 %v2186, %v2186
    %v2490 = vmul.f32 %v2187, %v2187
    %v2491 = vmul.f32 %v2188, %v2188
    %v2492 = vmul.f32 %v2189, %v2189
    %v2493 = vmul.f32 %v2190, %v2190
    %v2494 = vmul.f32 %v2191, %v2191
    %v2495 = vmul.f32 %v2192, %v2192
    %v2496 = vmul.f32 %v2193, %v2193
    %v2497 = vsel %vm131, %v2481, 0.0
    %v2498 = vsel %vm131, %v2482, 0.0
    %v2499 = vadd.f32 %v2497, %v2498
    %v2500 = vsel %vm131, %v2483, 0.0
    %v2501 = vadd.f32 %v2499, %v2500
    %v2502 = vsel %vm131, %v2484, 0.0
    %v2503 = vadd.f32 %v2501, %v2502
    %v2504 = vsel %vm131, %v2485, 0.0
    %v2505 = vadd.f32 %v2503, %v2504
    %v2506 = vsel %vm131, %v2486, 0.0
    %v2507 = vadd.f32 %v2505, %v2506
    %v2508 = vsel %vm131, %v2487, 0.0
    %v2509 = vadd.f32 %v2507, %v2508
    %v2510 = vsel %vm131, %v2488, 0.0
    %v2511 = vadd.f32 %v2509, %v2510
    %v2512 = vsel %vm131, %v2489, 0.0
    %v2513 = vadd.f32 %v2511, %v2512
    %v2514 = vsel %vm131, %v2490, 0.0
    %v2515 = vadd.f32 %v2513, %v2514
    %v2516 = vsel %vm131, %v2491, 0.0
    %v2517 = vadd.f32 %v2515, %v2516
    %v2518 = vsel %vm131, %v2492, 0.0
    %v2519 = vadd.f32 %v2517, %v2518
    %v2520 = vsel %vm131, %v2493, 0.0
    %v2521 = vadd.f32 %v2519, %v2520
    %v2522 = vsel %vm131, %v2494, 0.0
    %v2523 = vadd.f32 %v2521, %v2522
    %v2524 = vsel %vm131, %v2495, 0.0
    %v2525 = vadd.f32 %v2523, %v2524
    %v2526 = vsel %vm131, %v2496, 0.0
    %v2527 = vadd.f32 %v2525, %v2526
    %v2528 = vrot.slane %v2527, 4
    %v2529 = vadd.f32 %v2527, %v2528
    %v2530 = vrot.slane %v2529, 2
    %v2531 = vadd.f32 %v2529, %v2530
    %v2532 = vrot.slane %v2531, 1
    %v2533 = vadd.f32 %v2531, %v2532
    %v2534 = vadd.f32 %v2171, %v2533
    loop: start=0, step=1, limit=26
    $region71: #{autoencoder_forward.1} parent=1 // loop_pre_header
      _
    $region72: #{autoencoder_forward.1} parent=1 // loop_header
      %s2536 = sphi 0, %s2540
      %p2537 = scmp.ge.s32.totalorder %s2536, 26
      %v2541 = vphi 0.0, %v2644
      %v2542 = vphi 0.0, %v2645
      %v2543 = vphi 0.0, %v2646
    $region73: #{autoencoder_forward.1} parent=1 // loop_header_branch
      %2539 = sbr.rel (%p2537) target = $region77
    $region74: #{autoencoder_forward.1} parent=1 // loop_body
      %s2544 = sadd.s32 %s2536, 384
      %s2545 = scalar_lea.vmem [#allocation3], %s2544
      %v2546 = vld [vmem:[%s2545] sm:$0xff]
      %v2547 = vld [vmem:[%s2545 + $0x8] sm:$0xff]
      %v2548 = vld [vmem:[%s2545 + $0x10] sm:$0x3]
      %s2549 = smul.u32 %s2536, 32
      %s2550 = scalar_lea.vmem %s2, %s2549
      %v2551 = vld [vmem:[%s2550] sm:$0xff]
      %v2552 = vld [vmem:[%s2550 + $0x8] sm:$0xff]
      %v2553 = vld [vmem:[%s2550 + $0x10] sm:$0xff]
      %v2554 = vld [vmem:[%s2550 + $0x18] sm:$0xff]
      %v2556 = vsel %vm21, %v2546, 0
      %v2559 = vsel %vm21, %v2547, 0
      %v2562 = vsel %vm21, %v2548, 0
      %2564 = vmatprep.subr.mxu0 0.0
      %2565 = vmatpush1.msra.mxu0 %v2551
      %2566 = vmatprep.subr.mxu0 0.0
      %2567 = vmatpush1.msra.mxu0 %v2552
      %2568 = vmatprep.subr.mxu0 0.0
      %2569 = vmatpush1.msra.mxu0 %v2553
      %2570 = vmatprep.subr.mxu0 0.0
      %2571 = vmatpush1.msra.mxu0 %v2554
      %2572 = vmatprep.subr.mxu0 0.0
      %2573 = vmatpush1.msra.mxu0 0.0
      %2574 = vmatprep.subr.mxu0 0.0
      %2575 = vmatpush1.msra.mxu0 0.0
      %2576 = vmatprep.subr.mxu0 0.0
      %2577 = vmatpush1.msra.mxu0 0.0
      %2578 = vmatprep.subr.mxu0 0.0
      %2579 = vmatpush1.msra.mxu0 0.0
      %2580 = vmatprep.subr.mxu0 0.0
      %2581 = vmatpush1.msra.mxu0 0.0
      %2582 = vmatprep.subr.mxu0 0.0
      %2583 = vmatpush1.msra.mxu0 0.0
      %2584 = vmatprep.subr.mxu0 0.0
      %2585 = vmatpush1.msra.mxu0 0.0
      %2586 = vmatprep.subr.mxu0 0.0
      %2587 = vmatpush1.msra.mxu0 0.0
      %2588 = vmatprep.subr.mxu0 0.0
      %2589 = vmatpush1.msra.mxu0 0.0
      %2590 = vmatprep.subr.mxu0 0.0
      %2591 = vmatpush1.msra.mxu0 0.0
      %2592 = vmatprep.subr.mxu0 0.0
      %2593 = vmatpush1.msra.mxu0 0.0
      %2594 = vmatprep.subr.mxu0 0.0
      %2595 = vmatpush1.msra.mxu0 0.0
      %2596 = vmatprep.subr.mxu0 0.0
      %2597 = vmatpush1.msra.mxu0 0.0
      %2598 = vmatprep.subr.mxu0 0.0
      %2599 = vmatpush1.msra.mxu0 0.0
      %2600 = vmatprep.subr.mxu0 0.0
      %2601 = vmatpush1.msra.mxu0 0.0
      %2602 = vmatprep.subr.mxu0 0.0
      %2603 = vmatpush1.msra.mxu0 0.0
      %2604 = vmatprep.subr.mxu0 0.0
      %2605 = vmatpush1.msra.mxu0 0.0
      %2606 = vmatprep.subr.mxu0 0.0
      %2607 = vmatpush1.msra.mxu0 0.0
      %2608 = vmatprep.subr.mxu0 0.0
      %2609 = vmatpush1.msra.mxu0 0.0
      %2610 = vmatprep.subr.mxu0 0.0
      %2611 = vmatpush1.msra.mxu0 0.0
      %2612 = vmatprep.subr.mxu0 0.0
      %2613 = vmatpush1.msra.mxu0 0.0
      %2614 = vmatprep.subr.mxu0 0.0
      %2615 = vmatpush1.msra.mxu0 0.0
      %2616 = vmatprep.subr.mxu0 0.0
      %2617 = vmatpush1.msra.mxu0 0.0
      %2618 = vmatprep.subr.mxu0 0.0
      %2619 = vmatpush1.msra.mxu0 0.0
      %2620 = vmatprep.subr.mxu0 0.0
      %2621 = vmatpush1.msra.mxu0 0.0
      %2622 = vmatprep.subr.mxu0 0.0
      %2623 = vmatpush1.msra.mxu0 0.0
      %2624 = vmatprep.subr.mxu0 0.0
      %2625 = vmatpush1.msra.mxu0 0.0
      %2626 = vmatprep.subr.mxu0 0.0
      %2627 = vmatpush1.msra.mxu0 0.0
      %2628 = vmatprep.mubr.f32.mxu0 0.0
      %2629 = vmatmul.mubr.f32.gmra.mrb[0].mxu0 %v2556
      %v2630 = vpop.f32.mrb[0].mxu0
      %v2631 = vadd.f32 0.0, %v2630
      %v2632 = vpop.f32.mrb[0].mxu0
      %2633 = vmatprep.mubr.f32.mxu0 0.0
      %2634 = vmatmul.mubr.f32.gmra.mrb[0].mxu0 %v2559
      %v2635 = vpop.f32.mrb[0].mxu0
      %v2636 = vadd.f32 0.0, %v2635
      %v2637 = vpop.f32.mrb[0].mxu0
      %2638 = vmatprep.mubr.f32.mxu0 0.0
      %2639 = vmatmul.mubr.f32.gmra.mrb[0].mxu0 %v2562
      %v2640 = vpop.f32.mrb[0].mxu0
      %v2641 = vadd.f32 0.0, %v2640
      %v2642 = vpop.f32.mrb[0].mxu0
      %2643 = vdwg.mxu0
      %v2644 = vadd.f32 %v2541, %v2631
      %v2645 = vadd.f32 %v2542, %v2636
      %v2646 = vadd.f32 %v2543, %v2641
    $region75: #{autoencoder_forward.1} parent=1 // loop_footer
      %s2540 = sadd.s32 1, %s2536
    $region76: #{autoencoder_forward.1} parent=1 // loop_footer_branch
      %2535 = sbr.rel target = $region72
    $region77: #{autoencoder_forward.1} parent=1 // loop_exit
      _
    %2647 = vst.msk [vmem:[#allocation4 + $0x180] sm:$0xff] %vm131, %v2541
    %2648 = vst.msk [vmem:[#allocation4 + $0x188] sm:$0xff] %vm131, %v2542
    %2649 = vst.msk [vmem:[#allocation4 + $0x190] sm:$0x3] %vm139, %v2543
    %v2650 = vsel %vm131, %v2541, 0.0
    %v2651 = vsel %vm131, %v2542, 0.0
    %v2652 = vadd.f32 %v2650, %v2651
    %v2653 = vsel %vm139, %v2543, 0.0
    %v2654 = vadd.f32 %v2652, %v2653
    %v2655 = vrot.slane %v2654, 4
    %v2656 = vadd.f32 %v2654, %v2655
    %v2657 = vrot.slane %v2656, 2
    %v2658 = vadd.f32 %v2656, %v2657
    %v2659 = vrot.slane %v2658, 1
    %v2660 = vadd.f32 %v2658, %v2659
    %v2661 = vadd.f32 %v2480, %v2660
    %v2662 = vmul.f32 %v2541, %v2541
    %v2663 = vmul.f32 %v2542, %v2542
    %v2664 = vmul.f32 %v2543, %v2543
    %v2665 = vsel %vm131, %v2662, 0.0
    %v2666 = vsel %vm131, %v2663, 0.0
    %v2667 = vadd.f32 %v2665, %v2666
    %v2668 = vsel %vm139, %v2664, 0.0
    %v2669 = vadd.f32 %v2667, %v2668
    %v2670 = vrot.slane %v2669, 4
    %v2671 = vadd.f32 %v2669, %v2670
    %v2672 = vrot.slane %v2671, 2
    %v2673 = vadd.f32 %v2671, %v2672
    %v2674 = vrot.slane %v2673, 1
    %v2675 = vadd.f32 %v2673, %v2674
    %v2676 = vadd.f32 %v2534, %v2675
    loop: start=0, step=1, limit=26
    $region78: #{autoencoder_forward.1} parent=1 // loop_pre_header
      _
    $region79: #{autoencoder_forward.1} parent=1 // loop_header
      %s2678 = sphi 0, %s2682
      %p2679 = scmp.ge.s32.totalorder %s2678, 26
      %v2683 = vphi 0.0, %v2916
      %v2684 = vphi 0.0, %v2917
      %v2685 = vphi 0.0, %v2918
      %v2686 = vphi 0.0, %v2919
      %v2687 = vphi 0.0, %v2920
      %v2688 = vphi 0.0, %v2921
      %v2689 = vphi 0.0, %v2922
      %v2690 = vphi 0.0, %v2923
      %v2691 = vphi 0.0, %v2924
      %v2692 = vphi 0.0, %v2925
      %v2693 = vphi 0.0, %v2926
      %v2694 = vphi 0.0, %v2927
      %v2695 = vphi 0.0, %v2928
      %v2696 = vphi 0.0, %v2929
      %v2697 = vphi 0.0, %v2930
      %v2698 = vphi 0.0, %v2931
    $region80: #{autoencoder_forward.1} parent=1 // loop_header_branch
      %2681 = sbr.rel (%p2679) target = $region84
    $region81: #{autoencoder_forward.1} parent=1 // loop_body
      %s2699 = sadd.s32 %s2678, 432
      %s2700 = scalar_lea.vmem [#allocation3], %s2699
      %v2701 = vld [vmem:[%s2700] sm:$0xff]
      %v2702 = vld [vmem:[%s2700 + $0x8] sm:$0xff]
      %v2703 = vld [vmem:[%s2700 + $0x10] sm:$0xff]
      %v2704 = vld [vmem:[%s2700 + $0x18] sm:$0xff]
      %v2705 = vld [vmem:[%s2700 + $0x20] sm:$0xff]
      %v2706 = vld [vmem:[%s2700 + $0x28] sm:$0xff]
      %v2707 = vld [vmem:[%s2700 + $0x30] sm:$0xff]
      %v2708 = vld [vmem:[%s2700 + $0x38] sm:$0xff]
      %v2709 = vld [vmem:[%s2700 + $0x40] sm:$0xff]
      %v2710 = vld [vmem:[%s2700 + $0x48] sm:$0xff]
      %v2711 = vld [vmem:[%s2700 + $0x50] sm:$0xff]
      %v2712 = vld [vmem:[%s2700 + $0x58] sm:$0xff]
      %v2713 = vld [vmem:[%s2700 + $0x60] sm:$0xff]
      %v2714 = vld [vmem:[%s2700 + $0x68] sm:$0xff]
      %v2715 = vld [vmem:[%s2700 + $0x70] sm:$0xff]
      %v2716 = vld [vmem:[%s2700 + $0x78] sm:$0xff]
      %s2717 = smul.u32 %s2678, 32
      %s2718 = scalar_lea.vmem %s2, %s2717
      %v2719 = vld [vmem:[%s2718] sm:$0xff]
      %v2720 = vld [vmem:[%s2718 + $0x8] sm:$0xff]
      %v2721 = vld [vmem:[%s2718 + $0x10] sm:$0xff]
      %v2722 = vld [vmem:[%s2718 + $0x18] sm:$0xff]
      %v2724 = vsel %vm21, %v2701, 0
      %v2727 = vsel %vm21, %v2702, 0
      %v2730 = vsel %vm21, %v2703, 0
      %v2733 = vsel %vm21, %v2704, 0
      %v2736 = vsel %vm21, %v2705, 0
      %v2739 = vsel %vm21, %v2706, 0
      %v2742 = vsel %vm21, %v2707, 0
      %v2745 = vsel %vm21, %v2708, 0
      %v2748 = vsel %vm21, %v2709, 0
      %v2751 = vsel %vm21, %v2710, 0
      %v2754 = vsel %vm21, %v2711, 0
      %v2757 = vsel %vm21, %v2712, 0
      %v2760 = vsel %vm21, %v2713, 0
      %v2763 = vsel %vm21, %v2714, 0
      %v2766 = vsel %vm21, %v2715, 0
      %v2769 = vsel %vm21, %v2716, 0
      %2771 = vmatprep.subr.mxu0 0.0
      %2772 = vmatpush1.msra.mxu0 %v2719
      %2773 = vmatprep.subr.mxu0 0.0
      %2774 = vmatpush1.msra.mxu0 %v2720
      %2775 = vmatprep.subr.mxu0 0.0
      %2776 = vmatpush1.msra.mxu0 %v2721
      %2777 = vmatprep.subr.mxu0 0.0
      %2778 = vmatpush1.msra.mxu0 %v2722
      %2779 = vmatprep.subr.mxu0 0.0
      %2780 = vmatpush1.msra.mxu0 0.0
      %2781 = vmatprep.subr.mxu0 0.0
      %2782 = vmatpush1.msra.mxu0 0.0
      %2783 = vmatprep.subr.mxu0 0.0
      %2784 = vmatpush1.msra.mxu0 0.0
      %2785 = vmatprep.subr.mxu0 0.0
      %2786 = vmatpush1.msra.mxu0 0.0
      %2787 = vmatprep.subr.mxu0 0.0
      %2788 = vmatpush1.msra.mxu0 0.0
      %2789 = vmatprep.subr.mxu0 0.0
      %2790 = vmatpush1.msra.mxu0 0.0
      %2791 = vmatprep.subr.mxu0 0.0
      %2792 = vmatpush1.msra.mxu0 0.0
      %2793 = vmatprep.subr.mxu0 0.0
      %2794 = vmatpush1.msra.mxu0 0.0
      %2795 = vmatprep.subr.mxu0 0.0
      %2796 = vmatpush1.msra.mxu0 0.0
      %2797 = vmatprep.subr.mxu0 0.0
      %2798 = vmatpush1.msra.mxu0 0.0
      %2799 = vmatprep.subr.mxu0 0.0
      %2800 = vmatpush1.msra.mxu0 0.0
      %2801 = vmatprep.subr.mxu0 0.0
      %2802 = vmatpush1.msra.mxu0 0.0
      %2803 = vmatprep.subr.mxu0 0.0
      %2804 = vmatpush1.msra.mxu0 0.0
      %2805 = vmatprep.subr.mxu0 0.0
      %2806 = vmatpush1.msra.mxu0 0.0
      %2807 = vmatprep.subr.mxu0 0.0
      %2808 = vmatpush1.msra.mxu0 0.0
      %2809 = vmatprep.subr.mxu0 0.0
      %2810 = vmatpush1.msra.mxu0 0.0
      %2811 = vmatprep.subr.mxu0 0.0
      %2812 = vmatpush1.msra.mxu0 0.0
      %2813 = vmatprep.subr.mxu0 0.0
      %2814 = vmatpush1.msra.mxu0 0.0
      %2815 = vmatprep.subr.mxu0 0.0
      %2816 = vmatpush1.msra.mxu0 0.0
      %2817 = vmatprep.subr.mxu0 0.0
      %2818 = vmatpush1.msra.mxu0 0.0
      %2819 = vmatprep.subr.mxu0 0.0
      %2820 = vmatpush1.msra.mxu0 0.0
      %2821 = vmatprep.subr.mxu0 0.0
      %2822 = vmatpush1.msra.mxu0 0.0
      %2823 = vmatprep.subr.mxu0 0.0
      %2824 = vmatpush1.msra.mxu0 0.0
      %2825 = vmatprep.subr.mxu0 0.0
      %2826 = vmatpush1.msra.mxu0 0.0
      %2827 = vmatprep.subr.mxu0 0.0
      %2828 = vmatpush1.msra.mxu0 0.0
      %2829 = vmatprep.subr.mxu0 0.0
      %2830 = vmatpush1.msra.mxu0 0.0
      %2831 = vmatprep.subr.mxu0 0.0
      %2832 = vmatpush1.msra.mxu0 0.0
      %2833 = vmatprep.subr.mxu0 0.0
      %2834 = vmatpush1.msra.mxu0 0.0
      %2835 = vmatprep.mubr.f32.mxu0 0.0
      %2836 = vmatmul.mubr.f32.gmra.mrb[0].mxu0 %v2724
      %v2837 = vpop.f32.mrb[0].mxu0
      %v2838 = vadd.f32 0.0, %v2837
      %v2839 = vpop.f32.mrb[0].mxu0
      %2840 = vmatprep.mubr.f32.mxu0 0.0
      %2841 = vmatmul.mubr.f32.gmra.mrb[0].mxu0 %v2727
      %v2842 = vpop.f32.mrb[0].mxu0
      %v2843 = vadd.f32 0.0, %v2842
      %v2844 = vpop.f32.mrb[0].mxu0
      %2845 = vmatprep.mubr.f32.mxu0 0.0
      %2846 = vmatmul.mubr.f32.gmra.mrb[0].mxu0 %v2730
      %v2847 = vpop.f32.mrb[0].mxu0
      %v2848 = vadd.f32 0.0, %v2847
      %v2849 = vpop.f32.mrb[0].mxu0
      %2850 = vmatprep.mubr.f32.mxu0 0.0
      %2851 = vmatmul.mubr.f32.gmra.mrb[0].mxu0 %v2733
      %v2852 = vpop.f32.mrb[0].mxu0
      %v2853 = vadd.f32 0.0, %v2852
      %v2854 = vpop.f32.mrb[0].mxu0
      %2855 = vmatprep.mubr.f32.mxu0 0.0
      %2856 = vmatmul.mubr.f32.gmra.mrb[0].mxu0 %v2736
      %v2857 = vpop.f32.mrb[0].mxu0
      %v2858 = vadd.f32 0.0, %v2857
      %v2859 = vpop.f32.mrb[0].mxu0
      %2860 = vmatprep.mubr.f32.mxu0 0.0
      %2861 = vmatmul.mubr.f32.gmra.mrb[0].mxu0 %v2739
      %v2862 = vpop.f32.mrb[0].mxu0
      %v2863 = vadd.f32 0.0, %v2862
      %v2864 = vpop.f32.mrb[0].mxu0
      %2865 = vmatprep.mubr.f32.mxu0 0.0
      %2866 = vmatmul.mubr.f32.gmra.mrb[0].mxu0 %v2742
      %v2867 = vpop.f32.mrb[0].mxu0
      %v2868 = vadd.f32 0.0, %v2867
      %v2869 = vpop.f32.mrb[0].mxu0
      %2870 = vmatprep.mubr.f32.mxu0 0.0
      %2871 = vmatmul.mubr.f32.gmra.mrb[0].mxu0 %v2745
      %v2872 = vpop.f32.mrb[0].mxu0
      %v2873 = vadd.f32 0.0, %v2872
      %v2874 = vpop.f32.mrb[0].mxu0
      %2875 = vmatprep.mubr.f32.mxu0 0.0
      %2876 = vmatmul.mubr.f32.gmra.mrb[0].mxu0 %v2748
      %v2877 = vpop.f32.mrb[0].mxu0
      %v2878 = vadd.f32 0.0, %v2877
      %v2879 = vpop.f32.mrb[0].mxu0
      %2880 = vmatprep.mubr.f32.mxu0 0.0
      %2881 = vmatmul.mubr.f32.gmra.mrb[0].mxu0 %v2751
      %v2882 = vpop.f32.mrb[0].mxu0
      %v2883 = vadd.f32 0.0, %v2882
      %v2884 = vpop.f32.mrb[0].mxu0
      %2885 = vmatprep.mubr.f32.mxu0 0.0
      %2886 = vmatmul.mubr.f32.gmra.mrb[0].mxu0 %v2754
      %v2887 = vpop.f32.mrb[0].mxu0
      %v2888 = vadd.f32 0.0, %v2887
      %v2889 = vpop.f32.mrb[0].mxu0
      %2890 = vmatprep.mubr.f32.mxu0 0.0
      %2891 = vmatmul.mubr.f32.gmra.mrb[0].mxu0 %v2757
      %v2892 = vpop.f32.mrb[0].mxu0
      %v2893 = vadd.f32 0.0, %v2892
      %v2894 = vpop.f32.mrb[0].mxu0
      %2895 = vmatprep.mubr.f32.mxu0 0.0
      %2896 = vmatmul.mubr.f32.gmra.mrb[0].mxu0 %v2760
      %v2897 = vpop.f32.mrb[0].mxu0
      %v2898 = vadd.f32 0.0, %v2897
      %v2899 = vpop.f32.mrb[0].mxu0
      %2900 = vmatprep.mubr.f32.mxu0 0.0
      %2901 = vmatmul.mubr.f32.gmra.mrb[0].mxu0 %v2763
      %v2902 = vpop.f32.mrb[0].mxu0
      %v2903 = vadd.f32 0.0, %v2902
      %v2904 = vpop.f32.mrb[0].mxu0
      %2905 = vmatprep.mubr.f32.mxu0 0.0
      %2906 = vmatmul.mubr.f32.gmra.mrb[0].mxu0 %v2766
      %v2907 = vpop.f32.mrb[0].mxu0
      %v2908 = vadd.f32 0.0, %v2907
      %v2909 = vpop.f32.mrb[0].mxu0
      %2910 = vmatprep.mubr.f32.mxu0 0.0
      %2911 = vmatmul.mubr.f32.gmra.mrb[0].mxu0 %v2769
      %v2912 = vpop.f32.mrb[0].mxu0
      %v2913 = vadd.f32 0.0, %v2912
      %v2914 = vpop.f32.mrb[0].mxu0
      %2915 = vdwg.mxu0
      %v2916 = vadd.f32 %v2683, %v2838
      %v2917 = vadd.f32 %v2684, %v2843
      %v2918 = vadd.f32 %v2685, %v2848
      %v2919 = vadd.f32 %v2686, %v2853
      %v2920 = vadd.f32 %v2687, %v2858
      %v2921 = vadd.f32 %v2688, %v2863
      %v2922 = vadd.f32 %v2689, %v2868
      %v2923 = vadd.f32 %v2690, %v2873
      %v2924 = vadd.f32 %v2691, %v2878
      %v2925 = vadd.f32 %v2692, %v2883
      %v2926 = vadd.f32 %v2693, %v2888
      %v2927 = vadd.f32 %v2694, %v2893
      %v2928 = vadd.f32 %v2695, %v2898
      %v2929 = vadd.f32 %v2696, %v2903
      %v2930 = vadd.f32 %v2697, %v2908
      %v2931 = vadd.f32 %v2698, %v2913
    $region82: #{autoencoder_forward.1} parent=1 // loop_footer
      %s2682 = sadd.s32 1, %s2678
    $region83: #{autoencoder_forward.1} parent=1 // loop_footer_branch
      %2677 = sbr.rel target = $region79
    $region84: #{autoencoder_forward.1} parent=1 // loop_exit
      _
    %s2932 = scalar_lea.vmem [#allocation4], 408
    %2933 = vst.msk [vmem:[%s2932] sm:$0xff] %vm131, %v2683
    %2934 = vst.msk [vmem:[%s2932 + $0x8] sm:$0xff] %vm131, %v2684
    %2935 = vst.msk [vmem:[%s2932 + $0x10] sm:$0xff] %vm131, %v2685
    %2936 = vst.msk [vmem:[%s2932 + $0x18] sm:$0xff] %vm131, %v2686
    %2937 = vst.msk [vmem:[%s2932 + $0x20] sm:$0xff] %vm131, %v2687
    %2938 = vst.msk [vmem:[%s2932 + $0x28] sm:$0xff] %vm131, %v2688
    %2939 = vst.msk [vmem:[%s2932 + $0x30] sm:$0xff] %vm131, %v2689
    %2940 = vst.msk [vmem:[%s2932 + $0x38] sm:$0xff] %vm131, %v2690
    %2941 = vst.msk [vmem:[%s2932 + $0x40] sm:$0xff] %vm131, %v2691
    %2942 = vst.msk [vmem:[%s2932 + $0x48] sm:$0xff] %vm131, %v2692
    %2943 = vst.msk [vmem:[%s2932 + $0x50] sm:$0xff] %vm131, %v2693
    %2944 = vst.msk [vmem:[%s2932 + $0x58] sm:$0xff] %vm131, %v2694
    %2945 = vst.msk [vmem:[%s2932 + $0x60] sm:$0xff] %vm131, %v2695
    %2946 = vst.msk [vmem:[%s2932 + $0x68] sm:$0xff] %vm131, %v2696
    %2947 = vst.msk [vmem:[%s2932 + $0x70] sm:$0xff] %vm131, %v2697
    %2948 = vst.msk [vmem:[%s2932 + $0x78] sm:$0xff] %vm131, %v2698
    %v2949 = vsel %vm131, %v2683, 0.0
    %v2950 = vsel %vm131, %v2684, 0.0
    %v2951 = vadd.f32 %v2949, %v2950
    %v2952 = vsel %vm131, %v2685, 0.0
    %v2953 = vadd.f32 %v2951, %v2952
    %v2954 = vsel %vm131, %v2686, 0.0
    %v2955 = vadd.f32 %v2953, %v2954
    %v2956 = vsel %vm131, %v2687, 0.0
    %v2957 = vadd.f32 %v2955, %v2956
    %v2958 = vsel %vm131, %v2688, 0.0
    %v2959 = vadd.f32 %v2957, %v2958
    %v2960 = vsel %vm131, %v2689, 0.0
    %v2961 = vadd.f32 %v2959, %v2960
    %v2962 = vsel %vm131, %v2690, 0.0
    %v2963 = vadd.f32 %v2961, %v2962
    %v2964 = vsel %vm131, %v2691, 0.0
    %v2965 = vadd.f32 %v2963, %v2964
    %v2966 = vsel %vm131, %v2692, 0.0
    %v2967 = vadd.f32 %v2965, %v2966
    %v2968 = vsel %vm131, %v2693, 0.0
    %v2969 = vadd.f32 %v2967, %v2968
    %v2970 = vsel %vm131, %v2694, 0.0
    %v2971 = vadd.f32 %v2969, %v2970
    %v2972 = vsel %vm131, %v2695, 0.0
    %v2973 = vadd.f32 %v2971, %v2972
    %v2974 = vsel %vm131, %v2696, 0.0
    %v2975 = vadd.f32 %v2973, %v2974
    %v2976 = vsel %vm131, %v2697, 0.0
    %v2977 = vadd.f32 %v2975, %v2976
    %v2978 = vsel %vm131, %v2698, 0.0
    %v2979 = vadd.f32 %v2977, %v2978
    %v2980 = vrot.slane %v2979, 4
    %v2981 = vadd.f32 %v2979, %v2980
    %v2982 = vrot.slane %v2981, 2
    %v2983 = vadd.f32 %v2981, %v2982
    %v2984 = vrot.slane %v2983, 1
    %v2985 = vadd.f32 %v2983, %v2984
    %v2986 = vadd.f32 %v2661, %v2985
    %v2987 = vmul.f32 %v2683, %v2683
    %v2988 = vmul.f32 %v2684, %v2684
    %v2989 = vmul.f32 %v2685, %v2685
    %v2990 = vmul.f32 %v2686, %v2686
    %v2991 = vmul.f32 %v2687, %v2687
    %v2992 = vmul.f32 %v2688, %v2688
    %v2993 = vmul.f32 %v2689, %v2689
    %v2994 = vmul.f32 %v2690, %v2690
    %v2995 = vmul.f32 %v2691, %v2691
    %v2996 = vmul.f32 %v2692, %v2692
    %v2997 = vmul.f32 %v2693, %v2693
    %v2998 = vmul.f32 %v2694, %v2694
    %v2999 = vmul.f32 %v2695, %v2695
    %v3000 = vmul.f32 %v2696, %v2696
    %v3001 = vmul.f32 %v2697, %v2697
    %v3002 = vmul.f32 %v2698, %v2698
    %v3003 = vsel %vm131, %v2987, 0.0
    %v3004 = vsel %vm131, %v2988, 0.0
    %v3005 = vadd.f32 %v3003, %v3004
    %v3006 = vsel %vm131, %v2989, 0.0
    %v3007 = vadd.f32 %v3005, %v3006
    %v3008 = vsel %vm131, %v2990, 0.0
    %v3009 = vadd.f32 %v3007, %v3008
    %v3010 = vsel %vm131, %v2991, 0.0
    %v3011 = vadd.f32 %v3009, %v3010
    %v3012 = vsel %vm131, %v2992, 0.0
    %v3013 = vadd.f32 %v3011, %v3012
    %v3014 = vsel %vm131, %v2993, 0.0
    %v3015 = vadd.f32 %v3013, %v3014
    %v3016 = vsel %vm131, %v2994, 0.0
    %v3017 = vadd.f32 %v3015, %v3016
    %v3018 = vsel %vm131, %v2995, 0.0
    %v3019 = vadd.f32 %v3017, %v3018
    %v3020 = vsel %vm131, %v2996, 0.0
    %v3021 = vadd.f32 %v3019, %v3020
    %v3022 = vsel %vm131, %v2997, 0.0
    %v3023 = vadd.f32 %v3021, %v3022
    %v3024 = vsel %vm131, %v2998, 0.0
    %v3025 = vadd.f32 %v3023, %v3024
    %v3026 = vsel %vm131, %v2999, 0.0
    %v3027 = vadd.f32 %v3025, %v3026
    %v3028 = vsel %vm131, %v3000, 0.0
    %v3029 = vadd.f32 %v3027, %v3028
    %v3030 = vsel %vm131, %v3001, 0.0
    %v3031 = vadd.f32 %v3029, %v3030
    %v3032 = vsel %vm131, %v3002, 0.0
    %v3033 = vadd.f32 %v3031, %v3032
    %v3034 = vrot.slane %v3033, 4
    %v3035 = vadd.f32 %v3033, %v3034
    %v3036 = vrot.slane %v3035, 2
    %v3037 = vadd.f32 %v3035, %v3036
    %v3038 = vrot.slane %v3037, 1
    %v3039 = vadd.f32 %v3037, %v3038
    %v3040 = vadd.f32 %v2676, %v3039
    loop: start=0, step=1, limit=26
    $region85: #{autoencoder_forward.1} parent=1 // loop_pre_header
      _
    $region86: #{autoencoder_forward.1} parent=1 // loop_header
      %s3042 = sphi 0, %s3046
      %p3043 = scmp.ge.s32.totalorder %s3042, 26
      %v3047 = vphi 0.0, %v3281
      %v3048 = vphi 0.0, %v3282
      %v3049 = vphi 0.0, %v3283
      %v3050 = vphi 0.0, %v3284
      %v3051 = vphi 0.0, %v3285
      %v3052 = vphi 0.0, %v3286
      %v3053 = vphi 0.0, %v3287
      %v3054 = vphi 0.0, %v3288
      %v3055 = vphi 0.0, %v3289
      %v3056 = vphi 0.0, %v3290
      %v3057 = vphi 0.0, %v3291
      %v3058 = vphi 0.0, %v3292
      %v3059 = vphi 0.0, %v3293
      %v3060 = vphi 0.0, %v3294
      %v3061 = vphi 0.0, %v3295
      %v3062 = vphi 0.0, %v3296
    $region87: #{autoencoder_forward.1} parent=1 // loop_header_branch
      %3045 = sbr.rel (%p3043) target = $region91
    $region88: #{autoencoder_forward.1} parent=1 // loop_body
      %s3063 = sadd.s32 %s3042, 128
      %s3064 = sadd.s32 %s3063, 432
      %s3065 = scalar_lea.vmem [#allocation3], %s3064
      %v3066 = vld [vmem:[%s3065] sm:$0xff]
      %v3067 = vld [vmem:[%s3065 + $0x8] sm:$0xff]
      %v3068 = vld [vmem:[%s3065 + $0x10] sm:$0xff]
      %v3069 = vld [vmem:[%s3065 + $0x18] sm:$0xff]
      %v3070 = vld [vmem:[%s3065 + $0x20] sm:$0xff]
      %v3071 = vld [vmem:[%s3065 + $0x28] sm:$0xff]
      %v3072 = vld [vmem:[%s3065 + $0x30] sm:$0xff]
      %v3073 = vld [vmem:[%s3065 + $0x38] sm:$0xff]
      %v3074 = vld [vmem:[%s3065 + $0x40] sm:$0xff]
      %v3075 = vld [vmem:[%s3065 + $0x48] sm:$0xff]
      %v3076 = vld [vmem:[%s3065 + $0x50] sm:$0xff]
      %v3077 = vld [vmem:[%s3065 + $0x58] sm:$0xff]
      %v3078 = vld [vmem:[%s3065 + $0x60] sm:$0xff]
      %v3079 = vld [vmem:[%s3065 + $0x68] sm:$0xff]
      %v3080 = vld [vmem:[%s3065 + $0x70] sm:$0xff]
      %v3081 = vld [vmem:[%s3065 + $0x78] sm:$0xff]
      %s3082 = smul.u32 %s3042, 32
      %s3083 = scalar_lea.vmem %s2, %s3082
      %v3084 = vld [vmem:[%s3083] sm:$0xff]
      %v3085 = vld [vmem:[%s3083 + $0x8] sm:$0xff]
      %v3086 = vld [vmem:[%s3083 + $0x10] sm:$0xff]
      %v3087 = vld [vmem:[%s3083 + $0x18] sm:$0xff]
      %v3089 = vsel %vm21, %v3066, 0
      %v3092 = vsel %vm21, %v3067, 0
      %v3095 = vsel %vm21, %v3068, 0
      %v3098 = vsel %vm21, %v3069, 0
      %v3101 = vsel %vm21, %v3070, 0
      %v3104 = vsel %vm21, %v3071, 0
      %v3107 = vsel %vm21, %v3072, 0
      %v3110 = vsel %vm21, %v3073, 0
      %v3113 = vsel %vm21, %v3074, 0
      %v3116 = vsel %vm21, %v3075, 0
      %v3119 = vsel %vm21, %v3076, 0
      %v3122 = vsel %vm21, %v3077, 0
      %v3125 = vsel %vm21, %v3078, 0
      %v3128 = vsel %vm21, %v3079, 0
      %v3131 = vsel %vm21, %v3080, 0
      %v3134 = vsel %vm21, %v3081, 0
      %3136 = vmatprep.subr.mxu0 0.0
      %3137 = vmatpush1.msra.mxu0 %v3084
      %3138 = vmatprep.subr.mxu0 0.0
      %3139 = vmatpush1.msra.mxu0 %v3085
      %3140 = vmatprep.subr.mxu0 0.0
      %3141 = vmatpush1.msra.mxu0 %v3086
      %3142 = vmatprep.subr.mxu0 0.0
      %3143 = vmatpush1.msra.mxu0 %v3087
      %3144 = vmatprep.subr.mxu0 0.0
      %3145 = vmatpush1.msra.mxu0 0.0
      %3146 = vmatprep.subr.mxu0 0.0
      %3147 = vmatpush1.msra.mxu0 0.0
      %3148 = vmatprep.subr.mxu0 0.0
      %3149 = vmatpush1.msra.mxu0 0.0
      %3150 = vmatprep.subr.mxu0 0.0
      %3151 = vmatpush1.msra.mxu0 0.0
      %3152 = vmatprep.subr.mxu0 0.0
      %3153 = vmatpush1.msra.mxu0 0.0
      %3154 = vmatprep.subr.mxu0 0.0
      %3155 = vmatpush1.msra.mxu0 0.0
      %3156 = vmatprep.subr.mxu0 0.0
      %3157 = vmatpush1.msra.mxu0 0.0
      %3158 = vmatprep.subr.mxu0 0.0
      %3159 = vmatpush1.msra.mxu0 0.0
      %3160 = vmatprep.subr.mxu0 0.0
      %3161 = vmatpush1.msra.mxu0 0.0
      %3162 = vmatprep.subr.mxu0 0.0
      %3163 = vmatpush1.msra.mxu0 0.0
      %3164 = vmatprep.subr.mxu0 0.0
      %3165 = vmatpush1.msra.mxu0 0.0
      %3166 = vmatprep.subr.mxu0 0.0
      %3167 = vmatpush1.msra.mxu0 0.0
      %3168 = vmatprep.subr.mxu0 0.0
      %3169 = vmatpush1.msra.mxu0 0.0
      %3170 = vmatprep.subr.mxu0 0.0
      %3171 = vmatpush1.msra.mxu0 0.0
      %3172 = vmatprep.subr.mxu0 0.0
      %3173 = vmatpush1.msra.mxu0 0.0
      %3174 = vmatprep.subr.mxu0 0.0
      %3175 = vmatpush1.msra.mxu0 0.0
      %3176 = vmatprep.subr.mxu0 0.0
      %3177 = vmatpush1.msra.mxu0 0.0
      %3178 = vmatprep.subr.mxu0 0.0
      %3179 = vmatpush1.msra.mxu0 0.0
      %3180 = vmatprep.subr.mxu0 0.0
      %3181 = vmatpush1.msra.mxu0 0.0
      %3182 = vmatprep.subr.mxu0 0.0
      %3183 = vmatpush1.msra.mxu0 0.0
      %3184 = vmatprep.subr.mxu0 0.0
      %3185 = vmatpush1.msra.mxu0 0.0
      %3186 = vmatprep.subr.mxu0 0.0
      %3187 = vmatpush1.msra.mxu0 0.0
      %3188 = vmatprep.subr.mxu0 0.0
      %3189 = vmatpush1.msra.mxu0 0.0
      %3190 = vmatprep.subr.mxu0 0.0
      %3191 = vmatpush1.msra.mxu0 0.0
      %3192 = vmatprep.subr.mxu0 0.0
      %3193 = vmatpush1.msra.mxu0 0.0
      %3194 = vmatprep.subr.mxu0 0.0
      %3195 = vmatpush1.msra.mxu0 0.0
      %3196 = vmatprep.subr.mxu0 0.0
      %3197 = vmatpush1.msra.mxu0 0.0
      %3198 = vmatprep.subr.mxu0 0.0
      %3199 = vmatpush1.msra.mxu0 0.0
      %3200 = vmatprep.mubr.f32.mxu0 0.0
      %3201 = vmatmul.mubr.f32.gmra.mrb[0].mxu0 %v3089
      %v3202 = vpop.f32.mrb[0].mxu0
      %v3203 = vadd.f32 0.0, %v3202
      %v3204 = vpop.f32.mrb[0].mxu0
      %3205 = vmatprep.mubr.f32.mxu0 0.0
      %3206 = vmatmul.mubr.f32.gmra.mrb[0].mxu0 %v3092
      %v3207 = vpop.f32.mrb[0].mxu0
      %v3208 = vadd.f32 0.0, %v3207
      %v3209 = vpop.f32.mrb[0].mxu0
      %3210 = vmatprep.mubr.f32.mxu0 0.0
      %3211 = vmatmul.mubr.f32.gmra.mrb[0].mxu0 %v3095
      %v3212 = vpop.f32.mrb[0].mxu0
      %v3213 = vadd.f32 0.0, %v3212
      %v3214 = vpop.f32.mrb[0].mxu0
      %3215 = vmatprep.mubr.f32.mxu0 0.0
      %3216 = vmatmul.mubr.f32.gmra.mrb[0].mxu0 %v3098
      %v3217 = vpop.f32.mrb[0].mxu0
      %v3218 = vadd.f32 0.0, %v3217
      %v3219 = vpop.f32.mrb[0].mxu0
      %3220 = vmatprep.mubr.f32.mxu0 0.0
      %3221 = vmatmul.mubr.f32.gmra.mrb[0].mxu0 %v3101
      %v3222 = vpop.f32.mrb[0].mxu0
      %v3223 = vadd.f32 0.0, %v3222
      %v3224 = vpop.f32.mrb[0].mxu0
      %3225 = vmatprep.mubr.f32.mxu0 0.0
      %3226 = vmatmul.mubr.f32.gmra.mrb[0].mxu0 %v3104
      %v3227 = vpop.f32.mrb[0].mxu0
      %v3228 = vadd.f32 0.0, %v3227
      %v3229 = vpop.f32.mrb[0].mxu0
      %3230 = vmatprep.mubr.f32.mxu0 0.0
      %3231 = vmatmul.mubr.f32.gmra.mrb[0].mxu0 %v3107
      %v3232 = vpop.f32.mrb[0].mxu0
      %v3233 = vadd.f32 0.0, %v3232
      %v3234 = vpop.f32.mrb[0].mxu0
      %3235 = vmatprep.mubr.f32.mxu0 0.0
      %3236 = vmatmul.mubr.f32.gmra.mrb[0].mxu0 %v3110
      %v3237 = vpop.f32.mrb[0].mxu0
      %v3238 = vadd.f32 0.0, %v3237
      %v3239 = vpop.f32.mrb[0].mxu0
      %3240 = vmatprep.mubr.f32.mxu0 0.0
      %3241 = vmatmul.mubr.f32.gmra.mrb[0].mxu0 %v3113
      %v3242 = vpop.f32.mrb[0].mxu0
      %v3243 = vadd.f32 0.0, %v3242
      %v3244 = vpop.f32.mrb[0].mxu0
      %3245 = vmatprep.mubr.f32.mxu0 0.0
      %3246 = vmatmul.mubr.f32.gmra.mrb[0].mxu0 %v3116
      %v3247 = vpop.f32.mrb[0].mxu0
      %v3248 = vadd.f32 0.0, %v3247
      %v3249 = vpop.f32.mrb[0].mxu0
      %3250 = vmatprep.mubr.f32.mxu0 0.0
      %3251 = vmatmul.mubr.f32.gmra.mrb[0].mxu0 %v3119
      %v3252 = vpop.f32.mrb[0].mxu0
      %v3253 = vadd.f32 0.0, %v3252
      %v3254 = vpop.f32.mrb[0].mxu0
      %3255 = vmatprep.mubr.f32.mxu0 0.0
      %3256 = vmatmul.mubr.f32.gmra.mrb[0].mxu0 %v3122
      %v3257 = vpop.f32.mrb[0].mxu0
      %v3258 = vadd.f32 0.0, %v3257
      %v3259 = vpop.f32.mrb[0].mxu0
      %3260 = vmatprep.mubr.f32.mxu0 0.0
      %3261 = vmatmul.mubr.f32.gmra.mrb[0].mxu0 %v3125
      %v3262 = vpop.f32.mrb[0].mxu0
      %v3263 = vadd.f32 0.0, %v3262
      %v3264 = vpop.f32.mrb[0].mxu0
      %3265 = vmatprep.mubr.f32.mxu0 0.0
      %3266 = vmatmul.mubr.f32.gmra.mrb[0].mxu0 %v3128
      %v3267 = vpop.f32.mrb[0].mxu0
      %v3268 = vadd.f32 0.0, %v3267
      %v3269 = vpop.f32.mrb[0].mxu0
      %3270 = vmatprep.mubr.f32.mxu0 0.0
      %3271 = vmatmul.mubr.f32.gmra.mrb[0].mxu0 %v3131
      %v3272 = vpop.f32.mrb[0].mxu0
      %v3273 = vadd.f32 0.0, %v3272
      %v3274 = vpop.f32.mrb[0].mxu0
      %3275 = vmatprep.mubr.f32.mxu0 0.0
      %3276 = vmatmul.mubr.f32.gmra.mrb[0].mxu0 %v3134
      %v3277 = vpop.f32.mrb[0].mxu0
      %v3278 = vadd.f32 0.0, %v3277
      %v3279 = vpop.f32.mrb[0].mxu0
      %3280 = vdwg.mxu0
      %v3281 = vadd.f32 %v3047, %v3203
      %v3282 = vadd.f32 %v3048, %v3208
      %v3283 = vadd.f32 %v3049, %v3213
      %v3284 = vadd.f32 %v3050, %v3218
      %v3285 = vadd.f32 %v3051, %v3223
      %v3286 = vadd.f32 %v3052, %v3228
      %v3287 = vadd.f32 %v3053, %v3233
      %v3288 = vadd.f32 %v3054, %v3238
      %v3289 = vadd.f32 %v3055, %v3243
      %v3290 = vadd.f32 %v3056, %v3248
      %v3291 = vadd.f32 %v3057, %v3253
      %v3292 = vadd.f32 %v3058, %v3258
      %v3293 = vadd.f32 %v3059, %v3263
      %v3294 = vadd.f32 %v3060, %v3268
      %v3295 = vadd.f32 %v3061, %v3273
      %v3296 = vadd.f32 %v3062, %v3278
    $region89: #{autoencoder_forward.1} parent=1 // loop_footer
      %s3046 = sadd.s32 1, %s3042
    $region90: #{autoencoder_forward.1} parent=1 // loop_footer_branch
      %3041 = sbr.rel target = $region86
    $region91: #{autoencoder_forward.1} parent=1 // loop_exit
      _
    %3297 = vst.msk [vmem:[%s2932 + $0x80] sm:$0xff] %vm131, %v3047
    %3298 = vst.msk [vmem:[%s2932 + $0x88] sm:$0xff] %vm131, %v3048
    %3299 = vst.msk [vmem:[%s2932 + $0x90] sm:$0xff] %vm131, %v3049
    %3300 = vst.msk [vmem:[%s2932 + $0x98] sm:$0xff] %vm131, %v3050
    %3301 = vst.msk [vmem:[%s2932 + $0xa0] sm:$0xff] %vm131, %v3051
    %3302 = vst.msk [vmem:[%s2932 + $0xa8] sm:$0xff] %vm131, %v3052
    %3303 = vst.msk [vmem:[%s2932 + $0xb0] sm:$0xff] %vm131, %v3053
    %3304 = vst.msk [vmem:[%s2932 + $0xb8] sm:$0xff] %vm131, %v3054
    %3305 = vst.msk [vmem:[%s2932 + $0xc0] sm:$0xff] %vm131, %v3055
    %3306 = vst.msk [vmem:[%s2932 + $0xc8] sm:$0xff] %vm131, %v3056
    %3307 = vst.msk [vmem:[%s2932 + $0xd0] sm:$0xff] %vm131, %v3057
    %3308 = vst.msk [vmem:[%s2932 + $0xd8] sm:$0xff] %vm131, %v3058
    %3309 = vst.msk [vmem:[%s2932 + $0xe0] sm:$0xff] %vm131, %v3059
    %3310 = vst.msk [vmem:[%s2932 + $0xe8] sm:$0xff] %vm131, %v3060
    %3311 = vst.msk [vmem:[%s2932 + $0xf0] sm:$0xff] %vm131, %v3061
    %3312 = vst.msk [vmem:[%s2932 + $0xf8] sm:$0xff] %vm131, %v3062
    %v3313 = vsel %vm131, %v3047, 0.0
    %v3314 = vsel %vm131, %v3048, 0.0
    %v3315 = vadd.f32 %v3313, %v3314
    %v3316 = vsel %vm131, %v3049, 0.0
    %v3317 = vadd.f32 %v3315, %v3316
    %v3318 = vsel %vm131, %v3050, 0.0
    %v3319 = vadd.f32 %v3317, %v3318
    %v3320 = vsel %vm131, %v3051, 0.0
    %v3321 = vadd.f32 %v3319, %v3320
    %v3322 = vsel %vm131, %v3052, 0.0
    %v3323 = vadd.f32 %v3321, %v3322
    %v3324 = vsel %vm131, %v3053, 0.0
    %v3325 = vadd.f32 %v3323, %v3324
    %v3326 = vsel %vm131, %v3054, 0.0
    %v3327 = vadd.f32 %v3325, %v3326
    %v3328 = vsel %vm131, %v3055, 0.0
    %v3329 = vadd.f32 %v3327, %v3328
    %v3330 = vsel %vm131, %v3056, 0.0
    %v3331 = vadd.f32 %v3329, %v3330
    %v3332 = vsel %vm131, %v3057, 0.0
    %v3333 = vadd.f32 %v3331, %v3332
    %v3334 = vsel %vm131, %v3058, 0.0
    %v3335 = vadd.f32 %v3333, %v3334
    %v3336 = vsel %vm131, %v3059, 0.0
    %v3337 = vadd.f32 %v3335, %v3336
    %v3338 = vsel %vm131, %v3060, 0.0
    %v3339 = vadd.f32 %v3337, %v3338
    %v3340 = vsel %vm131, %v3061, 0.0
    %v3341 = vadd.f32 %v3339, %v3340
    %v3342 = vsel %vm131, %v3062, 0.0
    %v3343 = vadd.f32 %v3341, %v3342
    %v3344 = vrot.slane %v3343, 4
    %v3345 = vadd.f32 %v3343, %v3344
    %v3346 = vrot.slane %v3345, 2
    %v3347 = vadd.f32 %v3345, %v3346
    %v3348 = vrot.slane %v3347, 1
    %v3349 = vadd.f32 %v3347, %v3348
    %v3350 = vadd.f32 %v2986, %v3349
    %v3351 = vmul.f32 %v3047, %v3047
    %v3352 = vmul.f32 %v3048, %v3048
    %v3353 = vmul.f32 %v3049, %v3049
    %v3354 = vmul.f32 %v3050, %v3050
    %v3355 = vmul.f32 %v3051, %v3051
    %v3356 = vmul.f32 %v3052, %v3052
    %v3357 = vmul.f32 %v3053, %v3053
    %v3358 = vmul.f32 %v3054, %v3054
    %v3359 = vmul.f32 %v3055, %v3055
    %v3360 = vmul.f32 %v3056, %v3056
    %v3361 = vmul.f32 %v3057, %v3057
    %v3362 = vmul.f32 %v3058, %v3058
    %v3363 = vmul.f32 %v3059, %v3059
    %v3364 = vmul.f32 %v3060, %v3060
    %v3365 = vmul.f32 %v3061, %v3061
    %v3366 = vmul.f32 %v3062, %v3062
    %v3367 = vsel %vm131, %v3351, 0.0
    %v3368 = vsel %vm131, %v3352, 0.0
    %v3369 = vadd.f32 %v3367, %v3368
    %v3370 = vsel %vm131, %v3353, 0.0
    %v3371 = vadd.f32 %v3369, %v3370
    %v3372 = vsel %vm131, %v3354, 0.0
    %v3373 = vadd.f32 %v3371, %v3372
    %v3374 = vsel %vm131, %v3355, 0.0
    %v3375 = vadd.f32 %v3373, %v3374
    %v3376 = vsel %vm131, %v3356, 0.0
    %v3377 = vadd.f32 %v3375, %v3376
    %v3378 = vsel %vm131, %v3357, 0.0
    %v3379 = vadd.f32 %v3377, %v3378
    %v3380 = vsel %vm131, %v3358, 0.0
    %v3381 = vadd.f32 %v3379, %v3380
    %v3382 = vsel %vm131, %v3359, 0.0
    %v3383 = vadd.f32 %v3381, %v3382
    %v3384 = vsel %vm131, %v3360, 0.0
    %v3385 = vadd.f32 %v3383, %v3384
    %v3386 = vsel %vm131, %v3361, 0.0
    %v3387 = vadd.f32 %v3385, %v3386
    %v3388 = vsel %vm131, %v3362, 0.0
    %v3389 = vadd.f32 %v3387, %v3388
    %v3390 = vsel %vm131, %v3363, 0.0
    %v3391 = vadd.f32 %v3389, %v3390
    %v3392 = vsel %vm131, %v3364, 0.0
    %v3393 = vadd.f32 %v3391, %v3392
    %v3394 = vsel %vm131, %v3365, 0.0
    %v3395 = vadd.f32 %v3393, %v3394
    %v3396 = vsel %vm131, %v3366, 0.0
    %v3397 = vadd.f32 %v3395, %v3396
    %v3398 = vrot.slane %v3397, 4
    %v3399 = vadd.f32 %v3397, %v3398
    %v3400 = vrot.slane %v3399, 2
    %v3401 = vadd.f32 %v3399, %v3400
    %v3402 = vrot.slane %v3401, 1
    %v3403 = vadd.f32 %v3401, %v3402
    %v3404 = vadd.f32 %v3040, %v3403
    loop: start=0, step=1, limit=26
    $region92: #{autoencoder_forward.1} parent=1 // loop_pre_header
      _
    $region93: #{autoencoder_forward.1} parent=1 // loop_header
      %s3406 = sphi 0, %s3410
      %p3407 = scmp.ge.s32.totalorder %s3406, 26
      %v3411 = vphi 0.0, %v3645
      %v3412 = vphi 0.0, %v3646
      %v3413 = vphi 0.0, %v3647
      %v3414 = vphi 0.0, %v3648
      %v3415 = vphi 0.0, %v3649
      %v3416 = vphi 0.0, %v3650
      %v3417 = vphi 0.0, %v3651
      %v3418 = vphi 0.0, %v3652
      %v3419 = vphi 0.0, %v3653
      %v3420 = vphi 0.0, %v3654
      %v3421 = vphi 0.0, %v3655
      %v3422 = vphi 0.0, %v3656
      %v3423 = vphi 0.0, %v3657
      %v3424 = vphi 0.0, %v3658
      %v3425 = vphi 0.0, %v3659
      %v3426 = vphi 0.0, %v3660
    $region94: #{autoencoder_forward.1} parent=1 // loop_header_branch
      %3409 = sbr.rel (%p3407) target = $region98
    $region95: #{autoencoder_forward.1} parent=1 // loop_body
      %s3427 = sadd.s32 %s3406, 256
      %s3428 = sadd.s32 %s3427, 432
      %s3429 = scalar_lea.vmem [#allocation3], %s3428
      %v3430 = vld [vmem:[%s3429] sm:$0xff]
      %v3431 = vld [vmem:[%s3429 + $0x8] sm:$0xff]
      %v3432 = vld [vmem:[%s3429 + $0x10] sm:$0xff]
      %v3433 = vld [vmem:[%s3429 + $0x18] sm:$0xff]
      %v3434 = vld [vmem:[%s3429 + $0x20] sm:$0xff]
      %v3435 = vld [vmem:[%s3429 + $0x28] sm:$0xff]
      %v3436 = vld [vmem:[%s3429 + $0x30] sm:$0xff]
      %v3437 = vld [vmem:[%s3429 + $0x38] sm:$0xff]
      %v3438 = vld [vmem:[%s3429 + $0x40] sm:$0xff]
      %v3439 = vld [vmem:[%s3429 + $0x48] sm:$0xff]
      %v3440 = vld [vmem:[%s3429 + $0x50] sm:$0xff]
      %v3441 = vld [vmem:[%s3429 + $0x58] sm:$0xff]
      %v3442 = vld [vmem:[%s3429 + $0x60] sm:$0xff]
      %v3443 = vld [vmem:[%s3429 + $0x68] sm:$0xff]
      %v3444 = vld [vmem:[%s3429 + $0x70] sm:$0xff]
      %v3445 = vld [vmem:[%s3429 + $0x78] sm:$0xff]
      %s3446 = smul.u32 %s3406, 32
      %s3447 = scalar_lea.vmem %s2, %s3446
      %v3448 = vld [vmem:[%s3447] sm:$0xff]
      %v3449 = vld [vmem:[%s3447 + $0x8] sm:$0xff]
      %v3450 = vld [vmem:[%s3447 + $0x10] sm:$0xff]
      %v3451 = vld [vmem:[%s3447 + $0x18] sm:$0xff]
      %v3453 = vsel %vm21, %v3430, 0
      %v3456 = vsel %vm21, %v3431, 0
      %v3459 = vsel %vm21, %v3432, 0
      %v3462 = vsel %vm21, %v3433, 0
      %v3465 = vsel %vm21, %v3434, 0
      %v3468 = vsel %vm21, %v3435, 0
      %v3471 = vsel %vm21, %v3436, 0
      %v3474 = vsel %vm21, %v3437, 0
      %v3477 = vsel %vm21, %v3438, 0
      %v3480 = vsel %vm21, %v3439, 0
      %v3483 = vsel %vm21, %v3440, 0
      %v3486 = vsel %vm21, %v3441, 0
      %v3489 = vsel %vm21, %v3442, 0
      %v3492 = vsel %vm21, %v3443, 0
      %v3495 = vsel %vm21, %v3444, 0
      %v3498 = vsel %vm21, %v3445, 0
      %3500 = vmatprep.subr.mxu0 0.0
      %3501 = vmatpush1.msra.mxu0 %v3448
      %3502 = vmatprep.subr.mxu0 0.0
      %3503 = vmatpush1.msra.mxu0 %v3449
      %3504 = vmatprep.subr.mxu0 0.0
      %3505 = vmatpush1.msra.mxu0 %v3450
      %3506 = vmatprep.subr.mxu0 0.0
      %3507 = vmatpush1.msra.mxu0 %v3451
      %3508 = vmatprep.subr.mxu0 0.0
      %3509 = vmatpush1.msra.mxu0 0.0
      %3510 = vmatprep.subr.mxu0 0.0
      %3511 = vmatpush1.msra.mxu0 0.0
      %3512 = vmatprep.subr.mxu0 0.0
      %3513 = vmatpush1.msra.mxu0 0.0
      %3514 = vmatprep.subr.mxu0 0.0
      %3515 = vmatpush1.msra.mxu0 0.0
      %3516 = vmatprep.subr.mxu0 0.0
      %3517 = vmatpush1.msra.mxu0 0.0
      %3518 = vmatprep.subr.mxu0 0.0
      %3519 = vmatpush1.msra.mxu0 0.0
      %3520 = vmatprep.subr.mxu0 0.0
      %3521 = vmatpush1.msra.mxu0 0.0
      %3522 = vmatprep.subr.mxu0 0.0
      %3523 = vmatpush1.msra.mxu0 0.0
      %3524 = vmatprep.subr.mxu0 0.0
      %3525 = vmatpush1.msra.mxu0 0.0
      %3526 = vmatprep.subr.mxu0 0.0
      %3527 = vmatpush1.msra.mxu0 0.0
      %3528 = vmatprep.subr.mxu0 0.0
      %3529 = vmatpush1.msra.mxu0 0.0
      %3530 = vmatprep.subr.mxu0 0.0
      %3531 = vmatpush1.msra.mxu0 0.0
      %3532 = vmatprep.subr.mxu0 0.0
      %3533 = vmatpush1.msra.mxu0 0.0
      %3534 = vmatprep.subr.mxu0 0.0
      %3535 = vmatpush1.msra.mxu0 0.0
      %3536 = vmatprep.subr.mxu0 0.0
      %3537 = vmatpush1.msra.mxu0 0.0
      %3538 = vmatprep.subr.mxu0 0.0
      %3539 = vmatpush1.msra.mxu0 0.0
      %3540 = vmatprep.subr.mxu0 0.0
      %3541 = vmatpush1.msra.mxu0 0.0
      %3542 = vmatprep.subr.mxu0 0.0
      %3543 = vmatpush1.msra.mxu0 0.0
      %3544 = vmatprep.subr.mxu0 0.0
      %3545 = vmatpush1.msra.mxu0 0.0
      %3546 = vmatprep.subr.mxu0 0.0
      %3547 = vmatpush1.msra.mxu0 0.0
      %3548 = vmatprep.subr.mxu0 0.0
      %3549 = vmatpush1.msra.mxu0 0.0
      %3550 = vmatprep.subr.mxu0 0.0
      %3551 = vmatpush1.msra.mxu0 0.0
      %3552 = vmatprep.subr.mxu0 0.0
      %3553 = vmatpush1.msra.mxu0 0.0
      %3554 = vmatprep.subr.mxu0 0.0
      %3555 = vmatpush1.msra.mxu0 0.0
      %3556 = vmatprep.subr.mxu0 0.0
      %3557 = vmatpush1.msra.mxu0 0.0
      %3558 = vmatprep.subr.mxu0 0.0
      %3559 = vmatpush1.msra.mxu0 0.0
      %3560 = vmatprep.subr.mxu0 0.0
      %3561 = vmatpush1.msra.mxu0 0.0
      %3562 = vmatprep.subr.mxu0 0.0
      %3563 = vmatpush1.msra.mxu0 0.0
      %3564 = vmatprep.mubr.f32.mxu0 0.0
      %3565 = vmatmul.mubr.f32.gmra.mrb[0].mxu0 %v3453
      %v3566 = vpop.f32.mrb[0].mxu0
      %v3567 = vadd.f32 0.0, %v3566
      %v3568 = vpop.f32.mrb[0].mxu0
      %3569 = vmatprep.mubr.f32.mxu0 0.0
      %3570 = vmatmul.mubr.f32.gmra.mrb[0].mxu0 %v3456
      %v3571 = vpop.f32.mrb[0].mxu0
      %v3572 = vadd.f32 0.0, %v3571
      %v3573 = vpop.f32.mrb[0].mxu0
      %3574 = vmatprep.mubr.f32.mxu0 0.0
      %3575 = vmatmul.mubr.f32.gmra.mrb[0].mxu0 %v3459
      %v3576 = vpop.f32.mrb[0].mxu0
      %v3577 = vadd.f32 0.0, %v3576
      %v3578 = vpop.f32.mrb[0].mxu0
      %3579 = vmatprep.mubr.f32.mxu0 0.0
      %3580 = vmatmul.mubr.f32.gmra.mrb[0].mxu0 %v3462
      %v3581 = vpop.f32.mrb[0].mxu0
      %v3582 = vadd.f32 0.0, %v3581
      %v3583 = vpop.f32.mrb[0].mxu0
      %3584 = vmatprep.mubr.f32.mxu0 0.0
      %3585 = vmatmul.mubr.f32.gmra.mrb[0].mxu0 %v3465
      %v3586 = vpop.f32.mrb[0].mxu0
      %v3587 = vadd.f32 0.0, %v3586
      %v3588 = vpop.f32.mrb[0].mxu0
      %3589 = vmatprep.mubr.f32.mxu0 0.0
      %3590 = vmatmul.mubr.f32.gmra.mrb[0].mxu0 %v3468
      %v3591 = vpop.f32.mrb[0].mxu0
      %v3592 = vadd.f32 0.0, %v3591
      %v3593 = vpop.f32.mrb[0].mxu0
      %3594 = vmatprep.mubr.f32.mxu0 0.0
      %3595 = vmatmul.mubr.f32.gmra.mrb[0].mxu0 %v3471
      %v3596 = vpop.f32.mrb[0].mxu0
      %v3597 = vadd.f32 0.0, %v3596
      %v3598 = vpop.f32.mrb[0].mxu0
      %3599 = vmatprep.mubr.f32.mxu0 0.0
      %3600 = vmatmul.mubr.f32.gmra.mrb[0].mxu0 %v3474
      %v3601 = vpop.f32.mrb[0].mxu0
      %v3602 = vadd.f32 0.0, %v3601
      %v3603 = vpop.f32.mrb[0].mxu0
      %3604 = vmatprep.mubr.f32.mxu0 0.0
      %3605 = vmatmul.mubr.f32.gmra.mrb[0].mxu0 %v3477
      %v3606 = vpop.f32.mrb[0].mxu0
      %v3607 = vadd.f32 0.0, %v3606
      %v3608 = vpop.f32.mrb[0].mxu0
      %3609 = vmatprep.mubr.f32.mxu0 0.0
      %3610 = vmatmul.mubr.f32.gmra.mrb[0].mxu0 %v3480
      %v3611 = vpop.f32.mrb[0].mxu0
      %v3612 = vadd.f32 0.0, %v3611
      %v3613 = vpop.f32.mrb[0].mxu0
      %3614 = vmatprep.mubr.f32.mxu0 0.0
      %3615 = vmatmul.mubr.f32.gmra.mrb[0].mxu0 %v3483
      %v3616 = vpop.f32.mrb[0].mxu0
      %v3617 = vadd.f32 0.0, %v3616
      %v3618 = vpop.f32.mrb[0].mxu0
      %3619 = vmatprep.mubr.f32.mxu0 0.0
      %3620 = vmatmul.mubr.f32.gmra.mrb[0].mxu0 %v3486
      %v3621 = vpop.f32.mrb[0].mxu0
      %v3622 = vadd.f32 0.0, %v3621
      %v3623 = vpop.f32.mrb[0].mxu0
      %3624 = vmatprep.mubr.f32.mxu0 0.0
      %3625 = vmatmul.mubr.f32.gmra.mrb[0].mxu0 %v3489
      %v3626 = vpop.f32.mrb[0].mxu0
      %v3627 = vadd.f32 0.0, %v3626
      %v3628 = vpop.f32.mrb[0].mxu0
      %3629 = vmatprep.mubr.f32.mxu0 0.0
      %3630 = vmatmul.mubr.f32.gmra.mrb[0].mxu0 %v3492
      %v3631 = vpop.f32.mrb[0].mxu0
      %v3632 = vadd.f32 0.0, %v3631
      %v3633 = vpop.f32.mrb[0].mxu0
      %3634 = vmatprep.mubr.f32.mxu0 0.0
      %3635 = vmatmul.mubr.f32.gmra.mrb[0].mxu0 %v3495
      %v3636 = vpop.f32.mrb[0].mxu0
      %v3637 = vadd.f32 0.0, %v3636
      %v3638 = vpop.f32.mrb[0].mxu0
      %3639 = vmatprep.mubr.f32.mxu0 0.0
      %3640 = vmatmul.mubr.f32.gmra.mrb[0].mxu0 %v3498
      %v3641 = vpop.f32.mrb[0].mxu0
      %v3642 = vadd.f32 0.0, %v3641
      %v3643 = vpop.f32.mrb[0].mxu0
      %3644 = vdwg.mxu0
      %v3645 = vadd.f32 %v3411, %v3567
      %v3646 = vadd.f32 %v3412, %v3572
      %v3647 = vadd.f32 %v3413, %v3577
      %v3648 = vadd.f32 %v3414, %v3582
      %v3649 = vadd.f32 %v3415, %v3587
      %v3650 = vadd.f32 %v3416, %v3592
      %v3651 = vadd.f32 %v3417, %v3597
      %v3652 = vadd.f32 %v3418, %v3602
      %v3653 = vadd.f32 %v3419, %v3607
      %v3654 = vadd.f32 %v3420, %v3612
      %v3655 = vadd.f32 %v3421, %v3617
      %v3656 = vadd.f32 %v3422, %v3622
      %v3657 = vadd.f32 %v3423, %v3627
      %v3658 = vadd.f32 %v3424, %v3632
      %v3659 = vadd.f32 %v3425, %v3637
      %v3660 = vadd.f32 %v3426, %v3642
    $region96: #{autoencoder_forward.1} parent=1 // loop_footer
      %s3410 = sadd.s32 1, %s3406
    $region97: #{autoencoder_forward.1} parent=1 // loop_footer_branch
      %3405 = sbr.rel target = $region93
    $region98: #{autoencoder_forward.1} parent=1 // loop_exit
      _
    %3661 = vst.msk [vmem:[%s2932 + $0x100] sm:$0xff] %vm131, %v3411
    %3662 = vst.msk [vmem:[%s2932 + $0x108] sm:$0xff] %vm131, %v3412
    %3663 = vst.msk [vmem:[%s2932 + $0x110] sm:$0xff] %vm131, %v3413
    %3664 = vst.msk [vmem:[%s2932 + $0x118] sm:$0xff] %vm131, %v3414
    %3665 = vst.msk [vmem:[%s2932 + $0x120] sm:$0xff] %vm131, %v3415
    %3666 = vst.msk [vmem:[%s2932 + $0x128] sm:$0xff] %vm131, %v3416
    %3667 = vst.msk [vmem:[%s2932 + $0x130] sm:$0xff] %vm131, %v3417
    %3668 = vst.msk [vmem:[%s2932 + $0x138] sm:$0xff] %vm131, %v3418
    %3669 = vst.msk [vmem:[%s2932 + $0x140] sm:$0xff] %vm131, %v3419
    %3670 = vst.msk [vmem:[%s2932 + $0x148] sm:$0xff] %vm131, %v3420
    %3671 = vst.msk [vmem:[%s2932 + $0x150] sm:$0xff] %vm131, %v3421
    %3672 = vst.msk [vmem:[%s2932 + $0x158] sm:$0xff] %vm131, %v3422
    %3673 = vst.msk [vmem:[%s2932 + $0x160] sm:$0xff] %vm131, %v3423
    %3674 = vst.msk [vmem:[%s2932 + $0x168] sm:$0xff] %vm131, %v3424
    %3675 = vst.msk [vmem:[%s2932 + $0x170] sm:$0xff] %vm131, %v3425
    %3676 = vst.msk [vmem:[%s2932 + $0x178] sm:$0xff] %vm131, %v3426
    %v3677 = vsel %vm131, %v3411, 0.0
    %v3678 = vsel %vm131, %v3412, 0.0
    %v3679 = vadd.f32 %v3677, %v3678
    %v3680 = vsel %vm131, %v3413, 0.0
    %v3681 = vadd.f32 %v3679, %v3680
    %v3682 = vsel %vm131, %v3414, 0.0
    %v3683 = vadd.f32 %v3681, %v3682
    %v3684 = vsel %vm131, %v3415, 0.0
    %v3685 = vadd.f32 %v3683, %v3684
    %v3686 = vsel %vm131, %v3416, 0.0
    %v3687 = vadd.f32 %v3685, %v3686
    %v3688 = vsel %vm131, %v3417, 0.0
    %v3689 = vadd.f32 %v3687, %v3688
    %v3690 = vsel %vm131, %v3418, 0.0
    %v3691 = vadd.f32 %v3689, %v3690
    %v3692 = vsel %vm131, %v3419, 0.0
    %v3693 = vadd.f32 %v3691, %v3692
    %v3694 = vsel %vm131, %v3420, 0.0
    %v3695 = vadd.f32 %v3693, %v3694
    %v3696 = vsel %vm131, %v3421, 0.0
    %v3697 = vadd.f32 %v3695, %v3696
    %v3698 = vsel %vm131, %v3422, 0.0
    %v3699 = vadd.f32 %v3697, %v3698
    %v3700 = vsel %vm131, %v3423, 0.0
    %v3701 = vadd.f32 %v3699, %v3700
    %v3702 = vsel %vm131, %v3424, 0.0
    %v3703 = vadd.f32 %v3701, %v3702
    %v3704 = vsel %vm131, %v3425, 0.0
    %v3705 = vadd.f32 %v3703, %v3704
    %v3706 = vsel %vm131, %v3426, 0.0
    %v3707 = vadd.f32 %v3705, %v3706
    %v3708 = vrot.slane %v3707, 4
    %v3709 = vadd.f32 %v3707, %v3708
    %v3710 = vrot.slane %v3709, 2
    %v3711 = vadd.f32 %v3709, %v3710
    %v3712 = vrot.slane %v3711, 1
    %v3713 = vadd.f32 %v3711, %v3712
    %v3714 = vadd.f32 %v3350, %v3713
    %v3715 = vmul.f32 %v3411, %v3411
    %v3716 = vmul.f32 %v3412, %v3412
    %v3717 = vmul.f32 %v3413, %v3413
    %v3718 = vmul.f32 %v3414, %v3414
    %v3719 = vmul.f32 %v3415, %v3415
    %v3720 = vmul.f32 %v3416, %v3416
    %v3721 = vmul.f32 %v3417, %v3417
    %v3722 = vmul.f32 %v3418, %v3418
    %v3723 = vmul.f32 %v3419, %v3419
    %v3724 = vmul.f32 %v3420, %v3420
    %v3725 = vmul.f32 %v3421, %v3421
    %v3726 = vmul.f32 %v3422, %v3422
    %v3727 = vmul.f32 %v3423, %v3423
    %v3728 = vmul.f32 %v3424, %v3424
    %v3729 = vmul.f32 %v3425, %v3425
    %v3730 = vmul.f32 %v3426, %v3426
    %v3731 = vsel %vm131, %v3715, 0.0
    %v3732 = vsel %vm131, %v3716, 0.0
    %v3733 = vadd.f32 %v3731, %v3732
    %v3734 = vsel %vm131, %v3717, 0.0
    %v3735 = vadd.f32 %v3733, %v3734
    %v3736 = vsel %vm131, %v3718, 0.0
    %v3737 = vadd.f32 %v3735, %v3736
    %v3738 = vsel %vm131, %v3719, 0.0
    %v3739 = vadd.f32 %v3737, %v3738
    %v3740 = vsel %vm131, %v3720, 0.0
    %v3741 = vadd.f32 %v3739, %v3740
    %v3742 = vsel %vm131, %v3721, 0.0
    %v3743 = vadd.f32 %v3741, %v3742
    %v3744 = vsel %vm131, %v3722, 0.0
    %v3745 = vadd.f32 %v3743, %v3744
    %v3746 = vsel %vm131, %v3723, 0.0
    %v3747 = vadd.f32 %v3745, %v3746
    %v3748 = vsel %vm131, %v3724, 0.0
    %v3749 = vadd.f32 %v3747, %v3748
    %v3750 = vsel %vm131, %v3725, 0.0
    %v3751 = vadd.f32 %v3749, %v3750
    %v3752 = vsel %vm131, %v3726, 0.0
    %v3753 = vadd.f32 %v3751, %v3752
    %v3754 = vsel %vm131, %v3727, 0.0
    %v3755 = vadd.f32 %v3753, %v3754
    %v3756 = vsel %vm131, %v3728, 0.0
    %v3757 = vadd.f32 %v3755, %v3756
    %v3758 = vsel %vm131, %v3729, 0.0
    %v3759 = vadd.f32 %v3757, %v3758
    %v3760 = vsel %vm131, %v3730, 0.0
    %v3761 = vadd.f32 %v3759, %v3760
    %v3762 = vrot.slane %v3761, 4
    %v3763 = vadd.f32 %v3761, %v3762
    %v3764 = vrot.slane %v3763, 2
    %v3765 = vadd.f32 %v3763, %v3764
    %v3766 = vrot.slane %v3765, 1
    %v3767 = vadd.f32 %v3765, %v3766
    %v3768 = vadd.f32 %v3404, %v3767
    loop: start=0, step=1, limit=26
    $region99: #{autoencoder_forward.1} parent=1 // loop_pre_header
      _
    $region100: #{autoencoder_forward.1} parent=1 // loop_header
      %s3770 = sphi 0, %s3774
      %p3771 = scmp.ge.s32.totalorder %s3770, 26
      %v3775 = vphi 0.0, %v3879
      %v3776 = vphi 0.0, %v3880
      %v3777 = vphi 0.0, %v3881
    $region101: #{autoencoder_forward.1} parent=1 // loop_header_branch
      %3773 = sbr.rel (%p3771) target = $region105
    $region102: #{autoencoder_forward.1} parent=1 // loop_body
      %s3778 = sadd.s32 %s3770, 384
      %s3779 = sadd.s32 %s3778, 432
      %s3780 = scalar_lea.vmem [#allocation3], %s3779
      %v3781 = vld [vmem:[%s3780] sm:$0xff]
      %v3782 = vld [vmem:[%s3780 + $0x8] sm:$0xff]
      %v3783 = vld [vmem:[%s3780 + $0x10] sm:$0x3]
      %s3784 = smul.u32 %s3770, 32
      %s3785 = scalar_lea.vmem %s2, %s3784
      %v3786 = vld [vmem:[%s3785] sm:$0xff]
      %v3787 = vld [vmem:[%s3785 + $0x8] sm:$0xff]
      %v3788 = vld [vmem:[%s3785 + $0x10] sm:$0xff]
      %v3789 = vld [vmem:[%s3785 + $0x18] sm:$0xff]
      %v3791 = vsel %vm21, %v3781, 0
      %v3794 = vsel %vm21, %v3782, 0
      %v3797 = vsel %vm21, %v3783, 0
      %3799 = vmatprep.subr.mxu0 0.0
      %3800 = vmatpush1.msra.mxu0 %v3786
      %3801 = vmatprep.subr.mxu0 0.0
      %3802 = vmatpush1.msra.mxu0 %v3787
      %3803 = vmatprep.subr.mxu0 0.0
      %3804 = vmatpush1.msra.mxu0 %v3788
      %3805 = vmatprep.subr.mxu0 0.0
      %3806 = vmatpush1.msra.mxu0 %v3789
      %3807 = vmatprep.subr.mxu0 0.0
      %3808 = vmatpush1.msra.mxu0 0.0
      %3809 = vmatprep.subr.mxu0 0.0
      %3810 = vmatpush1.msra.mxu0 0.0
      %3811 = vmatprep.subr.mxu0 0.0
      %3812 = vmatpush1.msra.mxu0 0.0
      %3813 = vmatprep.subr.mxu0 0.0
      %3814 = vmatpush1.msra.mxu0 0.0
      %3815 = vmatprep.subr.mxu0 0.0
      %3816 = vmatpush1.msra.mxu0 0.0
      %3817 = vmatprep.subr.mxu0 0.0
      %3818 = vmatpush1.msra.mxu0 0.0
      %3819 = vmatprep.subr.mxu0 0.0
      %3820 = vmatpush1.msra.mxu0 0.0
      %3821 = vmatprep.subr.mxu0 0.0
      %3822 = vmatpush1.msra.mxu0 0.0
      %3823 = vmatprep.subr.mxu0 0.0
      %3824 = vmatpush1.msra.mxu0 0.0
      %3825 = vmatprep.subr.mxu0 0.0
      %3826 = vmatpush1.msra.mxu0 0.0
      %3827 = vmatprep.subr.mxu0 0.0
      %3828 = vmatpush1.msra.mxu0 0.0
      %3829 = vmatprep.subr.mxu0 0.0
      %3830 = vmatpush1.msra.mxu0 0.0
      %3831 = vmatprep.subr.mxu0 0.0
      %3832 = vmatpush1.msra.mxu0 0.0
      %3833 = vmatprep.subr.mxu0 0.0
      %3834 = vmatpush1.msra.mxu0 0.0
      %3835 = vmatprep.subr.mxu0 0.0
      %3836 = vmatpush1.msra.mxu0 0.0
      %3837 = vmatprep.subr.mxu0 0.0
      %3838 = vmatpush1.msra.mxu0 0.0
      %3839 = vmatprep.subr.mxu0 0.0
      %3840 = vmatpush1.msra.mxu0 0.0
      %3841 = vmatprep.subr.mxu0 0.0
      %3842 = vmatpush1.msra.mxu0 0.0
      %3843 = vmatprep.subr.mxu0 0.0
      %3844 = vmatpush1.msra.mxu0 0.0
      %3845 = vmatprep.subr.mxu0 0.0
      %3846 = vmatpush1.msra.mxu0 0.0
      %3847 = vmatprep.subr.mxu0 0.0
      %3848 = vmatpush1.msra.mxu0 0.0
      %3849 = vmatprep.subr.mxu0 0.0
      %3850 = vmatpush1.msra.mxu0 0.0
      %3851 = vmatprep.subr.mxu0 0.0
      %3852 = vmatpush1.msra.mxu0 0.0
      %3853 = vmatprep.subr.mxu0 0.0
      %3854 = vmatpush1.msra.mxu0 0.0
      %3855 = vmatprep.subr.mxu0 0.0
      %3856 = vmatpush1.msra.mxu0 0.0
      %3857 = vmatprep.subr.mxu0 0.0
      %3858 = vmatpush1.msra.mxu0 0.0
      %3859 = vmatprep.subr.mxu0 0.0
      %3860 = vmatpush1.msra.mxu0 0.0
      %3861 = vmatprep.subr.mxu0 0.0
      %3862 = vmatpush1.msra.mxu0 0.0
      %3863 = vmatprep.mubr.f32.mxu0 0.0
      %3864 = vmatmul.mubr.f32.gmra.mrb[0].mxu0 %v3791
      %v3865 = vpop.f32.mrb[0].mxu0
      %v3866 = vadd.f32 0.0, %v3865
      %v3867 = vpop.f32.mrb[0].mxu0
      %3868 = vmatprep.mubr.f32.mxu0 0.0
      %3869 = vmatmul.mubr.f32.gmra.mrb[0].mxu0 %v3794
      %v3870 = vpop.f32.mrb[0].mxu0
      %v3871 = vadd.f32 0.0, %v3870
      %v3872 = vpop.f32.mrb[0].mxu0
      %3873 = vmatprep.mubr.f32.mxu0 0.0
      %3874 = vmatmul.mubr.f32.gmra.mrb[0].mxu0 %v3797
      %v3875 = vpop.f32.mrb[0].mxu0
      %v3876 = vadd.f32 0.0, %v3875
      %v3877 = vpop.f32.mrb[0].mxu0
      %3878 = vdwg.mxu0
      %v3879 = vadd.f32 %v3775, %v3866
      %v3880 = vadd.f32 %v3776, %v3871
      %v3881 = vadd.f32 %v3777, %v3876
    $region103: #{autoencoder_forward.1} parent=1 // loop_footer
      %s3774 = sadd.s32 1, %s3770
    $region104: #{autoencoder_forward.1} parent=1 // loop_footer_branch
      %3769 = sbr.rel target = $region100
    $region105: #{autoencoder_forward.1} parent=1 // loop_exit
      _
    %3882 = vst.msk [vmem:[%s2932 + $0x180] sm:$0xff] %vm131, %v3775
    %3883 = vst.msk [vmem:[%s2932 + $0x188] sm:$0xff] %vm131, %v3776
    %3884 = vst.msk [vmem:[%s2932 + $0x190] sm:$0x3] %vm139, %v3777
    %v3885 = vsel %vm131, %v3775, 0.0
    %v3886 = vsel %vm131, %v3776, 0.0
    %v3887 = vadd.f32 %v3885, %v3886
    %v3888 = vsel %vm139, %v3777, 0.0
    %v3889 = vadd.f32 %v3887, %v3888
    %v3890 = vrot.slane %v3889, 4
    %v3891 = vadd.f32 %v3889, %v3890
    %v3892 = vrot.slane %v3891, 2
    %v3893 = vadd.f32 %v3891, %v3892
    %v3894 = vrot.slane %v3893, 1
    %v3895 = vadd.f32 %v3893, %v3894
    %v3896 = vadd.f32 %v3714, %v3895
    %v3897 = vmul.f32 %v3775, %v3775
    %v3898 = vmul.f32 %v3776, %v3776
    %v3899 = vmul.f32 %v3777, %v3777
    %v3900 = vsel %vm131, %v3897, 0.0
    %v3901 = vsel %vm131, %v3898, 0.0
    %v3902 = vadd.f32 %v3900, %v3901
    %v3903 = vsel %vm139, %v3899, 0.0
    %v3904 = vadd.f32 %v3902, %v3903
    %v3905 = vrot.slane %v3904, 4
    %v3906 = vadd.f32 %v3904, %v3905
    %v3907 = vrot.slane %v3906, 2
    %v3908 = vadd.f32 %v3906, %v3907
    %v3909 = vrot.slane %v3908, 1
    %v3910 = vadd.f32 %v3908, %v3909
    %v3911 = vadd.f32 %v3768, %v3910
    %v3912 = vmul.f32 %v3896, 0.0012437811
    %v3913 = vmul.f32 %v3911, 0.0012437811
    %v3914 = vmul.f32 %v3912, %v3912
    %v3915 = vsub.f32 %v3913, %v3914
    %v3916 = vadd.f32 %v3915, 1e-05
    %v3917 = vrsqrt.pop %v3916
    loop: start=0, step=1, limit=7
    $region106: #{autoencoder_forward.1} parent=1 // loop_pre_header
      _
    $region107: #{autoencoder_forward.1} parent=1 // loop_header
      %s3919 = sphi 0, %s3923
      %p3920 = scmp.ge.s32.totalorder %s3919, 7
    $region108: #{autoencoder_forward.1} parent=1 // loop_header_branch
      %3922 = sbr.rel (%p3920) target = $region112
    $region109: #{autoencoder_forward.1} parent=1 // loop_body
      %s3924 = smul.u32 %s3919, 8
      %s3925 = smul.u32 %s3919, 56
      %s3926 = scalar_lea.vmem [#allocation4], %s3925
      %v3927 = vld [vmem:[%s3926] sm:$0xff]
      %v3928 = vld [vmem:[%s3926 + $0x8] sm:$0xf]
      %v3929 = vsel %vm131, %v3927, -inf
      %vm3930 = vcmask 519168
      %v3931 = vsel %vm3930, %v3928, -inf
      %v3932 = vmax.f32 %v3929, %v3931
      %v3933 = vrot.slane %v3932, 4
      %v3934 = vmax.f32 %v3932, %v3933
      %v3935 = vrot.slane %v3934, 2
      %v3936 = vmax.f32 %v3934, %v3935
      %v3937 = vrot.slane %v3936, 1
      %v3938 = vmax.f32 %v3936, %v3937
      %s3939 = sadd.s32 %s3924, 1
      %s3940 = smul.u32 %s3939, 7
      %s3941 = scalar_lea.vmem [#allocation4], %s3940
      %v3942 = vld [vmem:[%s3941] sm:$0xff]
      %v3943 = vld [vmem:[%s3941 + $0x8] sm:$0xf]
      %v3944 = vsel %vm131, %v3942, -inf
      %v3945 = vsel %vm3930, %v3943, -inf
      %v3946 = vmax.f32 %v3944, %v3945
      %v3947 = vrot.slane %v3946, 4
      %v3948 = vmax.f32 %v3946, %v3947
      %v3949 = vrot.slane %v3948, 2
      %v3950 = vmax.f32 %v3948, %v3949
      %v3951 = vrot.slane %v3950, 1
      %v3952 = vmax.f32 %v3950, %v3951
      %s3953 = sadd.s32 %s3924, 2
      %s3954 = smul.u32 %s3953, 7
      %s3955 = scalar_lea.vmem [#allocation4], %s3954
      %v3956 = vld [vmem:[%s3955] sm:$0xff]
      %v3957 = vld [vmem:[%s3955 + $0x8] sm:$0xf]
      %v3958 = vsel %vm131, %v3956, -inf
      %v3959 = vsel %vm3930, %v3957, -inf
      %v3960 = vmax.f32 %v3958, %v3959
      %v3961 = vrot.slane %v3960, 4
      %v3962 = vmax.f32 %v3960, %v3961
      %v3963 = vrot.slane %v3962, 2
      %v3964 = vmax.f32 %v3962, %v3963
      %v3965 = vrot.slane %v3964, 1
      %v3966 = vmax.f32 %v3964, %v3965
      %s3967 = sadd.s32 %s3924, 3
      %s3968 = smul.u32 %s3967, 7
      %s3969 = scalar_lea.vmem [#allocation4], %s3968
      %v3970 = vld [vmem:[%s3969] sm:$0xff]
      %v3971 = vld [vmem:[%s3969 + $0x8] sm:$0xf]
      %v3972 = vsel %vm131, %v3970, -inf
      %v3973 = vsel %vm3930, %v3971, -inf
      %v3974 = vmax.f32 %v3972, %v3973
      %v3975 = vrot.slane %v3974, 4
      %v3976 = vmax.f32 %v3974, %v3975
      %v3977 = vrot.slane %v3976, 2
      %v3978 = vmax.f32 %v3976, %v3977
      %v3979 = vrot.slane %v3978, 1
      %v3980 = vmax.f32 %v3978, %v3979
      %s3981 = sadd.s32 %s3924, 4
      %s3982 = smul.u32 %s3981, 7
      %s3983 = scalar_lea.vmem [#allocation4], %s3982
      %v3984 = vld [vmem:[%s3983] sm:$0xff]
      %v3985 = vld [vmem:[%s3983 + $0x8] sm:$0xf]
      %v3986 = vsel %vm131, %v3984, -inf
      %v3987 = vsel %vm3930, %v3985, -inf
      %v3988 = vmax.f32 %v3986, %v3987
      %v3989 = vrot.slane %v3988, 4
      %v3990 = vmax.f32 %v3988, %v3989
      %v3991 = vrot.slane %v3990, 2
      %v3992 = vmax.f32 %v3990, %v3991
      %v3993 = vrot.slane %v3992, 1
      %v3994 = vmax.f32 %v3992, %v3993
      %s3995 = sadd.s32 %s3924, 5
      %s3996 = smul.u32 %s3995, 7
      %s3997 = scalar_lea.vmem [#allocation4], %s3996
      %v3998 = vld [vmem:[%s3997] sm:$0xff]
      %v3999 = vld [vmem:[%s3997 + $0x8] sm:$0xf]
      %v4000 = vsel %vm131, %v3998, -inf
      %v4001 = vsel %vm3930, %v3999, -inf
      %v4002 = vmax.f32 %v4000, %v4001
      %v4003 = vrot.slane %v4002, 4
      %v4004 = vmax.f32 %v4002, %v4003
      %v4005 = vrot.slane %v4004, 2
      %v4006 = vmax.f32 %v4004, %v4005
      %v4007 = vrot.slane %v4006, 1
      %v4008 = vmax.f32 %v4006, %v4007
      %s4009 = sadd.s32 %s3924, 6
      %s4010 = smul.u32 %s4009, 7
      %s4011 = scalar_lea.vmem [#allocation4], %s4010
      %v4012 = vld [vmem:[%s4011] sm:$0xff]
      %v4013 = vld [vmem:[%s4011 + $0x8] sm:$0xf]
      %v4014 = vsel %vm131, %v4012, -inf
      %v4015 = vsel %vm3930, %v4013, -inf
      %v4016 = vmax.f32 %v4014, %v4015
      %v4017 = vrot.slane %v4016, 4
      %v4018 = vmax.f32 %v4016, %v4017
      %v4019 = vrot.slane %v4018, 2
      %v4020 = vmax.f32 %v4018, %v4019
      %v4021 = vrot.slane %v4020, 1
      %v4022 = vmax.f32 %v4020, %v4021
      %s4023 = sadd.s32 %s3924, 7
      %s4024 = smul.u32 %s4023, 7
      %s4025 = scalar_lea.vmem [#allocation4], %s4024
      %v4026 = vld [vmem:[%s4025] sm:$0xff]
      %v4027 = vld [vmem:[%s4025 + $0x8] sm:$0xf]
      %v4028 = vsel %vm131, %v4026, -inf
      %v4029 = vsel %vm3930, %v4027, -inf
      %v4030 = vmax.f32 %v4028, %v4029
      %v4031 = vrot.slane %v4030, 4
      %v4032 = vmax.f32 %v4030, %v4031
      %v4033 = vrot.slane %v4032, 2
      %v4034 = vmax.f32 %v4032, %v4033
      %v4035 = vrot.slane %v4034, 1
      %v4036 = vmax.f32 %v4034, %v4035
      %vm4037 = vcmask 1040384
      %v4038 = vsel %vm4037, %v3938, %v3952
      %vm4039 = vcmask 1041408
      %v4040 = vsel %vm4039, %v4038, %v3966
      %vm4041 = vcmask 1042432
      %v4042 = vsel %vm4041, %v4040, %v3980
      %v4043 = vsel %vm506, %v4042, %v3994
      %vm4044 = vcmask 1044480
      %v4045 = vsel %vm4044, %v4043, %v4008
      %vm4046 = vcmask 1045504
      %v4047 = vsel %vm4046, %v4045, %v4022
      %vm4048 = vcmask 1046528
      %v4049 = vsel %vm4048, %v4047, %v4036
      %v4050 = vsub.f32 %v4049, %v3912
      %v4051 = vmul.f32 %v4050, %v3917
      %v4052 = vtanh.pop %v4051
      %s4053 = scalar_lea.vmem [#allocation5], %s3939
      %4054 = vst.msk [vmem:[%s4053] sm:$0xff] %vm131, %v4052
    $region110: #{autoencoder_forward.1} parent=1 // loop_footer
      %s3923 = sadd.s32 1, %s3919
    $region111: #{autoencoder_forward.1} parent=1 // loop_footer_branch
      %3918 = sbr.rel target = $region107
    $region112: #{autoencoder_forward.1} parent=1 // loop_exit
      _
    loop: start=0, step=1, limit=7
    $region113: #{autoencoder_forward.1} parent=1 // loop_pre_header
      _
    $region114: #{autoencoder_forward.1} parent=1 // loop_header
      %s4056 = sphi 0, %s4060
      %p4057 = scmp.ge.s32.totalorder %s4056, 7
    $region115: #{autoencoder_forward.1} parent=1 // loop_header_branch
      %4059 = sbr.rel (%p4057) target = $region119
    $region116: #{autoencoder_forward.1} parent=1 // loop_body
      %s4061 = smul.u32 %s4056, 8
      %s4062 = smul.u32 %s4056, 56
      %s4063 = sadd.s32 %s4062, 408
      %s4064 = scalar_lea.vmem [#allocation4], %s4063
      %v4065 = vld [vmem:[%s4064] sm:$0xff]
      %v4066 = vld [vmem:[%s4064 + $0x8] sm:$0xf]
      %v4067 = vsel %vm131, %v4065, -inf
      %vm4068 = vcmask 519168
      %v4069 = vsel %vm4068, %v4066, -inf
      %v4070 = vmax.f32 %v4067, %v4069
      %v4071 = vrot.slane %v4070, 4
      %v4072 = vmax.f32 %v4070, %v4071
      %v4073 = vrot.slane %v4072, 2
      %v4074 = vmax.f32 %v4072, %v4073
      %v4075 = vrot.slane %v4074, 1
      %v4076 = vmax.f32 %v4074, %v4075
      %s4077 = sadd.s32 %s4061, 1
      %s4078 = smul.u32 %s4077, 7
      %s4079 = sadd.s32 %s4078, 408
      %s4080 = scalar_lea.vmem [#allocation4], %s4079
      %v4081 = vld [vmem:[%s4080] sm:$0xff]
      %v4082 = vld [vmem:[%s4080 + $0x8] sm:$0xf]
      %v4083 = vsel %vm131, %v4081, -inf
      %v4084 = vsel %vm4068, %v4082, -inf
      %v4085 = vmax.f32 %v4083, %v4084
      %v4086 = vrot.slane %v4085, 4
      %v4087 = vmax.f32 %v4085, %v4086
      %v4088 = vrot.slane %v4087, 2
      %v4089 = vmax.f32 %v4087, %v4088
      %v4090 = vrot.slane %v4089, 1
      %v4091 = vmax.f32 %v4089, %v4090
      %s4092 = sadd.s32 %s4061, 2
      %s4093 = smul.u32 %s4092, 7
      %s4094 = sadd.s32 %s4093, 408
      %s4095 = scalar_lea.vmem [#allocation4], %s4094
      %v4096 = vld [vmem:[%s4095] sm:$0xff]
      %v4097 = vld [vmem:[%s4095 + $0x8] sm:$0xf]
      %v4098 = vsel %vm131, %v4096, -inf
      %v4099 = vsel %vm4068, %v4097, -inf
      %v4100 = vmax.f32 %v4098, %v4099
      %v4101 = vrot.slane %v4100, 4
      %v4102 = vmax.f32 %v4100, %v4101
      %v4103 = vrot.slane %v4102, 2
      %v4104 = vmax.f32 %v4102, %v4103
      %v4105 = vrot.slane %v4104, 1
      %v4106 = vmax.f32 %v4104, %v4105
      %s4107 = sadd.s32 %s4061, 3
      %s4108 = smul.u32 %s4107, 7
      %s4109 = sadd.s32 %s4108, 408
      %s4110 = scalar_lea.vmem [#allocation4], %s4109
      %v4111 = vld [vmem:[%s4110] sm:$0xff]
      %v4112 = vld [vmem:[%s4110 + $0x8] sm:$0xf]
      %v4113 = vsel %vm131, %v4111, -inf
      %v4114 = vsel %vm4068, %v4112, -inf
      %v4115 = vmax.f32 %v4113, %v4114
      %v4116 = vrot.slane %v4115, 4
      %v4117 = vmax.f32 %v4115, %v4116
      %v4118 = vrot.slane %v4117, 2
      %v4119 = vmax.f32 %v4117, %v4118
      %v4120 = vrot.slane %v4119, 1
      %v4121 = vmax.f32 %v4119, %v4120
      %s4122 = sadd.s32 %s4061, 4
      %s4123 = smul.u32 %s4122, 7
      %s4124 = sadd.s32 %s4123, 408
      %s4125 = scalar_lea.vmem [#allocation4], %s4124
      %v4126 = vld [vmem:[%s4125] sm:$0xff]
      %v4127 = vld [vmem:[%s4125 + $0x8] sm:$0xf]
      %v4128 = vsel %vm131, %v4126, -inf
      %v4129 = vsel %vm4068, %v4127, -inf
      %v4130 = vmax.f32 %v4128, %v4129
      %v4131 = vrot.slane %v4130, 4
      %v4132 = vmax.f32 %v4130, %v4131
      %v4133 = vrot.slane %v4132, 2
      %v4134 = vmax.f32 %v4132, %v4133
      %v4135 = vrot.slane %v4134, 1
      %v4136 = vmax.f32 %v4134, %v4135
      %s4137 = sadd.s32 %s4061, 5
      %s4138 = smul.u32 %s4137, 7
      %s4139 = sadd.s32 %s4138, 408
      %s4140 = scalar_lea.vmem [#allocation4], %s4139
      %v4141 = vld [vmem:[%s4140] sm:$0xff]
      %v4142 = vld [vmem:[%s4140 + $0x8] sm:$0xf]
      %v4143 = vsel %vm131, %v4141, -inf
      %v4144 = vsel %vm4068, %v4142, -inf
      %v4145 = vmax.f32 %v4143, %v4144
      %v4146 = vrot.slane %v4145, 4
      %v4147 = vmax.f32 %v4145, %v4146
      %v4148 = vrot.slane %v4147, 2
      %v4149 = vmax.f32 %v4147, %v4148
      %v4150 = vrot.slane %v4149, 1
      %v4151 = vmax.f32 %v4149, %v4150
      %s4152 = sadd.s32 %s4061, 6
      %s4153 = smul.u32 %s4152, 7
      %s4154 = sadd.s32 %s4153, 408
      %s4155 = scalar_lea.vmem [#allocation4], %s4154
      %v4156 = vld [vmem:[%s4155] sm:$0xff]
      %v4157 = vld [vmem:[%s4155 + $0x8] sm:$0xf]
      %v4158 = vsel %vm131, %v4156, -inf
      %v4159 = vsel %vm4068, %v4157, -inf
      %v4160 = vmax.f32 %v4158, %v4159
      %v4161 = vrot.slane %v4160, 4
      %v4162 = vmax.f32 %v4160, %v4161
      %v4163 = vrot.slane %v4162, 2
      %v4164 = vmax.f32 %v4162, %v4163
      %v4165 = vrot.slane %v4164, 1
      %v4166 = vmax.f32 %v4164, %v4165
      %s4167 = sadd.s32 %s4061, 7
      %s4168 = smul.u32 %s4167, 7
      %s4169 = sadd.s32 %s4168, 408
      %s4170 = scalar_lea.vmem [#allocation4], %s4169
      %v4171 = vld [vmem:[%s4170] sm:$0xff]
      %v4172 = vld [vmem:[%s4170 + $0x8] sm:$0xf]
      %v4173 = vsel %vm131, %v4171, -inf
      %v4174 = vsel %vm4068, %v4172, -inf
      %v4175 = vmax.f32 %v4173, %v4174
      %v4176 = vrot.slane %v4175, 4
      %v4177 = vmax.f32 %v4175, %v4176
      %v4178 = vrot.slane %v4177, 2
      %v4179 = vmax.f32 %v4177, %v4178
      %v4180 = vrot.slane %v4179, 1
      %v4181 = vmax.f32 %v4179, %v4180
      %vm4182 = vcmask 1040384
      %v4183 = vsel %vm4182, %v4076, %v4091
      %vm4184 = vcmask 1041408
      %v4185 = vsel %vm4184, %v4183, %v4106
      %vm4186 = vcmask 1042432
      %v4187 = vsel %vm4186, %v4185, %v4121
      %v4188 = vsel %vm506, %v4187, %v4136
      %vm4189 = vcmask 1044480
      %v4190 = vsel %vm4189, %v4188, %v4151
      %vm4191 = vcmask 1045504
      %v4192 = vsel %vm4191, %v4190, %v4166
      %vm4193 = vcmask 1046528
      %v4194 = vsel %vm4193, %v4192, %v4181
      %v4195 = vsub.f32 %v4194, %v3912
      %v4196 = vmul.f32 %v4195, %v3917
      %v4197 = vtanh.pop %v4196
      %s4198 = sadd.s32 %s4077, 64
      %s4199 = scalar_lea.vmem [#allocation5], %s4198
      %4200 = vst.msk [vmem:[%s4199] sm:$0xff] %vm131, %v4197
    $region117: #{autoencoder_forward.1} parent=1 // loop_footer
      %s4060 = sadd.s32 1, %s4056
    $region118: #{autoencoder_forward.1} parent=1 // loop_footer_branch
      %4055 = sbr.rel target = $region114
    $region119: #{autoencoder_forward.1} parent=1 // loop_exit
      _
    loop: start=0, step=1, limit=31
    $region120: #{autoencoder_forward.1} parent=1 // loop_pre_header
      _
    $region121: #{autoencoder_forward.1} parent=1 // loop_header
      %s4202 = sphi 0, %s4206
      %p4203 = scmp.ge.s32.totalorder %s4202, 31
      %v4207 = vphi 0.0, %v4323
      %v4208 = vphi 0.0, %v4324
      %v4209 = vphi 0.0, %v4325
      %v4210 = vphi 0.0, %v4326
    $region122: #{autoencoder_forward.1} parent=1 // loop_header_branch
      %4205 = sbr.rel (%p4203) target = $region126
    $region123: #{autoencoder_forward.1} parent=1 // loop_body
      %s4211 = scalar_lea.vmem [#allocation5], %s4202
      %v4212 = vld [vmem:[%s4211] sm:$0xff]
      %v4213 = vld [vmem:[%s4211 + $0x8] sm:$0xff]
      %v4214 = vld [vmem:[%s4211 + $0x10] sm:$0xff]
      %v4215 = vld [vmem:[%s4211 + $0x18] sm:$0xf]
      %s4216 = smul.u32 %s4202, 64
      %s4217 = scalar_lea.vmem %s3, %s4216
      %v4218 = vld [vmem:[%s4217] sm:$0xff]
      %v4219 = vld [vmem:[%s4217 + $0x8] sm:$0xff]
      %v4220 = vld [vmem:[%s4217 + $0x10] sm:$0xff]
      %v4221 = vld [vmem:[%s4217 + $0x18] sm:$0xff]
      %v4222 = vld [vmem:[%s4217 + $0x20] sm:$0xff]
      %v4223 = vld [vmem:[%s4217 + $0x28] sm:$0xff]
      %v4224 = vld [vmem:[%s4217 + $0x30] sm:$0xff]
      %v4225 = vld [vmem:[%s4217 + $0x38] sm:$0xff]
      %v4227 = vsel %vm131, %v4212, 0
      %v4230 = vsel %vm131, %v4213, 0
      %v4233 = vsel %vm131, %v4214, 0
      %v4236 = vsel %vm131, %v4215, 0
      %4238 = vmatprep.subr.mxu0 0.0
      %4239 = vmatpush1.msra.mxu0 %v4218
      %4240 = vmatprep.subr.mxu0 0.0
      %4241 = vmatpush1.msra.mxu0 %v4219
      %4242 = vmatprep.subr.mxu0 0.0
      %4243 = vmatpush1.msra.mxu0 %v4220
      %4244 = vmatprep.subr.mxu0 0.0
      %4245 = vmatpush1.msra.mxu0 %v4221
      %4246 = vmatprep.subr.mxu0 0.0
      %4247 = vmatpush1.msra.mxu0 %v4222
      %4248 = vmatprep.subr.mxu0 0.0
      %4249 = vmatpush1.msra.mxu0 %v4223
      %4250 = vmatprep.subr.mxu0 0.0
      %4251 = vmatpush1.msra.mxu0 %v4224
      %4252 = vmatprep.subr.mxu0 0.0
      %4253 = vmatpush1.msra.mxu0 %v4225
      %4254 = vmatprep.subr.mxu0 0.0
      %4255 = vmatpush1.msra.mxu0 0.0
      %4256 = vmatprep.subr.mxu0 0.0
      %4257 = vmatpush1.msra.mxu0 0.0
      %4258 = vmatprep.subr.mxu0 0.0
      %4259 = vmatpush1.msra.mxu0 0.0
      %4260 = vmatprep.subr.mxu0 0.0
      %4261 = vmatpush1.msra.mxu0 0.0
      %4262 = vmatprep.subr.mxu0 0.0
      %4263 = vmatpush1.msra.mxu0 0.0
      %4264 = vmatprep.subr.mxu0 0.0
      %4265 = vmatpush1.msra.mxu0 0.0
      %4266 = vmatprep.subr.mxu0 0.0
      %4267 = vmatpush1.msra.mxu0 0.0
      %4268 = vmatprep.subr.mxu0 0.0
      %4269 = vmatpush1.msra.mxu0 0.0
      %4270 = vmatprep.subr.mxu0 0.0
      %4271 = vmatpush1.msra.mxu0 0.0
      %4272 = vmatprep.subr.mxu0 0.0
      %4273 = vmatpush1.msra.mxu0 0.0
      %4274 = vmatprep.subr.mxu0 0.0
      %4275 = vmatpush1.msra.mxu0 0.0
      %4276 = vmatprep.subr.mxu0 0.0
      %4277 = vmatpush1.msra.mxu0 0.0
      %4278 = vmatprep.subr.mxu0 0.0
      %4279 = vmatpush1.msra.mxu0 0.0
      %4280 = vmatprep.subr.mxu0 0.0
      %4281 = vmatpush1.msra.mxu0 0.0
      %4282 = vmatprep.subr.mxu0 0.0
      %4283 = vmatpush1.msra.mxu0 0.0
      %4284 = vmatprep.subr.mxu0 0.0
      %4285 = vmatpush1.msra.mxu0 0.0
      %4286 = vmatprep.subr.mxu0 0.0
      %4287 = vmatpush1.msra.mxu0 0.0
      %4288 = vmatprep.subr.mxu0 0.0
      %4289 = vmatpush1.msra.mxu0 0.0
      %4290 = vmatprep.subr.mxu0 0.0
      %4291 = vmatpush1.msra.mxu0 0.0
      %4292 = vmatprep.subr.mxu0 0.0
      %4293 = vmatpush1.msra.mxu0 0.0
      %4294 = vmatprep.subr.mxu0 0.0
      %4295 = vmatpush1.msra.mxu0 0.0
      %4296 = vmatprep.subr.mxu0 0.0
      %4297 = vmatpush1.msra.mxu0 0.0
      %4298 = vmatprep.subr.mxu0 0.0
      %4299 = vmatpush1.msra.mxu0 0.0
      %4300 = vmatprep.subr.mxu0 0.0
      %4301 = vmatpush1.msra.mxu0 0.0
      %4302 = vmatprep.mubr.f32.mxu0 0.0
      %4303 = vmatmul.mubr.f32.gmra.mrb[0].mxu0 %v4227
      %v4304 = vpop.f32.mrb[0].mxu0
      %v4305 = vadd.f32 0.0, %v4304
      %v4306 = vpop.f32.mrb[0].mxu0
      %4307 = vmatprep.mubr.f32.mxu0 0.0
      %4308 = vmatmul.mubr.f32.gmra.mrb[0].mxu0 %v4230
      %v4309 = vpop.f32.mrb[0].mxu0
      %v4310 = vadd.f32 0.0, %v4309
      %v4311 = vpop.f32.mrb[0].mxu0
      %4312 = vmatprep.mubr.f32.mxu0 0.0
      %4313 = vmatmul.mubr.f32.gmra.mrb[0].mxu0 %v4233
      %v4314 = vpop.f32.mrb[0].mxu0
      %v4315 = vadd.f32 0.0, %v4314
      %v4316 = vpop.f32.mrb[0].mxu0
      %4317 = vmatprep.mubr.f32.mxu0 0.0
      %4318 = vmatmul.mubr.f32.gmra.mrb[0].mxu0 %v4236
      %v4319 = vpop.f32.mrb[0].mxu0
      %v4320 = vadd.f32 0.0, %v4319
      %v4321 = vpop.f32.mrb[0].mxu0
      %4322 = vdwg.mxu0
      %v4323 = vadd.f32 %v4207, %v4305
      %v4324 = vadd.f32 %v4208, %v4310
      %v4325 = vadd.f32 %v4209, %v4315
      %v4326 = vadd.f32 %v4210, %v4320
    $region124: #{autoencoder_forward.1} parent=1 // loop_footer
      %s4206 = sadd.s32 1, %s4202
    $region125: #{autoencoder_forward.1} parent=1 // loop_footer_branch
      %4201 = sbr.rel target = $region121
    $region126: #{autoencoder_forward.1} parent=1 // loop_exit
      _
    loop: start=0, step=1, limit=31
    $region127: #{autoencoder_forward.1} parent=1 // loop_pre_header
      _
    $region128: #{autoencoder_forward.1} parent=1 // loop_header
      %s4328 = sphi 0, %s4332
      %p4329 = scmp.ge.s32.totalorder %s4328, 31
      %v4333 = vphi 0.0, %v4450
      %v4334 = vphi 0.0, %v4451
      %v4335 = vphi 0.0, %v4452
      %v4336 = vphi 0.0, %v4453
    $region129: #{autoencoder_forward.1} parent=1 // loop_header_branch
      %4331 = sbr.rel (%p4329) target = $region133
    $region130: #{autoencoder_forward.1} parent=1 // loop_body
      %s4337 = sadd.s32 %s4328, 64
      %s4338 = scalar_lea.vmem [#allocation5], %s4337
      %v4339 = vld [vmem:[%s4338] sm:$0xff]
      %v4340 = vld [vmem:[%s4338 + $0x8] sm:$0xff]
      %v4341 = vld [vmem:[%s4338 + $0x10] sm:$0xff]
      %v4342 = vld [vmem:[%s4338 + $0x18] sm:$0xf]
      %s4343 = smul.u32 %s4328, 64
      %s4344 = scalar_lea.vmem %s3, %s4343
      %v4345 = vld [vmem:[%s4344] sm:$0xff]
      %v4346 = vld [vmem:[%s4344 + $0x8] sm:$0xff]
      %v4347 = vld [vmem:[%s4344 + $0x10] sm:$0xff]
      %v4348 = vld [vmem:[%s4344 + $0x18] sm:$0xff]
      %v4349 = vld [vmem:[%s4344 + $0x20] sm:$0xff]
      %v4350 = vld [vmem:[%s4344 + $0x28] sm:$0xff]
      %v4351 = vld [vmem:[%s4344 + $0x30] sm:$0xff]
      %v4352 = vld [vmem:[%s4344 + $0x38] sm:$0xff]
      %v4354 = vsel %vm131, %v4339, 0
      %v4357 = vsel %vm131, %v4340, 0
      %v4360 = vsel %vm131, %v4341, 0
      %v4363 = vsel %vm131, %v4342, 0
      %4365 = vmatprep.subr.mxu0 0.0
      %4366 = vmatpush1.msra.mxu0 %v4345
      %4367 = vmatprep.subr.mxu0 0.0
      %4368 = vmatpush1.msra.mxu0 %v4346
      %4369 = vmatprep.subr.mxu0 0.0
      %4370 = vmatpush1.msra.mxu0 %v4347
      %4371 = vmatprep.subr.mxu0 0.0
      %4372 = vmatpush1.msra.mxu0 %v4348
      %4373 = vmatprep.subr.mxu0 0.0
      %4374 = vmatpush1.msra.mxu0 %v4349
      %4375 = vmatprep.subr.mxu0 0.0
      %4376 = vmatpush1.msra.mxu0 %v4350
      %4377 = vmatprep.subr.mxu0 0.0
      %4378 = vmatpush1.msra.mxu0 %v4351
      %4379 = vmatprep.subr.mxu0 0.0
      %4380 = vmatpush1.msra.mxu0 %v4352
      %4381 = vmatprep.subr.mxu0 0.0
      %4382 = vmatpush1.msra.mxu0 0.0
      %4383 = vmatprep.subr.mxu0 0.0
      %4384 = vmatpush1.msra.mxu0 0.0
      %4385 = vmatprep.subr.mxu0 0.0
      %4386 = vmatpush1.msra.mxu0 0.0
      %4387 = vmatprep.subr.mxu0 0.0
      %4388 = vmatpush1.msra.mxu0 0.0
      %4389 = vmatprep.subr.mxu0 0.0
      %4390 = vmatpush1.msra.mxu0 0.0
      %4391 = vmatprep.subr.mxu0 0.0
      %4392 = vmatpush1.msra.mxu0 0.0
      %4393 = vmatprep.subr.mxu0 0.0
      %4394 = vmatpush1.msra.mxu0 0.0
      %4395 = vmatprep.subr.mxu0 0.0
      %4396 = vmatpush1.msra.mxu0 0.0
      %4397 = vmatprep.subr.mxu0 0.0
      %4398 = vmatpush1.msra.mxu0 0.0
      %4399 = vmatprep.subr.mxu0 0.0
      %4400 = vmatpush1.msra.mxu0 0.0
      %4401 = vmatprep.subr.mxu0 0.0
      %4402 = vmatpush1.msra.mxu0 0.0
      %4403 = vmatprep.subr.mxu0 0.0
      %4404 = vmatpush1.msra.mxu0 0.0
      %4405 = vmatprep.subr.mxu0 0.0
      %4406 = vmatpush1.msra.mxu0 0.0
      %4407 = vmatprep.subr.mxu0 0.0
      %4408 = vmatpush1.msra.mxu0 0.0
      %4409 = vmatprep.subr.mxu0 0.0
      %4410 = vmatpush1.msra.mxu0 0.0
      %4411 = vmatprep.subr.mxu0 0.0
      %4412 = vmatpush1.msra.mxu0 0.0
      %4413 = vmatprep.subr.mxu0 0.0
      %4414 = vmatpush1.msra.mxu0 0.0
      %4415 = vmatprep.subr.mxu0 0.0
      %4416 = vmatpush1.msra.mxu0 0.0
      %4417 = vmatprep.subr.mxu0 0.0
      %4418 = vmatpush1.msra.mxu0 0.0
      %4419 = vmatprep.subr.mxu0 0.0
      %4420 = vmatpush1.msra.mxu0 0.0
      %4421 = vmatprep.subr.mxu0 0.0
      %4422 = vmatpush1.msra.mxu0 0.0
      %4423 = vmatprep.subr.mxu0 0.0
      %4424 = vmatpush1.msra.mxu0 0.0
      %4425 = vmatprep.subr.mxu0 0.0
      %4426 = vmatpush1.msra.mxu0 0.0
      %4427 = vmatprep.subr.mxu0 0.0
      %4428 = vmatpush1.msra.mxu0 0.0
      %4429 = vmatprep.mubr.f32.mxu0 0.0
      %4430 = vmatmul.mubr.f32.gmra.mrb[0].mxu0 %v4354
      %v4431 = vpop.f32.mrb[0].mxu0
      %v4432 = vadd.f32 0.0, %v4431
      %v4433 = vpop.f32.mrb[0].mxu0
      %4434 = vmatprep.mubr.f32.mxu0 0.0
      %4435 = vmatmul.mubr.f32.gmra.mrb[0].mxu0 %v4357
      %v4436 = vpop.f32.mrb[0].mxu0
      %v4437 = vadd.f32 0.0, %v4436
      %v4438 = vpop.f32.mrb[0].mxu0
      %4439 = vmatprep.mubr.f32.mxu0 0.0
      %4440 = vmatmul.mubr.f32.gmra.mrb[0].mxu0 %v4360
      %v4441 = vpop.f32.mrb[0].mxu0
      %v4442 = vadd.f32 0.0, %v4441
      %v4443 = vpop.f32.mrb[0].mxu0
      %4444 = vmatprep.mubr.f32.mxu0 0.0
      %4445 = vmatmul.mubr.f32.gmra.mrb[0].mxu0 %v4363
      %v4446 = vpop.f32.mrb[0].mxu0
      %v4447 = vadd.f32 0.0, %v4446
      %v4448 = vpop.f32.mrb[0].mxu0
      %4449 = vdwg.mxu0
      %v4450 = vadd.f32 %v4333, %v4432
      %v4451 = vadd.f32 %v4334, %v4437
      %v4452 = vadd.f32 %v4335, %v4442
      %v4453 = vadd.f32 %v4336, %v4447
    $region131: #{autoencoder_forward.1} parent=1 // loop_footer
      %s4332 = sadd.s32 1, %s4328
    $region132: #{autoencoder_forward.1} parent=1 // loop_footer_branch
      %4327 = sbr.rel target = $region128
    $region133: #{autoencoder_forward.1} parent=1 // loop_exit
      _
    %v4454 = vadd.f32 %v4207, %v4208
    %v4455 = vadd.f32 %v4454, %v4209
    %v4456 = vsel %vm506, %v4210, 0.0
    %v4457 = vadd.f32 %v4455, %v4456
    %v4458 = vrot.slane %v4457, 4
    %v4459 = vadd.f32 %v4457, %v4458
    %v4460 = vrot.slane %v4459, 2
    %v4461 = vadd.f32 %v4459, %v4460
    %v4462 = vrot.slane %v4461, 1
    %v4463 = vadd.f32 %v4461, %v4462
    %v4464 = vadd.f32 %v4463, 0.0
    %v4465 = vmul.f32 %v4207, %v4207
    %v4466 = vmul.f32 %v4208, %v4208
    %v4467 = vmul.f32 %v4209, %v4209
    %v4468 = vmul.f32 %v4210, %v4210
    %v4469 = vadd.f32 %v4465, %v4466
    %v4470 = vadd.f32 %v4469, %v4467
    %v4471 = vsel %vm506, %v4468, 0.0
    %v4472 = vadd.f32 %v4470, %v4471
    %v4473 = vrot.slane %v4472, 4
    %v4474 = vadd.f32 %v4472, %v4473
    %v4475 = vrot.slane %v4474, 2
    %v4476 = vadd.f32 %v4474, %v4475
    %v4477 = vrot.slane %v4476, 1
    %v4478 = vadd.f32 %v4476, %v4477
    %v4479 = vadd.f32 %v4478, 0.0
    %v4480 = vadd.f32 %v4333, %v4334
    %v4481 = vadd.f32 %v4480, %v4335
    %v4482 = vsel %vm506, %v4336, 0.0
    %v4483 = vadd.f32 %v4481, %v4482
    %v4484 = vrot.slane %v4483, 4
    %v4485 = vadd.f32 %v4483, %v4484
    %v4486 = vrot.slane %v4485, 2
    %v4487 = vadd.f32 %v4485, %v4486
    %v4488 = vrot.slane %v4487, 1
    %v4489 = vadd.f32 %v4487, %v4488
    %v4490 = vadd.f32 %v4464, %v4489
    %v4491 = vmul.f32 %v4333, %v4333
    %v4492 = vmul.f32 %v4334, %v4334
    %v4493 = vmul.f32 %v4335, %v4335
    %v4494 = vmul.f32 %v4336, %v4336
    %v4495 = vadd.f32 %v4491, %v4492
    %v4496 = vadd.f32 %v4495, %v4493
    %v4497 = vsel %vm506, %v4494, 0.0
    %v4498 = vadd.f32 %v4496, %v4497
    %v4499 = vrot.slane %v4498, 4
    %v4500 = vadd.f32 %v4498, %v4499
    %v4501 = vrot.slane %v4500, 2
    %v4502 = vadd.f32 %v4500, %v4501
    %v4503 = vrot.slane %v4502, 1
    %v4504 = vadd.f32 %v4502, %v4503
    %v4505 = vadd.f32 %v4479, %v4504
    %v4506 = vmul.f32 %v4490, 0.017857144
    %v4507 = vmul.f32 %v4505, 0.017857144
    %v4508 = vmul.f32 %v4506, %v4506
    %v4509 = vsub.f32 %v4507, %v4508
    %v4510 = vadd.f32 %v4509, 1e-05
    %v4511 = vrsqrt.pop %v4510
    %v4512 = vsel %vm506, %v4208, -inf
    %v4513 = vmax.f32 %v4207, %v4512
    %v4514 = vrot.slane %v4513, 4
    %v4515 = vmax.f32 %v4513, %v4514
    %v4516 = vrot.slane %v4515, 2
    %v4517 = vmax.f32 %v4515, %v4516
    %v4518 = vrot.slane %v4517, 1
    %v4519 = vmax.f32 %v4517, %v4518
    %vm4520 = vcmask 1047559
    %v4521 = vsel %vm4520, %v4207, -inf
    %vm4522 = vcmask 1042432
    %v4523 = vsel %vm4522, %v4209, -inf
    %v4524 = vmax.f32 %v4521, %v4208
    %v4525 = vmax.f32 %v4524, %v4523
    %v4526 = vrot.slane %v4525, 4
    %v4527 = vmax.f32 %v4525, %v4526
    %v4528 = vrot.slane %v4527, 2
    %v4529 = vmax.f32 %v4527, %v4528
    %v4530 = vrot.slane %v4529, 1
    %v4531 = vmax.f32 %v4529, %v4530
    %vm4532 = vcmask 1047558
    %v4533 = vsel %vm4532, %v4208, -inf
    %vm4534 = vcmask 1041408
    %v4535 = vsel %vm4534, %v4210, -inf
    %v4536 = vmax.f32 %v4533, %v4209
    %v4537 = vmax.f32 %v4536, %v4535
    %v4538 = vrot.slane %v4537, 4
    %v4539 = vmax.f32 %v4537, %v4538
    %v4540 = vrot.slane %v4539, 2
    %v4541 = vmax.f32 %v4539, %v4540
    %v4542 = vrot.slane %v4541, 1
    %v4543 = vmax.f32 %v4541, %v4542
    %vm4544 = vcmask 1040384
    %v4545 = vsel %vm4544, %v4519, %v4531
    %v4546 = vsel %vm4534, %v4545, %v4543
    %v4547 = vsub.f32 %v4546, %v4506
    %v4548 = vmul.f32 %v4547, %v4511
    %v4549 = vtanh.pop %v4548
    %v4550 = vld [vmem:[%s4] sm:$0xff]
    %v4551 = vld [vmem:[%s4 + $0x8] sm:$0xff]
    %v4552 = vld [vmem:[%s4 + $0x10] sm:$0xff]
    %v4553 = vld [vmem:[%s4 + $0x18] sm:$0xff]
    %v4554 = vld [vmem:[%s4 + $0x20] sm:$0xff]
    %v4555 = vld [vmem:[%s4 + $0x28] sm:$0xff]
    %v4556 = vld [vmem:[%s4 + $0x30] sm:$0xff]
    %v4557 = vld [vmem:[%s4 + $0x38] sm:$0xff]
    %v4558 = vld [vmem:[%s4 + $0x40] sm:$0xff]
    %v4559 = vld [vmem:[%s4 + $0x48] sm:$0xff]
    %v4560 = vld [vmem:[%s4 + $0x50] sm:$0xff]
    %v4561 = vld [vmem:[%s4 + $0x58] sm:$0xff]
    %v4562 = vld [vmem:[%s4 + $0x60] sm:$0xff]
    %v4563 = vld [vmem:[%s4 + $0x68] sm:$0xff]
    %v4564 = vld [vmem:[%s4 + $0x70] sm:$0xff]
    %v4565 = vld [vmem:[%s4 + $0x78] sm:$0xff]
    %v4566 = vld [vmem:[%s4 + $0x80] sm:$0xff]
    %v4567 = vld [vmem:[%s4 + $0x88] sm:$0xff]
    %v4568 = vld [vmem:[%s4 + $0x90] sm:$0xff]
    %v4569 = vld [vmem:[%s4 + $0x98] sm:$0xff]
    %v4570 = vld [vmem:[%s4 + $0xa0] sm:$0xff]
    %v4571 = vld [vmem:[%s4 + $0xa8] sm:$0xff]
    %v4572 = vld [vmem:[%s4 + $0xb0] sm:$0xff]
    %v4573 = vld [vmem:[%s4 + $0xb8] sm:$0xff]
    %v4574 = vld [vmem:[%s4 + $0xc0] sm:$0xff]
    %v4575 = vld [vmem:[%s4 + $0xc8] sm:$0xff]
    %v4576 = vld [vmem:[%s4 + $0xd0] sm:$0xff]
    %v4577 = vld [vmem:[%s4 + $0xd8] sm:$0xff]
    %v4578 = vld [vmem:[%s4 + $0xe0] sm:$0xff]
    %v4579 = vld [vmem:[%s4 + $0xe8] sm:$0xff]
    %v4580 = vld [vmem:[%s4 + $0xf0] sm:$0xff]
    %v4581 = vld [vmem:[%s4 + $0xf8] sm:$0xff]
    %v4583 = vrot.slane %v4549, 1
    %4585 = vmatprep.subr.mxu0 0.0
    %4586 = vmatpush1.msra.mxu0 %v4566
    %4587 = vmatprep.subr.mxu0 0.0
    %4588 = vmatpush1.msra.mxu0 %v4567
    %4589 = vmatprep.subr.mxu0 0.0
    %4590 = vmatpush1.msra.mxu0 %v4568
    %4591 = vmatprep.subr.mxu0 0.0
    %4592 = vmatpush1.msra.mxu0 %v4569
    %4593 = vmatprep.subr.mxu0 0.0
    %4594 = vmatpush1.msra.mxu0 %v4570
    %4595 = vmatprep.subr.mxu0 0.0
    %4596 = vmatpush1.msra.mxu0 %v4571
    %4597 = vmatprep.subr.mxu0 0.0
    %4598 = vmatpush1.msra.mxu0 %v4572
    %4599 = vmatprep.subr.mxu0 0.0
    %4600 = vmatpush1.msra.mxu0 %v4573
    %4601 = vmatprep.subr.mxu0 0.0
    %4602 = vmatpush1.msra.mxu0 %v4574
    %4603 = vmatprep.subr.mxu0 0.0
    %4604 = vmatpush1.msra.mxu0 %v4575
    %4605 = vmatprep.subr.mxu0 0.0
    %4606 = vmatpush1.msra.mxu0 %v4576
    %4607 = vmatprep.subr.mxu0 0.0
    %4608 = vmatpush1.msra.mxu0 %v4577
    %4609 = vmatprep.subr.mxu0 0.0
    %4610 = vmatpush1.msra.mxu0 %v4578
    %4611 = vmatprep.subr.mxu0 0.0
    %4612 = vmatpush1.msra.mxu0 %v4579
    %4613 = vmatprep.subr.mxu0 0.0
    %4614 = vmatpush1.msra.mxu0 %v4580
    %4615 = vmatprep.subr.mxu0 0.0
    %4616 = vmatpush1.msra.mxu0 %v4581
    %4617 = vmatprep.subr.mxu0 0.0
    %4618 = vmatpush1.msra.mxu0 0.0
    %4619 = vmatprep.subr.mxu0 0.0
    %4620 = vmatpush1.msra.mxu0 0.0
    %4621 = vmatprep.subr.mxu0 0.0
    %4622 = vmatpush1.msra.mxu0 0.0
    %4623 = vmatprep.subr.mxu0 0.0
    %4624 = vmatpush1.msra.mxu0 0.0
    %4625 = vmatprep.subr.mxu0 0.0
    %4626 = vmatpush1.msra.mxu0 0.0
    %4627 = vmatprep.subr.mxu0 0.0
    %4628 = vmatpush1.msra.mxu0 0.0
    %4629 = vmatprep.subr.mxu0 0.0
    %4630 = vmatpush1.msra.mxu0 0.0
    %4631 = vmatprep.subr.mxu0 0.0
    %4632 = vmatpush1.msra.mxu0 0.0
    %4633 = vmatprep.subr.mxu0 0.0
    %4634 = vmatpush1.msra.mxu0 0.0
    %4635 = vmatprep.subr.mxu0 0.0
    %4636 = vmatpush1.msra.mxu0 0.0
    %4637 = vmatprep.subr.mxu0 0.0
    %4638 = vmatpush1.msra.mxu0 0.0
    %4639 = vmatprep.subr.mxu0 0.0
    %4640 = vmatpush1.msra.mxu0 0.0
    %4641 = vmatprep.subr.mxu0 0.0
    %4642 = vmatpush1.msra.mxu0 0.0
    %4643 = vmatprep.subr.mxu0 0.0
    %4644 = vmatpush1.msra.mxu0 0.0
    %4645 = vmatprep.subr.mxu0 0.0
    %4646 = vmatpush1.msra.mxu0 0.0
    %4647 = vmatprep.subr.mxu0 0.0
    %4648 = vmatpush1.msra.mxu0 0.0
    %4649 = vmatprep.mubr.f32.mxu0 0.0
    %4650 = vmatmul.mubr.f32.gmra.mrb[0].mxu0 %v4583
    %v4651 = vpop.f32.mrb[0].mxu0
    %v4652 = vadd.f32 0.0, %v4651
    %v4653 = vpop.f32.mrb[0].mxu0
    %4654 = vdwg.mxu0
    %4655 = vmatprep.subr.mxu0 0.0
    %4656 = vmatpush1.msra.mxu0 %v4550
    %4657 = vmatprep.subr.mxu0 0.0
    %4658 = vmatpush1.msra.mxu0 %v4551
    %4659 = vmatprep.subr.mxu0 0.0
    %4660 = vmatpush1.msra.mxu0 %v4552
    %4661 = vmatprep.subr.mxu0 0.0
    %4662 = vmatpush1.msra.mxu0 %v4553
    %4663 = vmatprep.subr.mxu0 0.0
    %4664 = vmatpush1.msra.mxu0 %v4554
    %4665 = vmatprep.subr.mxu0 0.0
    %4666 = vmatpush1.msra.mxu0 %v4555
    %4667 = vmatprep.subr.mxu0 0.0
    %4668 = vmatpush1.msra.mxu0 %v4556
    %4669 = vmatprep.subr.mxu0 0.0
    %4670 = vmatpush1.msra.mxu0 %v4557
    %4671 = vmatprep.subr.mxu0 0.0
    %4672 = vmatpush1.msra.mxu0 %v4558
    %4673 = vmatprep.subr.mxu0 0.0
    %4674 = vmatpush1.msra.mxu0 %v4559
    %4675 = vmatprep.subr.mxu0 0.0
    %4676 = vmatpush1.msra.mxu0 %v4560
    %4677 = vmatprep.subr.mxu0 0.0
    %4678 = vmatpush1.msra.mxu0 %v4561
    %4679 = vmatprep.subr.mxu0 0.0
    %4680 = vmatpush1.msra.mxu0 %v4562
    %4681 = vmatprep.subr.mxu0 0.0
    %4682 = vmatpush1.msra.mxu0 %v4563
    %4683 = vmatprep.subr.mxu0 0.0
    %4684 = vmatpush1.msra.mxu0 %v4564
    %4685 = vmatprep.subr.mxu0 0.0
    %4686 = vmatpush1.msra.mxu0 %v4565
    %4687 = vmatprep.subr.mxu0 0.0
    %4688 = vmatpush1.msra.mxu0 0.0
    %4689 = vmatprep.subr.mxu0 0.0
    %4690 = vmatpush1.msra.mxu0 0.0
    %4691 = vmatprep.subr.mxu0 0.0
    %4692 = vmatpush1.msra.mxu0 0.0
    %4693 = vmatprep.subr.mxu0 0.0
    %4694 = vmatpush1.msra.mxu0 0.0
    %4695 = vmatprep.subr.mxu0 0.0
    %4696 = vmatpush1.msra.mxu0 0.0
    %4697 = vmatprep.subr.mxu0 0.0
    %4698 = vmatpush1.msra.mxu0 0.0
    %4699 = vmatprep.subr.mxu0 0.0
    %4700 = vmatpush1.msra.mxu0 0.0
    %4701 = vmatprep.subr.mxu0 0.0
    %4702 = vmatpush1.msra.mxu0 0.0
    %4703 = vmatprep.subr.mxu0 0.0
    %4704 = vmatpush1.msra.mxu0 0.0
    %4705 = vmatprep.subr.mxu0 0.0
    %4706 = vmatpush1.msra.mxu0 0.0
    %4707 = vmatprep.subr.mxu0 0.0
    %4708 = vmatpush1.msra.mxu0 0.0
    %4709 = vmatprep.subr.mxu0 0.0
    %4710 = vmatpush1.msra.mxu0 0.0
    %4711 = vmatprep.subr.mxu0 0.0
    %4712 = vmatpush1.msra.mxu0 0.0
    %4713 = vmatprep.subr.mxu0 0.0
    %4714 = vmatpush1.msra.mxu0 0.0
    %4715 = vmatprep.subr.mxu0 0.0
    %4716 = vmatpush1.msra.mxu0 0.0
    %4717 = vmatprep.subr.mxu0 0.0
    %4718 = vmatpush1.msra.mxu0 0.0
    %4719 = vmatprep.mubr.f32.mxu0 0.0
    %4720 = vmatmul.mubr.f32.gmra.mrb[0].mxu0 %v4549
    %v4721 = vpop.f32.mrb[0].mxu0
    %v4722 = vadd.f32 %v4652, %v4721
    %v4723 = vpop.f32.mrb[0].mxu0
    %4724 = vdwg.mxu0
    %v4725 = vld [vmem:[%s4 + $0x100] sm:$0xff]
    %v4726 = vld [vmem:[%s4 + $0x108] sm:$0xff]
    %v4727 = vld [vmem:[%s4 + $0x110] sm:$0xff]
    %v4728 = vld [vmem:[%s4 + $0x118] sm:$0xff]
    %v4729 = vld [vmem:[%s4 + $0x120] sm:$0xff]
    %v4730 = vld [vmem:[%s4 + $0x128] sm:$0xff]
    %v4731 = vld [vmem:[%s4 + $0x130] sm:$0xff]
    %v4732 = vld [vmem:[%s4 + $0x138] sm:$0xff]
    %v4733 = vld [vmem:[%s4 + $0x140] sm:$0xff]
    %v4734 = vld [vmem:[%s4 + $0x148] sm:$0xff]
    %v4735 = vld [vmem:[%s4 + $0x150] sm:$0xff]
    %v4736 = vld [vmem:[%s4 + $0x158] sm:$0xff]
    %v4737 = vld [vmem:[%s4 + $0x160] sm:$0xff]
    %v4738 = vld [vmem:[%s4 + $0x168] sm:$0xff]
    %v4739 = vld [vmem:[%s4 + $0x170] sm:$0xff]
    %v4740 = vld [vmem:[%s4 + $0x178] sm:$0xff]
    %v4741 = vrot.slane %v4549, 2
    %4743 = vmatprep.subr.mxu0 0.0
    %4744 = vmatpush1.msra.mxu0 %v4725
    %4745 = vmatprep.subr.mxu0 0.0
    %4746 = vmatpush1.msra.mxu0 %v4726
    %4747 = vmatprep.subr.mxu0 0.0
    %4748 = vmatpush1.msra.mxu0 %v4727
    %4749 = vmatprep.subr.mxu0 0.0
    %4750 = vmatpush1.msra.mxu0 %v4728
    %4751 = vmatprep.subr.mxu0 0.0
    %4752 = vmatpush1.msra.mxu0 %v4729
    %4753 = vmatprep.subr.mxu0 0.0
    %4754 = vmatpush1.msra.mxu0 %v4730
    %4755 = vmatprep.subr.mxu0 0.0
    %4756 = vmatpush1.msra.mxu0 %v4731
    %4757 = vmatprep.subr.mxu0 0.0
    %4758 = vmatpush1.msra.mxu0 %v4732
    %4759 = vmatprep.subr.mxu0 0.0
    %4760 = vmatpush1.msra.mxu0 %v4733
    %4761 = vmatprep.subr.mxu0 0.0
    %4762 = vmatpush1.msra.mxu0 %v4734
    %4763 = vmatprep.subr.mxu0 0.0
    %4764 = vmatpush1.msra.mxu0 %v4735
    %4765 = vmatprep.subr.mxu0 0.0
    %4766 = vmatpush1.msra.mxu0 %v4736
    %4767 = vmatprep.subr.mxu0 0.0
    %4768 = vmatpush1.msra.mxu0 %v4737
    %4769 = vmatprep.subr.mxu0 0.0
    %4770 = vmatpush1.msra.mxu0 %v4738
    %4771 = vmatprep.subr.mxu0 0.0
    %4772 = vmatpush1.msra.mxu0 %v4739
    %4773 = vmatprep.subr.mxu0 0.0
    %4774 = vmatpush1.msra.mxu0 %v4740
    %4775 = vmatprep.subr.mxu0 0.0
    %4776 = vmatpush1.msra.mxu0 0.0
    %4777 = vmatprep.subr.mxu0 0.0
    %4778 = vmatpush1.msra.mxu0 0.0
    %4779 = vmatprep.subr.mxu0 0.0
    %4780 = vmatpush1.msra.mxu0 0.0
    %4781 = vmatprep.subr.mxu0 0.0
    %4782 = vmatpush1.msra.mxu0 0.0
    %4783 = vmatprep.subr.mxu0 0.0
    %4784 = vmatpush1.msra.mxu0 0.0
    %4785 = vmatprep.subr.mxu0 0.0
    %4786 = vmatpush1.msra.mxu0 0.0
    %4787 = vmatprep.subr.mxu0 0.0
    %4788 = vmatpush1.msra.mxu0 0.0
    %4789 = vmatprep.subr.mxu0 0.0
    %4790 = vmatpush1.msra.mxu0 0.0
    %4791 = vmatprep.subr.mxu0 0.0
    %4792 = vmatpush1.msra.mxu0 0.0
    %4793 = vmatprep.subr.mxu0 0.0
    %4794 = vmatpush1.msra.mxu0 0.0
    %4795 = vmatprep.subr.mxu0 0.0
    %4796 = vmatpush1.msra.mxu0 0.0
    %4797 = vmatprep.subr.mxu0 0.0
    %4798 = vmatpush1.msra.mxu0 0.0
    %4799 = vmatprep.subr.mxu0 0.0
    %4800 = vmatpush1.msra.mxu0 0.0
    %4801 = vmatprep.subr.mxu0 0.0
    %4802 = vmatpush1.msra.mxu0 0.0
    %4803 = vmatprep.subr.mxu0 0.0
    %4804 = vmatpush1.msra.mxu0 0.0
    %4805 = vmatprep.subr.mxu0 0.0
    %4806 = vmatpush1.msra.mxu0 0.0
    %4807 = vmatprep.mubr.f32.mxu0 0.0
    %4808 = vmatmul.mubr.f32.gmra.mrb[0].mxu0 %v4741
    %v4809 = vpop.f32.mrb[0].mxu0
    %v4810 = vadd.f32 0.0, %v4809
    %v4811 = vpop.f32.mrb[0].mxu0
    %4812 = vdwg.mxu0
    %v4813 = vadd.f32 %v4722, %v4810
    %v4814 = vsel %vm506, %v4334, -inf
    %v4815 = vmax.f32 %v4333, %v4814
    %v4816 = vrot.slane %v4815, 4
    %v4817 = vmax.f32 %v4815, %v4816
    %v4818 = vrot.slane %v4817, 2
    %v4819 = vmax.f32 %v4817, %v4818
    %v4820 = vrot.slane %v4819, 1
    %v4821 = vmax.f32 %v4819, %v4820
    %v4822 = vsel %vm4520, %v4333, -inf
    %v4823 = vsel %vm4522, %v4335, -inf
    %v4824 = vmax.f32 %v4822, %v4334
    %v4825 = vmax.f32 %v4824, %v4823
    %v4826 = vrot.slane %v4825, 4
    %v4827 = vmax.f32 %v4825, %v4826
    %v4828 = vrot.slane %v4827, 2
    %v4829 = vmax.f32 %v4827, %v4828
    %v4830 = vrot.slane %v4829, 1
    %v4831 = vmax.f32 %v4829, %v4830
    %v4832 = vsel %vm4532, %v4334, -inf
    %v4833 = vsel %vm4534, %v4336, -inf
    %v4834 = vmax.f32 %v4832, %v4335
    %v4835 = vmax.f32 %v4834, %v4833
    %v4836 = vrot.slane %v4835, 4
    %v4837 = vmax.f32 %v4835, %v4836
    %v4838 = vrot.slane %v4837, 2
    %v4839 = vmax.f32 %v4837, %v4838
    %v4840 = vrot.slane %v4839, 1
    %v4841 = vmax.f32 %v4839, %v4840
    %v4842 = vsel %vm4544, %v4821, %v4831
    %v4843 = vsel %vm4534, %v4842, %v4841
    %v4844 = vsub.f32 %v4843, %v4506
    %v4845 = vmul.f32 %v4844, %v4511
    %v4846 = vtanh.pop %v4845
    %v4848 = vrot.slane %v4846, 1
    %4850 = vmatprep.subr.mxu0 0.0
    %4851 = vmatpush1.msra.mxu0 %v4566
    %4852 = vmatprep.subr.mxu0 0.0
    %4853 = vmatpush1.msra.mxu0 %v4567
    %4854 = vmatprep.subr.mxu0 0.0
    %4855 = vmatpush1.msra.mxu0 %v4568
    %4856 = vmatprep.subr.mxu0 0.0
    %4857 = vmatpush1.msra.mxu0 %v4569
    %4858 = vmatprep.subr.mxu0 0.0
    %4859 = vmatpush1.msra.mxu0 %v4570
    %4860 = vmatprep.subr.mxu0 0.0
    %4861 = vmatpush1.msra.mxu0 %v4571
    %4862 = vmatprep.subr.mxu0 0.0
    %4863 = vmatpush1.msra.mxu0 %v4572
    %4864 = vmatprep.subr.mxu0 0.0
    %4865 = vmatpush1.msra.mxu0 %v4573
    %4866 = vmatprep.subr.mxu0 0.0
    %4867 = vmatpush1.msra.mxu0 %v4574
    %4868 = vmatprep.subr.mxu0 0.0
    %4869 = vmatpush1.msra.mxu0 %v4575
    %4870 = vmatprep.subr.mxu0 0.0
    %4871 = vmatpush1.msra.mxu0 %v4576
    %4872 = vmatprep.subr.mxu0 0.0
    %4873 = vmatpush1.msra.mxu0 %v4577
    %4874 = vmatprep.subr.mxu0 0.0
    %4875 = vmatpush1.msra.mxu0 %v4578
    %4876 = vmatprep.subr.mxu0 0.0
    %4877 = vmatpush1.msra.mxu0 %v4579
    %4878 = vmatprep.subr.mxu0 0.0
    %4879 = vmatpush1.msra.mxu0 %v4580
    %4880 = vmatprep.subr.mxu0 0.0
    %4881 = vmatpush1.msra.mxu0 %v4581
    %4882 = vmatprep.subr.mxu0 0.0
    %4883 = vmatpush1.msra.mxu0 0.0
    %4884 = vmatprep.subr.mxu0 0.0
    %4885 = vmatpush1.msra.mxu0 0.0
    %4886 = vmatprep.subr.mxu0 0.0
    %4887 = vmatpush1.msra.mxu0 0.0
    %4888 = vmatprep.subr.mxu0 0.0
    %4889 = vmatpush1.msra.mxu0 0.0
    %4890 = vmatprep.subr.mxu0 0.0
    %4891 = vmatpush1.msra.mxu0 0.0
    %4892 = vmatprep.subr.mxu0 0.0
    %4893 = vmatpush1.msra.mxu0 0.0
    %4894 = vmatprep.subr.mxu0 0.0
    %4895 = vmatpush1.msra.mxu0 0.0
    %4896 = vmatprep.subr.mxu0 0.0
    %4897 = vmatpush1.msra.mxu0 0.0
    %4898 = vmatprep.subr.mxu0 0.0
    %4899 = vmatpush1.msra.mxu0 0.0
    %4900 = vmatprep.subr.mxu0 0.0
    %4901 = vmatpush1.msra.mxu0 0.0
    %4902 = vmatprep.subr.mxu0 0.0
    %4903 = vmatpush1.msra.mxu0 0.0
    %4904 = vmatprep.subr.mxu0 0.0
    %4905 = vmatpush1.msra.mxu0 0.0
    %4906 = vmatprep.subr.mxu0 0.0
    %4907 = vmatpush1.msra.mxu0 0.0
    %4908 = vmatprep.subr.mxu0 0.0
    %4909 = vmatpush1.msra.mxu0 0.0
    %4910 = vmatprep.subr.mxu0 0.0
    %4911 = vmatpush1.msra.mxu0 0.0
    %4912 = vmatprep.subr.mxu0 0.0
    %4913 = vmatpush1.msra.mxu0 0.0
    %4914 = vmatprep.mubr.f32.mxu0 0.0
    %4915 = vmatmul.mubr.f32.gmra.mrb[0].mxu0 %v4848
    %v4916 = vpop.f32.mrb[0].mxu0
    %v4917 = vadd.f32 0.0, %v4916
    %v4918 = vpop.f32.mrb[0].mxu0
    %4919 = vdwg.mxu0
    %4920 = vmatprep.subr.mxu0 0.0
    %4921 = vmatpush1.msra.mxu0 %v4550
    %4922 = vmatprep.subr.mxu0 0.0
    %4923 = vmatpush1.msra.mxu0 %v4551
    %4924 = vmatprep.subr.mxu0 0.0
    %4925 = vmatpush1.msra.mxu0 %v4552
    %4926 = vmatprep.subr.mxu0 0.0
    %4927 = vmatpush1.msra.mxu0 %v4553
    %4928 = vmatprep.subr.mxu0 0.0
    %4929 = vmatpush1.msra.mxu0 %v4554
    %4930 = vmatprep.subr.mxu0 0.0
    %4931 = vmatpush1.msra.mxu0 %v4555
    %4932 = vmatprep.subr.mxu0 0.0
    %4933 = vmatpush1.msra.mxu0 %v4556
    %4934 = vmatprep.subr.mxu0 0.0
    %4935 = vmatpush1.msra.mxu0 %v4557
    %4936 = vmatprep.subr.mxu0 0.0
    %4937 = vmatpush1.msra.mxu0 %v4558
    %4938 = vmatprep.subr.mxu0 0.0
    %4939 = vmatpush1.msra.mxu0 %v4559
    %4940 = vmatprep.subr.mxu0 0.0
    %4941 = vmatpush1.msra.mxu0 %v4560
    %4942 = vmatprep.subr.mxu0 0.0
    %4943 = vmatpush1.msra.mxu0 %v4561
    %4944 = vmatprep.subr.mxu0 0.0
    %4945 = vmatpush1.msra.mxu0 %v4562
    %4946 = vmatprep.subr.mxu0 0.0
    %4947 = vmatpush1.msra.mxu0 %v4563
    %4948 = vmatprep.subr.mxu0 0.0
    %4949 = vmatpush1.msra.mxu0 %v4564
    %4950 = vmatprep.subr.mxu0 0.0
    %4951 = vmatpush1.msra.mxu0 %v4565
    %4952 = vmatprep.subr.mxu0 0.0
    %4953 = vmatpush1.msra.mxu0 0.0
    %4954 = vmatprep.subr.mxu0 0.0
    %4955 = vmatpush1.msra.mxu0 0.0
    %4956 = vmatprep.subr.mxu0 0.0
    %4957 = vmatpush1.msra.mxu0 0.0
    %4958 = vmatprep.subr.mxu0 0.0
    %4959 = vmatpush1.msra.mxu0 0.0
    %4960 = vmatprep.subr.mxu0 0.0
    %4961 = vmatpush1.msra.mxu0 0.0
    %4962 = vmatprep.subr.mxu0 0.0
    %4963 = vmatpush1.msra.mxu0 0.0
    %4964 = vmatprep.subr.mxu0 0.0
    %4965 = vmatpush1.msra.mxu0 0.0
    %4966 = vmatprep.subr.mxu0 0.0
    %4967 = vmatpush1.msra.mxu0 0.0
    %4968 = vmatprep.subr.mxu0 0.0
    %4969 = vmatpush1.msra.mxu0 0.0
    %4970 = vmatprep.subr.mxu0 0.0
    %4971 = vmatpush1.msra.mxu0 0.0
    %4972 = vmatprep.subr.mxu0 0.0
    %4973 = vmatpush1.msra.mxu0 0.0
    %4974 = vmatprep.subr.mxu0 0.0
    %4975 = vmatpush1.msra.mxu0 0.0
    %4976 = vmatprep.subr.mxu0 0.0
    %4977 = vmatpush1.msra.mxu0 0.0
    %4978 = vmatprep.subr.mxu0 0.0
    %4979 = vmatpush1.msra.mxu0 0.0
    %4980 = vmatprep.subr.mxu0 0.0
    %4981 = vmatpush1.msra.mxu0 0.0
    %4982 = vmatprep.subr.mxu0 0.0
    %4983 = vmatpush1.msra.mxu0 0.0
    %4984 = vmatprep.mubr.f32.mxu0 0.0
    %4985 = vmatmul.mubr.f32.gmra.mrb[0].mxu0 %v4846
    %v4986 = vpop.f32.mrb[0].mxu0
    %v4987 = vadd.f32 %v4917, %v4986
    %v4988 = vpop.f32.mrb[0].mxu0
    %4989 = vdwg.mxu0
    %v4990 = vrot.slane %v4846, 2
    %4992 = vmatprep.subr.mxu0 0.0
    %4993 = vmatpush1.msra.mxu0 %v4725
    %4994 = vmatprep.subr.mxu0 0.0
    %4995 = vmatpush1.msra.mxu0 %v4726
    %4996 = vmatprep.subr.mxu0 0.0
    %4997 = vmatpush1.msra.mxu0 %v4727
    %4998 = vmatprep.subr.mxu0 0.0
    %4999 = vmatpush1.msra.mxu0 %v4728
    %5000 = vmatprep.subr.mxu0 0.0
    %5001 = vmatpush1.msra.mxu0 %v4729
    %5002 = vmatprep.subr.mxu0 0.0
    %5003 = vmatpush1.msra.mxu0 %v4730
    %5004 = vmatprep.subr.mxu0 0.0
    %5005 = vmatpush1.msra.mxu0 %v4731
    %5006 = vmatprep.subr.mxu0 0.0
    %5007 = vmatpush1.msra.mxu0 %v4732
    %5008 = vmatprep.subr.mxu0 0.0
    %5009 = vmatpush1.msra.mxu0 %v4733
    %5010 = vmatprep.subr.mxu0 0.0
    %5011 = vmatpush1.msra.mxu0 %v4734
    %5012 = vmatprep.subr.mxu0 0.0
    %5013 = vmatpush1.msra.mxu0 %v4735
    %5014 = vmatprep.subr.mxu0 0.0
    %5015 = vmatpush1.msra.mxu0 %v4736
    %5016 = vmatprep.subr.mxu0 0.0
    %5017 = vmatpush1.msra.mxu0 %v4737
    %5018 = vmatprep.subr.mxu0 0.0
    %5019 = vmatpush1.msra.mxu0 %v4738
    %5020 = vmatprep.subr.mxu0 0.0
    %5021 = vmatpush1.msra.mxu0 %v4739
    %5022 = vmatprep.subr.mxu0 0.0
    %5023 = vmatpush1.msra.mxu0 %v4740
    %5024 = vmatprep.subr.mxu0 0.0
    %5025 = vmatpush1.msra.mxu0 0.0
    %5026 = vmatprep.subr.mxu0 0.0
    %5027 = vmatpush1.msra.mxu0 0.0
    %5028 = vmatprep.subr.mxu0 0.0
    %5029 = vmatpush1.msra.mxu0 0.0
    %5030 = vmatprep.subr.mxu0 0.0
    %5031 = vmatpush1.msra.mxu0 0.0
    %5032 = vmatprep.subr.mxu0 0.0
    %5033 = vmatpush1.msra.mxu0 0.0
    %5034 = vmatprep.subr.mxu0 0.0
    %5035 = vmatpush1.msra.mxu0 0.0
    %5036 = vmatprep.subr.mxu0 0.0
    %5037 = vmatpush1.msra.mxu0 0.0
    %5038 = vmatprep.subr.mxu0 0.0
    %5039 = vmatpush1.msra.mxu0 0.0
    %5040 = vmatprep.subr.mxu0 0.0
    %5041 = vmatpush1.msra.mxu0 0.0
    %5042 = vmatprep.subr.mxu0 0.0
    %5043 = vmatpush1.msra.mxu0 0.0
    %5044 = vmatprep.subr.mxu0 0.0
    %5045 = vmatpush1.msra.mxu0 0.0
    %5046 = vmatprep.subr.mxu0 0.0
    %5047 = vmatpush1.msra.mxu0 0.0
    %5048 = vmatprep.subr.mxu0 0.0
    %5049 = vmatpush1.msra.mxu0 0.0
    %5050 = vmatprep.subr.mxu0 0.0
    %5051 = vmatpush1.msra.mxu0 0.0
    %5052 = vmatprep.subr.mxu0 0.0
    %5053 = vmatpush1.msra.mxu0 0.0
    %5054 = vmatprep.subr.mxu0 0.0
    %5055 = vmatpush1.msra.mxu0 0.0
    %5056 = vmatprep.mubr.f32.mxu0 0.0
    %5057 = vmatmul.mubr.f32.gmra.mrb[0].mxu0 %v4990
    %v5058 = vpop.f32.mrb[0].mxu0
    %v5059 = vadd.f32 0.0, %v5058
    %v5060 = vpop.f32.mrb[0].mxu0
    %5061 = vdwg.mxu0
    %v5062 = vadd.f32 %v4987, %v5059
    %v5064 = vrot.slane %v5062, 7
    %v5066 = vsel %vm4544, %v4813, %v5064
    %vm5067 = vcmask 74752
    %v5068 = vsel %vm5067, %v5066, 0.0
    %5069 = vadd.xlane.f32.xlu0 %v5068
    %v5070 = vpop.xlane.xlu0 %5069
    %v5071 = vrot.slane %v5070, 4
    %v5072 = vadd.f32 %v5070, %v5071
    %v5073 = vrot.slane %v5072, 2
    %v5074 = vadd.f32 %v5072, %v5073
    %v5075 = vrot.slane %v5074, 1
    %v5076 = vadd.f32 %v5074, %v5075
    %s5077 = vtos %v5076
    %v5078 = vstv %s5077
    %v5079 = vmul.f32 %v5078, 0.05
    %v5080 = vmul.f32 %v5066, %v5066
    %v5081 = vsel %vm5067, %v5080, 0.0
    %5082 = vadd.xlane.f32.xlu0 %v5081
    %v5083 = vpop.xlane.xlu0 %5082
    %v5084 = vrot.slane %v5083, 4
    %v5085 = vadd.f32 %v5083, %v5084
    %v5086 = vrot.slane %v5085, 2
    %v5087 = vadd.f32 %v5085, %v5086
    %v5088 = vrot.slane %v5087, 1
    %v5089 = vadd.f32 %v5087, %v5088
    %s5090 = vtos %v5089
    %v5091 = vstv %s5090
    %v5092 = vmul.f32 %v5091, 0.05
    %v5093 = vmul.f32 %v5079, %v5079
    %v5094 = vsub.f32 %v5092, %v5093
    %v5095 = vsub.f32 %v5066, %v5079
    %v5096 = vadd.f32 %v5094, 1e-05
    %v5097 = vrsqrt.pop %v5096
    %v5098 = vmul.f32 %v5095, %v5097
    %5099 = vst.msk [vmem:[#allocation6] sm:$0x3] %vm5067, %v5098
    // Predicated region
    $region134: #{autoencoder_forward.1} parent=1 // pred_check
      _
    $region135: #{autoencoder_forward.1} parent=1 // pred_check_branch
      %5101 = sbr.rel (0) target = $region137
    $region136: #{autoencoder_forward.1} parent=1 // pred_region
      %s5103 = ssub.s32 32, 32
      %5104 = vsyncadd [#allocation7], %s5103
      %s5106 = sshll.u32 [#allocation6], 4
      %s5107 = int_to_ptr.vmem [resolvable:$true] %s5106
      %5109 = dma.vmem_to_hbm [thread:$0]  %s5107, 32, %s5, [#allocation7]
    $region137: #{autoencoder_forward.1} parent=1 // pred_fallthru
      _
    // Predicated region
    $region138: #{autoencoder_forward.1} parent=1 // pred_check
      _
    $region139: #{autoencoder_forward.1} parent=1 // pred_check_branch
      %5111 = sbr.rel (0) target = $region141
    $region140: #{autoencoder_forward.1} parent=1 // pred_region
      %5112 = dma.done [#allocation7], 32
    $region141: #{autoencoder_forward.1} parent=1 // pred_fallthru
      _
    %5113 = vsyncpa [#allocation7], 1

</llo_original>
